<compile_context>
chip_gen: v7x
topology: tpu7x:2x2x1
jax: 0.10.0
libtpu: 0.0.40
codegen_flags: <defaults>
</compile_context>

<pallas_src>
import functools

import jax
import jax.numpy as jnp
from jax import lax
from jax.experimental import pallas as pl
from jax.experimental.pallas import tpu as pltpu


# ------------------------------ fused kernel --------------------------------

def fused_cross_attention_kernel(x_ref, ctx_ref, wq_ref, wkv_ref, wo_ref,
                                 bo_ref, o_ref,
                                 q_s, k_s, vp_s, acc_s,
                                 *, num_heads, dim_head, dim_query):
    H, dh, Dq = num_heads, dim_head, dim_query

    # --- Once per batch element (first q-tile): fused K|V projection and
    #     fold of the output projection into V per head.  K and V' stay
    #     resident in VMEM scratch for all q-tiles of this batch element.
    #     INVARIANT: the q-tile grid axis must remain the innermost,
    #     sequentially iterated ("arbitrary") axis with batch outermost;
    #     reordering the grid or marking the q axis "parallel" would make
    #     other q-tiles consume stale K/V' from a different batch element.
    @pl.when(pl.program_id(1) == 0)
    def _():
        ctx = ctx_ref[0].astype(jnp.bfloat16)                      # [M, Dc]
        # One MXU call, N = 2*Dq: fused K|V projection (bf16 x bf16 -> f32).
        kv = jnp.dot(ctx, wkv_ref[...],
                     preferred_element_type=jnp.float32)           # [M, 2*Dq]
        k_s[...] = kv[:, :Dq].astype(jnp.bfloat16)
        v = kv[:, Dq:]                                             # [M, Dq] f32
        for h in range(H):
            lo = h * dh
            # V'_h = V_h @ Wo_h : [M, dh] x [dh, Dq] -> lane-dense [M, Dq].
            vp_s[h] = jnp.dot(v[:, lo:lo + dh].astype(jnp.bfloat16),
                              wo_ref[lo:lo + dh, :],
                              preferred_element_type=jnp.float32
                              ).astype(jnp.bfloat16)

    # --- Q projection for this q-tile (softmax scale already folded into wq).
    #     Stage Q in VMEM scratch; per-head slices are read back from the ref
    #     inside the loop to keep vreg pressure low.
    x = x_ref[0].astype(jnp.bfloat16)                               # [tq, Dq]
    q_s[...] = jnp.dot(x, wq_ref[...],
                       preferred_element_type=jnp.float32).astype(jnp.bfloat16)

    acc_s[...] = jnp.zeros_like(acc_s)

    # --- Per-head attention.  bf16 MXU operands, f32 accumulation; softmax
    #     elementwise math stays f32.
    for h in range(H):
        lo = h * dh
        qh = q_s[:, lo:lo + dh]                                     # [tq, dh] bf16
        kh = k_s[:, lo:lo + dh]                                     # [M,  dh] bf16
        # Contract the last dims directly -> no explicit K transpose / XLU pass.
        s = lax.dot_general(qh, kh, (((1,), (1,)), ((), ())),
                            preferred_element_type=jnp.float32)     # [tq, M] f32
        s = s - jnp.max(s, axis=-1, keepdims=True)                  # stable softmax
        p = jnp.exp(s)
        p = p * pl.reciprocal(jnp.sum(p, axis=-1, keepdims=True), approx=True)
        # Wo already folded into V' -> lane-dense [tq, Dq] accumulate; no
        # masked 16-lane scratch stores, no separate out-proj matmul.
        acc_s[...] += jnp.dot(p.astype(jnp.bfloat16), vp_s[h],
                              preferred_element_type=jnp.float32)

    # Bias add (f32); dropout p = 0.0 -> identity.
    o_ref[0] = (acc_s[...] + bo_ref[...]).astype(o_ref.dtype)


def fused_cross_attention(x, ctx, wq_k, wkv_k, wo_k, bo_k,
                          *, num_heads, dim_head, q_tile=256):
    B, N, Dq = x.shape
    _, M, Dc = ctx.shape
    # NOTE: for N not divisible by q_tile we fall back to one full-N tile;
    # numerically fine, but for very large N this can exceed the VMEM budget
    # (especially on v7x with 64 MiB) -- pick q_tile dividing N in production.
    tq = q_tile if (N % q_tile == 0) else N
    grid = (B, N // tq)

    kern = functools.partial(fused_cross_attention_kernel,
                             num_heads=num_heads, dim_head=dim_head,
                             dim_query=Dq)
    return pl.pallas_call(
        kern,
        out_shape=jax.ShapeDtypeStruct((B, N, Dq), x.dtype),
        grid_spec=pltpu.PrefetchScalarGridSpec(
            num_scalar_prefetch=0,
            grid=grid,
            in_specs=[
                pl.BlockSpec((1, tq, Dq), lambda b, i: (b, i, 0)),   # hidden
                pl.BlockSpec((1, M, Dc), lambda b, i: (b, 0, 0)),    # context
                pl.BlockSpec((Dq, Dq), lambda b, i: (0, 0)),         # wq_t (scaled, bf16)
                pl.BlockSpec((Dc, 2 * Dq), lambda b, i: (0, 0)),     # wkv_t (bf16)
                pl.BlockSpec((Dq, Dq), lambda b, i: (0, 0)),         # wo_t (bf16)
                pl.BlockSpec((1, Dq), lambda b, i: (0, 0)),          # out bias (f32)
            ],
            out_specs=pl.BlockSpec((1, tq, Dq), lambda b, i: (b, i, 0)),
            scratch_shapes=[
                pltpu.VMEM((tq, Dq), jnp.bfloat16),             # Q, per q-tile
                pltpu.VMEM((M, Dq), jnp.bfloat16),              # K (all heads), batch-resident
                pltpu.VMEM((num_heads, M, Dq), jnp.bfloat16),   # V'_h = V_h @ Wo_h, batch-resident
                pltpu.VMEM((tq, Dq), jnp.float32),              # output accumulator
            ],
        ),
        compiler_params=pltpu.CompilerParams(
            dimension_semantics=("parallel", "arbitrary"),
            vmem_limit_bytes=48 * 1024 * 1024),
    )(x, ctx, wq_k, wkv_k, wo_k, bo_k)


# --------------------------- CrossAttention module --------------------------

class CrossAttentionPallas:
    def __init__(self, dim_query, dim_cross=None, num_heads=8, dropout=0.0,
                 bias=False, upcast_attention=False, key=None):
        dim_cross = dim_query if dim_cross is None else dim_cross
        assert dim_query % num_heads == 0
        self.dim_query = dim_query
        self.num_heads = num_heads
        self.dim_head = dim_query // num_heads
        self.scale = self.dim_head ** (-0.5)
        # dropout p=0.0 -> identity; upcast_attention moot (scores accumulate f32).

        key = jax.random.PRNGKey(42) if key is None else key
        k1, k2, k3, k4 = jax.random.split(key, 4)
        # torch nn.Linear stores weight as [out_features, in_features].
        wq = 0.05 * jax.random.normal(k1, (dim_query, dim_query), jnp.float32)
        wkv = 0.05 * jax.random.normal(k2, (dim_query * 2, dim_cross), jnp.float32)
        wout = 0.05 * jax.random.normal(k3, (dim_query, dim_query), jnp.float32)
        bout = 0.05 * jax.random.normal(k4, (dim_query,), jnp.float32)

        # f32 master copies (reference / parity with the torch parameters);
        # x @ W^T == x @ W_t, so store pre-transposed [in, out].
        self.wq_t = jnp.asarray(wq.T)                        # [Dq, Dq]
        self.wkv_t = jnp.asarray(wkv.T)                      # [Dc, 2*Dq]  (cols [0:Dq)=K, [Dq:2Dq)=V)
        self.wo_t = jnp.asarray(wout.T)                      # [Dq, Dq]
        self.bo = jnp.asarray(bout)                          # [Dq]

        # Kernel operands: softmax scale folded into the Q weight; weights in
        # bf16 for the MXU (halves weight DMA + VMEM); bias stays f32 (added
        # post-accumulation). bias=False -> q/kv biases are hard zero, dropped.
        self.wq_k = (self.wq_t * self.scale).astype(jnp.bfloat16)
        self.wkv_k = self.wkv_t.astype(jnp.bfloat16)
        self.wo_k = self.wo_t.astype(jnp.bfloat16)
        self.bo_k = self.bo.reshape(1, dim_query)            # [1, Dq] f32

    def __call__(self, hidden_states, context=None):
        context = hidden_states if context is None else context
        return fused_cross_attention(
            hidden_states, context,
            self.wq_k, self.wkv_k, self.wo_k, self.bo_k,
            num_heads=self.num_heads, dim_head=self.dim_head)


# ----------------------------- pure-JAX reference ----------------------------

def reference_forward(mod, hidden_states, context=None):
    context = hidden_states if context is None else context
    B, N, Dq = hidden_states.shape
    _, M, Dc = context.shape
    H, dh = mod.num_heads, mod.dim_head
    q = (hidden_states @ mod.wq_t).reshape(B, N, H, dh)
    kv = context @ mod.wkv_t                                  # [B, M, 2*Dq]
    k = kv[..., :Dq].reshape(B, M, H, dh)
    v = kv[..., Dq:].reshape(B, M, H, dh)
    s = mod.scale * jnp.einsum("bnhd,bmhd->bhnm", q, k)
    p = jax.nn.softmax(s, axis=-1)
    o = jnp.einsum("bhnm,bmhd->bnhd", p, v).reshape(B, N, Dq)
    return o @ mod.wo_t + mod.bo


# ---------------------------------- main -------------------------------------

if __name__ == "__main__":
    batch, query_n, context_n = 2, 256, 128
    dim_query, dim_cross, num_heads = 128, 64, 8      # dim_head = 16

    key = jax.random.PRNGKey(0)
    kx, kc, kp = jax.random.split(key, 3)
    hidden_states = jax.random.normal(kx, (batch, query_n, dim_query), jnp.float32)
    context = jax.random.normal(kc, (batch, context_n, dim_cross), jnp.float32)

    mod = CrossAttentionPallas(dim_query, dim_cross, num_heads=num_heads, key=kp)

    out = jax.block_until_ready(mod(hidden_states, context))

    ref = reference_forward(mod, hidden_states, context)
    assert out.shape == (batch, query_n, dim_query)
    # Tolerance accounts for bf16 MXU operands (f32 accumulation) and the EUP
    # approximate reciprocal in the softmax divide (deliberate perf tradeoffs).
    assert jnp.allclose(out, ref, atol=2e-2, rtol=2e-2), "mismatch vs reference"

    print("KERNEL_OK")
</pallas_src>

<mosaic_0001>
module attributes {stable_mosaic.version = 11 : i64} {
  func.func @fused_cross_attention_kernel(%arg0: i32, %arg1: i32, %arg2: memref<1x256x128xf32, #tpu.memory_space<vmem>>, %arg3: memref<1x128x64xf32, #tpu.memory_space<vmem>>, %arg4: memref<128x128xbf16, #tpu.memory_space<vmem>>, %arg5: memref<64x256xbf16, #tpu.memory_space<vmem>>, %arg6: memref<128x128xbf16, #tpu.memory_space<vmem>>, %arg7: memref<1x128xf32, #tpu.memory_space<vmem>>, %arg8: memref<1x256x128xf32, #tpu.memory_space<vmem>>, %arg9: memref<256x128xbf16, #tpu.memory_space<vmem>>, %arg10: memref<128x128xbf16, #tpu.memory_space<vmem>>, %arg11: memref<8x128x128xbf16, #tpu.memory_space<vmem>>, %arg12: memref<256x128xf32, #tpu.memory_space<vmem>>) attributes {dimension_semantics = [#tpu.dimension_semantics<parallel>, #tpu.dimension_semantics<arbitrary>], iteration_bounds = array<i64: 2, 1>, scalar_prefetch = 0 : i64, scratch_operands = 4 : i64, tpu.core_type = #tpu.core_type<tc>, window_params = [{transform_indices = @transform_0, window_bounds = array<i64: 1, 256, 128>}, {transform_indices = @transform_1, window_bounds = array<i64: 1, 128, 64>}, {pipeline_mode = #tpu.pipeline_mode<synchronous>, transform_indices = @transform_2, window_bounds = array<i64: 128, 128>}, {pipeline_mode = #tpu.pipeline_mode<synchronous>, transform_indices = @transform_3, window_bounds = array<i64: 64, 256>}, {pipeline_mode = #tpu.pipeline_mode<synchronous>, transform_indices = @transform_4, window_bounds = array<i64: 128, 128>}, {pipeline_mode = #tpu.pipeline_mode<synchronous>, transform_indices = @transform_5, window_bounds = array<i64: 1, 128>}, {transform_indices = @transform_6, window_bounds = array<i64: 1, 256, 128>}]} {
    %c0_i32 = arith.constant 0 : i32
    %0 = arith.cmpi eq, %arg1, %c0_i32 : i32
    %1 = arith.extui %0 : i1 to i32
    %c0_i32_0 = arith.constant 0 : i32
    %2 = arith.cmpi ne, %1, %c0_i32_0 : i32
    scf.if %2 {
      %c0_123 = arith.constant 0 : index
      %c0_124 = arith.constant 0 : index
      %c0_125 = arith.constant 0 : index
      %179 = vector.load %arg3[%c0_123, %c0_124, %c0_125] : memref<1x128x64xf32, #tpu.memory_space<vmem>>, vector<1x128x64xf32>
      %180 = vector.shape_cast %179 : vector<1x128x64xf32> to vector<128x64xf32>
      %181 = arith.truncf %180 : vector<128x64xf32> to vector<128x64xbf16>
      %c0_126 = arith.constant 0 : index
      %c0_127 = arith.constant 0 : index
      %182 = vector.load %arg5[%c0_126, %c0_127] : memref<64x256xbf16, #tpu.memory_space<vmem>>, vector<64x256xbf16>
      %cst_128 = arith.constant dense<0.000000e+00> : vector<128x256xf32>
      %183 = tpu.matmul %181, %182, %cst_128 {dimension_numbers = #tpu.dot_dimension_numbers<[1], [0], [0], [1], [0, 0, 1, 1], [], []>} : vector<128x64xbf16>, vector<64x256xbf16>, vector<128x256xf32> -> vector<128x256xf32>
      %184 = vector.extract_strided_slice %183 {offsets = [0, 0], sizes = [128, 128], strides = [1, 1]} : vector<128x256xf32> to vector<128x128xf32>
      %185 = arith.truncf %184 : vector<128x128xf32> to vector<128x128xbf16>
      %c0_129 = arith.constant 0 : index
      %c0_130 = arith.constant 0 : index
      %186 = vector.load %arg10[%c0_129, %c0_130] : memref<128x128xbf16, #tpu.memory_space<vmem>>, vector<128x128xbf16>
      tpu.vector_store %arg10[%c0_129, %c0_130], %185 {strides = array<i32>} : memref<128x128xbf16, #tpu.memory_space<vmem>>, vector<128x128xbf16>,
      %187 = vector.extract_strided_slice %183 {offsets = [0, 128], sizes = [128, 128], strides = [1, 1]} : vector<128x256xf32> to vector<128x128xf32>
      %188 = vector.extract_strided_slice %187 {offsets = [0, 0], sizes = [128, 16], strides = [1, 1]} : vector<128x128xf32> to vector<128x16xf32>
      %189 = arith.truncf %188 : vector<128x16xf32> to vector<128x16xbf16>
      %c0_131 = arith.constant 0 : index
      %c0_132 = arith.constant 0 : index
      %190 = vector.load %arg6[%c0_131, %c0_132] : memref<128x128xbf16, #tpu.memory_space<vmem>>, vector<16x128xbf16>
      %cst_133 = arith.constant dense<0.000000e+00> : vector<128x128xf32>
      %191 = tpu.matmul %189, %190, %cst_133 {dimension_numbers = #tpu.dot_dimension_numbers<[1], [0], [0], [1], [0, 0, 1, 1], [], []>} : vector<128x16xbf16>, vector<16x128xbf16>, vector<128x128xf32> -> vector<128x128xf32>
      %192 = arith.truncf %191 : vector<128x128xf32> to vector<128x128xbf16>
      %c0_134 = arith.constant 0 : index
      %c0_135 = arith.constant 0 : index
      %c0_136 = arith.constant 0 : index
      %193 = vector.load %arg11[%c0_134, %c0_135, %c0_136] : memref<8x128x128xbf16, #tpu.memory_space<vmem>>, vector<1x128x128xbf16>
      %194 = vector.shape_cast %193 : vector<1x128x128xbf16> to vector<128x128xbf16>
      %195 = vector.shape_cast %192 : vector<128x128xbf16> to vector<1x128x128xbf16>
      tpu.vector_store %arg11[%c0_134, %c0_135, %c0_136], %195 {strides = array<i32>} : memref<8x128x128xbf16, #tpu.memory_space<vmem>>, vector<1x128x128xbf16>,
      %196 = vector.extract_strided_slice %187 {offsets = [0, 16], sizes = [128, 16], strides = [1, 1]} : vector<128x128xf32> to vector<128x16xf32>
      %197 = arith.truncf %196 : vector<128x16xf32> to vector<128x16xbf16>
      %c16_137 = arith.constant 16 : index
      %c0_138 = arith.constant 0 : index
      %198 = vector.load %arg6[%c16_137, %c0_138] : memref<128x128xbf16, #tpu.memory_space<vmem>>, vector<16x128xbf16>
      %cst_139 = arith.constant dense<0.000000e+00> : vector<128x128xf32>
      %199 = tpu.matmul %197, %198, %cst_139 {dimension_numbers = #tpu.dot_dimension_numbers<[1], [0], [0], [1], [0, 0, 1, 1], [], []>} : vector<128x16xbf16>, vector<16x128xbf16>, vector<128x128xf32> -> vector<128x128xf32>
      %200 = arith.truncf %199 : vector<128x128xf32> to vector<128x128xbf16>
      %c1_140 = arith.constant 1 : index
      %c0_141 = arith.constant 0 : index
      %c0_142 = arith.constant 0 : index
      %201 = vector.load %arg11[%c1_140, %c0_141, %c0_142] : memref<8x128x128xbf16, #tpu.memory_space<vmem>>, vector<1x128x128xbf16>
      %202 = vector.shape_cast %201 : vector<1x128x128xbf16> to vector<128x128xbf16>
      %203 = vector.shape_cast %200 : vector<128x128xbf16> to vector<1x128x128xbf16>
      tpu.vector_store %arg11[%c1_140, %c0_141, %c0_142], %203 {strides = array<i32>} : memref<8x128x128xbf16, #tpu.memory_space<vmem>>, vector<1x128x128xbf16>,
      %204 = vector.extract_strided_slice %187 {offsets = [0, 32], sizes = [128, 16], strides = [1, 1]} : vector<128x128xf32> to vector<128x16xf32>
      %205 = arith.truncf %204 : vector<128x16xf32> to vector<128x16xbf16>
      %c32_143 = arith.constant 32 : index
      %c0_144 = arith.constant 0 : index
      %206 = vector.load %arg6[%c32_143, %c0_144] : memref<128x128xbf16, #tpu.memory_space<vmem>>, vector<16x128xbf16>
      %cst_145 = arith.constant dense<0.000000e+00> : vector<128x128xf32>
      %207 = tpu.matmul %205, %206, %cst_145 {dimension_numbers = #tpu.dot_dimension_numbers<[1], [0], [0], [1], [0, 0, 1, 1], [], []>} : vector<128x16xbf16>, vector<16x128xbf16>, vector<128x128xf32> -> vector<128x128xf32>
      %208 = arith.truncf %207 : vector<128x128xf32> to vector<128x128xbf16>
      %c2_146 = arith.constant 2 : index
      %c0_147 = arith.constant 0 : index
      %c0_148 = arith.constant 0 : index
      %209 = vector.load %arg11[%c2_146, %c0_147, %c0_148] : memref<8x128x128xbf16, #tpu.memory_space<vmem>>, vector<1x128x128xbf16>
      %210 = vector.shape_cast %209 : vector<1x128x128xbf16> to vector<128x128xbf16>
      %211 = vector.shape_cast %208 : vector<128x128xbf16> to vector<1x128x128xbf16>
      tpu.vector_store %arg11[%c2_146, %c0_147, %c0_148], %211 {strides = array<i32>} : memref<8x128x128xbf16, #tpu.memory_space<vmem>>, vector<1x128x128xbf16>,
      %212 = vector.extract_strided_slice %187 {offsets = [0, 48], sizes = [128, 16], strides = [1, 1]} : vector<128x128xf32> to vector<128x16xf32>
      %213 = arith.truncf %212 : vector<128x16xf32> to vector<128x16xbf16>
      %c48_149 = arith.constant 48 : index
      %c0_150 = arith.constant 0 : index
      %214 = vector.load %arg6[%c48_149, %c0_150] : memref<128x128xbf16, #tpu.memory_space<vmem>>, vector<16x128xbf16>
      %cst_151 = arith.constant dense<0.000000e+00> : vector<128x128xf32>
      %215 = tpu.matmul %213, %214, %cst_151 {dimension_numbers = #tpu.dot_dimension_numbers<[1], [0], [0], [1], [0, 0, 1, 1], [], []>} : vector<128x16xbf16>, vector<16x128xbf16>, vector<128x128xf32> -> vector<128x128xf32>
      %216 = arith.truncf %215 : vector<128x128xf32> to vector<128x128xbf16>
      %c3_152 = arith.constant 3 : index
      %c0_153 = arith.constant 0 : index
      %c0_154 = arith.constant 0 : index
      %217 = vector.load %arg11[%c3_152, %c0_153, %c0_154] : memref<8x128x128xbf16, #tpu.memory_space<vmem>>, vector<1x128x128xbf16>
      %218 = vector.shape_cast %217 : vector<1x128x128xbf16> to vector<128x128xbf16>
      %219 = vector.shape_cast %216 : vector<128x128xbf16> to vector<1x128x128xbf16>
      tpu.vector_store %arg11[%c3_152, %c0_153, %c0_154], %219 {strides = array<i32>} : memref<8x128x128xbf16, #tpu.memory_space<vmem>>, vector<1x128x128xbf16>,
      %220 = vector.extract_strided_slice %187 {offsets = [0, 64], sizes = [128, 16], strides = [1, 1]} : vector<128x128xf32> to vector<128x16xf32>
      %221 = arith.truncf %220 : vector<128x16xf32> to vector<128x16xbf16>
      %c64_155 = arith.constant 64 : index
      %c0_156 = arith.constant 0 : index
      %222 = vector.load %arg6[%c64_155, %c0_156] : memref<128x128xbf16, #tpu.memory_space<vmem>>, vector<16x128xbf16>
      %cst_157 = arith.constant dense<0.000000e+00> : vector<128x128xf32>
      %223 = tpu.matmul %221, %222, %cst_157 {dimension_numbers = #tpu.dot_dimension_numbers<[1], [0], [0], [1], [0, 0, 1, 1], [], []>} : vector<128x16xbf16>, vector<16x128xbf16>, vector<128x128xf32> -> vector<128x128xf32>
      %224 = arith.truncf %223 : vector<128x128xf32> to vector<128x128xbf16>
      %c4_158 = arith.constant 4 : index
      %c0_159 = arith.constant 0 : index
      %c0_160 = arith.constant 0 : index
      %225 = vector.load %arg11[%c4_158, %c0_159, %c0_160] : memref<8x128x128xbf16, #tpu.memory_space<vmem>>, vector<1x128x128xbf16>
      %226 = vector.shape_cast %225 : vector<1x128x128xbf16> to vector<128x128xbf16>
      %227 = vector.shape_cast %224 : vector<128x128xbf16> to vector<1x128x128xbf16>
      tpu.vector_store %arg11[%c4_158, %c0_159, %c0_160], %227 {strides = array<i32>} : memref<8x128x128xbf16, #tpu.memory_space<vmem>>, vector<1x128x128xbf16>,
      %228 = vector.extract_strided_slice %187 {offsets = [0, 80], sizes = [128, 16], strides = [1, 1]} : vector<128x128xf32> to vector<128x16xf32>
      %229 = arith.truncf %228 : vector<128x16xf32> to vector<128x16xbf16>
      %c80_161 = arith.constant 80 : index
      %c0_162 = arith.constant 0 : index
      %230 = vector.load %arg6[%c80_161, %c0_162] : memref<128x128xbf16, #tpu.memory_space<vmem>>, vector<16x128xbf16>
      %cst_163 = arith.constant dense<0.000000e+00> : vector<128x128xf32>
      %231 = tpu.matmul %229, %230, %cst_163 {dimension_numbers = #tpu.dot_dimension_numbers<[1], [0], [0], [1], [0, 0, 1, 1], [], []>} : vector<128x16xbf16>, vector<16x128xbf16>, vector<128x128xf32> -> vector<128x128xf32>
      %232 = arith.truncf %231 : vector<128x128xf32> to vector<128x128xbf16>
      %c5_164 = arith.constant 5 : index
      %c0_165 = arith.constant 0 : index
      %c0_166 = arith.constant 0 : index
      %233 = vector.load %arg11[%c5_164, %c0_165, %c0_166] : memref<8x128x128xbf16, #tpu.memory_space<vmem>>, vector<1x128x128xbf16>
      %234 = vector.shape_cast %233 : vector<1x128x128xbf16> to vector<128x128xbf16>
      %235 = vector.shape_cast %232 : vector<128x128xbf16> to vector<1x128x128xbf16>
      tpu.vector_store %arg11[%c5_164, %c0_165, %c0_166], %235 {strides = array<i32>} : memref<8x128x128xbf16, #tpu.memory_space<vmem>>, vector<1x128x128xbf16>,
      %236 = vector.extract_strided_slice %187 {offsets = [0, 96], sizes = [128, 16], strides = [1, 1]} : vector<128x128xf32> to vector<128x16xf32>
      %237 = arith.truncf %236 : vector<128x16xf32> to vector<128x16xbf16>
      %c96_167 = arith.constant 96 : index
      %c0_168 = arith.constant 0 : index
      %238 = vector.load %arg6[%c96_167, %c0_168] : memref<128x128xbf16, #tpu.memory_space<vmem>>, vector<16x128xbf16>
      %cst_169 = arith.constant dense<0.000000e+00> : vector<128x128xf32>
      %239 = tpu.matmul %237, %238, %cst_169 {dimension_numbers = #tpu.dot_dimension_numbers<[1], [0], [0], [1], [0, 0, 1, 1], [], []>} : vector<128x16xbf16>, vector<16x128xbf16>, vector<128x128xf32> -> vector<128x128xf32>
      %240 = arith.truncf %239 : vector<128x128xf32> to vector<128x128xbf16>
      %c6_170 = arith.constant 6 : index
      %c0_171 = arith.constant 0 : index
      %c0_172 = arith.constant 0 : index
      %241 = vector.load %arg11[%c6_170, %c0_171, %c0_172] : memref<8x128x128xbf16, #tpu.memory_space<vmem>>, vector<1x128x128xbf16>
      %242 = vector.shape_cast %241 : vector<1x128x128xbf16> to vector<128x128xbf16>
      %243 = vector.shape_cast %240 : vector<128x128xbf16> to vector<1x128x128xbf16>
      tpu.vector_store %arg11[%c6_170, %c0_171, %c0_172], %243 {strides = array<i32>} : memref<8x128x128xbf16, #tpu.memory_space<vmem>>, vector<1x128x128xbf16>,
      %244 = vector.extract_strided_slice %187 {offsets = [0, 112], sizes = [128, 16], strides = [1, 1]} : vector<128x128xf32> to vector<128x16xf32>
      %245 = arith.truncf %244 : vector<128x16xf32> to vector<128x16xbf16>
      %c112_173 = arith.constant 112 : index
      %c0_174 = arith.constant 0 : index
      %246 = vector.load %arg6[%c112_173, %c0_174] : memref<128x128xbf16, #tpu.memory_space<vmem>>, vector<16x128xbf16>
      %cst_175 = arith.constant dense<0.000000e+00> : vector<128x128xf32>
      %247 = tpu.matmul %245, %246, %cst_175 {dimension_numbers = #tpu.dot_dimension_numbers<[1], [0], [0], [1], [0, 0, 1, 1], [], []>} : vector<128x16xbf16>, vector<16x128xbf16>, vector<128x128xf32> -> vector<128x128xf32>
      %248 = arith.truncf %247 : vector<128x128xf32> to vector<128x128xbf16>
      %c7_176 = arith.constant 7 : index
      %c0_177 = arith.constant 0 : index
      %c0_178 = arith.constant 0 : index
      %249 = vector.load %arg11[%c7_176, %c0_177, %c0_178] : memref<8x128x128xbf16, #tpu.memory_space<vmem>>, vector<1x128x128xbf16>
      %250 = vector.shape_cast %249 : vector<1x128x128xbf16> to vector<128x128xbf16>
      %251 = vector.shape_cast %248 : vector<128x128xbf16> to vector<1x128x128xbf16>
      tpu.vector_store %arg11[%c7_176, %c0_177, %c0_178], %251 {strides = array<i32>} : memref<8x128x128xbf16, #tpu.memory_space<vmem>>, vector<1x128x128xbf16>,
    } else {
    }
    %c0 = arith.constant 0 : index
    %c0_1 = arith.constant 0 : index
    %c0_2 = arith.constant 0 : index
    %3 = vector.load %arg2[%c0, %c0_1, %c0_2] : memref<1x256x128xf32, #tpu.memory_space<vmem>>, vector<1x256x128xf32>
    %4 = vector.shape_cast %3 : vector<1x256x128xf32> to vector<256x128xf32>
    %5 = arith.truncf %4 : vector<256x128xf32> to vector<256x128xbf16>
    %c0_3 = arith.constant 0 : index
    %c0_4 = arith.constant 0 : index
    %6 = vector.load %arg4[%c0_3, %c0_4] : memref<128x128xbf16, #tpu.memory_space<vmem>>, vector<128x128xbf16>
    %cst = arith.constant dense<0.000000e+00> : vector<256x128xf32>
    %7 = tpu.matmul %5, %6, %cst {dimension_numbers = #tpu.dot_dimension_numbers<[1], [0], [0], [1], [0, 0, 1, 1], [], []>} : vector<256x128xbf16>, vector<128x128xbf16>, vector<256x128xf32> -> vector<256x128xf32>
    %8 = arith.truncf %7 : vector<256x128xf32> to vector<256x128xbf16>
    %c0_5 = arith.constant 0 : index
    %c0_6 = arith.constant 0 : index
    %9 = vector.load %arg9[%c0_5, %c0_6] : memref<256x128xbf16, #tpu.memory_space<vmem>>, vector<256x128xbf16>
    tpu.vector_store %arg9[%c0_5, %c0_6], %8 {strides = array<i32>} : memref<256x128xbf16, #tpu.memory_space<vmem>>, vector<256x128xbf16>,
    %cst_7 = arith.constant 0.000000e+00 : f32
    %10 = vector.broadcast %cst_7 : f32 to vector<256x128xf32>
    %c0_8 = arith.constant 0 : index
    %c0_9 = arith.constant 0 : index
    %11 = vector.load %arg12[%c0_8, %c0_9] : memref<256x128xf32, #tpu.memory_space<vmem>>, vector<256x128xf32>
    tpu.vector_store %arg12[%c0_8, %c0_9], %10 {strides = array<i32>} : memref<256x128xf32, #tpu.memory_space<vmem>>, vector<256x128xf32>,
    %c0_10 = arith.constant 0 : index
    %c0_11 = arith.constant 0 : index
    %12 = vector.load %arg9[%c0_10, %c0_11] : memref<256x128xbf16, #tpu.memory_space<vmem>>, vector<256x16xbf16>
    %c0_12 = arith.constant 0 : index
    %c0_13 = arith.constant 0 : index
    %13 = vector.load %arg10[%c0_12, %c0_13] : memref<128x128xbf16, #tpu.memory_space<vmem>>, vector<128x16xbf16>
    %cst_14 = arith.constant dense<0.000000e+00> : vector<256x128xf32>
    %14 = tpu.matmul %12, %13, %cst_14 {dimension_numbers = #tpu.dot_dimension_numbers<[1], [1], [0], [0], [0, 0, 1, 0], [], []>} : vector<256x16xbf16>, vector<128x16xbf16>, vector<256x128xf32> -> vector<256x128xf32>
    %cst_15 = arith.constant dense<0xFF800000> : vector<256xf32>
    %15 = vector.multi_reduction <maximumf>, %14, %cst_15 [1] : vector<256x128xf32> to vector<256xf32>
    %16 = vector.shape_cast %15 : vector<256xf32> to vector<256x1xf32>
    %17 = vector.broadcast %16 : vector<256x1xf32> to vector<256x128xf32>
    %18 = arith.subf %14, %17 : vector<256x128xf32>
    %19 = math.exp %18 : vector<256x128xf32>
    %cst_16 = arith.constant dense<0.000000e+00> : vector<256xf32>
    %20 = vector.multi_reduction <add>, %19, %cst_16 [1] : vector<256x128xf32> to vector<256xf32>
    %21 = vector.shape_cast %20 : vector<256xf32> to vector<256x1xf32>
    %22 = tpu.reciprocal %21 {approx = true} : vector<256x1xf32> -> vector<256x1xf32>
    %23 = vector.broadcast %22 : vector<256x1xf32> to vector<256x128xf32>
    %24 = arith.mulf %19, %23 : vector<256x128xf32>
    %c0_17 = arith.constant 0 : index
    %c0_18 = arith.constant 0 : index
    %25 = vector.load %arg12[%c0_17, %c0_18] : memref<256x128xf32, #tpu.memory_space<vmem>>, vector<256x128xf32>
    %26 = arith.truncf %24 : vector<256x128xf32> to vector<256x128xbf16>
    %c0_19 = arith.constant 0 : index
    %c0_20 = arith.constant 0 : index
    %c0_21 = arith.constant 0 : index
    %27 = vector.load %arg11[%c0_19, %c0_20, %c0_21] : memref<8x128x128xbf16, #tpu.memory_space<vmem>>, vector<1x128x128xbf16>
    %28 = vector.shape_cast %27 : vector<1x128x128xbf16> to vector<128x128xbf16>
    %cst_22 = arith.constant dense<0.000000e+00> : vector<256x128xf32>
    %29 = tpu.matmul %26, %28, %cst_22 {dimension_numbers = #tpu.dot_dimension_numbers<[1], [0], [0], [1], [0, 0, 1, 1], [], []>} : vector<256x128xbf16>, vector<128x128xbf16>, vector<256x128xf32> -> vector<256x128xf32>
    %30 = arith.addf %25, %29 : vector<256x128xf32>
    %c0_23 = arith.constant 0 : index
    %c0_24 = arith.constant 0 : index
    %31 = vector.load %arg12[%c0_23, %c0_24] : memref<256x128xf32, #tpu.memory_space<vmem>>, vector<256x128xf32>
    tpu.vector_store %arg12[%c0_23, %c0_24], %30 {strides = array<i32>} : memref<256x128xf32, #tpu.memory_space<vmem>>, vector<256x128xf32>,
    %c0_25 = arith.constant 0 : index
    %c16 = arith.constant 16 : index
    %32 = vector.load %arg9[%c0_25, %c16] : memref<256x128xbf16, #tpu.memory_space<vmem>>, vector<256x16xbf16>
    %c0_26 = arith.constant 0 : index
    %c16_27 = arith.constant 16 : index
    %33 = vector.load %arg10[%c0_26, %c16_27] : memref<128x128xbf16, #tpu.memory_space<vmem>>, vector<128x16xbf16>
    %cst_28 = arith.constant dense<0.000000e+00> : vector<256x128xf32>
    %34 = tpu.matmul %32, %33, %cst_28 {dimension_numbers = #tpu.dot_dimension_numbers<[1], [1], [0], [0], [0, 0, 1, 0], [], []>} : vector<256x16xbf16>, vector<128x16xbf16>, vector<256x128xf32> -> vector<256x128xf32>
    %cst_29 = arith.constant dense<0xFF800000> : vector<256xf32>
    %35 = vector.multi_reduction <maximumf>, %34, %cst_29 [1] : vector<256x128xf32> to vector<256xf32>
    %36 = vector.shape_cast %35 : vector<256xf32> to vector<256x1xf32>
    %37 = vector.broadcast %36 : vector<256x1xf32> to vector<256x128xf32>
    %38 = arith.subf %34, %37 : vector<256x128xf32>
    %39 = math.exp %38 : vector<256x128xf32>
    %cst_30 = arith.constant dense<0.000000e+00> : vector<256xf32>
    %40 = vector.multi_reduction <add>, %39, %cst_30 [1] : vector<256x128xf32> to vector<256xf32>
    %41 = vector.shape_cast %40 : vector<256xf32> to vector<256x1xf32>
    %42 = tpu.reciprocal %41 {approx = true} : vector<256x1xf32> -> vector<256x1xf32>
    %43 = vector.broadcast %42 : vector<256x1xf32> to vector<256x128xf32>
    %44 = arith.mulf %39, %43 : vector<256x128xf32>
    %c0_31 = arith.constant 0 : index
    %c0_32 = arith.constant 0 : index
    %45 = vector.load %arg12[%c0_31, %c0_32] : memref<256x128xf32, #tpu.memory_space<vmem>>, vector<256x128xf32>
    %46 = arith.truncf %44 : vector<256x128xf32> to vector<256x128xbf16>
    %c1 = arith.constant 1 : index
    %c0_33 = arith.constant 0 : index
    %c0_34 = arith.constant 0 : index
    %47 = vector.load %arg11[%c1, %c0_33, %c0_34] : memref<8x128x128xbf16, #tpu.memory_space<vmem>>, vector<1x128x128xbf16>
    %48 = vector.shape_cast %47 : vector<1x128x128xbf16> to vector<128x128xbf16>
    %cst_35 = arith.constant dense<0.000000e+00> : vector<256x128xf32>
    %49 = tpu.matmul %46, %48, %cst_35 {dimension_numbers = #tpu.dot_dimension_numbers<[1], [0], [0], [1], [0, 0, 1, 1], [], []>} : vector<256x128xbf16>, vector<128x128xbf16>, vector<256x128xf32> -> vector<256x128xf32>
    %50 = arith.addf %45, %49 : vector<256x128xf32>
    %c0_36 = arith.constant 0 : index
    %c0_37 = arith.constant 0 : index
    %51 = vector.load %arg12[%c0_36, %c0_37] : memref<256x128xf32, #tpu.memory_space<vmem>>, vector<256x128xf32>
    tpu.vector_store %arg12[%c0_36, %c0_37], %50 {strides = array<i32>} : memref<256x128xf32, #tpu.memory_space<vmem>>, vector<256x128xf32>,
    %c0_38 = arith.constant 0 : index
    %c32 = arith.constant 32 : index
    %52 = vector.load %arg9[%c0_38, %c32] : memref<256x128xbf16, #tpu.memory_space<vmem>>, vector<256x16xbf16>
    %c0_39 = arith.constant 0 : index
    %c32_40 = arith.constant 32 : index
    %53 = vector.load %arg10[%c0_39, %c32_40] : memref<128x128xbf16, #tpu.memory_space<vmem>>, vector<128x16xbf16>
    %cst_41 = arith.constant dense<0.000000e+00> : vector<256x128xf32>
    %54 = tpu.matmul %52, %53, %cst_41 {dimension_numbers = #tpu.dot_dimension_numbers<[1], [1], [0], [0], [0, 0, 1, 0], [], []>} : vector<256x16xbf16>, vector<128x16xbf16>, vector<256x128xf32> -> vector<256x128xf32>
    %cst_42 = arith.constant dense<0xFF800000> : vector<256xf32>
    %55 = vector.multi_reduction <maximumf>, %54, %cst_42 [1] : vector<256x128xf32> to vector<256xf32>
    %56 = vector.shape_cast %55 : vector<256xf32> to vector<256x1xf32>
    %57 = vector.broadcast %56 : vector<256x1xf32> to vector<256x128xf32>
    %58 = arith.subf %54, %57 : vector<256x128xf32>
    %59 = math.exp %58 : vector<256x128xf32>
    %cst_43 = arith.constant dense<0.000000e+00> : vector<256xf32>
    %60 = vector.multi_reduction <add>, %59, %cst_43 [1] : vector<256x128xf32> to vector<256xf32>
    %61 = vector.shape_cast %60 : vector<256xf32> to vector<256x1xf32>
    %62 = tpu.reciprocal %61 {approx = true} : vector<256x1xf32> -> vector<256x1xf32>
    %63 = vector.broadcast %62 : vector<256x1xf32> to vector<256x128xf32>
    %64 = arith.mulf %59, %63 : vector<256x128xf32>
    %c0_44 = arith.constant 0 : index
    %c0_45 = arith.constant 0 : index
    %65 = vector.load %arg12[%c0_44, %c0_45] : memref<256x128xf32, #tpu.memory_space<vmem>>, vector<256x128xf32>
    %66 = arith.truncf %64 : vector<256x128xf32> to vector<256x128xbf16>
    %c2 = arith.constant 2 : index
    %c0_46 = arith.constant 0 : index
    %c0_47 = arith.constant 0 : index
    %67 = vector.load %arg11[%c2, %c0_46, %c0_47] : memref<8x128x128xbf16, #tpu.memory_space<vmem>>, vector<1x128x128xbf16>
    %68 = vector.shape_cast %67 : vector<1x128x128xbf16> to vector<128x128xbf16>
    %cst_48 = arith.constant dense<0.000000e+00> : vector<256x128xf32>
    %69 = tpu.matmul %66, %68, %cst_48 {dimension_numbers = #tpu.dot_dimension_numbers<[1], [0], [0], [1], [0, 0, 1, 1], [], []>} : vector<256x128xbf16>, vector<128x128xbf16>, vector<256x128xf32> -> vector<256x128xf32>
    %70 = arith.addf %65, %69 : vector<256x128xf32>
    %c0_49 = arith.constant 0 : index
    %c0_50 = arith.constant 0 : index
    %71 = vector.load %arg12[%c0_49, %c0_50] : memref<256x128xf32, #tpu.memory_space<vmem>>, vector<256x128xf32>
    tpu.vector_store %arg12[%c0_49, %c0_50], %70 {strides = array<i32>} : memref<256x128xf32, #tpu.memory_space<vmem>>, vector<256x128xf32>,
    %c0_51 = arith.constant 0 : index
    %c48 = arith.constant 48 : index
    %72 = vector.load %arg9[%c0_51, %c48] : memref<256x128xbf16, #tpu.memory_space<vmem>>, vector<256x16xbf16>
    %c0_52 = arith.constant 0 : index
    %c48_53 = arith.constant 48 : index
    %73 = vector.load %arg10[%c0_52, %c48_53] : memref<128x128xbf16, #tpu.memory_space<vmem>>, vector<128x16xbf16>
    %cst_54 = arith.constant dense<0.000000e+00> : vector<256x128xf32>
    %74 = tpu.matmul %72, %73, %cst_54 {dimension_numbers = #tpu.dot_dimension_numbers<[1], [1], [0], [0], [0, 0, 1, 0], [], []>} : vector<256x16xbf16>, vector<128x16xbf16>, vector<256x128xf32> -> vector<256x128xf32>
    %cst_55 = arith.constant dense<0xFF800000> : vector<256xf32>
    %75 = vector.multi_reduction <maximumf>, %74, %cst_55 [1] : vector<256x128xf32> to vector<256xf32>
    %76 = vector.shape_cast %75 : vector<256xf32> to vector<256x1xf32>
    %77 = vector.broadcast %76 : vector<256x1xf32> to vector<256x128xf32>
    %78 = arith.subf %74, %77 : vector<256x128xf32>
    %79 = math.exp %78 : vector<256x128xf32>
    %cst_56 = arith.constant dense<0.000000e+00> : vector<256xf32>
    %80 = vector.multi_reduction <add>, %79, %cst_56 [1] : vector<256x128xf32> to vector<256xf32>
    %81 = vector.shape_cast %80 : vector<256xf32> to vector<256x1xf32>
    %82 = tpu.reciprocal %81 {approx = true} : vector<256x1xf32> -> vector<256x1xf32>
    %83 = vector.broadcast %82 : vector<256x1xf32> to vector<256x128xf32>
    %84 = arith.mulf %79, %83 : vector<256x128xf32>
    %c0_57 = arith.constant 0 : index
    %c0_58 = arith.constant 0 : index
    %85 = vector.load %arg12[%c0_57, %c0_58] : memref<256x128xf32, #tpu.memory_space<vmem>>, vector<256x128xf32>
    %86 = arith.truncf %84 : vector<256x128xf32> to vector<256x128xbf16>
    %c3 = arith.constant 3 : index
    %c0_59 = arith.constant 0 : index
    %c0_60 = arith.constant 0 : index
    %87 = vector.load %arg11[%c3, %c0_59, %c0_60] : memref<8x128x128xbf16, #tpu.memory_space<vmem>>, vector<1x128x128xbf16>
    %88 = vector.shape_cast %87 : vector<1x128x128xbf16> to vector<128x128xbf16>
    %cst_61 = arith.constant dense<0.000000e+00> : vector<256x128xf32>
    %89 = tpu.matmul %86, %88, %cst_61 {dimension_numbers = #tpu.dot_dimension_numbers<[1], [0], [0], [1], [0, 0, 1, 1], [], []>} : vector<256x128xbf16>, vector<128x128xbf16>, vector<256x128xf32> -> vector<256x128xf32>
    %90 = arith.addf %85, %89 : vector<256x128xf32>
    %c0_62 = arith.constant 0 : index
    %c0_63 = arith.constant 0 : index
    %91 = vector.load %arg12[%c0_62, %c0_63] : memref<256x128xf32, #tpu.memory_space<vmem>>, vector<256x128xf32>
    tpu.vector_store %arg12[%c0_62, %c0_63], %90 {strides = array<i32>} : memref<256x128xf32, #tpu.memory_space<vmem>>, vector<256x128xf32>,
    %c0_64 = arith.constant 0 : index
    %c64 = arith.constant 64 : index
    %92 = vector.load %arg9[%c0_64, %c64] : memref<256x128xbf16, #tpu.memory_space<vmem>>, vector<256x16xbf16>
    %c0_65 = arith.constant 0 : index
    %c64_66 = arith.constant 64 : index
    %93 = vector.load %arg10[%c0_65, %c64_66] : memref<128x128xbf16, #tpu.memory_space<vmem>>, vector<128x16xbf16>
    %cst_67 = arith.constant dense<0.000000e+00> : vector<256x128xf32>
    %94 = tpu.matmul %92, %93, %cst_67 {dimension_numbers = #tpu.dot_dimension_numbers<[1], [1], [0], [0], [0, 0, 1, 0], [], []>} : vector<256x16xbf16>, vector<128x16xbf16>, vector<256x128xf32> -> vector<256x128xf32>
    %cst_68 = arith.constant dense<0xFF800000> : vector<256xf32>
    %95 = vector.multi_reduction <maximumf>, %94, %cst_68 [1] : vector<256x128xf32> to vector<256xf32>
    %96 = vector.shape_cast %95 : vector<256xf32> to vector<256x1xf32>
    %97 = vector.broadcast %96 : vector<256x1xf32> to vector<256x128xf32>
    %98 = arith.subf %94, %97 : vector<256x128xf32>
    %99 = math.exp %98 : vector<256x128xf32>
    %cst_69 = arith.constant dense<0.000000e+00> : vector<256xf32>
    %100 = vector.multi_reduction <add>, %99, %cst_69 [1] : vector<256x128xf32> to vector<256xf32>
    %101 = vector.shape_cast %100 : vector<256xf32> to vector<256x1xf32>
    %102 = tpu.reciprocal %101 {approx = true} : vector<256x1xf32> -> vector<256x1xf32>
    %103 = vector.broadcast %102 : vector<256x1xf32> to vector<256x128xf32>
    %104 = arith.mulf %99, %103 : vector<256x128xf32>
    %c0_70 = arith.constant 0 : index
    %c0_71 = arith.constant 0 : index
    %105 = vector.load %arg12[%c0_70, %c0_71] : memref<256x128xf32, #tpu.memory_space<vmem>>, vector<256x128xf32>
    %106 = arith.truncf %104 : vector<256x128xf32> to vector<256x128xbf16>
    %c4 = arith.constant 4 : index
    %c0_72 = arith.constant 0 : index
    %c0_73 = arith.constant 0 : index
    %107 = vector.load %arg11[%c4, %c0_72, %c0_73] : memref<8x128x128xbf16, #tpu.memory_space<vmem>>, vector<1x128x128xbf16>
    %108 = vector.shape_cast %107 : vector<1x128x128xbf16> to vector<128x128xbf16>
    %cst_74 = arith.constant dense<0.000000e+00> : vector<256x128xf32>
    %109 = tpu.matmul %106, %108, %cst_74 {dimension_numbers = #tpu.dot_dimension_numbers<[1], [0], [0], [1], [0, 0, 1, 1], [], []>} : vector<256x128xbf16>, vector<128x128xbf16>, vector<256x128xf32> -> vector<256x128xf32>
    %110 = arith.addf %105, %109 : vector<256x128xf32>
    %c0_75 = arith.constant 0 : index
    %c0_76 = arith.constant 0 : index
    %111 = vector.load %arg12[%c0_75, %c0_76] : memref<256x128xf32, #tpu.memory_space<vmem>>, vector<256x128xf32>
    tpu.vector_store %arg12[%c0_75, %c0_76], %110 {strides = array<i32>} : memref<256x128xf32, #tpu.memory_space<vmem>>, vector<256x128xf32>,
    %c0_77 = arith.constant 0 : index
    %c80 = arith.constant 80 : index
    %112 = vector.load %arg9[%c0_77, %c80] : memref<256x128xbf16, #tpu.memory_space<vmem>>, vector<256x16xbf16>
    %c0_78 = arith.constant 0 : index
    %c80_79 = arith.constant 80 : index
    %113 = vector.load %arg10[%c0_78, %c80_79] : memref<128x128xbf16, #tpu.memory_space<vmem>>, vector<128x16xbf16>
    %cst_80 = arith.constant dense<0.000000e+00> : vector<256x128xf32>
    %114 = tpu.matmul %112, %113, %cst_80 {dimension_numbers = #tpu.dot_dimension_numbers<[1], [1], [0], [0], [0, 0, 1, 0], [], []>} : vector<256x16xbf16>, vector<128x16xbf16>, vector<256x128xf32> -> vector<256x128xf32>
    %cst_81 = arith.constant dense<0xFF800000> : vector<256xf32>
    %115 = vector.multi_reduction <maximumf>, %114, %cst_81 [1] : vector<256x128xf32> to vector<256xf32>
    %116 = vector.shape_cast %115 : vector<256xf32> to vector<256x1xf32>
    %117 = vector.broadcast %116 : vector<256x1xf32> to vector<256x128xf32>
    %118 = arith.subf %114, %117 : vector<256x128xf32>
    %119 = math.exp %118 : vector<256x128xf32>
    %cst_82 = arith.constant dense<0.000000e+00> : vector<256xf32>
    %120 = vector.multi_reduction <add>, %119, %cst_82 [1] : vector<256x128xf32> to vector<256xf32>
    %121 = vector.shape_cast %120 : vector<256xf32> to vector<256x1xf32>
    %122 = tpu.reciprocal %121 {approx = true} : vector<256x1xf32> -> vector<256x1xf32>
    %123 = vector.broadcast %122 : vector<256x1xf32> to vector<256x128xf32>
    %124 = arith.mulf %119, %123 : vector<256x128xf32>
    %c0_83 = arith.constant 0 : index
    %c0_84 = arith.constant 0 : index
    %125 = vector.load %arg12[%c0_83, %c0_84] : memref<256x128xf32, #tpu.memory_space<vmem>>, vector<256x128xf32>
    %126 = arith.truncf %124 : vector<256x128xf32> to vector<256x128xbf16>
    %c5 = arith.constant 5 : index
    %c0_85 = arith.constant 0 : index
    %c0_86 = arith.constant 0 : index
    %127 = vector.load %arg11[%c5, %c0_85, %c0_86] : memref<8x128x128xbf16, #tpu.memory_space<vmem>>, vector<1x128x128xbf16>
    %128 = vector.shape_cast %127 : vector<1x128x128xbf16> to vector<128x128xbf16>
    %cst_87 = arith.constant dense<0.000000e+00> : vector<256x128xf32>
    %129 = tpu.matmul %126, %128, %cst_87 {dimension_numbers = #tpu.dot_dimension_numbers<[1], [0], [0], [1], [0, 0, 1, 1], [], []>} : vector<256x128xbf16>, vector<128x128xbf16>, vector<256x128xf32> -> vector<256x128xf32>
    %130 = arith.addf %125, %129 : vector<256x128xf32>
    %c0_88 = arith.constant 0 : index
    %c0_89 = arith.constant 0 : index
    %131 = vector.load %arg12[%c0_88, %c0_89] : memref<256x128xf32, #tpu.memory_space<vmem>>, vector<256x128xf32>
    tpu.vector_store %arg12[%c0_88, %c0_89], %130 {strides = array<i32>} : memref<256x128xf32, #tpu.memory_space<vmem>>, vector<256x128xf32>,
    %c0_90 = arith.constant 0 : index
    %c96 = arith.constant 96 : index
    %132 = vector.load %arg9[%c0_90, %c96] : memref<256x128xbf16, #tpu.memory_space<vmem>>, vector<256x16xbf16>
    %c0_91 = arith.constant 0 : index
    %c96_92 = arith.constant 96 : index
    %133 = vector.load %arg10[%c0_91, %c96_92] : memref<128x128xbf16, #tpu.memory_space<vmem>>, vector<128x16xbf16>
    %cst_93 = arith.constant dense<0.000000e+00> : vector<256x128xf32>
    %134 = tpu.matmul %132, %133, %cst_93 {dimension_numbers = #tpu.dot_dimension_numbers<[1], [1], [0], [0], [0, 0, 1, 0], [], []>} : vector<256x16xbf16>, vector<128x16xbf16>, vector<256x128xf32> -> vector<256x128xf32>
    %cst_94 = arith.constant dense<0xFF800000> : vector<256xf32>
    %135 = vector.multi_reduction <maximumf>, %134, %cst_94 [1] : vector<256x128xf32> to vector<256xf32>
    %136 = vector.shape_cast %135 : vector<256xf32> to vector<256x1xf32>
    %137 = vector.broadcast %136 : vector<256x1xf32> to vector<256x128xf32>
    %138 = arith.subf %134, %137 : vector<256x128xf32>
    %139 = math.exp %138 : vector<256x128xf32>
    %cst_95 = arith.constant dense<0.000000e+00> : vector<256xf32>
    %140 = vector.multi_reduction <add>, %139, %cst_95 [1] : vector<256x128xf32> to vector<256xf32>
    %141 = vector.shape_cast %140 : vector<256xf32> to vector<256x1xf32>
    %142 = tpu.reciprocal %141 {approx = true} : vector<256x1xf32> -> vector<256x1xf32>
    %143 = vector.broadcast %142 : vector<256x1xf32> to vector<256x128xf32>
    %144 = arith.mulf %139, %143 : vector<256x128xf32>
    %c0_96 = arith.constant 0 : index
    %c0_97 = arith.constant 0 : index
    %145 = vector.load %arg12[%c0_96, %c0_97] : memref<256x128xf32, #tpu.memory_space<vmem>>, vector<256x128xf32>
    %146 = arith.truncf %144 : vector<256x128xf32> to vector<256x128xbf16>
    %c6 = arith.constant 6 : index
    %c0_98 = arith.constant 0 : index
    %c0_99 = arith.constant 0 : index
    %147 = vector.load %arg11[%c6, %c0_98, %c0_99] : memref<8x128x128xbf16, #tpu.memory_space<vmem>>, vector<1x128x128xbf16>
    %148 = vector.shape_cast %147 : vector<1x128x128xbf16> to vector<128x128xbf16>
    %cst_100 = arith.constant dense<0.000000e+00> : vector<256x128xf32>
    %149 = tpu.matmul %146, %148, %cst_100 {dimension_numbers = #tpu.dot_dimension_numbers<[1], [0], [0], [1], [0, 0, 1, 1], [], []>} : vector<256x128xbf16>, vector<128x128xbf16>, vector<256x128xf32> -> vector<256x128xf32>
    %150 = arith.addf %145, %149 : vector<256x128xf32>
    %c0_101 = arith.constant 0 : index
    %c0_102 = arith.constant 0 : index
    %151 = vector.load %arg12[%c0_101, %c0_102] : memref<256x128xf32, #tpu.memory_space<vmem>>, vector<256x128xf32>
    tpu.vector_store %arg12[%c0_101, %c0_102], %150 {strides = array<i32>} : memref<256x128xf32, #tpu.memory_space<vmem>>, vector<256x128xf32>,
    %c0_103 = arith.constant 0 : index
    %c112 = arith.constant 112 : index
    %152 = vector.load %arg9[%c0_103, %c112] : memref<256x128xbf16, #tpu.memory_space<vmem>>, vector<256x16xbf16>
    %c0_104 = arith.constant 0 : index
    %c112_105 = arith.constant 112 : index
    %153 = vector.load %arg10[%c0_104, %c112_105] : memref<128x128xbf16, #tpu.memory_space<vmem>>, vector<128x16xbf16>
    %cst_106 = arith.constant dense<0.000000e+00> : vector<256x128xf32>
    %154 = tpu.matmul %152, %153, %cst_106 {dimension_numbers = #tpu.dot_dimension_numbers<[1], [1], [0], [0], [0, 0, 1, 0], [], []>} : vector<256x16xbf16>, vector<128x16xbf16>, vector<256x128xf32> -> vector<256x128xf32>
    %cst_107 = arith.constant dense<0xFF800000> : vector<256xf32>
    %155 = vector.multi_reduction <maximumf>, %154, %cst_107 [1] : vector<256x128xf32> to vector<256xf32>
    %156 = vector.shape_cast %155 : vector<256xf32> to vector<256x1xf32>
    %157 = vector.broadcast %156 : vector<256x1xf32> to vector<256x128xf32>
    %158 = arith.subf %154, %157 : vector<256x128xf32>
    %159 = math.exp %158 : vector<256x128xf32>
    %cst_108 = arith.constant dense<0.000000e+00> : vector<256xf32>
    %160 = vector.multi_reduction <add>, %159, %cst_108 [1] : vector<256x128xf32> to vector<256xf32>
    %161 = vector.shape_cast %160 : vector<256xf32> to vector<256x1xf32>
    %162 = tpu.reciprocal %161 {approx = true} : vector<256x1xf32> -> vector<256x1xf32>
    %163 = vector.broadcast %162 : vector<256x1xf32> to vector<256x128xf32>
    %164 = arith.mulf %159, %163 : vector<256x128xf32>
    %c0_109 = arith.constant 0 : index
    %c0_110 = arith.constant 0 : index
    %165 = vector.load %arg12[%c0_109, %c0_110] : memref<256x128xf32, #tpu.memory_space<vmem>>, vector<256x128xf32>
    %166 = arith.truncf %164 : vector<256x128xf32> to vector<256x128xbf16>
    %c7 = arith.constant 7 : index
    %c0_111 = arith.constant 0 : index
    %c0_112 = arith.constant 0 : index
    %167 = vector.load %arg11[%c7, %c0_111, %c0_112] : memref<8x128x128xbf16, #tpu.memory_space<vmem>>, vector<1x128x128xbf16>
    %168 = vector.shape_cast %167 : vector<1x128x128xbf16> to vector<128x128xbf16>
    %cst_113 = arith.constant dense<0.000000e+00> : vector<256x128xf32>
    %169 = tpu.matmul %166, %168, %cst_113 {dimension_numbers = #tpu.dot_dimension_numbers<[1], [0], [0], [1], [0, 0, 1, 1], [], []>} : vector<256x128xbf16>, vector<128x128xbf16>, vector<256x128xf32> -> vector<256x128xf32>
    %170 = arith.addf %165, %169 : vector<256x128xf32>
    %c0_114 = arith.constant 0 : index
    %c0_115 = arith.constant 0 : index
    %171 = vector.load %arg12[%c0_114, %c0_115] : memref<256x128xf32, #tpu.memory_space<vmem>>, vector<256x128xf32>
    tpu.vector_store %arg12[%c0_114, %c0_115], %170 {strides = array<i32>} : memref<256x128xf32, #tpu.memory_space<vmem>>, vector<256x128xf32>,
    %c0_116 = arith.constant 0 : index
    %c0_117 = arith.constant 0 : index
    %172 = vector.load %arg12[%c0_116, %c0_117] : memref<256x128xf32, #tpu.memory_space<vmem>>, vector<256x128xf32>
    %c0_118 = arith.constant 0 : index
    %c0_119 = arith.constant 0 : index
    %173 = vector.load %arg7[%c0_118, %c0_119] : memref<1x128xf32, #tpu.memory_space<vmem>>, vector<1x128xf32>
    %174 = vector.broadcast %173 : vector<1x128xf32> to vector<256x128xf32>
    %175 = arith.addf %172, %174 : vector<256x128xf32>
    %c0_120 = arith.constant 0 : index
    %c0_121 = arith.constant 0 : index
    %c0_122 = arith.constant 0 : index
    %176 = vector.load %arg8[%c0_120, %c0_121, %c0_122] : memref<1x256x128xf32, #tpu.memory_space<vmem>>, vector<1x256x128xf32>
    %177 = vector.shape_cast %176 : vector<1x256x128xf32> to vector<256x128xf32>
    %178 = vector.shape_cast %175 : vector<256x128xf32> to vector<1x256x128xf32>
    tpu.vector_store %arg8[%c0_120, %c0_121, %c0_122], %178 {strides = array<i32>} : memref<1x256x128xf32, #tpu.memory_space<vmem>>, vector<1x256x128xf32>,
    return
  }
  func.func @transform_0(%arg0: i32, %arg1: i32) -> (i32, i32, i32) {
    %c0_i32 = arith.constant 0 : i32
    %c0_i32_0 = arith.constant 0 : i32
    return %arg0, %arg1, %c0_i32 : i32, i32, i32
  }
  func.func @transform_1(%arg0: i32, %arg1: i32) -> (i32, i32, i32) {
    %c0_i32 = arith.constant 0 : i32
    %c0_i32_0 = arith.constant 0 : i32
    %c0_i32_1 = arith.constant 0 : i32
    return %arg0, %c0_i32, %c0_i32_0 : i32, i32, i32
  }
  func.func @transform_2(%arg0: i32, %arg1: i32) -> (i32, i32) {
    %c0_i32 = arith.constant 0 : i32
    %c0_i32_0 = arith.constant 0 : i32
    %c0_i32_1 = arith.constant 0 : i32
    return %c0_i32, %c0_i32_0 : i32, i32
  }
  func.func @transform_3(%arg0: i32, %arg1: i32) -> (i32, i32) {
    %c0_i32 = arith.constant 0 : i32
    %c0_i32_0 = arith.constant 0 : i32
    %c0_i32_1 = arith.constant 0 : i32
    return %c0_i32, %c0_i32_0 : i32, i32
  }
  func.func @transform_4(%arg0: i32, %arg1: i32) -> (i32, i32) {
    %c0_i32 = arith.constant 0 : i32
    %c0_i32_0 = arith.constant 0 : i32
    %c0_i32_1 = arith.constant 0 : i32
    return %c0_i32, %c0_i32_0 : i32, i32
  }
  func.func @transform_5(%arg0: i32, %arg1: i32) -> (i32, i32) {
    %c0_i32 = arith.constant 0 : i32
    %c0_i32_0 = arith.constant 0 : i32
    %c0_i32_1 = arith.constant 0 : i32
    return %c0_i32, %c0_i32_0 : i32, i32
  }
  func.func @transform_6(%arg0: i32, %arg1: i32) -> (i32, i32, i32) {
    %c0_i32 = arith.constant 0 : i32
    %c0_i32_0 = arith.constant 0 : i32
    return %arg0, %arg1, %c0_i32 : i32, i32, i32
  }
}

</mosaic_0001>

<llo_original>
// kernel: tpu_custom_call.1
$region0: #{tpu_custom_call.1}
  #allocation0 [shape = 'u32[]', space=smem, size = 0x4, offset = 0x4, fixed_abs, tag = 'smem constant byte address 0x4 - core index']
  #allocation1 [shape = 'u32[144,128]{1,0:T(1,128)}', space=vmem, size = 0x12000, scoped, tag = 'internal scratch']
  #allocation2 [shape = 'bf16[256,128]{1,0:T(16,128)(2,1)}', space=vmem, size = 0x10000, scoped, tag = 'scratch operand']
  #allocation3 [shape = 'bf16[128,128]{1,0:T(16,128)(2,1)}', space=vmem, size = 0x8000, scoped, tag = 'scratch operand']
  #allocation4 [shape = 'bf16[8,128,128]{2,1,0:T(16,128)(2,1)}', space=vmem, size = 0x40000, scoped, tag = 'scratch operand']
  #allocation5 [shape = 'f32[256,128]{1,0:T(8,128)}', space=vmem, size = 0x20000, scoped, tag = 'scratch operand']
  %s0 = inlined_call_operand.hbm [shape: f32[2,256,128], index: 0, kind: input, shape index: {}]
  %s1 = inlined_call_operand.vmem [shape: f32[2,128,64], index: 1, kind: input, shape index: {}]
  %s2 = inlined_call_operand.vmem [shape: bf16[128,128], index: 2, kind: input, shape index: {}]
  %s3 = inlined_call_operand.vmem [shape: bf16[64,256], index: 3, kind: input, shape index: {}]
  %s4 = inlined_call_operand.vmem [shape: bf16[128,128], index: 4, kind: input, shape index: {}]
  %s5 = inlined_call_operand.vmem [shape: f32[1,128], index: 5, kind: input, shape index: {}]
  %s6 = inlined_call_operand.hbm [shape: f32[2,256,128], index: 6, kind: output, shape index: {}]
  %s7 = sld [smem:[#allocation0]]
  $region65: #{tpu_custom_call.1} parent=0
    _
  %s9 = ssub.s32 1, %s7
  %s10 = scalar_select 0, %s9, %s7
  $region1: #{tpu_custom_call.1} parent=0
    #allocation6 [shape = 'u8[262144]{0}', space=vmem, size = 0x40000, scoped, tag = 'input window, operand 0']
    #allocation7 [shape = 's32[2]{0}', space=sflag, size = 0x8, scoped, tag = 'scoped memory for tpu_custom_call.1']
    #allocation8 [shape = 's32[2]{0}', space=sflag, size = 0x8, scoped, tag = 'scoped memory for tpu_custom_call.1']
    #allocation9 [shape = 'u8[262144]{0}', space=vmem, size = 0x40000, scoped, tag = 'output window, operand 0']
    %11 = vsyncpa [#allocation7], 0
    %s12 = scalar_lea.sflag [#allocation7], 1
    %13 = vsyncpa %s12, 0
    %14 = vsyncpa [#allocation8], 0
    %s15 = scalar_lea.sflag [#allocation8], 1
    %16 = vsyncpa %s15, 0
    loop: start=0, step=1, limit=4
    $region2: #{tpu_custom_call.1} parent=1 // loop_pre_header
      _
    $region3: #{tpu_custom_call.1} parent=1 // loop_header
      %s18 = sphi 0, %s22
      %p19 = scmp.ge.s32.totalorder %s18, 4
      %s25 = sphi 0, %s37
      %s26 = sphi 0, %s33
      %s27 = sphi 0, %s25
      %s28 = sphi 0, %s26
      %s29 = sphi 0, %s27
      %s30 = sphi 0, %s28
      %s42 = sphi 0, %s44
      %s45 = sphi 0, %s42
      %s46 = sphi 0, %s45
      %s62 = sphi 0, %s46
      %s68 = sphi 0, %s70
      %s71 = sphi 0, %s68
      %s72 = sphi 0, %s71
      %s88 = sphi 0, %s72
      %s92 = sphi 0, %s92
      %s94 = sphi 0, %s92
      %s95 = sphi 0, %s94
      %s109 = sphi 0, %s95
      %s113 = sphi 0, %s113
      %s115 = sphi 0, %s113
      %s116 = sphi 0, %s115
      %s130 = sphi 0, %s116
      %s134 = sphi 0, %s134
      %s136 = sphi 0, %s134
      %s137 = sphi 0, %s136
      %s151 = sphi 0, %s137
      %s155 = sphi 0, %s155
      %s157 = sphi 0, %s155
      %s158 = sphi 0, %s157
      %s172 = sphi 0, %s158
      %s180 = sphi 0, %s182
      %s183 = sphi 0, %s180
      %s184 = sphi 0, %s183
      %s200 = sphi 0, %s184
    $region4: #{tpu_custom_call.1} parent=1 // loop_header_branch
      %21 = sbr.rel (%p19) target = $region8
    $region5: #{tpu_custom_call.1} parent=1 // loop_body
      %s23 = ssub.s32 %s18, 1
      %s24 = ssub.s32 %s18, 2
      %s31 = sadd.s32 1, %s26
      %p32 = scmp.ge.s32.totalorder %s31, 1
      %s33 = scalar_select %p32, 0, %s31
      %s34 = sadd.s32 1, %s25
      %s35 = scalar_select %p32, %s34, %s25
      %p36 = scmp.ge.s32.totalorder %s35, 2
      %s37 = scalar_select %p36, 0, %s35
      %s38 = ssub.s32 %s25, %s37
      %s39 = ssub.s32 %s26, %s33
      %s40 = sor.u32 %s38, %s39
      %p41 = scmp.eq.s32.totalorder %s40, 0
      %s43 = sadd.s32 %s42, 1
      %s44 = scalar_select %p41, %s42, %s43
      %p47 = pneg %p41
      %p48 = scmp.eq.s32.totalorder %s18, 1
      %p49 = por %p47, %p48
      %p50 = scmp.ne.s32.totalorder %s42, %s45
      %p51 = scmp.eq.s32.totalorder %s18, 0
      %p52 = por %p50, %p51
      %p53 = scmp.ne.s32.totalorder %s42, %s45
      %p54 = scmp.eq.s32.totalorder %s23, 1
      %p55 = por %p53, %p54
      %p56 = scmp.ne.s32.totalorder %s45, %s46
      %p57 = scmp.eq.s32.totalorder %s23, 0
      %p58 = por %p56, %p57
      %p59 = scmp.ne.s32.totalorder %s45, %s46
      %p60 = scmp.eq.s32.totalorder %s24, 1
      %p61 = por %p59, %p60
      %p63 = scmp.ne.s32.totalorder %s46, %s62
      %p64 = scmp.eq.s32.totalorder %s24, 0
      %p65 = por %p63, %p64
      %s66 = ssub.s32 %s25, %s37
      %p67 = scmp.eq.s32.totalorder %s66, 0
      %s69 = sadd.s32 %s68, 1
      %s70 = scalar_select %p67, %s68, %s69
      %p73 = pneg %p67
      %p74 = scmp.eq.s32.totalorder %s18, 1
      %p75 = por %p73, %p74
      %p76 = scmp.ne.s32.totalorder %s68, %s71
      %p77 = scmp.eq.s32.totalorder %s18, 0
      %p78 = por %p76, %p77
      %p79 = scmp.ne.s32.totalorder %s68, %s71
      %p80 = scmp.eq.s32.totalorder %s23, 1
      %p81 = por %p79, %p80
      %p82 = scmp.ne.s32.totalorder %s71, %s72
      %p83 = scmp.eq.s32.totalorder %s23, 0
      %p84 = por %p82, %p83
      %p85 = scmp.ne.s32.totalorder %s71, %s72
      %p86 = scmp.eq.s32.totalorder %s24, 1
      %p87 = por %p85, %p86
      %p89 = scmp.ne.s32.totalorder %s72, %s88
      %p90 = scmp.eq.s32.totalorder %s24, 0
      %p91 = por %p89, %p90
      %s93 = sadd.s32 %s92, 1
      %p96 = scmp.eq.s32.totalorder %s18, 1
      %p97 = scmp.ne.s32.totalorder %s92, %s94
      %p98 = scmp.eq.s32.totalorder %s18, 0
      %p99 = por %p97, %p98
      %p100 = scmp.ne.s32.totalorder %s92, %s94
      %p101 = scmp.eq.s32.totalorder %s23, 1
      %p102 = por %p100, %p101
      %p103 = scmp.ne.s32.totalorder %s94, %s95
      %p104 = scmp.eq.s32.totalorder %s23, 0
      %p105 = por %p103, %p104
      %p106 = scmp.ne.s32.totalorder %s94, %s95
      %p107 = scmp.eq.s32.totalorder %s24, 1
      %p108 = por %p106, %p107
      %p110 = scmp.ne.s32.totalorder %s95, %s109
      %p111 = scmp.eq.s32.totalorder %s24, 0
      %p112 = por %p110, %p111
      %s114 = sadd.s32 %s113, 1
      %p117 = scmp.eq.s32.totalorder %s18, 1
      %p118 = scmp.ne.s32.totalorder %s113, %s115
      %p119 = scmp.eq.s32.totalorder %s18, 0
      %p120 = por %p118, %p119
      %p121 = scmp.ne.s32.totalorder %s113, %s115
      %p122 = scmp.eq.s32.totalorder %s23, 1
      %p123 = por %p121, %p122
      %p124 = scmp.ne.s32.totalorder %s115, %s116
      %p125 = scmp.eq.s32.totalorder %s23, 0
      %p126 = por %p124, %p125
      %p127 = scmp.ne.s32.totalorder %s115, %s116
      %p128 = scmp.eq.s32.totalorder %s24, 1
      %p129 = por %p127, %p128
      %p131 = scmp.ne.s32.totalorder %s116, %s130
      %p132 = scmp.eq.s32.totalorder %s24, 0
      %p133 = por %p131, %p132
      %s135 = sadd.s32 %s134, 1
      %p138 = scmp.eq.s32.totalorder %s18, 1
      %p139 = scmp.ne.s32.totalorder %s134, %s136
      %p140 = scmp.eq.s32.totalorder %s18, 0
      %p141 = por %p139, %p140
      %p142 = scmp.ne.s32.totalorder %s134, %s136
      %p143 = scmp.eq.s32.totalorder %s23, 1
      %p144 = por %p142, %p143
      %p145 = scmp.ne.s32.totalorder %s136, %s137
      %p146 = scmp.eq.s32.totalorder %s23, 0
      %p147 = por %p145, %p146
      %p148 = scmp.ne.s32.totalorder %s136, %s137
      %p149 = scmp.eq.s32.totalorder %s24, 1
      %p150 = por %p148, %p149
      %p152 = scmp.ne.s32.totalorder %s137, %s151
      %p153 = scmp.eq.s32.totalorder %s24, 0
      %p154 = por %p152, %p153
      %s156 = sadd.s32 %s155, 1
      %p159 = scmp.eq.s32.totalorder %s18, 1
      %p160 = scmp.ne.s32.totalorder %s155, %s157
      %p161 = scmp.eq.s32.totalorder %s18, 0
      %p162 = por %p160, %p161
      %p163 = scmp.ne.s32.totalorder %s155, %s157
      %p164 = scmp.eq.s32.totalorder %s23, 1
      %p165 = por %p163, %p164
      %p166 = scmp.ne.s32.totalorder %s157, %s158
      %p167 = scmp.eq.s32.totalorder %s23, 0
      %p168 = por %p166, %p167
      %p169 = scmp.ne.s32.totalorder %s157, %s158
      %p170 = scmp.eq.s32.totalorder %s24, 1
      %p171 = por %p169, %p170
      %p173 = scmp.ne.s32.totalorder %s158, %s172
      %p174 = scmp.eq.s32.totalorder %s24, 0
      %p175 = por %p173, %p174
      %s176 = ssub.s32 %s25, %s37
      %s177 = ssub.s32 %s26, %s33
      %s178 = sor.u32 %s176, %s177
      %p179 = scmp.eq.s32.totalorder %s178, 0
      %s181 = sadd.s32 %s180, 1
      %s182 = scalar_select %p179, %s180, %s181
      %p185 = pneg %p179
      %p186 = scmp.eq.s32.totalorder %s18, 1
      %p187 = por %p185, %p186
      %p188 = scmp.ne.s32.totalorder %s180, %s183
      %p189 = scmp.eq.s32.totalorder %s18, 0
      %p190 = por %p188, %p189
      %p191 = scmp.ne.s32.totalorder %s180, %s183
      %p192 = scmp.eq.s32.totalorder %s23, 1
      %p193 = por %p191, %p192
      %p194 = scmp.ne.s32.totalorder %s183, %s184
      %p195 = scmp.eq.s32.totalorder %s23, 0
      %p196 = por %p194, %p195
      %p197 = scmp.ne.s32.totalorder %s183, %s184
      %p198 = scmp.eq.s32.totalorder %s24, 1
      %p199 = por %p197, %p198
      %p201 = scmp.ne.s32.totalorder %s184, %s200
      %p202 = scmp.eq.s32.totalorder %s24, 0
      %p203 = por %p201, %p202
      %p204 = scmp.le.s32.totalorder 1, %s18
      %p205 = scmp.lt.s32.totalorder %s18, 3
      %p206 = pnand %p204, %p205
      %p207 = pneg %p206
      // Predicated region
      $region9: #{tpu_custom_call.1} parent=5 // pred_check
        _
      $region10: #{tpu_custom_call.1} parent=5 // pred_check_branch
        %209 = sbr.rel (%p206) target = $region12
      $region11: #{tpu_custom_call.1} parent=5 // pred_region
        %s210 = ssub.s32 %s18, 1
        // Predicated region
        $region13: #{tpu_custom_call.1} parent=11 // pred_check
          %p211 = pneg %p105
        $region14: #{tpu_custom_call.1} parent=11 // pred_check_branch
          %213 = sbr.rel (%p211) target = $region16
        $region15: #{tpu_custom_call.1} parent=11 // pred_region
          _
        $region16: #{tpu_custom_call.1} parent=11 // pred_fallthru
          _
        // Predicated region
        $region17: #{tpu_custom_call.1} parent=11 // pred_check
          %p214 = pneg %p126
        $region18: #{tpu_custom_call.1} parent=11 // pred_check_branch
          %216 = sbr.rel (%p214) target = $region20
        $region19: #{tpu_custom_call.1} parent=11 // pred_region
          _
        $region20: #{tpu_custom_call.1} parent=11 // pred_fallthru
          _
        // Predicated region
        $region21: #{tpu_custom_call.1} parent=11 // pred_check
          %p217 = pneg %p147
        $region22: #{tpu_custom_call.1} parent=11 // pred_check_branch
          %219 = sbr.rel (%p217) target = $region24
        $region23: #{tpu_custom_call.1} parent=11 // pred_region
          _
        $region24: #{tpu_custom_call.1} parent=11 // pred_fallthru
          _
        // Predicated region
        $region25: #{tpu_custom_call.1} parent=11 // pred_check
          %p220 = pneg %p168
        $region26: #{tpu_custom_call.1} parent=11 // pred_check_branch
          %222 = sbr.rel (%p220) target = $region28
        $region27: #{tpu_custom_call.1} parent=11 // pred_region
          _
        $region28: #{tpu_custom_call.1} parent=11 // pred_fallthru
          _
      $region12: #{tpu_custom_call.1} parent=5 // pred_fallthru
        _
      %p223 = scmp.lt.s32.totalorder %s18, 2
      // Predicated region
      $region29: #{tpu_custom_call.1} parent=5 // pred_check
        %p224 = pneg %p223
      $region30: #{tpu_custom_call.1} parent=5 // pred_check_branch
        %226 = sbr.rel (%p224) target = $region32
      $region31: #{tpu_custom_call.1} parent=5 // pred_region
        // Predicated region
        $region33: #{tpu_custom_call.1} parent=31 // pred_check
          %p227 = pneg %p52
        $region34: #{tpu_custom_call.1} parent=31 // pred_check_branch
          %229 = sbr.rel (%p227) target = $region36
        $region35: #{tpu_custom_call.1} parent=31 // pred_region
          %s230 = sand.u32 %s42, 1
          %s231 = scalar_lea.sflag [#allocation7], %s230
          %s232 = sand.u32 %s42, 1
          %s233 = smul.addr %s232, 256
          %s234 = scalar_lea.vmem [#allocation6], %s233
          %s235 = smul.u32 32, %s26
          %s237 = ssub.s32 4096, 4096
          %238 = vsyncadd %s231, %s237
          %s239 = smul.addr %s25, 32
          %s240 = sadd.s32 %s235, %s239
          %s241 = smul.addr %s240, 128
          %s242 = scalar_lea.hbm %s0, %s241
          %s243 = sshll.u32 %s234, 4
          %s244 = int_to_ptr.vmem [resolvable:$true] %s243
          %249 = dma.hbm_to_vmem [thread:$0]  %s242, 4096, %s244, %s231, 128, 128, 8
        $region36: #{tpu_custom_call.1} parent=31 // pred_fallthru
          _
        // Predicated region
        $region37: #{tpu_custom_call.1} parent=31 // pred_check
          %p250 = pneg %p78
        $region38: #{tpu_custom_call.1} parent=31 // pred_check_branch
          %252 = sbr.rel (%p250) target = $region40
        $region39: #{tpu_custom_call.1} parent=31 // pred_region
          %p253 = scmp.lt.s32.totalorder %s25, 1
          %s254 = scalar_select %p253, %s25, 1
          %s255 = smul.addr %s254, 16
          %s256 = smul.addr %s255, 8
          %s257 = scalar_lea.vmem %s1, %s256
        $region40: #{tpu_custom_call.1} parent=31 // pred_fallthru
          _
      $region32: #{tpu_custom_call.1} parent=5 // pred_fallthru
        _
      %p258 = scmp.le.s32.totalorder 1, %s18
      %p259 = scmp.lt.s32.totalorder %s18, 3
      %p260 = pnand %p258, %p259
      %p261 = pneg %p260
      // Predicated region
      $region41: #{tpu_custom_call.1} parent=5 // pred_check
        _
      $region42: #{tpu_custom_call.1} parent=5 // pred_check_branch
        %263 = sbr.rel (%p260) target = $region44
      $region43: #{tpu_custom_call.1} parent=5 // pred_region
        %s264 = ssub.s32 %s18, 1
        %s265 = sand.u32 %s45, 1
        %s266 = scalar_lea.sflag [#allocation7], %s265
        %s267 = sand.u32 %s45, 1
        %s268 = smul.addr %s267, 256
        %s269 = scalar_lea.vmem [#allocation6], %s268
        // Predicated region
        $region45: #{tpu_custom_call.1} parent=43 // pred_check
          %p270 = pneg %p58
        $region46: #{tpu_custom_call.1} parent=43 // pred_check_branch
          %272 = sbr.rel (%p270) target = $region48
        $region47: #{tpu_custom_call.1} parent=43 // pred_region
          %273 = dma.done %s266, 4096
        $region48: #{tpu_custom_call.1} parent=43 // pred_fallthru
          _
        %s274 = sand.u32 %s45, 1
        %s275 = scalar_lea.sflag [#allocation7], %s274
        %s276 = sand.u32 %s45, 1
        %s277 = smul.addr %s276, 256
        %s278 = scalar_lea.vmem [#allocation6], %s277
        %p279 = pneg %p58
        %p280 = pneg %p55
        %p281 = scmp.lt.s32.totalorder %s27, 1
        %s282 = scalar_select %p281, %s27, 1
        %s283 = smul.addr %s282, 16
        %s284 = smul.addr %s283, 8
        %s285 = scalar_lea.vmem %s1, %s284
        %p286 = pneg %p84
        %p287 = pneg %p81
        %p288 = pneg %p105
        %p289 = pneg %p102
        %p290 = pneg %p126
        %p291 = pneg %p123
        %p292 = pneg %p147
        %p293 = pneg %p144
        %p294 = pneg %p168
        %p295 = pneg %p165
        %p296 = pneg %p196
        %p297 = pneg %p193
        %s298 = sand.u32 %s183, 1
        %s299 = scalar_lea.sflag [#allocation8], %s298
        %s300 = sand.u32 %s183, 1
        %s301 = smul.addr %s300, 256
        %s302 = scalar_lea.vmem [#allocation9], %s301
        %s303 = smul.u32 32, %s28
        %p304 = scmp.lt.s32.totalorder %s27, 1
        %s305 = scalar_select %p304, %s27, 1
        %s306 = smul.addr %s305, 16
        %s307 = smul.addr %s306, 8
        %s308 = scalar_lea.vmem %s1, %s307
        %s309 = smul.u32 32, %s28
        %p311 = scmp.eq.s32.totalorder %s28, 0
        // Predicated region
        $region49: #{tpu_custom_call.1} parent=43 // pred_check
          %p312 = pneg %p311
        $region50: #{tpu_custom_call.1} parent=43 // pred_check_branch
          %314 = sbr.rel (%p312) target = $region52
        $region51: #{tpu_custom_call.1} parent=43 // pred_region
          %v315 = vld [vmem:[%s308] sm:$0xff]
          %v316 = vld [vmem:[%s308 + $0x8] sm:$0xff]
          %v317 = vld [vmem:[%s308 + $0x10] sm:$0xff]
          %v318 = vld [vmem:[%s308 + $0x18] sm:$0xff]
          %v319 = vld [vmem:[%s308 + $0x20] sm:$0xff]
          %v320 = vld [vmem:[%s308 + $0x28] sm:$0xff]
          %v321 = vld [vmem:[%s308 + $0x30] sm:$0xff]
          %v322 = vld [vmem:[%s308 + $0x38] sm:$0xff]
          %v323 = vld [vmem:[%s308 + $0x40] sm:$0xff]
          %v324 = vld [vmem:[%s308 + $0x48] sm:$0xff]
          %v325 = vld [vmem:[%s308 + $0x50] sm:$0xff]
          %v326 = vld [vmem:[%s308 + $0x58] sm:$0xff]
          %v327 = vld [vmem:[%s308 + $0x60] sm:$0xff]
          %v328 = vld [vmem:[%s308 + $0x68] sm:$0xff]
          %v329 = vld [vmem:[%s308 + $0x70] sm:$0xff]
          %v330 = vld [vmem:[%s308 + $0x78] sm:$0xff]
          %v331 = vpack.c.bf16 %v316, %v315
          %v332 = vpack.c.bf16 %v318, %v317
          %v333 = vpack.c.bf16 %v320, %v319
          %v334 = vpack.c.bf16 %v322, %v321
          %v335 = vpack.c.bf16 %v324, %v323
          %v336 = vpack.c.bf16 %v326, %v325
          %v337 = vpack.c.bf16 %v328, %v327
          %v338 = vpack.c.bf16 %v330, %v329
          %v339 = vld [vmem:[%s3] sm:$0xff]
          %v340 = vld [vmem:[%s3 + $0x8] sm:$0xff]
          %v341 = vld [vmem:[%s3 + $0x10] sm:$0xff]
          %v342 = vld [vmem:[%s3 + $0x18] sm:$0xff]
          %v343 = vld [vmem:[%s3 + $0x20] sm:$0xff]
          %v344 = vld [vmem:[%s3 + $0x28] sm:$0xff]
          %v345 = vld [vmem:[%s3 + $0x30] sm:$0xff]
          %v346 = vld [vmem:[%s3 + $0x38] sm:$0xff]
          %v355 = vunpack.c.l.b16 %v339
          %v356 = vunpack.c.h.b16 %v339
          %v357 = vunpack.c.l.b16 %v340
          %v358 = vunpack.c.h.b16 %v340
          %v359 = vunpack.c.l.b16 %v341
          %v360 = vunpack.c.h.b16 %v341
          %v361 = vunpack.c.l.b16 %v342
          %v362 = vunpack.c.h.b16 %v342
          %v363 = vunpack.c.l.b16 %v343
          %v364 = vunpack.c.h.b16 %v343
          %v365 = vunpack.c.l.b16 %v344
          %v366 = vunpack.c.h.b16 %v344
          %v367 = vunpack.c.l.b16 %v345
          %v368 = vunpack.c.h.b16 %v345
          %v369 = vunpack.c.l.b16 %v346
          %v370 = vunpack.c.h.b16 %v346
          %v371 = vpack.c.b16 %v357, %v355
          %v372 = vpack.c.b16 %v358, %v356
          %v373 = vpack.c.b16 %v361, %v359
          %v374 = vpack.c.b16 %v362, %v360
          %v375 = vpack.c.b16 %v365, %v363
          %v376 = vpack.c.b16 %v366, %v364
          %v377 = vpack.c.b16 %v369, %v367
          %v378 = vpack.c.b16 %v370, %v368
          %vm387 = vcmask 523264
          %v389 = vsel %vm387, %v331, 0
          %v392 = vsel %vm387, %v332, 0
          %v395 = vsel %vm387, %v333, 0
          %v398 = vsel %vm387, %v334, 0
          %v401 = vsel %vm387, %v335, 0
          %v404 = vsel %vm387, %v336, 0
          %v407 = vsel %vm387, %v337, 0
          %v410 = vsel %vm387, %v338, 0
          %412 = vmatprep.subr.bf16.mxu0 %v372
          %413 = vmatpush1.bf16.msra.mxu0 %v371
          %414 = vmatprep.subr.bf16.mxu0 %v374
          %415 = vmatpush1.bf16.msra.mxu0 %v373
          %416 = vmatprep.subr.bf16.mxu0 %v376
          %417 = vmatpush1.bf16.msra.mxu0 %v375
          %418 = vmatprep.subr.bf16.mxu0 %v378
          %419 = vmatpush1.bf16.msra.mxu0 %v377
          %420 = vmatprep.subr.bf16.mxu0 0
          %421 = vmatpush1.bf16.msra.mxu0 0
          %422 = vmatprep.subr.bf16.mxu0 0
          %423 = vmatpush1.bf16.msra.mxu0 0
          %424 = vmatprep.subr.bf16.mxu0 0
          %425 = vmatpush1.bf16.msra.mxu0 0
          %426 = vmatprep.subr.bf16.mxu0 0
          %427 = vmatpush1.bf16.msra.mxu0 0
          %428 = vmatprep.subr.bf16.mxu0 0
          %429 = vmatpush1.bf16.msra.mxu0 0
          %430 = vmatprep.subr.bf16.mxu0 0
          %431 = vmatpush1.bf16.msra.mxu0 0
          %432 = vmatprep.subr.bf16.mxu0 0
          %433 = vmatpush1.bf16.msra.mxu0 0
          %434 = vmatprep.subr.bf16.mxu0 0
          %435 = vmatpush1.bf16.msra.mxu0 0
          %436 = vmatprep.subr.bf16.mxu0 0
          %437 = vmatpush1.bf16.msra.mxu0 0
          %438 = vmatprep.subr.bf16.mxu0 0
          %439 = vmatpush1.bf16.msra.mxu0 0
          %440 = vmatprep.subr.bf16.mxu0 0
          %441 = vmatpush1.bf16.msra.mxu0 0
          %442 = vmatprep.subr.bf16.mxu0 0
          %443 = vmatpush1.bf16.msra.mxu0 0
          %444 = vmatprep.mubr.bf16.mxu0 0
          %445 = vmatmul.mubr.bf16.gmra.mrb[0].mxu0 %v389
          %v446 = vpop.f32.mrb[0].mxu0
          %v447 = vadd.f32 0.0, %v446
          %v448 = vpop.f32.mrb[0].mxu0
          %v449 = vadd.f32 0.0, %v448
          %v450 = vpop.f32.mrb[0].mxu0
          %v451 = vadd.f32 0.0, %v450
          %v452 = vpop.f32.mrb[0].mxu0
          %v453 = vadd.f32 0.0, %v452
          %454 = vmatprep.mubr.bf16.mxu0 0
          %455 = vmatmul.mubr.bf16.gmra.mrb[0].mxu0 %v392
          %v456 = vpop.f32.mrb[0].mxu0
          %v457 = vadd.f32 0.0, %v456
          %v458 = vpop.f32.mrb[0].mxu0
          %v459 = vadd.f32 0.0, %v458
          %v460 = vpop.f32.mrb[0].mxu0
          %v461 = vadd.f32 0.0, %v460
          %v462 = vpop.f32.mrb[0].mxu0
          %v463 = vadd.f32 0.0, %v462
          %464 = vmatprep.mubr.bf16.mxu0 0
          %465 = vmatmul.mubr.bf16.gmra.mrb[0].mxu0 %v395
          %v466 = vpop.f32.mrb[0].mxu0
          %v467 = vadd.f32 0.0, %v466
          %v468 = vpop.f32.mrb[0].mxu0
          %v469 = vadd.f32 0.0, %v468
          %v470 = vpop.f32.mrb[0].mxu0
          %v471 = vadd.f32 0.0, %v470
          %v472 = vpop.f32.mrb[0].mxu0
          %v473 = vadd.f32 0.0, %v472
          %474 = vmatprep.mubr.bf16.mxu0 0
          %475 = vmatmul.mubr.bf16.gmra.mrb[0].mxu0 %v398
          %v476 = vpop.f32.mrb[0].mxu0
          %v477 = vadd.f32 0.0, %v476
          %v478 = vpop.f32.mrb[0].mxu0
          %v479 = vadd.f32 0.0, %v478
          %v480 = vpop.f32.mrb[0].mxu0
          %v481 = vadd.f32 0.0, %v480
          %v482 = vpop.f32.mrb[0].mxu0
          %v483 = vadd.f32 0.0, %v482
          %484 = vmatprep.mubr.bf16.mxu0 0
          %485 = vmatmul.mubr.bf16.gmra.mrb[0].mxu0 %v401
          %v486 = vpop.f32.mrb[0].mxu0
          %v487 = vadd.f32 0.0, %v486
          %v488 = vpop.f32.mrb[0].mxu0
          %v489 = vadd.f32 0.0, %v488
          %v490 = vpop.f32.mrb[0].mxu0
          %v491 = vadd.f32 0.0, %v490
          %v492 = vpop.f32.mrb[0].mxu0
          %v493 = vadd.f32 0.0, %v492
          %494 = vmatprep.mubr.bf16.mxu0 0
          %495 = vmatmul.mubr.bf16.gmra.mrb[0].mxu0 %v404
          %v496 = vpop.f32.mrb[0].mxu0
          %v497 = vadd.f32 0.0, %v496
          %v498 = vpop.f32.mrb[0].mxu0
          %v499 = vadd.f32 0.0, %v498
          %v500 = vpop.f32.mrb[0].mxu0
          %v501 = vadd.f32 0.0, %v500
          %v502 = vpop.f32.mrb[0].mxu0
          %v503 = vadd.f32 0.0, %v502
          %504 = vmatprep.mubr.bf16.mxu0 0
          %505 = vmatmul.mubr.bf16.gmra.mrb[0].mxu0 %v407
          %v506 = vpop.f32.mrb[0].mxu0
          %v507 = vadd.f32 0.0, %v506
          %v508 = vpop.f32.mrb[0].mxu0
          %v509 = vadd.f32 0.0, %v508
          %v510 = vpop.f32.mrb[0].mxu0
          %v511 = vadd.f32 0.0, %v510
          %v512 = vpop.f32.mrb[0].mxu0
          %v513 = vadd.f32 0.0, %v512
          %514 = vmatprep.mubr.bf16.mxu0 0
          %515 = vmatmul.mubr.bf16.gmra.mrb[0].mxu0 %v410
          %v516 = vpop.f32.mrb[0].mxu0
          %v517 = vadd.f32 0.0, %v516
          %v518 = vpop.f32.mrb[0].mxu0
          %v519 = vadd.f32 0.0, %v518
          %v520 = vpop.f32.mrb[0].mxu0
          %v521 = vadd.f32 0.0, %v520
          %v522 = vpop.f32.mrb[0].mxu0
          %v523 = vadd.f32 0.0, %v522
          %524 = vdwg.mxu0
          %v525 = vpack.c.bf16 %v451, %v447
          %v526 = vpack.c.bf16 %v461, %v457
          %v527 = vpack.c.bf16 %v471, %v467
          %v528 = vpack.c.bf16 %v481, %v477
          %v529 = vpack.c.bf16 %v491, %v487
          %v530 = vpack.c.bf16 %v501, %v497
          %v531 = vpack.c.bf16 %v511, %v507
          %v532 = vpack.c.bf16 %v521, %v517
          %533 = vst [vmem:[#allocation3] sm:$0xff] %v525
          %534 = vst [vmem:[#allocation3 + $0x8] sm:$0xff] %v526
          %535 = vst [vmem:[#allocation3 + $0x10] sm:$0xff] %v527
          %536 = vst [vmem:[#allocation3 + $0x18] sm:$0xff] %v528
          %537 = vst [vmem:[#allocation3 + $0x20] sm:$0xff] %v529
          %538 = vst [vmem:[#allocation3 + $0x28] sm:$0xff] %v530
          %539 = vst [vmem:[#allocation3 + $0x30] sm:$0xff] %v531
          %540 = vst [vmem:[#allocation3 + $0x38] sm:$0xff] %v532
          %v541 = vpack.c.bf16 %v453, %v449
          %v542 = vpack.c.bf16 %v463, %v459
          %v543 = vpack.c.bf16 %v473, %v469
          %v544 = vpack.c.bf16 %v483, %v479
          %v545 = vpack.c.bf16 %v493, %v489
          %v546 = vpack.c.bf16 %v503, %v499
          %v547 = vpack.c.bf16 %v513, %v509
          %v548 = vpack.c.bf16 %v523, %v519
          %v549 = vld [vmem:[%s4] sm:$0xf]
          %v550 = vld [vmem:[%s4 + $0x4] sm:$0xf]
          %v553 = vunpack.c.l.b16 %v549
          %v554 = vunpack.c.l.b16 %v550
          %v555 = vpack.c.b16 %v554, %v553
          %vm557 = vcmask 130048
          %v559 = vsel %vm557, %v541, 0
          %v562 = vsel %vm557, %v542, 0
          %v565 = vsel %vm557, %v543, 0
          %v568 = vsel %vm557, %v544, 0
          %v571 = vsel %vm557, %v545, 0
          %v574 = vsel %vm557, %v546, 0
          %v577 = vsel %vm557, %v547, 0
          %v580 = vsel %vm557, %v548, 0
          %582 = vmatprep.subr.bf16.mxu0 0
          %583 = vmatpush1.bf16.msra.mxu0 %v555
          %584 = vmatprep.subr.bf16.mxu0 0
          %585 = vmatpush1.bf16.msra.mxu0 0
          %586 = vmatprep.subr.bf16.mxu0 0
          %587 = vmatpush1.bf16.msra.mxu0 0
          %588 = vmatprep.subr.bf16.mxu0 0
          %589 = vmatpush1.bf16.msra.mxu0 0
          %590 = vmatprep.subr.bf16.mxu0 0
          %591 = vmatpush1.bf16.msra.mxu0 0
          %592 = vmatprep.subr.bf16.mxu0 0
          %593 = vmatpush1.bf16.msra.mxu0 0
          %594 = vmatprep.subr.bf16.mxu0 0
          %595 = vmatpush1.bf16.msra.mxu0 0
          %596 = vmatprep.subr.bf16.mxu0 0
          %597 = vmatpush1.bf16.msra.mxu0 0
          %598 = vmatprep.subr.bf16.mxu0 0
          %599 = vmatpush1.bf16.msra.mxu0 0
          %600 = vmatprep.subr.bf16.mxu0 0
          %601 = vmatpush1.bf16.msra.mxu0 0
          %602 = vmatprep.subr.bf16.mxu0 0
          %603 = vmatpush1.bf16.msra.mxu0 0
          %604 = vmatprep.subr.bf16.mxu0 0
          %605 = vmatpush1.bf16.msra.mxu0 0
          %606 = vmatprep.subr.bf16.mxu0 0
          %607 = vmatpush1.bf16.msra.mxu0 0
          %608 = vmatprep.subr.bf16.mxu0 0
          %609 = vmatpush1.bf16.msra.mxu0 0
          %610 = vmatprep.subr.bf16.mxu0 0
          %611 = vmatpush1.bf16.msra.mxu0 0
          %612 = vmatprep.subr.bf16.mxu0 0
          %613 = vmatpush1.bf16.msra.mxu0 0
          %614 = vmatprep.mubr.bf16.mxu0 0
          %615 = vmatmul.mubr.bf16.gmra.mrb[0].mxu0 %v559
          %v616 = vpop.f32.mrb[0].mxu0
          %v617 = vadd.f32 0.0, %v616
          %v618 = vpop.f32.mrb[0].mxu0
          %v619 = vpop.f32.mrb[0].mxu0
          %v620 = vadd.f32 0.0, %v619
          %v621 = vpop.f32.mrb[0].mxu0
          %622 = vmatprep.mubr.bf16.mxu0 0
          %623 = vmatmul.mubr.bf16.gmra.mrb[0].mxu0 %v562
          %v624 = vpop.f32.mrb[0].mxu0
          %v625 = vadd.f32 0.0, %v624
          %v626 = vpop.f32.mrb[0].mxu0
          %v627 = vpop.f32.mrb[0].mxu0
          %v628 = vadd.f32 0.0, %v627
          %v629 = vpop.f32.mrb[0].mxu0
          %630 = vmatprep.mubr.bf16.mxu0 0
          %631 = vmatmul.mubr.bf16.gmra.mrb[0].mxu0 %v565
          %v632 = vpop.f32.mrb[0].mxu0
          %v633 = vadd.f32 0.0, %v632
          %v634 = vpop.f32.mrb[0].mxu0
          %v635 = vpop.f32.mrb[0].mxu0
          %v636 = vadd.f32 0.0, %v635
          %v637 = vpop.f32.mrb[0].mxu0
          %638 = vmatprep.mubr.bf16.mxu0 0
          %639 = vmatmul.mubr.bf16.gmra.mrb[0].mxu0 %v568
          %v640 = vpop.f32.mrb[0].mxu0
          %v641 = vadd.f32 0.0, %v640
          %v642 = vpop.f32.mrb[0].mxu0
          %v643 = vpop.f32.mrb[0].mxu0
          %v644 = vadd.f32 0.0, %v643
          %v645 = vpop.f32.mrb[0].mxu0
          %646 = vmatprep.mubr.bf16.mxu0 0
          %647 = vmatmul.mubr.bf16.gmra.mrb[0].mxu0 %v571
          %v648 = vpop.f32.mrb[0].mxu0
          %v649 = vadd.f32 0.0, %v648
          %v650 = vpop.f32.mrb[0].mxu0
          %v651 = vpop.f32.mrb[0].mxu0
          %v652 = vadd.f32 0.0, %v651
          %v653 = vpop.f32.mrb[0].mxu0
          %654 = vmatprep.mubr.bf16.mxu0 0
          %655 = vmatmul.mubr.bf16.gmra.mrb[0].mxu0 %v574
          %v656 = vpop.f32.mrb[0].mxu0
          %v657 = vadd.f32 0.0, %v656
          %v658 = vpop.f32.mrb[0].mxu0
          %v659 = vpop.f32.mrb[0].mxu0
          %v660 = vadd.f32 0.0, %v659
          %v661 = vpop.f32.mrb[0].mxu0
          %662 = vmatprep.mubr.bf16.mxu0 0
          %663 = vmatmul.mubr.bf16.gmra.mrb[0].mxu0 %v577
          %v664 = vpop.f32.mrb[0].mxu0
          %v665 = vadd.f32 0.0, %v664
          %v666 = vpop.f32.mrb[0].mxu0
          %v667 = vpop.f32.mrb[0].mxu0
          %v668 = vadd.f32 0.0, %v667
          %v669 = vpop.f32.mrb[0].mxu0
          %670 = vmatprep.mubr.bf16.mxu0 0
          %671 = vmatmul.mubr.bf16.gmra.mrb[0].mxu0 %v580
          %v672 = vpop.f32.mrb[0].mxu0
          %v673 = vadd.f32 0.0, %v672
          %v674 = vpop.f32.mrb[0].mxu0
          %v675 = vpop.f32.mrb[0].mxu0
          %v676 = vadd.f32 0.0, %v675
          %v677 = vpop.f32.mrb[0].mxu0
          %678 = vdwg.mxu0
          %v679 = vpack.c.bf16 %v620, %v617
          %v680 = vpack.c.bf16 %v628, %v625
          %v681 = vpack.c.bf16 %v636, %v633
          %v682 = vpack.c.bf16 %v644, %v641
          %v683 = vpack.c.bf16 %v652, %v649
          %v684 = vpack.c.bf16 %v660, %v657
          %v685 = vpack.c.bf16 %v668, %v665
          %v686 = vpack.c.bf16 %v676, %v673
          %687 = vst [vmem:[#allocation4] sm:$0xff] %v679
          %688 = vst [vmem:[#allocation4 + $0x8] sm:$0xff] %v680
          %689 = vst [vmem:[#allocation4 + $0x10] sm:$0xff] %v681
          %690 = vst [vmem:[#allocation4 + $0x18] sm:$0xff] %v682
          %691 = vst [vmem:[#allocation4 + $0x20] sm:$0xff] %v683
          %692 = vst [vmem:[#allocation4 + $0x28] sm:$0xff] %v684
          %693 = vst [vmem:[#allocation4 + $0x30] sm:$0xff] %v685
          %694 = vst [vmem:[#allocation4 + $0x38] sm:$0xff] %v686
          %v695 = vld [vmem:[%s4 + $0x8] sm:$0xf]
          %v696 = vld [vmem:[%s4 + $0xc] sm:$0xf]
          %705 = vrot.lane.b32.xlu0 %v541, 112
          %v706 = vpop.permute.xlu0 %705
          %707 = vrot.lane.b32.xlu0 %v542, 112
          %v708 = vpop.permute.xlu0 %707
          %709 = vrot.lane.b32.xlu0 %v543, 112
          %v710 = vpop.permute.xlu0 %709
          %711 = vrot.lane.b32.xlu0 %v544, 112
          %v712 = vpop.permute.xlu0 %711
          %713 = vrot.lane.b32.xlu0 %v545, 112
          %v714 = vpop.permute.xlu0 %713
          %715 = vrot.lane.b32.xlu0 %v546, 112
          %v716 = vpop.permute.xlu0 %715
          %717 = vrot.lane.b32.xlu0 %v547, 112
          %v718 = vpop.permute.xlu0 %717
          %719 = vrot.lane.b32.xlu0 %v548, 112
          %v720 = vpop.permute.xlu0 %719
          %v723 = vunpack.c.l.b16 %v695
          %v724 = vunpack.c.l.b16 %v696
          %v725 = vpack.c.b16 %v724, %v723
          %v728 = vsel %vm557, %v706, 0
          %v731 = vsel %vm557, %v708, 0
          %v734 = vsel %vm557, %v710, 0
          %v737 = vsel %vm557, %v712, 0
          %v740 = vsel %vm557, %v714, 0
          %v743 = vsel %vm557, %v716, 0
          %v746 = vsel %vm557, %v718, 0
          %v749 = vsel %vm557, %v720, 0
          %751 = vmatprep.subr.bf16.mxu0 0
          %752 = vmatpush1.bf16.msra.mxu0 %v725
          %753 = vmatprep.subr.bf16.mxu0 0
          %754 = vmatpush1.bf16.msra.mxu0 0
          %755 = vmatprep.subr.bf16.mxu0 0
          %756 = vmatpush1.bf16.msra.mxu0 0
          %757 = vmatprep.subr.bf16.mxu0 0
          %758 = vmatpush1.bf16.msra.mxu0 0
          %759 = vmatprep.subr.bf16.mxu0 0
          %760 = vmatpush1.bf16.msra.mxu0 0
          %761 = vmatprep.subr.bf16.mxu0 0
          %762 = vmatpush1.bf16.msra.mxu0 0
          %763 = vmatprep.subr.bf16.mxu0 0
          %764 = vmatpush1.bf16.msra.mxu0 0
          %765 = vmatprep.subr.bf16.mxu0 0
          %766 = vmatpush1.bf16.msra.mxu0 0
          %767 = vmatprep.subr.bf16.mxu0 0
          %768 = vmatpush1.bf16.msra.mxu0 0
          %769 = vmatprep.subr.bf16.mxu0 0
          %770 = vmatpush1.bf16.msra.mxu0 0
          %771 = vmatprep.subr.bf16.mxu0 0
          %772 = vmatpush1.bf16.msra.mxu0 0
          %773 = vmatprep.subr.bf16.mxu0 0
          %774 = vmatpush1.bf16.msra.mxu0 0
          %775 = vmatprep.subr.bf16.mxu0 0
          %776 = vmatpush1.bf16.msra.mxu0 0
          %777 = vmatprep.subr.bf16.mxu0 0
          %778 = vmatpush1.bf16.msra.mxu0 0
          %779 = vmatprep.subr.bf16.mxu0 0
          %780 = vmatpush1.bf16.msra.mxu0 0
          %781 = vmatprep.subr.bf16.mxu0 0
          %782 = vmatpush1.bf16.msra.mxu0 0
          %783 = vmatprep.mubr.bf16.mxu0 0
          %784 = vmatmul.mubr.bf16.gmra.mrb[0].mxu0 %v728
          %v785 = vpop.f32.mrb[0].mxu0
          %v786 = vadd.f32 0.0, %v785
          %v787 = vpop.f32.mrb[0].mxu0
          %v788 = vpop.f32.mrb[0].mxu0
          %v789 = vadd.f32 0.0, %v788
          %v790 = vpop.f32.mrb[0].mxu0
          %791 = vmatprep.mubr.bf16.mxu0 0
          %792 = vmatmul.mubr.bf16.gmra.mrb[0].mxu0 %v731
          %v793 = vpop.f32.mrb[0].mxu0
          %v794 = vadd.f32 0.0, %v793
          %v795 = vpop.f32.mrb[0].mxu0
          %v796 = vpop.f32.mrb[0].mxu0
          %v797 = vadd.f32 0.0, %v796
          %v798 = vpop.f32.mrb[0].mxu0
          %799 = vmatprep.mubr.bf16.mxu0 0
          %800 = vmatmul.mubr.bf16.gmra.mrb[0].mxu0 %v734
          %v801 = vpop.f32.mrb[0].mxu0
          %v802 = vadd.f32 0.0, %v801
          %v803 = vpop.f32.mrb[0].mxu0
          %v804 = vpop.f32.mrb[0].mxu0
          %v805 = vadd.f32 0.0, %v804
          %v806 = vpop.f32.mrb[0].mxu0
          %807 = vmatprep.mubr.bf16.mxu0 0
          %808 = vmatmul.mubr.bf16.gmra.mrb[0].mxu0 %v737
          %v809 = vpop.f32.mrb[0].mxu0
          %v810 = vadd.f32 0.0, %v809
          %v811 = vpop.f32.mrb[0].mxu0
          %v812 = vpop.f32.mrb[0].mxu0
          %v813 = vadd.f32 0.0, %v812
          %v814 = vpop.f32.mrb[0].mxu0
          %815 = vmatprep.mubr.bf16.mxu0 0
          %816 = vmatmul.mubr.bf16.gmra.mrb[0].mxu0 %v740
          %v817 = vpop.f32.mrb[0].mxu0
          %v818 = vadd.f32 0.0, %v817
          %v819 = vpop.f32.mrb[0].mxu0
          %v820 = vpop.f32.mrb[0].mxu0
          %v821 = vadd.f32 0.0, %v820
          %v822 = vpop.f32.mrb[0].mxu0
          %823 = vmatprep.mubr.bf16.mxu0 0
          %824 = vmatmul.mubr.bf16.gmra.mrb[0].mxu0 %v743
          %v825 = vpop.f32.mrb[0].mxu0
          %v826 = vadd.f32 0.0, %v825
          %v827 = vpop.f32.mrb[0].mxu0
          %v828 = vpop.f32.mrb[0].mxu0
          %v829 = vadd.f32 0.0, %v828
          %v830 = vpop.f32.mrb[0].mxu0
          %831 = vmatprep.mubr.bf16.mxu0 0
          %832 = vmatmul.mubr.bf16.gmra.mrb[0].mxu0 %v746
          %v833 = vpop.f32.mrb[0].mxu0
          %v834 = vadd.f32 0.0, %v833
          %v835 = vpop.f32.mrb[0].mxu0
          %v836 = vpop.f32.mrb[0].mxu0
          %v837 = vadd.f32 0.0, %v836
          %v838 = vpop.f32.mrb[0].mxu0
          %839 = vmatprep.mubr.bf16.mxu0 0
          %840 = vmatmul.mubr.bf16.gmra.mrb[0].mxu0 %v749
          %v841 = vpop.f32.mrb[0].mxu0
          %v842 = vadd.f32 0.0, %v841
          %v843 = vpop.f32.mrb[0].mxu0
          %v844 = vpop.f32.mrb[0].mxu0
          %v845 = vadd.f32 0.0, %v844
          %v846 = vpop.f32.mrb[0].mxu0
          %847 = vdwg.mxu0
          %v848 = vpack.c.bf16 %v789, %v786
          %v849 = vpack.c.bf16 %v797, %v794
          %v850 = vpack.c.bf16 %v805, %v802
          %v851 = vpack.c.bf16 %v813, %v810
          %v852 = vpack.c.bf16 %v821, %v818
          %v853 = vpack.c.bf16 %v829, %v826
          %v854 = vpack.c.bf16 %v837, %v834
          %v855 = vpack.c.bf16 %v845, %v842
          %s856 = scalar_lea.vmem [#allocation4], 64
          %857 = vst [vmem:[%s856] sm:$0xff] %v848
          %858 = vst [vmem:[%s856 + $0x8] sm:$0xff] %v849
          %859 = vst [vmem:[%s856 + $0x10] sm:$0xff] %v850
          %860 = vst [vmem:[%s856 + $0x18] sm:$0xff] %v851
          %861 = vst [vmem:[%s856 + $0x20] sm:$0xff] %v852
          %862 = vst [vmem:[%s856 + $0x28] sm:$0xff] %v853
          %863 = vst [vmem:[%s856 + $0x30] sm:$0xff] %v854
          %864 = vst [vmem:[%s856 + $0x38] sm:$0xff] %v855
          %v865 = vld [vmem:[%s4 + $0x10] sm:$0xf]
          %v866 = vld [vmem:[%s4 + $0x14] sm:$0xf]
          %867 = vrot.lane.b32.xlu0 %v541, 96
          %v868 = vpop.permute.xlu0 %867
          %869 = vrot.lane.b32.xlu0 %v542, 96
          %v870 = vpop.permute.xlu0 %869
          %871 = vrot.lane.b32.xlu0 %v543, 96
          %v872 = vpop.permute.xlu0 %871
          %873 = vrot.lane.b32.xlu0 %v544, 96
          %v874 = vpop.permute.xlu0 %873
          %875 = vrot.lane.b32.xlu0 %v545, 96
          %v876 = vpop.permute.xlu0 %875
          %877 = vrot.lane.b32.xlu0 %v546, 96
          %v878 = vpop.permute.xlu0 %877
          %879 = vrot.lane.b32.xlu0 %v547, 96
          %v880 = vpop.permute.xlu0 %879
          %881 = vrot.lane.b32.xlu0 %v548, 96
          %v882 = vpop.permute.xlu0 %881
          %v885 = vunpack.c.l.b16 %v865
          %v886 = vunpack.c.l.b16 %v866
          %v887 = vpack.c.b16 %v886, %v885
          %v890 = vsel %vm557, %v868, 0
          %v893 = vsel %vm557, %v870, 0
          %v896 = vsel %vm557, %v872, 0
          %v899 = vsel %vm557, %v874, 0
          %v902 = vsel %vm557, %v876, 0
          %v905 = vsel %vm557, %v878, 0
          %v908 = vsel %vm557, %v880, 0
          %v911 = vsel %vm557, %v882, 0
          %913 = vmatprep.subr.bf16.mxu0 0
          %914 = vmatpush1.bf16.msra.mxu0 %v887
          %915 = vmatprep.subr.bf16.mxu0 0
          %916 = vmatpush1.bf16.msra.mxu0 0
          %917 = vmatprep.subr.bf16.mxu0 0
          %918 = vmatpush1.bf16.msra.mxu0 0
          %919 = vmatprep.subr.bf16.mxu0 0
          %920 = vmatpush1.bf16.msra.mxu0 0
          %921 = vmatprep.subr.bf16.mxu0 0
          %922 = vmatpush1.bf16.msra.mxu0 0
          %923 = vmatprep.subr.bf16.mxu0 0
          %924 = vmatpush1.bf16.msra.mxu0 0
          %925 = vmatprep.subr.bf16.mxu0 0
          %926 = vmatpush1.bf16.msra.mxu0 0
          %927 = vmatprep.subr.bf16.mxu0 0
          %928 = vmatpush1.bf16.msra.mxu0 0
          %929 = vmatprep.subr.bf16.mxu0 0
          %930 = vmatpush1.bf16.msra.mxu0 0
          %931 = vmatprep.subr.bf16.mxu0 0
          %932 = vmatpush1.bf16.msra.mxu0 0
          %933 = vmatprep.subr.bf16.mxu0 0
          %934 = vmatpush1.bf16.msra.mxu0 0
          %935 = vmatprep.subr.bf16.mxu0 0
          %936 = vmatpush1.bf16.msra.mxu0 0
          %937 = vmatprep.subr.bf16.mxu0 0
          %938 = vmatpush1.bf16.msra.mxu0 0
          %939 = vmatprep.subr.bf16.mxu0 0
          %940 = vmatpush1.bf16.msra.mxu0 0
          %941 = vmatprep.subr.bf16.mxu0 0
          %942 = vmatpush1.bf16.msra.mxu0 0
          %943 = vmatprep.subr.bf16.mxu0 0
          %944 = vmatpush1.bf16.msra.mxu0 0
          %945 = vmatprep.mubr.bf16.mxu0 0
          %946 = vmatmul.mubr.bf16.gmra.mrb[0].mxu0 %v890
          %v947 = vpop.f32.mrb[0].mxu0
          %v948 = vadd.f32 0.0, %v947
          %v949 = vpop.f32.mrb[0].mxu0
          %v950 = vpop.f32.mrb[0].mxu0
          %v951 = vadd.f32 0.0, %v950
          %v952 = vpop.f32.mrb[0].mxu0
          %953 = vmatprep.mubr.bf16.mxu0 0
          %954 = vmatmul.mubr.bf16.gmra.mrb[0].mxu0 %v893
          %v955 = vpop.f32.mrb[0].mxu0
          %v956 = vadd.f32 0.0, %v955
          %v957 = vpop.f32.mrb[0].mxu0
          %v958 = vpop.f32.mrb[0].mxu0
          %v959 = vadd.f32 0.0, %v958
          %v960 = vpop.f32.mrb[0].mxu0
          %961 = vmatprep.mubr.bf16.mxu0 0
          %962 = vmatmul.mubr.bf16.gmra.mrb[0].mxu0 %v896
          %v963 = vpop.f32.mrb[0].mxu0
          %v964 = vadd.f32 0.0, %v963
          %v965 = vpop.f32.mrb[0].mxu0
          %v966 = vpop.f32.mrb[0].mxu0
          %v967 = vadd.f32 0.0, %v966
          %v968 = vpop.f32.mrb[0].mxu0
          %969 = vmatprep.mubr.bf16.mxu0 0
          %970 = vmatmul.mubr.bf16.gmra.mrb[0].mxu0 %v899
          %v971 = vpop.f32.mrb[0].mxu0
          %v972 = vadd.f32 0.0, %v971
          %v973 = vpop.f32.mrb[0].mxu0
          %v974 = vpop.f32.mrb[0].mxu0
          %v975 = vadd.f32 0.0, %v974
          %v976 = vpop.f32.mrb[0].mxu0
          %977 = vmatprep.mubr.bf16.mxu0 0
          %978 = vmatmul.mubr.bf16.gmra.mrb[0].mxu0 %v902
          %v979 = vpop.f32.mrb[0].mxu0
          %v980 = vadd.f32 0.0, %v979
          %v981 = vpop.f32.mrb[0].mxu0
          %v982 = vpop.f32.mrb[0].mxu0
          %v983 = vadd.f32 0.0, %v982
          %v984 = vpop.f32.mrb[0].mxu0
          %985 = vmatprep.mubr.bf16.mxu0 0
          %986 = vmatmul.mubr.bf16.gmra.mrb[0].mxu0 %v905
          %v987 = vpop.f32.mrb[0].mxu0
          %v988 = vadd.f32 0.0, %v987
          %v989 = vpop.f32.mrb[0].mxu0
          %v990 = vpop.f32.mrb[0].mxu0
          %v991 = vadd.f32 0.0, %v990
          %v992 = vpop.f32.mrb[0].mxu0
          %993 = vmatprep.mubr.bf16.mxu0 0
          %994 = vmatmul.mubr.bf16.gmra.mrb[0].mxu0 %v908
          %v995 = vpop.f32.mrb[0].mxu0
          %v996 = vadd.f32 0.0, %v995
          %v997 = vpop.f32.mrb[0].mxu0
          %v998 = vpop.f32.mrb[0].mxu0
          %v999 = vadd.f32 0.0, %v998
          %v1000 = vpop.f32.mrb[0].mxu0
          %1001 = vmatprep.mubr.bf16.mxu0 0
          %1002 = vmatmul.mubr.bf16.gmra.mrb[0].mxu0 %v911
          %v1003 = vpop.f32.mrb[0].mxu0
          %v1004 = vadd.f32 0.0, %v1003
          %v1005 = vpop.f32.mrb[0].mxu0
          %v1006 = vpop.f32.mrb[0].mxu0
          %v1007 = vadd.f32 0.0, %v1006
          %v1008 = vpop.f32.mrb[0].mxu0
          %1009 = vdwg.mxu0
          %v1010 = vpack.c.bf16 %v951, %v948
          %v1011 = vpack.c.bf16 %v959, %v956
          %v1012 = vpack.c.bf16 %v967, %v964
          %v1013 = vpack.c.bf16 %v975, %v972
          %v1014 = vpack.c.bf16 %v983, %v980
          %v1015 = vpack.c.bf16 %v991, %v988
          %v1016 = vpack.c.bf16 %v999, %v996
          %v1017 = vpack.c.bf16 %v1007, %v1004
          %s1018 = scalar_lea.vmem [#allocation4], 128
          %1019 = vst [vmem:[%s1018] sm:$0xff] %v1010
          %1020 = vst [vmem:[%s1018 + $0x8] sm:$0xff] %v1011
          %1021 = vst [vmem:[%s1018 + $0x10] sm:$0xff] %v1012
          %1022 = vst [vmem:[%s1018 + $0x18] sm:$0xff] %v1013
          %1023 = vst [vmem:[%s1018 + $0x20] sm:$0xff] %v1014
          %1024 = vst [vmem:[%s1018 + $0x28] sm:$0xff] %v1015
          %1025 = vst [vmem:[%s1018 + $0x30] sm:$0xff] %v1016
          %1026 = vst [vmem:[%s1018 + $0x38] sm:$0xff] %v1017
          %v1027 = vld [vmem:[%s4 + $0x18] sm:$0xf]
          %v1028 = vld [vmem:[%s4 + $0x1c] sm:$0xf]
          %1029 = vrot.lane.b32.xlu0 %v541, 80
          %v1030 = vpop.permute.xlu0 %1029
          %1031 = vrot.lane.b32.xlu0 %v542, 80
          %v1032 = vpop.permute.xlu0 %1031
          %1033 = vrot.lane.b32.xlu0 %v543, 80
          %v1034 = vpop.permute.xlu0 %1033
          %1035 = vrot.lane.b32.xlu0 %v544, 80
          %v1036 = vpop.permute.xlu0 %1035
          %1037 = vrot.lane.b32.xlu0 %v545, 80
          %v1038 = vpop.permute.xlu0 %1037
          %1039 = vrot.lane.b32.xlu0 %v546, 80
          %v1040 = vpop.permute.xlu0 %1039
          %1041 = vrot.lane.b32.xlu0 %v547, 80
          %v1042 = vpop.permute.xlu0 %1041
          %1043 = vrot.lane.b32.xlu0 %v548, 80
          %v1044 = vpop.permute.xlu0 %1043
          %v1047 = vunpack.c.l.b16 %v1027
          %v1048 = vunpack.c.l.b16 %v1028
          %v1049 = vpack.c.b16 %v1048, %v1047
          %v1052 = vsel %vm557, %v1030, 0
          %v1055 = vsel %vm557, %v1032, 0
          %v1058 = vsel %vm557, %v1034, 0
          %v1061 = vsel %vm557, %v1036, 0
          %v1064 = vsel %vm557, %v1038, 0
          %v1067 = vsel %vm557, %v1040, 0
          %v1070 = vsel %vm557, %v1042, 0
          %v1073 = vsel %vm557, %v1044, 0
          %1075 = vmatprep.subr.bf16.mxu0 0
          %1076 = vmatpush1.bf16.msra.mxu0 %v1049
          %1077 = vmatprep.subr.bf16.mxu0 0
          %1078 = vmatpush1.bf16.msra.mxu0 0
          %1079 = vmatprep.subr.bf16.mxu0 0
          %1080 = vmatpush1.bf16.msra.mxu0 0
          %1081 = vmatprep.subr.bf16.mxu0 0
          %1082 = vmatpush1.bf16.msra.mxu0 0
          %1083 = vmatprep.subr.bf16.mxu0 0
          %1084 = vmatpush1.bf16.msra.mxu0 0
          %1085 = vmatprep.subr.bf16.mxu0 0
          %1086 = vmatpush1.bf16.msra.mxu0 0
          %1087 = vmatprep.subr.bf16.mxu0 0
          %1088 = vmatpush1.bf16.msra.mxu0 0
          %1089 = vmatprep.subr.bf16.mxu0 0
          %1090 = vmatpush1.bf16.msra.mxu0 0
          %1091 = vmatprep.subr.bf16.mxu0 0
          %1092 = vmatpush1.bf16.msra.mxu0 0
          %1093 = vmatprep.subr.bf16.mxu0 0
          %1094 = vmatpush1.bf16.msra.mxu0 0
          %1095 = vmatprep.subr.bf16.mxu0 0
          %1096 = vmatpush1.bf16.msra.mxu0 0
          %1097 = vmatprep.subr.bf16.mxu0 0
          %1098 = vmatpush1.bf16.msra.mxu0 0
          %1099 = vmatprep.subr.bf16.mxu0 0
          %1100 = vmatpush1.bf16.msra.mxu0 0
          %1101 = vmatprep.subr.bf16.mxu0 0
          %1102 = vmatpush1.bf16.msra.mxu0 0
          %1103 = vmatprep.subr.bf16.mxu0 0
          %1104 = vmatpush1.bf16.msra.mxu0 0
          %1105 = vmatprep.subr.bf16.mxu0 0
          %1106 = vmatpush1.bf16.msra.mxu0 0
          %1107 = vmatprep.mubr.bf16.mxu0 0
          %1108 = vmatmul.mubr.bf16.gmra.mrb[0].mxu0 %v1052
          %v1109 = vpop.f32.mrb[0].mxu0
          %v1110 = vadd.f32 0.0, %v1109
          %v1111 = vpop.f32.mrb[0].mxu0
          %v1112 = vpop.f32.mrb[0].mxu0
          %v1113 = vadd.f32 0.0, %v1112
          %v1114 = vpop.f32.mrb[0].mxu0
          %1115 = vmatprep.mubr.bf16.mxu0 0
          %1116 = vmatmul.mubr.bf16.gmra.mrb[0].mxu0 %v1055
          %v1117 = vpop.f32.mrb[0].mxu0
          %v1118 = vadd.f32 0.0, %v1117
          %v1119 = vpop.f32.mrb[0].mxu0
          %v1120 = vpop.f32.mrb[0].mxu0
          %v1121 = vadd.f32 0.0, %v1120
          %v1122 = vpop.f32.mrb[0].mxu0
          %1123 = vmatprep.mubr.bf16.mxu0 0
          %1124 = vmatmul.mubr.bf16.gmra.mrb[0].mxu0 %v1058
          %v1125 = vpop.f32.mrb[0].mxu0
          %v1126 = vadd.f32 0.0, %v1125
          %v1127 = vpop.f32.mrb[0].mxu0
          %v1128 = vpop.f32.mrb[0].mxu0
          %v1129 = vadd.f32 0.0, %v1128
          %v1130 = vpop.f32.mrb[0].mxu0
          %1131 = vmatprep.mubr.bf16.mxu0 0
          %1132 = vmatmul.mubr.bf16.gmra.mrb[0].mxu0 %v1061
          %v1133 = vpop.f32.mrb[0].mxu0
          %v1134 = vadd.f32 0.0, %v1133
          %v1135 = vpop.f32.mrb[0].mxu0
          %v1136 = vpop.f32.mrb[0].mxu0
          %v1137 = vadd.f32 0.0, %v1136
          %v1138 = vpop.f32.mrb[0].mxu0
          %1139 = vmatprep.mubr.bf16.mxu0 0
          %1140 = vmatmul.mubr.bf16.gmra.mrb[0].mxu0 %v1064
          %v1141 = vpop.f32.mrb[0].mxu0
          %v1142 = vadd.f32 0.0, %v1141
          %v1143 = vpop.f32.mrb[0].mxu0
          %v1144 = vpop.f32.mrb[0].mxu0
          %v1145 = vadd.f32 0.0, %v1144
          %v1146 = vpop.f32.mrb[0].mxu0
          %1147 = vmatprep.mubr.bf16.mxu0 0
          %1148 = vmatmul.mubr.bf16.gmra.mrb[0].mxu0 %v1067
          %v1149 = vpop.f32.mrb[0].mxu0
          %v1150 = vadd.f32 0.0, %v1149
          %v1151 = vpop.f32.mrb[0].mxu0
          %v1152 = vpop.f32.mrb[0].mxu0
          %v1153 = vadd.f32 0.0, %v1152
          %v1154 = vpop.f32.mrb[0].mxu0
          %1155 = vmatprep.mubr.bf16.mxu0 0
          %1156 = vmatmul.mubr.bf16.gmra.mrb[0].mxu0 %v1070
          %v1157 = vpop.f32.mrb[0].mxu0
          %v1158 = vadd.f32 0.0, %v1157
          %v1159 = vpop.f32.mrb[0].mxu0
          %v1160 = vpop.f32.mrb[0].mxu0
          %v1161 = vadd.f32 0.0, %v1160
          %v1162 = vpop.f32.mrb[0].mxu0
          %1163 = vmatprep.mubr.bf16.mxu0 0
          %1164 = vmatmul.mubr.bf16.gmra.mrb[0].mxu0 %v1073
          %v1165 = vpop.f32.mrb[0].mxu0
          %v1166 = vadd.f32 0.0, %v1165
          %v1167 = vpop.f32.mrb[0].mxu0
          %v1168 = vpop.f32.mrb[0].mxu0
          %v1169 = vadd.f32 0.0, %v1168
          %v1170 = vpop.f32.mrb[0].mxu0
          %1171 = vdwg.mxu0
          %v1172 = vpack.c.bf16 %v1113, %v1110
          %v1173 = vpack.c.bf16 %v1121, %v1118
          %v1174 = vpack.c.bf16 %v1129, %v1126
          %v1175 = vpack.c.bf16 %v1137, %v1134
          %v1176 = vpack.c.bf16 %v1145, %v1142
          %v1177 = vpack.c.bf16 %v1153, %v1150
          %v1178 = vpack.c.bf16 %v1161, %v1158
          %v1179 = vpack.c.bf16 %v1169, %v1166
          %s1180 = scalar_lea.vmem [#allocation4], 192
          %1181 = vst [vmem:[%s1180] sm:$0xff] %v1172
          %1182 = vst [vmem:[%s1180 + $0x8] sm:$0xff] %v1173
          %1183 = vst [vmem:[%s1180 + $0x10] sm:$0xff] %v1174
          %1184 = vst [vmem:[%s1180 + $0x18] sm:$0xff] %v1175
          %1185 = vst [vmem:[%s1180 + $0x20] sm:$0xff] %v1176
          %1186 = vst [vmem:[%s1180 + $0x28] sm:$0xff] %v1177
          %1187 = vst [vmem:[%s1180 + $0x30] sm:$0xff] %v1178
          %1188 = vst [vmem:[%s1180 + $0x38] sm:$0xff] %v1179
          %v1189 = vld [vmem:[%s4 + $0x20] sm:$0xf]
          %v1190 = vld [vmem:[%s4 + $0x24] sm:$0xf]
          %1191 = vrot.lane.b32.xlu0 %v541, 64
          %v1192 = vpop.permute.xlu0 %1191
          %1193 = vrot.lane.b32.xlu0 %v542, 64
          %v1194 = vpop.permute.xlu0 %1193
          %1195 = vrot.lane.b32.xlu0 %v543, 64
          %v1196 = vpop.permute.xlu0 %1195
          %1197 = vrot.lane.b32.xlu0 %v544, 64
          %v1198 = vpop.permute.xlu0 %1197
          %1199 = vrot.lane.b32.xlu0 %v545, 64
          %v1200 = vpop.permute.xlu0 %1199
          %1201 = vrot.lane.b32.xlu0 %v546, 64
          %v1202 = vpop.permute.xlu0 %1201
          %1203 = vrot.lane.b32.xlu0 %v547, 64
          %v1204 = vpop.permute.xlu0 %1203
          %1205 = vrot.lane.b32.xlu0 %v548, 64
          %v1206 = vpop.permute.xlu0 %1205
          %v1209 = vunpack.c.l.b16 %v1189
          %v1210 = vunpack.c.l.b16 %v1190
          %v1211 = vpack.c.b16 %v1210, %v1209
          %v1214 = vsel %vm557, %v1192, 0
          %v1217 = vsel %vm557, %v1194, 0
          %v1220 = vsel %vm557, %v1196, 0
          %v1223 = vsel %vm557, %v1198, 0
          %v1226 = vsel %vm557, %v1200, 0
          %v1229 = vsel %vm557, %v1202, 0
          %v1232 = vsel %vm557, %v1204, 0
          %v1235 = vsel %vm557, %v1206, 0
          %1237 = vmatprep.subr.bf16.mxu0 0
          %1238 = vmatpush1.bf16.msra.mxu0 %v1211
          %1239 = vmatprep.subr.bf16.mxu0 0
          %1240 = vmatpush1.bf16.msra.mxu0 0
          %1241 = vmatprep.subr.bf16.mxu0 0
          %1242 = vmatpush1.bf16.msra.mxu0 0
          %1243 = vmatprep.subr.bf16.mxu0 0
          %1244 = vmatpush1.bf16.msra.mxu0 0
          %1245 = vmatprep.subr.bf16.mxu0 0
          %1246 = vmatpush1.bf16.msra.mxu0 0
          %1247 = vmatprep.subr.bf16.mxu0 0
          %1248 = vmatpush1.bf16.msra.mxu0 0
          %1249 = vmatprep.subr.bf16.mxu0 0
          %1250 = vmatpush1.bf16.msra.mxu0 0
          %1251 = vmatprep.subr.bf16.mxu0 0
          %1252 = vmatpush1.bf16.msra.mxu0 0
          %1253 = vmatprep.subr.bf16.mxu0 0
          %1254 = vmatpush1.bf16.msra.mxu0 0
          %1255 = vmatprep.subr.bf16.mxu0 0
          %1256 = vmatpush1.bf16.msra.mxu0 0
          %1257 = vmatprep.subr.bf16.mxu0 0
          %1258 = vmatpush1.bf16.msra.mxu0 0
          %1259 = vmatprep.subr.bf16.mxu0 0
          %1260 = vmatpush1.bf16.msra.mxu0 0
          %1261 = vmatprep.subr.bf16.mxu0 0
          %1262 = vmatpush1.bf16.msra.mxu0 0
          %1263 = vmatprep.subr.bf16.mxu0 0
          %1264 = vmatpush1.bf16.msra.mxu0 0
          %1265 = vmatprep.subr.bf16.mxu0 0
          %1266 = vmatpush1.bf16.msra.mxu0 0
          %1267 = vmatprep.subr.bf16.mxu0 0
          %1268 = vmatpush1.bf16.msra.mxu0 0
          %1269 = vmatprep.mubr.bf16.mxu0 0
          %1270 = vmatmul.mubr.bf16.gmra.mrb[0].mxu0 %v1214
          %v1271 = vpop.f32.mrb[0].mxu0
          %v1272 = vadd.f32 0.0, %v1271
          %v1273 = vpop.f32.mrb[0].mxu0
          %v1274 = vpop.f32.mrb[0].mxu0
          %v1275 = vadd.f32 0.0, %v1274
          %v1276 = vpop.f32.mrb[0].mxu0
          %1277 = vmatprep.mubr.bf16.mxu0 0
          %1278 = vmatmul.mubr.bf16.gmra.mrb[0].mxu0 %v1217
          %v1279 = vpop.f32.mrb[0].mxu0
          %v1280 = vadd.f32 0.0, %v1279
          %v1281 = vpop.f32.mrb[0].mxu0
          %v1282 = vpop.f32.mrb[0].mxu0
          %v1283 = vadd.f32 0.0, %v1282
          %v1284 = vpop.f32.mrb[0].mxu0
          %1285 = vmatprep.mubr.bf16.mxu0 0
          %1286 = vmatmul.mubr.bf16.gmra.mrb[0].mxu0 %v1220
          %v1287 = vpop.f32.mrb[0].mxu0
          %v1288 = vadd.f32 0.0, %v1287
          %v1289 = vpop.f32.mrb[0].mxu0
          %v1290 = vpop.f32.mrb[0].mxu0
          %v1291 = vadd.f32 0.0, %v1290
          %v1292 = vpop.f32.mrb[0].mxu0
          %1293 = vmatprep.mubr.bf16.mxu0 0
          %1294 = vmatmul.mubr.bf16.gmra.mrb[0].mxu0 %v1223
          %v1295 = vpop.f32.mrb[0].mxu0
          %v1296 = vadd.f32 0.0, %v1295
          %v1297 = vpop.f32.mrb[0].mxu0
          %v1298 = vpop.f32.mrb[0].mxu0
          %v1299 = vadd.f32 0.0, %v1298
          %v1300 = vpop.f32.mrb[0].mxu0
          %1301 = vmatprep.mubr.bf16.mxu0 0
          %1302 = vmatmul.mubr.bf16.gmra.mrb[0].mxu0 %v1226
          %v1303 = vpop.f32.mrb[0].mxu0
          %v1304 = vadd.f32 0.0, %v1303
          %v1305 = vpop.f32.mrb[0].mxu0
          %v1306 = vpop.f32.mrb[0].mxu0
          %v1307 = vadd.f32 0.0, %v1306
          %v1308 = vpop.f32.mrb[0].mxu0
          %1309 = vmatprep.mubr.bf16.mxu0 0
          %1310 = vmatmul.mubr.bf16.gmra.mrb[0].mxu0 %v1229
          %v1311 = vpop.f32.mrb[0].mxu0
          %v1312 = vadd.f32 0.0, %v1311
          %v1313 = vpop.f32.mrb[0].mxu0
          %v1314 = vpop.f32.mrb[0].mxu0
          %v1315 = vadd.f32 0.0, %v1314
          %v1316 = vpop.f32.mrb[0].mxu0
          %1317 = vmatprep.mubr.bf16.mxu0 0
          %1318 = vmatmul.mubr.bf16.gmra.mrb[0].mxu0 %v1232
          %v1319 = vpop.f32.mrb[0].mxu0
          %v1320 = vadd.f32 0.0, %v1319
          %v1321 = vpop.f32.mrb[0].mxu0
          %v1322 = vpop.f32.mrb[0].mxu0
          %v1323 = vadd.f32 0.0, %v1322
          %v1324 = vpop.f32.mrb[0].mxu0
          %1325 = vmatprep.mubr.bf16.mxu0 0
          %1326 = vmatmul.mubr.bf16.gmra.mrb[0].mxu0 %v1235
          %v1327 = vpop.f32.mrb[0].mxu0
          %v1328 = vadd.f32 0.0, %v1327
          %v1329 = vpop.f32.mrb[0].mxu0
          %v1330 = vpop.f32.mrb[0].mxu0
          %v1331 = vadd.f32 0.0, %v1330
          %v1332 = vpop.f32.mrb[0].mxu0
          %1333 = vdwg.mxu0
          %v1334 = vpack.c.bf16 %v1275, %v1272
          %v1335 = vpack.c.bf16 %v1283, %v1280
          %v1336 = vpack.c.bf16 %v1291, %v1288
          %v1337 = vpack.c.bf16 %v1299, %v1296
          %v1338 = vpack.c.bf16 %v1307, %v1304
          %v1339 = vpack.c.bf16 %v1315, %v1312
          %v1340 = vpack.c.bf16 %v1323, %v1320
          %v1341 = vpack.c.bf16 %v1331, %v1328
          %s1342 = scalar_lea.vmem [#allocation4], 256
          %1343 = vst [vmem:[%s1342] sm:$0xff] %v1334
          %1344 = vst [vmem:[%s1342 + $0x8] sm:$0xff] %v1335
          %1345 = vst [vmem:[%s1342 + $0x10] sm:$0xff] %v1336
          %1346 = vst [vmem:[%s1342 + $0x18] sm:$0xff] %v1337
          %1347 = vst [vmem:[%s1342 + $0x20] sm:$0xff] %v1338
          %1348 = vst [vmem:[%s1342 + $0x28] sm:$0xff] %v1339
          %1349 = vst [vmem:[%s1342 + $0x30] sm:$0xff] %v1340
          %1350 = vst [vmem:[%s1342 + $0x38] sm:$0xff] %v1341
          %v1351 = vld [vmem:[%s4 + $0x28] sm:$0xf]
          %v1352 = vld [vmem:[%s4 + $0x2c] sm:$0xf]
          %1353 = vrot.lane.b32.xlu0 %v541, 48
          %v1354 = vpop.permute.xlu0 %1353
          %1355 = vrot.lane.b32.xlu0 %v542, 48
          %v1356 = vpop.permute.xlu0 %1355
          %1357 = vrot.lane.b32.xlu0 %v543, 48
          %v1358 = vpop.permute.xlu0 %1357
          %1359 = vrot.lane.b32.xlu0 %v544, 48
          %v1360 = vpop.permute.xlu0 %1359
          %1361 = vrot.lane.b32.xlu0 %v545, 48
          %v1362 = vpop.permute.xlu0 %1361
          %1363 = vrot.lane.b32.xlu0 %v546, 48
          %v1364 = vpop.permute.xlu0 %1363
          %1365 = vrot.lane.b32.xlu0 %v547, 48
          %v1366 = vpop.permute.xlu0 %1365
          %1367 = vrot.lane.b32.xlu0 %v548, 48
          %v1368 = vpop.permute.xlu0 %1367
          %v1371 = vunpack.c.l.b16 %v1351
          %v1372 = vunpack.c.l.b16 %v1352
          %v1373 = vpack.c.b16 %v1372, %v1371
          %v1376 = vsel %vm557, %v1354, 0
          %v1379 = vsel %vm557, %v1356, 0
          %v1382 = vsel %vm557, %v1358, 0
          %v1385 = vsel %vm557, %v1360, 0
          %v1388 = vsel %vm557, %v1362, 0
          %v1391 = vsel %vm557, %v1364, 0
          %v1394 = vsel %vm557, %v1366, 0
          %v1397 = vsel %vm557, %v1368, 0
          %1399 = vmatprep.subr.bf16.mxu0 0
          %1400 = vmatpush1.bf16.msra.mxu0 %v1373
          %1401 = vmatprep.subr.bf16.mxu0 0
          %1402 = vmatpush1.bf16.msra.mxu0 0
          %1403 = vmatprep.subr.bf16.mxu0 0
          %1404 = vmatpush1.bf16.msra.mxu0 0
          %1405 = vmatprep.subr.bf16.mxu0 0
          %1406 = vmatpush1.bf16.msra.mxu0 0
          %1407 = vmatprep.subr.bf16.mxu0 0
          %1408 = vmatpush1.bf16.msra.mxu0 0
          %1409 = vmatprep.subr.bf16.mxu0 0
          %1410 = vmatpush1.bf16.msra.mxu0 0
          %1411 = vmatprep.subr.bf16.mxu0 0
          %1412 = vmatpush1.bf16.msra.mxu0 0
          %1413 = vmatprep.subr.bf16.mxu0 0
          %1414 = vmatpush1.bf16.msra.mxu0 0
          %1415 = vmatprep.subr.bf16.mxu0 0
          %1416 = vmatpush1.bf16.msra.mxu0 0
          %1417 = vmatprep.subr.bf16.mxu0 0
          %1418 = vmatpush1.bf16.msra.mxu0 0
          %1419 = vmatprep.subr.bf16.mxu0 0
          %1420 = vmatpush1.bf16.msra.mxu0 0
          %1421 = vmatprep.subr.bf16.mxu0 0
          %1422 = vmatpush1.bf16.msra.mxu0 0
          %1423 = vmatprep.subr.bf16.mxu0 0
          %1424 = vmatpush1.bf16.msra.mxu0 0
          %1425 = vmatprep.subr.bf16.mxu0 0
          %1426 = vmatpush1.bf16.msra.mxu0 0
          %1427 = vmatprep.subr.bf16.mxu0 0
          %1428 = vmatpush1.bf16.msra.mxu0 0
          %1429 = vmatprep.subr.bf16.mxu0 0
          %1430 = vmatpush1.bf16.msra.mxu0 0
          %1431 = vmatprep.mubr.bf16.mxu0 0
          %1432 = vmatmul.mubr.bf16.gmra.mrb[0].mxu0 %v1376
          %v1433 = vpop.f32.mrb[0].mxu0
          %v1434 = vadd.f32 0.0, %v1433
          %v1435 = vpop.f32.mrb[0].mxu0
          %v1436 = vpop.f32.mrb[0].mxu0
          %v1437 = vadd.f32 0.0, %v1436
          %v1438 = vpop.f32.mrb[0].mxu0
          %1439 = vmatprep.mubr.bf16.mxu0 0
          %1440 = vmatmul.mubr.bf16.gmra.mrb[0].mxu0 %v1379
          %v1441 = vpop.f32.mrb[0].mxu0
          %v1442 = vadd.f32 0.0, %v1441
          %v1443 = vpop.f32.mrb[0].mxu0
          %v1444 = vpop.f32.mrb[0].mxu0
          %v1445 = vadd.f32 0.0, %v1444
          %v1446 = vpop.f32.mrb[0].mxu0
          %1447 = vmatprep.mubr.bf16.mxu0 0
          %1448 = vmatmul.mubr.bf16.gmra.mrb[0].mxu0 %v1382
          %v1449 = vpop.f32.mrb[0].mxu0
          %v1450 = vadd.f32 0.0, %v1449
          %v1451 = vpop.f32.mrb[0].mxu0
          %v1452 = vpop.f32.mrb[0].mxu0
          %v1453 = vadd.f32 0.0, %v1452
          %v1454 = vpop.f32.mrb[0].mxu0
          %1455 = vmatprep.mubr.bf16.mxu0 0
          %1456 = vmatmul.mubr.bf16.gmra.mrb[0].mxu0 %v1385
          %v1457 = vpop.f32.mrb[0].mxu0
          %v1458 = vadd.f32 0.0, %v1457
          %v1459 = vpop.f32.mrb[0].mxu0
          %v1460 = vpop.f32.mrb[0].mxu0
          %v1461 = vadd.f32 0.0, %v1460
          %v1462 = vpop.f32.mrb[0].mxu0
          %1463 = vmatprep.mubr.bf16.mxu0 0
          %1464 = vmatmul.mubr.bf16.gmra.mrb[0].mxu0 %v1388
          %v1465 = vpop.f32.mrb[0].mxu0
          %v1466 = vadd.f32 0.0, %v1465
          %v1467 = vpop.f32.mrb[0].mxu0
          %v1468 = vpop.f32.mrb[0].mxu0
          %v1469 = vadd.f32 0.0, %v1468
          %v1470 = vpop.f32.mrb[0].mxu0
          %1471 = vmatprep.mubr.bf16.mxu0 0
          %1472 = vmatmul.mubr.bf16.gmra.mrb[0].mxu0 %v1391
          %v1473 = vpop.f32.mrb[0].mxu0
          %v1474 = vadd.f32 0.0, %v1473
          %v1475 = vpop.f32.mrb[0].mxu0
          %v1476 = vpop.f32.mrb[0].mxu0
          %v1477 = vadd.f32 0.0, %v1476
          %v1478 = vpop.f32.mrb[0].mxu0
          %1479 = vmatprep.mubr.bf16.mxu0 0
          %1480 = vmatmul.mubr.bf16.gmra.mrb[0].mxu0 %v1394
          %v1481 = vpop.f32.mrb[0].mxu0
          %v1482 = vadd.f32 0.0, %v1481
          %v1483 = vpop.f32.mrb[0].mxu0
          %v1484 = vpop.f32.mrb[0].mxu0
          %v1485 = vadd.f32 0.0, %v1484
          %v1486 = vpop.f32.mrb[0].mxu0
          %1487 = vmatprep.mubr.bf16.mxu0 0
          %1488 = vmatmul.mubr.bf16.gmra.mrb[0].mxu0 %v1397
          %v1489 = vpop.f32.mrb[0].mxu0
          %v1490 = vadd.f32 0.0, %v1489
          %v1491 = vpop.f32.mrb[0].mxu0
          %v1492 = vpop.f32.mrb[0].mxu0
          %v1493 = vadd.f32 0.0, %v1492
          %v1494 = vpop.f32.mrb[0].mxu0
          %1495 = vdwg.mxu0
          %v1496 = vpack.c.bf16 %v1437, %v1434
          %v1497 = vpack.c.bf16 %v1445, %v1442
          %v1498 = vpack.c.bf16 %v1453, %v1450
          %v1499 = vpack.c.bf16 %v1461, %v1458
          %v1500 = vpack.c.bf16 %v1469, %v1466
          %v1501 = vpack.c.bf16 %v1477, %v1474
          %v1502 = vpack.c.bf16 %v1485, %v1482
          %v1503 = vpack.c.bf16 %v1493, %v1490
          %s1504 = scalar_lea.vmem [#allocation4], 320
          %1505 = vst [vmem:[%s1504] sm:$0xff] %v1496
          %1506 = vst [vmem:[%s1504 + $0x8] sm:$0xff] %v1497
          %1507 = vst [vmem:[%s1504 + $0x10] sm:$0xff] %v1498
          %1508 = vst [vmem:[%s1504 + $0x18] sm:$0xff] %v1499
          %1509 = vst [vmem:[%s1504 + $0x20] sm:$0xff] %v1500
          %1510 = vst [vmem:[%s1504 + $0x28] sm:$0xff] %v1501
          %1511 = vst [vmem:[%s1504 + $0x30] sm:$0xff] %v1502
          %1512 = vst [vmem:[%s1504 + $0x38] sm:$0xff] %v1503
          %v1513 = vld [vmem:[%s4 + $0x30] sm:$0xf]
          %v1514 = vld [vmem:[%s4 + $0x34] sm:$0xf]
          %1515 = vrot.lane.b32.xlu0 %v541, 32
          %v1516 = vpop.permute.xlu0 %1515
          %1517 = vrot.lane.b32.xlu0 %v542, 32
          %v1518 = vpop.permute.xlu0 %1517
          %1519 = vrot.lane.b32.xlu0 %v543, 32
          %v1520 = vpop.permute.xlu0 %1519
          %1521 = vrot.lane.b32.xlu0 %v544, 32
          %v1522 = vpop.permute.xlu0 %1521
          %1523 = vrot.lane.b32.xlu0 %v545, 32
          %v1524 = vpop.permute.xlu0 %1523
          %1525 = vrot.lane.b32.xlu0 %v546, 32
          %v1526 = vpop.permute.xlu0 %1525
          %1527 = vrot.lane.b32.xlu0 %v547, 32
          %v1528 = vpop.permute.xlu0 %1527
          %1529 = vrot.lane.b32.xlu0 %v548, 32
          %v1530 = vpop.permute.xlu0 %1529
          %v1533 = vunpack.c.l.b16 %v1513
          %v1534 = vunpack.c.l.b16 %v1514
          %v1535 = vpack.c.b16 %v1534, %v1533
          %v1538 = vsel %vm557, %v1516, 0
          %v1541 = vsel %vm557, %v1518, 0
          %v1544 = vsel %vm557, %v1520, 0
          %v1547 = vsel %vm557, %v1522, 0
          %v1550 = vsel %vm557, %v1524, 0
          %v1553 = vsel %vm557, %v1526, 0
          %v1556 = vsel %vm557, %v1528, 0
          %v1559 = vsel %vm557, %v1530, 0
          %1561 = vmatprep.subr.bf16.mxu0 0
          %1562 = vmatpush1.bf16.msra.mxu0 %v1535
          %1563 = vmatprep.subr.bf16.mxu0 0
          %1564 = vmatpush1.bf16.msra.mxu0 0
          %1565 = vmatprep.subr.bf16.mxu0 0
          %1566 = vmatpush1.bf16.msra.mxu0 0
          %1567 = vmatprep.subr.bf16.mxu0 0
          %1568 = vmatpush1.bf16.msra.mxu0 0
          %1569 = vmatprep.subr.bf16.mxu0 0
          %1570 = vmatpush1.bf16.msra.mxu0 0
          %1571 = vmatprep.subr.bf16.mxu0 0
          %1572 = vmatpush1.bf16.msra.mxu0 0
          %1573 = vmatprep.subr.bf16.mxu0 0
          %1574 = vmatpush1.bf16.msra.mxu0 0
          %1575 = vmatprep.subr.bf16.mxu0 0
          %1576 = vmatpush1.bf16.msra.mxu0 0
          %1577 = vmatprep.subr.bf16.mxu0 0
          %1578 = vmatpush1.bf16.msra.mxu0 0
          %1579 = vmatprep.subr.bf16.mxu0 0
          %1580 = vmatpush1.bf16.msra.mxu0 0
          %1581 = vmatprep.subr.bf16.mxu0 0
          %1582 = vmatpush1.bf16.msra.mxu0 0
          %1583 = vmatprep.subr.bf16.mxu0 0
          %1584 = vmatpush1.bf16.msra.mxu0 0
          %1585 = vmatprep.subr.bf16.mxu0 0
          %1586 = vmatpush1.bf16.msra.mxu0 0
          %1587 = vmatprep.subr.bf16.mxu0 0
          %1588 = vmatpush1.bf16.msra.mxu0 0
          %1589 = vmatprep.subr.bf16.mxu0 0
          %1590 = vmatpush1.bf16.msra.mxu0 0
          %1591 = vmatprep.subr.bf16.mxu0 0
          %1592 = vmatpush1.bf16.msra.mxu0 0
          %1593 = vmatprep.mubr.bf16.mxu0 0
          %1594 = vmatmul.mubr.bf16.gmra.mrb[0].mxu0 %v1538
          %v1595 = vpop.f32.mrb[0].mxu0
          %v1596 = vadd.f32 0.0, %v1595
          %v1597 = vpop.f32.mrb[0].mxu0
          %v1598 = vpop.f32.mrb[0].mxu0
          %v1599 = vadd.f32 0.0, %v1598
          %v1600 = vpop.f32.mrb[0].mxu0
          %1601 = vmatprep.mubr.bf16.mxu0 0
          %1602 = vmatmul.mubr.bf16.gmra.mrb[0].mxu0 %v1541
          %v1603 = vpop.f32.mrb[0].mxu0
          %v1604 = vadd.f32 0.0, %v1603
          %v1605 = vpop.f32.mrb[0].mxu0
          %v1606 = vpop.f32.mrb[0].mxu0
          %v1607 = vadd.f32 0.0, %v1606
          %v1608 = vpop.f32.mrb[0].mxu0
          %1609 = vmatprep.mubr.bf16.mxu0 0
          %1610 = vmatmul.mubr.bf16.gmra.mrb[0].mxu0 %v1544
          %v1611 = vpop.f32.mrb[0].mxu0
          %v1612 = vadd.f32 0.0, %v1611
          %v1613 = vpop.f32.mrb[0].mxu0
          %v1614 = vpop.f32.mrb[0].mxu0
          %v1615 = vadd.f32 0.0, %v1614
          %v1616 = vpop.f32.mrb[0].mxu0
          %1617 = vmatprep.mubr.bf16.mxu0 0
          %1618 = vmatmul.mubr.bf16.gmra.mrb[0].mxu0 %v1547
          %v1619 = vpop.f32.mrb[0].mxu0
          %v1620 = vadd.f32 0.0, %v1619
          %v1621 = vpop.f32.mrb[0].mxu0
          %v1622 = vpop.f32.mrb[0].mxu0
          %v1623 = vadd.f32 0.0, %v1622
          %v1624 = vpop.f32.mrb[0].mxu0
          %1625 = vmatprep.mubr.bf16.mxu0 0
          %1626 = vmatmul.mubr.bf16.gmra.mrb[0].mxu0 %v1550
          %v1627 = vpop.f32.mrb[0].mxu0
          %v1628 = vadd.f32 0.0, %v1627
          %v1629 = vpop.f32.mrb[0].mxu0
          %v1630 = vpop.f32.mrb[0].mxu0
          %v1631 = vadd.f32 0.0, %v1630
          %v1632 = vpop.f32.mrb[0].mxu0
          %1633 = vmatprep.mubr.bf16.mxu0 0
          %1634 = vmatmul.mubr.bf16.gmra.mrb[0].mxu0 %v1553
          %v1635 = vpop.f32.mrb[0].mxu0
          %v1636 = vadd.f32 0.0, %v1635
          %v1637 = vpop.f32.mrb[0].mxu0
          %v1638 = vpop.f32.mrb[0].mxu0
          %v1639 = vadd.f32 0.0, %v1638
          %v1640 = vpop.f32.mrb[0].mxu0
          %1641 = vmatprep.mubr.bf16.mxu0 0
          %1642 = vmatmul.mubr.bf16.gmra.mrb[0].mxu0 %v1556
          %v1643 = vpop.f32.mrb[0].mxu0
          %v1644 = vadd.f32 0.0, %v1643
          %v1645 = vpop.f32.mrb[0].mxu0
          %v1646 = vpop.f32.mrb[0].mxu0
          %v1647 = vadd.f32 0.0, %v1646
          %v1648 = vpop.f32.mrb[0].mxu0
          %1649 = vmatprep.mubr.bf16.mxu0 0
          %1650 = vmatmul.mubr.bf16.gmra.mrb[0].mxu0 %v1559
          %v1651 = vpop.f32.mrb[0].mxu0
          %v1652 = vadd.f32 0.0, %v1651
          %v1653 = vpop.f32.mrb[0].mxu0
          %v1654 = vpop.f32.mrb[0].mxu0
          %v1655 = vadd.f32 0.0, %v1654
          %v1656 = vpop.f32.mrb[0].mxu0
          %1657 = vdwg.mxu0
          %v1658 = vpack.c.bf16 %v1599, %v1596
          %v1659 = vpack.c.bf16 %v1607, %v1604
          %v1660 = vpack.c.bf16 %v1615, %v1612
          %v1661 = vpack.c.bf16 %v1623, %v1620
          %v1662 = vpack.c.bf16 %v1631, %v1628
          %v1663 = vpack.c.bf16 %v1639, %v1636
          %v1664 = vpack.c.bf16 %v1647, %v1644
          %v1665 = vpack.c.bf16 %v1655, %v1652
          %s1666 = scalar_lea.vmem [#allocation4], 384
          %1667 = vst [vmem:[%s1666] sm:$0xff] %v1658
          %1668 = vst [vmem:[%s1666 + $0x8] sm:$0xff] %v1659
          %1669 = vst [vmem:[%s1666 + $0x10] sm:$0xff] %v1660
          %1670 = vst [vmem:[%s1666 + $0x18] sm:$0xff] %v1661
          %1671 = vst [vmem:[%s1666 + $0x20] sm:$0xff] %v1662
          %1672 = vst [vmem:[%s1666 + $0x28] sm:$0xff] %v1663
          %1673 = vst [vmem:[%s1666 + $0x30] sm:$0xff] %v1664
          %1674 = vst [vmem:[%s1666 + $0x38] sm:$0xff] %v1665
          %v1675 = vld [vmem:[%s4 + $0x38] sm:$0xf]
          %v1676 = vld [vmem:[%s4 + $0x3c] sm:$0xf]
          %1677 = vrot.lane.b32.xlu0 %v541, 16
          %v1678 = vpop.permute.xlu0 %1677
          %1679 = vrot.lane.b32.xlu0 %v542, 16
          %v1680 = vpop.permute.xlu0 %1679
          %1681 = vrot.lane.b32.xlu0 %v543, 16
          %v1682 = vpop.permute.xlu0 %1681
          %1683 = vrot.lane.b32.xlu0 %v544, 16
          %v1684 = vpop.permute.xlu0 %1683
          %1685 = vrot.lane.b32.xlu0 %v545, 16
          %v1686 = vpop.permute.xlu0 %1685
          %1687 = vrot.lane.b32.xlu0 %v546, 16
          %v1688 = vpop.permute.xlu0 %1687
          %1689 = vrot.lane.b32.xlu0 %v547, 16
          %v1690 = vpop.permute.xlu0 %1689
          %1691 = vrot.lane.b32.xlu0 %v548, 16
          %v1692 = vpop.permute.xlu0 %1691
          %v1695 = vunpack.c.l.b16 %v1675
          %v1696 = vunpack.c.l.b16 %v1676
          %v1697 = vpack.c.b16 %v1696, %v1695
          %v1700 = vsel %vm557, %v1678, 0
          %v1703 = vsel %vm557, %v1680, 0
          %v1706 = vsel %vm557, %v1682, 0
          %v1709 = vsel %vm557, %v1684, 0
          %v1712 = vsel %vm557, %v1686, 0
          %v1715 = vsel %vm557, %v1688, 0
          %v1718 = vsel %vm557, %v1690, 0
          %v1721 = vsel %vm557, %v1692, 0
          %1723 = vmatprep.subr.bf16.mxu0 0
          %1724 = vmatpush1.bf16.msra.mxu0 %v1697
          %1725 = vmatprep.subr.bf16.mxu0 0
          %1726 = vmatpush1.bf16.msra.mxu0 0
          %1727 = vmatprep.subr.bf16.mxu0 0
          %1728 = vmatpush1.bf16.msra.mxu0 0
          %1729 = vmatprep.subr.bf16.mxu0 0
          %1730 = vmatpush1.bf16.msra.mxu0 0
          %1731 = vmatprep.subr.bf16.mxu0 0
          %1732 = vmatpush1.bf16.msra.mxu0 0
          %1733 = vmatprep.subr.bf16.mxu0 0
          %1734 = vmatpush1.bf16.msra.mxu0 0
          %1735 = vmatprep.subr.bf16.mxu0 0
          %1736 = vmatpush1.bf16.msra.mxu0 0
          %1737 = vmatprep.subr.bf16.mxu0 0
          %1738 = vmatpush1.bf16.msra.mxu0 0
          %1739 = vmatprep.subr.bf16.mxu0 0
          %1740 = vmatpush1.bf16.msra.mxu0 0
          %1741 = vmatprep.subr.bf16.mxu0 0
          %1742 = vmatpush1.bf16.msra.mxu0 0
          %1743 = vmatprep.subr.bf16.mxu0 0
          %1744 = vmatpush1.bf16.msra.mxu0 0
          %1745 = vmatprep.subr.bf16.mxu0 0
          %1746 = vmatpush1.bf16.msra.mxu0 0
          %1747 = vmatprep.subr.bf16.mxu0 0
          %1748 = vmatpush1.bf16.msra.mxu0 0
          %1749 = vmatprep.subr.bf16.mxu0 0
          %1750 = vmatpush1.bf16.msra.mxu0 0
          %1751 = vmatprep.subr.bf16.mxu0 0
          %1752 = vmatpush1.bf16.msra.mxu0 0
          %1753 = vmatprep.subr.bf16.mxu0 0
          %1754 = vmatpush1.bf16.msra.mxu0 0
          %1755 = vmatprep.mubr.bf16.mxu0 0
          %1756 = vmatmul.mubr.bf16.gmra.mrb[0].mxu0 %v1700
          %v1757 = vpop.f32.mrb[0].mxu0
          %v1758 = vadd.f32 0.0, %v1757
          %v1759 = vpop.f32.mrb[0].mxu0
          %v1760 = vpop.f32.mrb[0].mxu0
          %v1761 = vadd.f32 0.0, %v1760
          %v1762 = vpop.f32.mrb[0].mxu0
          %1763 = vmatprep.mubr.bf16.mxu0 0
          %1764 = vmatmul.mubr.bf16.gmra.mrb[0].mxu0 %v1703
          %v1765 = vpop.f32.mrb[0].mxu0
          %v1766 = vadd.f32 0.0, %v1765
          %v1767 = vpop.f32.mrb[0].mxu0
          %v1768 = vpop.f32.mrb[0].mxu0
          %v1769 = vadd.f32 0.0, %v1768
          %v1770 = vpop.f32.mrb[0].mxu0
          %1771 = vmatprep.mubr.bf16.mxu0 0
          %1772 = vmatmul.mubr.bf16.gmra.mrb[0].mxu0 %v1706
          %v1773 = vpop.f32.mrb[0].mxu0
          %v1774 = vadd.f32 0.0, %v1773
          %v1775 = vpop.f32.mrb[0].mxu0
          %v1776 = vpop.f32.mrb[0].mxu0
          %v1777 = vadd.f32 0.0, %v1776
          %v1778 = vpop.f32.mrb[0].mxu0
          %1779 = vmatprep.mubr.bf16.mxu0 0
          %1780 = vmatmul.mubr.bf16.gmra.mrb[0].mxu0 %v1709
          %v1781 = vpop.f32.mrb[0].mxu0
          %v1782 = vadd.f32 0.0, %v1781
          %v1783 = vpop.f32.mrb[0].mxu0
          %v1784 = vpop.f32.mrb[0].mxu0
          %v1785 = vadd.f32 0.0, %v1784
          %v1786 = vpop.f32.mrb[0].mxu0
          %1787 = vmatprep.mubr.bf16.mxu0 0
          %1788 = vmatmul.mubr.bf16.gmra.mrb[0].mxu0 %v1712
          %v1789 = vpop.f32.mrb[0].mxu0
          %v1790 = vadd.f32 0.0, %v1789
          %v1791 = vpop.f32.mrb[0].mxu0
          %v1792 = vpop.f32.mrb[0].mxu0
          %v1793 = vadd.f32 0.0, %v1792
          %v1794 = vpop.f32.mrb[0].mxu0
          %1795 = vmatprep.mubr.bf16.mxu0 0
          %1796 = vmatmul.mubr.bf16.gmra.mrb[0].mxu0 %v1715
          %v1797 = vpop.f32.mrb[0].mxu0
          %v1798 = vadd.f32 0.0, %v1797
          %v1799 = vpop.f32.mrb[0].mxu0
          %v1800 = vpop.f32.mrb[0].mxu0
          %v1801 = vadd.f32 0.0, %v1800
          %v1802 = vpop.f32.mrb[0].mxu0
          %1803 = vmatprep.mubr.bf16.mxu0 0
          %1804 = vmatmul.mubr.bf16.gmra.mrb[0].mxu0 %v1718
          %v1805 = vpop.f32.mrb[0].mxu0
          %v1806 = vadd.f32 0.0, %v1805
          %v1807 = vpop.f32.mrb[0].mxu0
          %v1808 = vpop.f32.mrb[0].mxu0
          %v1809 = vadd.f32 0.0, %v1808
          %v1810 = vpop.f32.mrb[0].mxu0
          %1811 = vmatprep.mubr.bf16.mxu0 0
          %1812 = vmatmul.mubr.bf16.gmra.mrb[0].mxu0 %v1721
          %v1813 = vpop.f32.mrb[0].mxu0
          %v1814 = vadd.f32 0.0, %v1813
          %v1815 = vpop.f32.mrb[0].mxu0
          %v1816 = vpop.f32.mrb[0].mxu0
          %v1817 = vadd.f32 0.0, %v1816
          %v1818 = vpop.f32.mrb[0].mxu0
          %1819 = vdwg.mxu0
          %v1820 = vpack.c.bf16 %v1761, %v1758
          %v1821 = vpack.c.bf16 %v1769, %v1766
          %v1822 = vpack.c.bf16 %v1777, %v1774
          %v1823 = vpack.c.bf16 %v1785, %v1782
          %v1824 = vpack.c.bf16 %v1793, %v1790
          %v1825 = vpack.c.bf16 %v1801, %v1798
          %v1826 = vpack.c.bf16 %v1809, %v1806
          %v1827 = vpack.c.bf16 %v1817, %v1814
          %s1828 = scalar_lea.vmem [#allocation4], 448
          %1829 = vst [vmem:[%s1828] sm:$0xff] %v1820
          %1830 = vst [vmem:[%s1828 + $0x8] sm:$0xff] %v1821
          %1831 = vst [vmem:[%s1828 + $0x10] sm:$0xff] %v1822
          %1832 = vst [vmem:[%s1828 + $0x18] sm:$0xff] %v1823
          %1833 = vst [vmem:[%s1828 + $0x20] sm:$0xff] %v1824
          %1834 = vst [vmem:[%s1828 + $0x28] sm:$0xff] %v1825
          %1835 = vst [vmem:[%s1828 + $0x30] sm:$0xff] %v1826
          %1836 = vst [vmem:[%s1828 + $0x38] sm:$0xff] %v1827
        $region52: #{tpu_custom_call.1} parent=43 // pred_fallthru
          _
        %v1837 = vld [vmem:[%s269] sm:$0xff]
        %v1838 = vld [vmem:[%s269 + $0x8] sm:$0xff]
        %v1839 = vld [vmem:[%s269 + $0x10] sm:$0xff]
        %v1840 = vld [vmem:[%s269 + $0x18] sm:$0xff]
        %v1841 = vld [vmem:[%s269 + $0x20] sm:$0xff]
        %v1842 = vld [vmem:[%s269 + $0x28] sm:$0xff]
        %v1843 = vld [vmem:[%s269 + $0x30] sm:$0xff]
        %v1844 = vld [vmem:[%s269 + $0x38] sm:$0xff]
        %v1845 = vld [vmem:[%s269 + $0x40] sm:$0xff]
        %v1846 = vld [vmem:[%s269 + $0x48] sm:$0xff]
        %v1847 = vld [vmem:[%s269 + $0x50] sm:$0xff]
        %v1848 = vld [vmem:[%s269 + $0x58] sm:$0xff]
        %v1849 = vld [vmem:[%s269 + $0x60] sm:$0xff]
        %v1850 = vld [vmem:[%s269 + $0x68] sm:$0xff]
        %v1851 = vld [vmem:[%s269 + $0x70] sm:$0xff]
        %v1852 = vld [vmem:[%s269 + $0x78] sm:$0xff]
        %v1853 = vld [vmem:[%s269 + $0x80] sm:$0xff]
        %v1854 = vld [vmem:[%s269 + $0x88] sm:$0xff]
        %v1855 = vld [vmem:[%s269 + $0x90] sm:$0xff]
        %v1856 = vld [vmem:[%s269 + $0x98] sm:$0xff]
        %v1857 = vld [vmem:[%s269 + $0xa0] sm:$0xff]
        %v1858 = vld [vmem:[%s269 + $0xa8] sm:$0xff]
        %v1859 = vld [vmem:[%s269 + $0xb0] sm:$0xff]
        %v1860 = vld [vmem:[%s269 + $0xb8] sm:$0xff]
        %v1861 = vld [vmem:[%s269 + $0xc0] sm:$0xff]
        %v1862 = vld [vmem:[%s269 + $0xc8] sm:$0xff]
        %v1863 = vld [vmem:[%s269 + $0xd0] sm:$0xff]
        %v1864 = vld [vmem:[%s269 + $0xd8] sm:$0xff]
        %v1865 = vld [vmem:[%s269 + $0xe0] sm:$0xff]
        %v1866 = vld [vmem:[%s269 + $0xe8] sm:$0xff]
        %v1867 = vld [vmem:[%s269 + $0xf0] sm:$0xff]
        %v1868 = vld [vmem:[%s269 + $0xf8] sm:$0xff]
        %v1869 = vpack.c.bf16 %v1838, %v1837
        %v1870 = vpack.c.bf16 %v1840, %v1839
        %v1871 = vpack.c.bf16 %v1842, %v1841
        %v1872 = vpack.c.bf16 %v1844, %v1843
        %v1873 = vpack.c.bf16 %v1846, %v1845
        %v1874 = vpack.c.bf16 %v1848, %v1847
        %v1875 = vpack.c.bf16 %v1850, %v1849
        %v1876 = vpack.c.bf16 %v1852, %v1851
        %v1877 = vpack.c.bf16 %v1854, %v1853
        %v1878 = vpack.c.bf16 %v1856, %v1855
        %v1879 = vpack.c.bf16 %v1858, %v1857
        %v1880 = vpack.c.bf16 %v1860, %v1859
        %v1881 = vpack.c.bf16 %v1862, %v1861
        %v1882 = vpack.c.bf16 %v1864, %v1863
        %v1883 = vpack.c.bf16 %v1866, %v1865
        %v1884 = vpack.c.bf16 %v1868, %v1867
        %v1885 = vld [vmem:[%s2] sm:$0xf]
        %v1886 = vld [vmem:[%s2 + $0x4] sm:$0xf]
        %v1887 = vld [vmem:[%s2 + $0x8] sm:$0xf]
        %v1888 = vld [vmem:[%s2 + $0xc] sm:$0xf]
        %v1889 = vld [vmem:[%s2 + $0x10] sm:$0xf]
        %v1890 = vld [vmem:[%s2 + $0x14] sm:$0xf]
        %v1891 = vld [vmem:[%s2 + $0x18] sm:$0xf]
        %v1892 = vld [vmem:[%s2 + $0x1c] sm:$0xf]
        %v1893 = vld [vmem:[%s2 + $0x20] sm:$0xf]
        %v1894 = vld [vmem:[%s2 + $0x24] sm:$0xf]
        %v1895 = vld [vmem:[%s2 + $0x28] sm:$0xf]
        %v1896 = vld [vmem:[%s2 + $0x2c] sm:$0xf]
        %v1897 = vld [vmem:[%s2 + $0x30] sm:$0xf]
        %v1898 = vld [vmem:[%s2 + $0x34] sm:$0xf]
        %v1899 = vld [vmem:[%s2 + $0x38] sm:$0xf]
        %v1900 = vld [vmem:[%s2 + $0x3c] sm:$0xf]
        %v1917 = vunpack.c.l.b16 %v1885
        %v1918 = vunpack.c.l.b16 %v1886
        %v1919 = vunpack.c.l.b16 %v1887
        %v1920 = vunpack.c.l.b16 %v1888
        %v1921 = vunpack.c.l.b16 %v1889
        %v1922 = vunpack.c.l.b16 %v1890
        %v1923 = vunpack.c.l.b16 %v1891
        %v1924 = vunpack.c.l.b16 %v1892
        %v1925 = vunpack.c.l.b16 %v1893
        %v1926 = vunpack.c.l.b16 %v1894
        %v1927 = vunpack.c.l.b16 %v1895
        %v1928 = vunpack.c.l.b16 %v1896
        %v1929 = vunpack.c.l.b16 %v1897
        %v1930 = vunpack.c.l.b16 %v1898
        %v1931 = vunpack.c.l.b16 %v1899
        %v1932 = vunpack.c.l.b16 %v1900
        %v1933 = vpack.c.b16 %v1918, %v1917
        %v1934 = vpack.c.b16 %v1920, %v1919
        %v1935 = vpack.c.b16 %v1922, %v1921
        %v1936 = vpack.c.b16 %v1924, %v1923
        %v1937 = vpack.c.b16 %v1926, %v1925
        %v1938 = vpack.c.b16 %v1928, %v1927
        %v1939 = vpack.c.b16 %v1930, %v1929
        %v1940 = vpack.c.b16 %v1932, %v1931
        %1949 = vmatprep.subr.bf16.mxu0 0
        %1950 = vmatpush1.bf16.msra.mxu0 %v1933
        %1951 = vmatprep.subr.bf16.mxu0 0
        %1952 = vmatpush1.bf16.msra.mxu0 %v1934
        %1953 = vmatprep.subr.bf16.mxu0 0
        %1954 = vmatpush1.bf16.msra.mxu0 %v1935
        %1955 = vmatprep.subr.bf16.mxu0 0
        %1956 = vmatpush1.bf16.msra.mxu0 %v1936
        %1957 = vmatprep.subr.bf16.mxu0 0
        %1958 = vmatpush1.bf16.msra.mxu0 %v1937
        %1959 = vmatprep.subr.bf16.mxu0 0
        %1960 = vmatpush1.bf16.msra.mxu0 %v1938
        %1961 = vmatprep.subr.bf16.mxu0 0
        %1962 = vmatpush1.bf16.msra.mxu0 %v1939
        %1963 = vmatprep.subr.bf16.mxu0 0
        %1964 = vmatpush1.bf16.msra.mxu0 %v1940
        %1965 = vmatprep.subr.bf16.mxu0 0
        %1966 = vmatpush1.bf16.msra.mxu0 0
        %1967 = vmatprep.subr.bf16.mxu0 0
        %1968 = vmatpush1.bf16.msra.mxu0 0
        %1969 = vmatprep.subr.bf16.mxu0 0
        %1970 = vmatpush1.bf16.msra.mxu0 0
        %1971 = vmatprep.subr.bf16.mxu0 0
        %1972 = vmatpush1.bf16.msra.mxu0 0
        %1973 = vmatprep.subr.bf16.mxu0 0
        %1974 = vmatpush1.bf16.msra.mxu0 0
        %1975 = vmatprep.subr.bf16.mxu0 0
        %1976 = vmatpush1.bf16.msra.mxu0 0
        %1977 = vmatprep.subr.bf16.mxu0 0
        %1978 = vmatpush1.bf16.msra.mxu0 0
        %1979 = vmatprep.subr.bf16.mxu0 0
        %1980 = vmatpush1.bf16.msra.mxu0 0
        %1981 = vmatprep.mubr.bf16.mxu0 0
        %1982 = vmatmul.mubr.bf16.gmra.mrb[0].mxu0 %v1869
        %v1983 = vpop.f32.mrb[0].mxu0
        %v1984 = vadd.f32 0.0, %v1983
        %v1985 = vpop.f32.mrb[0].mxu0
        %v1986 = vpop.f32.mrb[0].mxu0
        %v1987 = vadd.f32 0.0, %v1986
        %v1988 = vpop.f32.mrb[0].mxu0
        %1989 = vmatprep.mubr.bf16.mxu0 0
        %1990 = vmatmul.mubr.bf16.gmra.mrb[0].mxu0 %v1870
        %v1991 = vpop.f32.mrb[0].mxu0
        %v1992 = vadd.f32 0.0, %v1991
        %v1993 = vpop.f32.mrb[0].mxu0
        %v1994 = vpop.f32.mrb[0].mxu0
        %v1995 = vadd.f32 0.0, %v1994
        %v1996 = vpop.f32.mrb[0].mxu0
        %1997 = vmatprep.mubr.bf16.mxu0 0
        %1998 = vmatmul.mubr.bf16.gmra.mrb[0].mxu0 %v1871
        %v1999 = vpop.f32.mrb[0].mxu0
        %v2000 = vadd.f32 0.0, %v1999
        %v2001 = vpop.f32.mrb[0].mxu0
        %v2002 = vpop.f32.mrb[0].mxu0
        %v2003 = vadd.f32 0.0, %v2002
        %v2004 = vpop.f32.mrb[0].mxu0
        %2005 = vmatprep.mubr.bf16.mxu0 0
        %2006 = vmatmul.mubr.bf16.gmra.mrb[0].mxu0 %v1872
        %v2007 = vpop.f32.mrb[0].mxu0
        %v2008 = vadd.f32 0.0, %v2007
        %v2009 = vpop.f32.mrb[0].mxu0
        %v2010 = vpop.f32.mrb[0].mxu0
        %v2011 = vadd.f32 0.0, %v2010
        %v2012 = vpop.f32.mrb[0].mxu0
        %2013 = vmatprep.mubr.bf16.mxu0 0
        %2014 = vmatmul.mubr.bf16.gmra.mrb[0].mxu0 %v1873
        %v2015 = vpop.f32.mrb[0].mxu0
        %v2016 = vadd.f32 0.0, %v2015
        %v2017 = vpop.f32.mrb[0].mxu0
        %v2018 = vpop.f32.mrb[0].mxu0
        %v2019 = vadd.f32 0.0, %v2018
        %v2020 = vpop.f32.mrb[0].mxu0
        %2021 = vmatprep.mubr.bf16.mxu0 0
        %2022 = vmatmul.mubr.bf16.gmra.mrb[0].mxu0 %v1874
        %v2023 = vpop.f32.mrb[0].mxu0
        %v2024 = vadd.f32 0.0, %v2023
        %v2025 = vpop.f32.mrb[0].mxu0
        %v2026 = vpop.f32.mrb[0].mxu0
        %v2027 = vadd.f32 0.0, %v2026
        %v2028 = vpop.f32.mrb[0].mxu0
        %2029 = vmatprep.mubr.bf16.mxu0 0
        %2030 = vmatmul.mubr.bf16.gmra.mrb[0].mxu0 %v1875
        %v2031 = vpop.f32.mrb[0].mxu0
        %v2032 = vadd.f32 0.0, %v2031
        %v2033 = vpop.f32.mrb[0].mxu0
        %v2034 = vpop.f32.mrb[0].mxu0
        %v2035 = vadd.f32 0.0, %v2034
        %v2036 = vpop.f32.mrb[0].mxu0
        %2037 = vmatprep.mubr.bf16.mxu0 0
        %2038 = vmatmul.mubr.bf16.gmra.mrb[0].mxu0 %v1876
        %v2039 = vpop.f32.mrb[0].mxu0
        %v2040 = vadd.f32 0.0, %v2039
        %v2041 = vpop.f32.mrb[0].mxu0
        %v2042 = vpop.f32.mrb[0].mxu0
        %v2043 = vadd.f32 0.0, %v2042
        %v2044 = vpop.f32.mrb[0].mxu0
        %2045 = vmatprep.mubr.bf16.mxu0 0
        %2046 = vmatmul.mubr.bf16.gmra.mrb[0].mxu0 %v1877
        %v2047 = vpop.f32.mrb[0].mxu0
        %v2048 = vadd.f32 0.0, %v2047
        %v2049 = vpop.f32.mrb[0].mxu0
        %v2050 = vpop.f32.mrb[0].mxu0
        %v2051 = vadd.f32 0.0, %v2050
        %v2052 = vpop.f32.mrb[0].mxu0
        %2053 = vmatprep.mubr.bf16.mxu0 0
        %2054 = vmatmul.mubr.bf16.gmra.mrb[0].mxu0 %v1878
        %v2055 = vpop.f32.mrb[0].mxu0
        %v2056 = vadd.f32 0.0, %v2055
        %v2057 = vpop.f32.mrb[0].mxu0
        %v2058 = vpop.f32.mrb[0].mxu0
        %v2059 = vadd.f32 0.0, %v2058
        %v2060 = vpop.f32.mrb[0].mxu0
        %2061 = vmatprep.mubr.bf16.mxu0 0
        %2062 = vmatmul.mubr.bf16.gmra.mrb[0].mxu0 %v1879
        %v2063 = vpop.f32.mrb[0].mxu0
        %v2064 = vadd.f32 0.0, %v2063
        %v2065 = vpop.f32.mrb[0].mxu0
        %v2066 = vpop.f32.mrb[0].mxu0
        %v2067 = vadd.f32 0.0, %v2066
        %v2068 = vpop.f32.mrb[0].mxu0
        %2069 = vmatprep.mubr.bf16.mxu0 0
        %2070 = vmatmul.mubr.bf16.gmra.mrb[0].mxu0 %v1880
        %v2071 = vpop.f32.mrb[0].mxu0
        %v2072 = vadd.f32 0.0, %v2071
        %v2073 = vpop.f32.mrb[0].mxu0
        %v2074 = vpop.f32.mrb[0].mxu0
        %v2075 = vadd.f32 0.0, %v2074
        %v2076 = vpop.f32.mrb[0].mxu0
        %2077 = vmatprep.mubr.bf16.mxu0 0
        %2078 = vmatmul.mubr.bf16.gmra.mrb[0].mxu0 %v1881
        %v2079 = vpop.f32.mrb[0].mxu0
        %v2080 = vadd.f32 0.0, %v2079
        %v2081 = vpop.f32.mrb[0].mxu0
        %v2082 = vpop.f32.mrb[0].mxu0
        %v2083 = vadd.f32 0.0, %v2082
        %v2084 = vpop.f32.mrb[0].mxu0
        %2085 = vmatprep.mubr.bf16.mxu0 0
        %2086 = vmatmul.mubr.bf16.gmra.mrb[0].mxu0 %v1882
        %v2087 = vpop.f32.mrb[0].mxu0
        %v2088 = vadd.f32 0.0, %v2087
        %v2089 = vpop.f32.mrb[0].mxu0
        %v2090 = vpop.f32.mrb[0].mxu0
        %v2091 = vadd.f32 0.0, %v2090
        %v2092 = vpop.f32.mrb[0].mxu0
        %2093 = vmatprep.mubr.bf16.mxu0 0
        %2094 = vmatmul.mubr.bf16.gmra.mrb[0].mxu0 %v1883
        %v2095 = vpop.f32.mrb[0].mxu0
        %v2096 = vadd.f32 0.0, %v2095
        %v2097 = vpop.f32.mrb[0].mxu0
        %v2098 = vpop.f32.mrb[0].mxu0
        %v2099 = vadd.f32 0.0, %v2098
        %v2100 = vpop.f32.mrb[0].mxu0
        %2101 = vmatprep.mubr.bf16.mxu0 0
        %2102 = vmatmul.mubr.bf16.gmra.mrb[0].mxu0 %v1884
        %v2103 = vpop.f32.mrb[0].mxu0
        %v2104 = vadd.f32 0.0, %v2103
        %v2105 = vpop.f32.mrb[0].mxu0
        %v2106 = vpop.f32.mrb[0].mxu0
        %v2107 = vadd.f32 0.0, %v2106
        %v2108 = vpop.f32.mrb[0].mxu0
        %2109 = vdwg.mxu0
        %v2110 = vpack.c.bf16 %v1987, %v1984
        %v2111 = vpack.c.bf16 %v1995, %v1992
        %v2112 = vpack.c.bf16 %v2003, %v2000
        %v2113 = vpack.c.bf16 %v2011, %v2008
        %v2114 = vpack.c.bf16 %v2019, %v2016
        %v2115 = vpack.c.bf16 %v2027, %v2024
        %v2116 = vpack.c.bf16 %v2035, %v2032
        %v2117 = vpack.c.bf16 %v2043, %v2040
        %v2118 = vpack.c.bf16 %v2051, %v2048
        %v2119 = vpack.c.bf16 %v2059, %v2056
        %v2120 = vpack.c.bf16 %v2067, %v2064
        %v2121 = vpack.c.bf16 %v2075, %v2072
        %v2122 = vpack.c.bf16 %v2083, %v2080
        %v2123 = vpack.c.bf16 %v2091, %v2088
        %v2124 = vpack.c.bf16 %v2099, %v2096
        %v2125 = vpack.c.bf16 %v2107, %v2104
        %2126 = vst [vmem:[#allocation2] sm:$0xff] %v2110
        %2127 = vst [vmem:[#allocation2 + $0x8] sm:$0xff] %v2111
        %2128 = vst [vmem:[#allocation2 + $0x10] sm:$0xff] %v2112
        %2129 = vst [vmem:[#allocation2 + $0x18] sm:$0xff] %v2113
        %2130 = vst [vmem:[#allocation2 + $0x20] sm:$0xff] %v2114
        %2131 = vst [vmem:[#allocation2 + $0x28] sm:$0xff] %v2115
        %2132 = vst [vmem:[#allocation2 + $0x30] sm:$0xff] %v2116
        %2133 = vst [vmem:[#allocation2 + $0x38] sm:$0xff] %v2117
        %2134 = vst [vmem:[#allocation2 + $0x40] sm:$0xff] %v2118
        %2135 = vst [vmem:[#allocation2 + $0x48] sm:$0xff] %v2119
        %2136 = vst [vmem:[#allocation2 + $0x50] sm:$0xff] %v2120
        %2137 = vst [vmem:[#allocation2 + $0x58] sm:$0xff] %v2121
        %2138 = vst [vmem:[#allocation2 + $0x60] sm:$0xff] %v2122
        %2139 = vst [vmem:[#allocation2 + $0x68] sm:$0xff] %v2123
        %2140 = vst [vmem:[#allocation2 + $0x70] sm:$0xff] %v2124
        %2141 = vst [vmem:[#allocation2 + $0x78] sm:$0xff] %v2125
        %2142 = vst [vmem:[#allocation5] sm:$0xff] 0.0
        %2143 = vst [vmem:[#allocation5 + $0x8] sm:$0xff] 0.0
        %2144 = vst [vmem:[#allocation5 + $0x10] sm:$0xff] 0.0
        %2145 = vst [vmem:[#allocation5 + $0x18] sm:$0xff] 0.0
        %2146 = vst [vmem:[#allocation5 + $0x20] sm:$0xff] 0.0
        %2147 = vst [vmem:[#allocation5 + $0x28] sm:$0xff] 0.0
        %2148 = vst [vmem:[#allocation5 + $0x30] sm:$0xff] 0.0
        %2149 = vst [vmem:[#allocation5 + $0x38] sm:$0xff] 0.0
        %2150 = vst [vmem:[#allocation5 + $0x40] sm:$0xff] 0.0
        %2151 = vst [vmem:[#allocation5 + $0x48] sm:$0xff] 0.0
        %2152 = vst [vmem:[#allocation5 + $0x50] sm:$0xff] 0.0
        %2153 = vst [vmem:[#allocation5 + $0x58] sm:$0xff] 0.0
        %2154 = vst [vmem:[#allocation5 + $0x60] sm:$0xff] 0.0
        %2155 = vst [vmem:[#allocation5 + $0x68] sm:$0xff] 0.0
        %2156 = vst [vmem:[#allocation5 + $0x70] sm:$0xff] 0.0
        %2157 = vst [vmem:[#allocation5 + $0x78] sm:$0xff] 0.0
        %2158 = vst [vmem:[#allocation5 + $0x80] sm:$0xff] 0.0
        %2159 = vst [vmem:[#allocation5 + $0x88] sm:$0xff] 0.0
        %2160 = vst [vmem:[#allocation5 + $0x90] sm:$0xff] 0.0
        %2161 = vst [vmem:[#allocation5 + $0x98] sm:$0xff] 0.0
        %2162 = vst [vmem:[#allocation5 + $0xa0] sm:$0xff] 0.0
        %2163 = vst [vmem:[#allocation5 + $0xa8] sm:$0xff] 0.0
        %2164 = vst [vmem:[#allocation5 + $0xb0] sm:$0xff] 0.0
        %2165 = vst [vmem:[#allocation5 + $0xb8] sm:$0xff] 0.0
        %2166 = vst [vmem:[#allocation5 + $0xc0] sm:$0xff] 0.0
        %2167 = vst [vmem:[#allocation5 + $0xc8] sm:$0xff] 0.0
        %2168 = vst [vmem:[#allocation5 + $0xd0] sm:$0xff] 0.0
        %2169 = vst [vmem:[#allocation5 + $0xd8] sm:$0xff] 0.0
        %2170 = vst [vmem:[#allocation5 + $0xe0] sm:$0xff] 0.0
        %2171 = vst [vmem:[#allocation5 + $0xe8] sm:$0xff] 0.0
        %2172 = vst [vmem:[#allocation5 + $0xf0] sm:$0xff] 0.0
        %2173 = vst [vmem:[#allocation5 + $0xf8] sm:$0xff] 0.0
        %v2174 = vld [vmem:[#allocation2] sm:$0xff]
        %v2175 = vld [vmem:[#allocation2 + $0x8] sm:$0xff]
        %v2176 = vld [vmem:[#allocation2 + $0x10] sm:$0xff]
        %v2177 = vld [vmem:[#allocation2 + $0x18] sm:$0xff]
        %v2178 = vld [vmem:[#allocation2 + $0x20] sm:$0xff]
        %v2179 = vld [vmem:[#allocation2 + $0x28] sm:$0xff]
        %v2180 = vld [vmem:[#allocation2 + $0x30] sm:$0xff]
        %v2181 = vld [vmem:[#allocation2 + $0x38] sm:$0xff]
        %v2182 = vld [vmem:[#allocation2 + $0x40] sm:$0xff]
        %v2183 = vld [vmem:[#allocation2 + $0x48] sm:$0xff]
        %v2184 = vld [vmem:[#allocation2 + $0x50] sm:$0xff]
        %v2185 = vld [vmem:[#allocation2 + $0x58] sm:$0xff]
        %v2186 = vld [vmem:[#allocation2 + $0x60] sm:$0xff]
        %v2187 = vld [vmem:[#allocation2 + $0x68] sm:$0xff]
        %v2188 = vld [vmem:[#allocation2 + $0x70] sm:$0xff]
        %v2189 = vld [vmem:[#allocation2 + $0x78] sm:$0xff]
        %v2190 = vld [vmem:[#allocation3] sm:$0xff]
        %v2191 = vld [vmem:[#allocation3 + $0x8] sm:$0xff]
        %v2192 = vld [vmem:[#allocation3 + $0x10] sm:$0xff]
        %v2193 = vld [vmem:[#allocation3 + $0x18] sm:$0xff]
        %v2194 = vld [vmem:[#allocation3 + $0x20] sm:$0xff]
        %v2195 = vld [vmem:[#allocation3 + $0x28] sm:$0xff]
        %v2196 = vld [vmem:[#allocation3 + $0x30] sm:$0xff]
        %v2197 = vld [vmem:[#allocation3 + $0x38] sm:$0xff]
        %vm2198 = vcmask 130048
        %v2200 = vsel %vm2198, %v2174, 0
        %v2203 = vsel %vm2198, %v2175, 0
        %v2206 = vsel %vm2198, %v2176, 0
        %v2209 = vsel %vm2198, %v2177, 0
        %v2212 = vsel %vm2198, %v2178, 0
        %v2215 = vsel %vm2198, %v2179, 0
        %v2218 = vsel %vm2198, %v2180, 0
        %v2221 = vsel %vm2198, %v2181, 0
        %v2224 = vsel %vm2198, %v2182, 0
        %v2227 = vsel %vm2198, %v2183, 0
        %v2230 = vsel %vm2198, %v2184, 0
        %v2233 = vsel %vm2198, %v2185, 0
        %v2236 = vsel %vm2198, %v2186, 0
        %v2239 = vsel %vm2198, %v2187, 0
        %v2242 = vsel %vm2198, %v2188, 0
        %v2245 = vsel %vm2198, %v2189, 0
        %v2248 = vsel %vm2198, %v2190, 0
        %v2251 = vsel %vm2198, %v2191, 0
        %v2254 = vsel %vm2198, %v2192, 0
        %v2257 = vsel %vm2198, %v2193, 0
        %v2260 = vsel %vm2198, %v2194, 0
        %v2263 = vsel %vm2198, %v2195, 0
        %v2266 = vsel %vm2198, %v2196, 0
        %v2269 = vsel %vm2198, %v2197, 0
        %2271 = vmatprep.subr.bf16.mxu0 0
        %2272 = vmatpush1.bf16.xpose.msra.mxu0 %v2248
        %2273 = vmatprep.subr.bf16.mxu0 0
        %2274 = vmatpush1.bf16.xpose.msra.mxu0 %v2251
        %2275 = vmatprep.subr.bf16.mxu0 0
        %2276 = vmatpush1.bf16.xpose.msra.mxu0 %v2254
        %2277 = vmatprep.subr.bf16.mxu0 0
        %2278 = vmatpush1.bf16.xpose.msra.mxu0 %v2257
        %2279 = vmatprep.subr.bf16.mxu0 0
        %2280 = vmatpush1.bf16.xpose.msra.mxu0 %v2260
        %2281 = vmatprep.subr.bf16.mxu0 0
        %2282 = vmatpush1.bf16.xpose.msra.mxu0 %v2263
        %2283 = vmatprep.subr.bf16.mxu0 0
        %2284 = vmatpush1.bf16.xpose.msra.mxu0 %v2266
        %2285 = vmatprep.subr.bf16.mxu0 0
        %2286 = vmatpush1.bf16.xpose.msra.mxu0 %v2269
        %2287 = vmatprep.subr.bf16.mxu0 0
        %2288 = vmatpush1.bf16.xpose.msra.mxu0 0
        %2289 = vmatprep.subr.bf16.mxu0 0
        %2290 = vmatpush1.bf16.xpose.msra.mxu0 0
        %2291 = vmatprep.subr.bf16.mxu0 0
        %2292 = vmatpush1.bf16.xpose.msra.mxu0 0
        %2293 = vmatprep.subr.bf16.mxu0 0
        %2294 = vmatpush1.bf16.xpose.msra.mxu0 0
        %2295 = vmatprep.subr.bf16.mxu0 0
        %2296 = vmatpush1.bf16.xpose.msra.mxu0 0
        %2297 = vmatprep.subr.bf16.mxu0 0
        %2298 = vmatpush1.bf16.xpose.msra.mxu0 0
        %2299 = vmatprep.subr.bf16.mxu0 0
        %2300 = vmatpush1.bf16.xpose.msra.mxu0 0
        %2301 = vmatprep.subr.bf16.mxu0 0
        %2302 = vmatpush1.bf16.xpose.msra.mxu0 0
        %2303 = vmatprep.mubr.bf16.mxu0 0
        %2304 = vmatmul.mubr.bf16.gmra.mrb[0].mxu0 %v2200
        %v2305 = vpop.f32.mrb[0].mxu0
        %v2306 = vadd.f32 0.0, %v2305
        %v2307 = vpop.f32.mrb[0].mxu0
        %v2308 = vpop.f32.mrb[0].mxu0
        %v2309 = vadd.f32 0.0, %v2308
        %v2310 = vpop.f32.mrb[0].mxu0
        %2311 = vmatprep.mubr.bf16.mxu0 0
        %2312 = vmatmul.mubr.bf16.gmra.mrb[0].mxu0 %v2203
        %v2313 = vpop.f32.mrb[0].mxu0
        %v2314 = vadd.f32 0.0, %v2313
        %v2315 = vpop.f32.mrb[0].mxu0
        %v2316 = vpop.f32.mrb[0].mxu0
        %v2317 = vadd.f32 0.0, %v2316
        %v2318 = vpop.f32.mrb[0].mxu0
        %2319 = vmatprep.mubr.bf16.mxu0 0
        %2320 = vmatmul.mubr.bf16.gmra.mrb[0].mxu0 %v2206
        %v2321 = vpop.f32.mrb[0].mxu0
        %v2322 = vadd.f32 0.0, %v2321
        %v2323 = vpop.f32.mrb[0].mxu0
        %v2324 = vpop.f32.mrb[0].mxu0
        %v2325 = vadd.f32 0.0, %v2324
        %v2326 = vpop.f32.mrb[0].mxu0
        %2327 = vmatprep.mubr.bf16.mxu0 0
        %2328 = vmatmul.mubr.bf16.gmra.mrb[0].mxu0 %v2209
        %v2329 = vpop.f32.mrb[0].mxu0
        %v2330 = vadd.f32 0.0, %v2329
        %v2331 = vpop.f32.mrb[0].mxu0
        %v2332 = vpop.f32.mrb[0].mxu0
        %v2333 = vadd.f32 0.0, %v2332
        %v2334 = vpop.f32.mrb[0].mxu0
        %2335 = vmatprep.mubr.bf16.mxu0 0
        %2336 = vmatmul.mubr.bf16.gmra.mrb[0].mxu0 %v2212
        %v2337 = vpop.f32.mrb[0].mxu0
        %v2338 = vadd.f32 0.0, %v2337
        %v2339 = vpop.f32.mrb[0].mxu0
        %v2340 = vpop.f32.mrb[0].mxu0
        %v2341 = vadd.f32 0.0, %v2340
        %v2342 = vpop.f32.mrb[0].mxu0
        %2343 = vmatprep.mubr.bf16.mxu0 0
        %2344 = vmatmul.mubr.bf16.gmra.mrb[0].mxu0 %v2215
        %v2345 = vpop.f32.mrb[0].mxu0
        %v2346 = vadd.f32 0.0, %v2345
        %v2347 = vpop.f32.mrb[0].mxu0
        %v2348 = vpop.f32.mrb[0].mxu0
        %v2349 = vadd.f32 0.0, %v2348
        %v2350 = vpop.f32.mrb[0].mxu0
        %2351 = vmatprep.mubr.bf16.mxu0 0
        %2352 = vmatmul.mubr.bf16.gmra.mrb[0].mxu0 %v2218
        %v2353 = vpop.f32.mrb[0].mxu0
        %v2354 = vadd.f32 0.0, %v2353
        %v2355 = vpop.f32.mrb[0].mxu0
        %v2356 = vpop.f32.mrb[0].mxu0
        %v2357 = vadd.f32 0.0, %v2356
        %v2358 = vpop.f32.mrb[0].mxu0
        %2359 = vmatprep.mubr.bf16.mxu0 0
        %2360 = vmatmul.mubr.bf16.gmra.mrb[0].mxu0 %v2221
        %v2361 = vpop.f32.mrb[0].mxu0
        %v2362 = vadd.f32 0.0, %v2361
        %v2363 = vpop.f32.mrb[0].mxu0
        %v2364 = vpop.f32.mrb[0].mxu0
        %v2365 = vadd.f32 0.0, %v2364
        %v2366 = vpop.f32.mrb[0].mxu0
        %2367 = vmatprep.mubr.bf16.mxu0 0
        %2368 = vmatmul.mubr.bf16.gmra.mrb[0].mxu0 %v2224
        %v2369 = vpop.f32.mrb[0].mxu0
        %v2370 = vadd.f32 0.0, %v2369
        %v2371 = vpop.f32.mrb[0].mxu0
        %v2372 = vpop.f32.mrb[0].mxu0
        %v2373 = vadd.f32 0.0, %v2372
        %v2374 = vpop.f32.mrb[0].mxu0
        %2375 = vmatprep.mubr.bf16.mxu0 0
        %2376 = vmatmul.mubr.bf16.gmra.mrb[0].mxu0 %v2227
        %v2377 = vpop.f32.mrb[0].mxu0
        %v2378 = vadd.f32 0.0, %v2377
        %v2379 = vpop.f32.mrb[0].mxu0
        %v2380 = vpop.f32.mrb[0].mxu0
        %v2381 = vadd.f32 0.0, %v2380
        %v2382 = vpop.f32.mrb[0].mxu0
        %2383 = vmatprep.mubr.bf16.mxu0 0
        %2384 = vmatmul.mubr.bf16.gmra.mrb[0].mxu0 %v2230
        %v2385 = vpop.f32.mrb[0].mxu0
        %v2386 = vadd.f32 0.0, %v2385
        %v2387 = vpop.f32.mrb[0].mxu0
        %v2388 = vpop.f32.mrb[0].mxu0
        %v2389 = vadd.f32 0.0, %v2388
        %v2390 = vpop.f32.mrb[0].mxu0
        %2391 = vmatprep.mubr.bf16.mxu0 0
        %2392 = vmatmul.mubr.bf16.gmra.mrb[0].mxu0 %v2233
        %v2393 = vpop.f32.mrb[0].mxu0
        %v2394 = vadd.f32 0.0, %v2393
        %v2395 = vpop.f32.mrb[0].mxu0
        %v2396 = vpop.f32.mrb[0].mxu0
        %v2397 = vadd.f32 0.0, %v2396
        %v2398 = vpop.f32.mrb[0].mxu0
        %2399 = vmatprep.mubr.bf16.mxu0 0
        %2400 = vmatmul.mubr.bf16.gmra.mrb[0].mxu0 %v2236
        %v2401 = vpop.f32.mrb[0].mxu0
        %v2402 = vadd.f32 0.0, %v2401
        %v2403 = vpop.f32.mrb[0].mxu0
        %v2404 = vpop.f32.mrb[0].mxu0
        %v2405 = vadd.f32 0.0, %v2404
        %v2406 = vpop.f32.mrb[0].mxu0
        %2407 = vmatprep.mubr.bf16.mxu0 0
        %2408 = vmatmul.mubr.bf16.gmra.mrb[0].mxu0 %v2239
        %v2409 = vpop.f32.mrb[0].mxu0
        %v2410 = vadd.f32 0.0, %v2409
        %v2411 = vpop.f32.mrb[0].mxu0
        %v2412 = vpop.f32.mrb[0].mxu0
        %v2413 = vadd.f32 0.0, %v2412
        %v2414 = vpop.f32.mrb[0].mxu0
        %2415 = vmatprep.mubr.bf16.mxu0 0
        %2416 = vmatmul.mubr.bf16.gmra.mrb[0].mxu0 %v2242
        %v2417 = vpop.f32.mrb[0].mxu0
        %v2418 = vadd.f32 0.0, %v2417
        %v2419 = vpop.f32.mrb[0].mxu0
        %v2420 = vpop.f32.mrb[0].mxu0
        %v2421 = vadd.f32 0.0, %v2420
        %v2422 = vpop.f32.mrb[0].mxu0
        %2423 = vmatprep.mubr.bf16.mxu0 0
        %2424 = vmatmul.mubr.bf16.gmra.mrb[0].mxu0 %v2245
        %v2425 = vpop.f32.mrb[0].mxu0
        %v2426 = vadd.f32 0.0, %v2425
        %v2427 = vpop.f32.mrb[0].mxu0
        %v2428 = vpop.f32.mrb[0].mxu0
        %v2429 = vadd.f32 0.0, %v2428
        %v2430 = vpop.f32.mrb[0].mxu0
        %2431 = vdwg.mxu0
        %2432 = vmax.xlane.f32.xlu0 %v2306
        %v2433 = vpop.xlane.xlu0 %2432
        %2434 = vmax.xlane.f32.xlu0 %v2309
        %v2435 = vpop.xlane.xlu0 %2434
        %2436 = vmax.xlane.f32.xlu0 %v2314
        %v2437 = vpop.xlane.xlu0 %2436
        %2438 = vmax.xlane.f32.xlu0 %v2317
        %v2439 = vpop.xlane.xlu0 %2438
        %2440 = vmax.xlane.f32.xlu0 %v2322
        %v2441 = vpop.xlane.xlu0 %2440
        %2442 = vmax.xlane.f32.xlu0 %v2325
        %v2443 = vpop.xlane.xlu0 %2442
        %2444 = vmax.xlane.f32.xlu0 %v2330
        %v2445 = vpop.xlane.xlu0 %2444
        %2446 = vmax.xlane.f32.xlu0 %v2333
        %v2447 = vpop.xlane.xlu0 %2446
        %2448 = vmax.xlane.f32.xlu0 %v2338
        %v2449 = vpop.xlane.xlu0 %2448
        %2450 = vmax.xlane.f32.xlu0 %v2341
        %v2451 = vpop.xlane.xlu0 %2450
        %2452 = vmax.xlane.f32.xlu0 %v2346
        %v2453 = vpop.xlane.xlu0 %2452
        %2454 = vmax.xlane.f32.xlu0 %v2349
        %v2455 = vpop.xlane.xlu0 %2454
        %2456 = vmax.xlane.f32.xlu0 %v2354
        %v2457 = vpop.xlane.xlu0 %2456
        %2458 = vmax.xlane.f32.xlu0 %v2357
        %v2459 = vpop.xlane.xlu0 %2458
        %2460 = vmax.xlane.f32.xlu0 %v2362
        %v2461 = vpop.xlane.xlu0 %2460
        %2462 = vmax.xlane.f32.xlu0 %v2365
        %v2463 = vpop.xlane.xlu0 %2462
        %2464 = vmax.xlane.f32.xlu0 %v2370
        %v2465 = vpop.xlane.xlu0 %2464
        %2466 = vmax.xlane.f32.xlu0 %v2373
        %v2467 = vpop.xlane.xlu0 %2466
        %2468 = vmax.xlane.f32.xlu0 %v2378
        %v2469 = vpop.xlane.xlu0 %2468
        %2470 = vmax.xlane.f32.xlu0 %v2381
        %v2471 = vpop.xlane.xlu0 %2470
        %2472 = vmax.xlane.f32.xlu0 %v2386
        %v2473 = vpop.xlane.xlu0 %2472
        %2474 = vmax.xlane.f32.xlu0 %v2389
        %v2475 = vpop.xlane.xlu0 %2474
        %2476 = vmax.xlane.f32.xlu0 %v2394
        %v2477 = vpop.xlane.xlu0 %2476
        %2478 = vmax.xlane.f32.xlu0 %v2397
        %v2479 = vpop.xlane.xlu0 %2478
        %2480 = vmax.xlane.f32.xlu0 %v2402
        %v2481 = vpop.xlane.xlu0 %2480
        %2482 = vmax.xlane.f32.xlu0 %v2405
        %v2483 = vpop.xlane.xlu0 %2482
        %2484 = vmax.xlane.f32.xlu0 %v2410
        %v2485 = vpop.xlane.xlu0 %2484
        %2486 = vmax.xlane.f32.xlu0 %v2413
        %v2487 = vpop.xlane.xlu0 %2486
        %2488 = vmax.xlane.f32.xlu0 %v2418
        %v2489 = vpop.xlane.xlu0 %2488
        %2490 = vmax.xlane.f32.xlu0 %v2421
        %v2491 = vpop.xlane.xlu0 %2490
        %2492 = vmax.xlane.f32.xlu0 %v2426
        %v2493 = vpop.xlane.xlu0 %2492
        %2494 = vmax.xlane.f32.xlu0 %v2429
        %v2495 = vpop.xlane.xlu0 %2494
        %v2496 = vsub.f32 %v2306, %v2433
        %v2497 = vsub.f32 %v2309, %v2435
        %v2498 = vsub.f32 %v2314, %v2437
        %v2499 = vsub.f32 %v2317, %v2439
        %v2500 = vsub.f32 %v2322, %v2441
        %v2501 = vsub.f32 %v2325, %v2443
        %v2502 = vsub.f32 %v2330, %v2445
        %v2503 = vsub.f32 %v2333, %v2447
        %v2504 = vsub.f32 %v2338, %v2449
        %v2505 = vsub.f32 %v2341, %v2451
        %v2506 = vsub.f32 %v2346, %v2453
        %v2507 = vsub.f32 %v2349, %v2455
        %v2508 = vsub.f32 %v2354, %v2457
        %v2509 = vsub.f32 %v2357, %v2459
        %v2510 = vsub.f32 %v2362, %v2461
        %v2511 = vsub.f32 %v2365, %v2463
        %v2512 = vsub.f32 %v2370, %v2465
        %v2513 = vsub.f32 %v2373, %v2467
        %v2514 = vsub.f32 %v2378, %v2469
        %v2515 = vsub.f32 %v2381, %v2471
        %v2516 = vsub.f32 %v2386, %v2473
        %v2517 = vsub.f32 %v2389, %v2475
        %v2518 = vsub.f32 %v2394, %v2477
        %v2519 = vsub.f32 %v2397, %v2479
        %v2520 = vsub.f32 %v2402, %v2481
        %v2521 = vsub.f32 %v2405, %v2483
        %v2522 = vsub.f32 %v2410, %v2485
        %v2523 = vsub.f32 %v2413, %v2487
        %v2524 = vsub.f32 %v2418, %v2489
        %v2525 = vsub.f32 %v2421, %v2491
        %v2526 = vsub.f32 %v2426, %v2493
        %v2527 = vsub.f32 %v2429, %v2495
        %v2528 = vmul.f32 %v2496, 1.442695
        %v2529 = vpow.pop %v2528
        %v2530 = vmul.f32 %v2497, 1.442695
        %v2531 = vpow.pop %v2530
        %v2532 = vmul.f32 %v2498, 1.442695
        %v2533 = vpow.pop %v2532
        %v2534 = vmul.f32 %v2499, 1.442695
        %v2535 = vpow.pop %v2534
        %v2536 = vmul.f32 %v2500, 1.442695
        %v2537 = vpow.pop %v2536
        %v2538 = vmul.f32 %v2501, 1.442695
        %v2539 = vpow.pop %v2538
        %v2540 = vmul.f32 %v2502, 1.442695
        %v2541 = vpow.pop %v2540
        %v2542 = vmul.f32 %v2503, 1.442695
        %v2543 = vpow.pop %v2542
        %v2544 = vmul.f32 %v2504, 1.442695
        %v2545 = vpow.pop %v2544
        %v2546 = vmul.f32 %v2505, 1.442695
        %v2547 = vpow.pop %v2546
        %v2548 = vmul.f32 %v2506, 1.442695
        %v2549 = vpow.pop %v2548
        %v2550 = vmul.f32 %v2507, 1.442695
        %v2551 = vpow.pop %v2550
        %v2552 = vmul.f32 %v2508, 1.442695
        %v2553 = vpow.pop %v2552
        %v2554 = vmul.f32 %v2509, 1.442695
        %v2555 = vpow.pop %v2554
        %v2556 = vmul.f32 %v2510, 1.442695
        %v2557 = vpow.pop %v2556
        %v2558 = vmul.f32 %v2511, 1.442695
        %v2559 = vpow.pop %v2558
        %v2560 = vmul.f32 %v2512, 1.442695
        %v2561 = vpow.pop %v2560
        %v2562 = vmul.f32 %v2513, 1.442695
        %v2563 = vpow.pop %v2562
        %v2564 = vmul.f32 %v2514, 1.442695
        %v2565 = vpow.pop %v2564
        %v2566 = vmul.f32 %v2515, 1.442695
        %v2567 = vpow.pop %v2566
        %v2568 = vmul.f32 %v2516, 1.442695
        %v2569 = vpow.pop %v2568
        %v2570 = vmul.f32 %v2517, 1.442695
        %v2571 = vpow.pop %v2570
        %v2572 = vmul.f32 %v2518, 1.442695
        %v2573 = vpow.pop %v2572
        %v2574 = vmul.f32 %v2519, 1.442695
        %v2575 = vpow.pop %v2574
        %v2576 = vmul.f32 %v2520, 1.442695
        %v2577 = vpow.pop %v2576
        %v2578 = vmul.f32 %v2521, 1.442695
        %v2579 = vpow.pop %v2578
        %v2580 = vmul.f32 %v2522, 1.442695
        %v2581 = vpow.pop %v2580
        %v2582 = vmul.f32 %v2523, 1.442695
        %v2583 = vpow.pop %v2582
        %v2584 = vmul.f32 %v2524, 1.442695
        %v2585 = vpow.pop %v2584
        %v2586 = vmul.f32 %v2525, 1.442695
        %v2587 = vpow.pop %v2586
        %v2588 = vmul.f32 %v2526, 1.442695
        %v2589 = vpow.pop %v2588
        %v2590 = vmul.f32 %v2527, 1.442695
        %v2591 = vpow.pop %v2590
        %2592 = vadd.xlane.f32.xlu0 %v2529
        %v2593 = vpop.xlane.xlu0 %2592
        %2594 = vadd.xlane.f32.xlu0 %v2531
        %v2595 = vpop.xlane.xlu0 %2594
        %2596 = vadd.xlane.f32.xlu0 %v2533
        %v2597 = vpop.xlane.xlu0 %2596
        %2598 = vadd.xlane.f32.xlu0 %v2535
        %v2599 = vpop.xlane.xlu0 %2598
        %2600 = vadd.xlane.f32.xlu0 %v2537
        %v2601 = vpop.xlane.xlu0 %2600
        %2602 = vadd.xlane.f32.xlu0 %v2539
        %v2603 = vpop.xlane.xlu0 %2602
        %2604 = vadd.xlane.f32.xlu0 %v2541
        %v2605 = vpop.xlane.xlu0 %2604
        %2606 = vadd.xlane.f32.xlu0 %v2543
        %v2607 = vpop.xlane.xlu0 %2606
        %2608 = vadd.xlane.f32.xlu0 %v2545
        %v2609 = vpop.xlane.xlu0 %2608
        %2610 = vadd.xlane.f32.xlu0 %v2547
        %v2611 = vpop.xlane.xlu0 %2610
        %2612 = vadd.xlane.f32.xlu0 %v2549
        %v2613 = vpop.xlane.xlu0 %2612
        %2614 = vadd.xlane.f32.xlu0 %v2551
        %v2615 = vpop.xlane.xlu0 %2614
        %2616 = vadd.xlane.f32.xlu0 %v2553
        %v2617 = vpop.xlane.xlu0 %2616
        %2618 = vadd.xlane.f32.xlu0 %v2555
        %v2619 = vpop.xlane.xlu0 %2618
        %2620 = vadd.xlane.f32.xlu0 %v2557
        %v2621 = vpop.xlane.xlu0 %2620
        %2622 = vadd.xlane.f32.xlu0 %v2559
        %v2623 = vpop.xlane.xlu0 %2622
        %2624 = vadd.xlane.f32.xlu0 %v2561
        %v2625 = vpop.xlane.xlu0 %2624
        %2626 = vadd.xlane.f32.xlu0 %v2563
        %v2627 = vpop.xlane.xlu0 %2626
        %2628 = vadd.xlane.f32.xlu0 %v2565
        %v2629 = vpop.xlane.xlu0 %2628
        %2630 = vadd.xlane.f32.xlu0 %v2567
        %v2631 = vpop.xlane.xlu0 %2630
        %2632 = vadd.xlane.f32.xlu0 %v2569
        %v2633 = vpop.xlane.xlu0 %2632
        %2634 = vadd.xlane.f32.xlu0 %v2571
        %v2635 = vpop.xlane.xlu0 %2634
        %2636 = vadd.xlane.f32.xlu0 %v2573
        %v2637 = vpop.xlane.xlu0 %2636
        %2638 = vadd.xlane.f32.xlu0 %v2575
        %v2639 = vpop.xlane.xlu0 %2638
        %2640 = vadd.xlane.f32.xlu0 %v2577
        %v2641 = vpop.xlane.xlu0 %2640
        %2642 = vadd.xlane.f32.xlu0 %v2579
        %v2643 = vpop.xlane.xlu0 %2642
        %2644 = vadd.xlane.f32.xlu0 %v2581
        %v2645 = vpop.xlane.xlu0 %2644
        %2646 = vadd.xlane.f32.xlu0 %v2583
        %v2647 = vpop.xlane.xlu0 %2646
        %2648 = vadd.xlane.f32.xlu0 %v2585
        %v2649 = vpop.xlane.xlu0 %2648
        %2650 = vadd.xlane.f32.xlu0 %v2587
        %v2651 = vpop.xlane.xlu0 %2650
        %2652 = vadd.xlane.f32.xlu0 %v2589
        %v2653 = vpop.xlane.xlu0 %2652
        %2654 = vadd.xlane.f32.xlu0 %v2591
        %v2655 = vpop.xlane.xlu0 %2654
        %v2656 = vrcp.pop %v2593
        %v2657 = vrcp.pop %v2595
        %v2658 = vrcp.pop %v2597
        %v2659 = vrcp.pop %v2599
        %v2660 = vrcp.pop %v2601
        %v2661 = vrcp.pop %v2603
        %v2662 = vrcp.pop %v2605
        %v2663 = vrcp.pop %v2607
        %v2664 = vrcp.pop %v2609
        %v2665 = vrcp.pop %v2611
        %v2666 = vrcp.pop %v2613
        %v2667 = vrcp.pop %v2615
        %v2668 = vrcp.pop %v2617
        %v2669 = vrcp.pop %v2619
        %v2670 = vrcp.pop %v2621
        %v2671 = vrcp.pop %v2623
        %v2672 = vrcp.pop %v2625
        %v2673 = vrcp.pop %v2627
        %v2674 = vrcp.pop %v2629
        %v2675 = vrcp.pop %v2631
        %v2676 = vrcp.pop %v2633
        %v2677 = vrcp.pop %v2635
        %v2678 = vrcp.pop %v2637
        %v2679 = vrcp.pop %v2639
        %v2680 = vrcp.pop %v2641
        %v2681 = vrcp.pop %v2643
        %v2682 = vrcp.pop %v2645
        %v2683 = vrcp.pop %v2647
        %v2684 = vrcp.pop %v2649
        %v2685 = vrcp.pop %v2651
        %v2686 = vrcp.pop %v2653
        %v2687 = vrcp.pop %v2655
        %v2688 = vmul.f32 %v2529, %v2656
        %v2689 = vmul.f32 %v2531, %v2657
        %v2690 = vmul.f32 %v2533, %v2658
        %v2691 = vmul.f32 %v2535, %v2659
        %v2692 = vmul.f32 %v2537, %v2660
        %v2693 = vmul.f32 %v2539, %v2661
        %v2694 = vmul.f32 %v2541, %v2662
        %v2695 = vmul.f32 %v2543, %v2663
        %v2696 = vmul.f32 %v2545, %v2664
        %v2697 = vmul.f32 %v2547, %v2665
        %v2698 = vmul.f32 %v2549, %v2666
        %v2699 = vmul.f32 %v2551, %v2667
        %v2700 = vmul.f32 %v2553, %v2668
        %v2701 = vmul.f32 %v2555, %v2669
        %v2702 = vmul.f32 %v2557, %v2670
        %v2703 = vmul.f32 %v2559, %v2671
        %v2704 = vmul.f32 %v2561, %v2672
        %v2705 = vmul.f32 %v2563, %v2673
        %v2706 = vmul.f32 %v2565, %v2674
        %v2707 = vmul.f32 %v2567, %v2675
        %v2708 = vmul.f32 %v2569, %v2676
        %v2709 = vmul.f32 %v2571, %v2677
        %v2710 = vmul.f32 %v2573, %v2678
        %v2711 = vmul.f32 %v2575, %v2679
        %v2712 = vmul.f32 %v2577, %v2680
        %v2713 = vmul.f32 %v2579, %v2681
        %v2714 = vmul.f32 %v2581, %v2682
        %v2715 = vmul.f32 %v2583, %v2683
        %v2716 = vmul.f32 %v2585, %v2684
        %v2717 = vmul.f32 %v2587, %v2685
        %v2718 = vmul.f32 %v2589, %v2686
        %v2719 = vmul.f32 %v2591, %v2687
        %v2720 = vld [vmem:[#allocation5] sm:$0xff]
        %v2721 = vld [vmem:[#allocation5 + $0x8] sm:$0xff]
        %v2722 = vld [vmem:[#allocation5 + $0x10] sm:$0xff]
        %v2723 = vld [vmem:[#allocation5 + $0x18] sm:$0xff]
        %v2724 = vld [vmem:[#allocation5 + $0x20] sm:$0xff]
        %v2725 = vld [vmem:[#allocation5 + $0x28] sm:$0xff]
        %v2726 = vld [vmem:[#allocation5 + $0x30] sm:$0xff]
        %v2727 = vld [vmem:[#allocation5 + $0x38] sm:$0xff]
        %v2728 = vld [vmem:[#allocation5 + $0x40] sm:$0xff]
        %v2729 = vld [vmem:[#allocation5 + $0x48] sm:$0xff]
        %v2730 = vld [vmem:[#allocation5 + $0x50] sm:$0xff]
        %v2731 = vld [vmem:[#allocation5 + $0x58] sm:$0xff]
        %v2732 = vld [vmem:[#allocation5 + $0x60] sm:$0xff]
        %v2733 = vld [vmem:[#allocation5 + $0x68] sm:$0xff]
        %v2734 = vld [vmem:[#allocation5 + $0x70] sm:$0xff]
        %v2735 = vld [vmem:[#allocation5 + $0x78] sm:$0xff]
        %v2736 = vld [vmem:[#allocation5 + $0x80] sm:$0xff]
        %v2737 = vld [vmem:[#allocation5 + $0x88] sm:$0xff]
        %v2738 = vld [vmem:[#allocation5 + $0x90] sm:$0xff]
        %v2739 = vld [vmem:[#allocation5 + $0x98] sm:$0xff]
        %v2740 = vld [vmem:[#allocation5 + $0xa0] sm:$0xff]
        %v2741 = vld [vmem:[#allocation5 + $0xa8] sm:$0xff]
        %v2742 = vld [vmem:[#allocation5 + $0xb0] sm:$0xff]
        %v2743 = vld [vmem:[#allocation5 + $0xb8] sm:$0xff]
        %v2744 = vld [vmem:[#allocation5 + $0xc0] sm:$0xff]
        %v2745 = vld [vmem:[#allocation5 + $0xc8] sm:$0xff]
        %v2746 = vld [vmem:[#allocation5 + $0xd0] sm:$0xff]
        %v2747 = vld [vmem:[#allocation5 + $0xd8] sm:$0xff]
        %v2748 = vld [vmem:[#allocation5 + $0xe0] sm:$0xff]
        %v2749 = vld [vmem:[#allocation5 + $0xe8] sm:$0xff]
        %v2750 = vld [vmem:[#allocation5 + $0xf0] sm:$0xff]
        %v2751 = vld [vmem:[#allocation5 + $0xf8] sm:$0xff]
        %v2752 = vpack.c.bf16 %v2689, %v2688
        %v2753 = vpack.c.bf16 %v2691, %v2690
        %v2754 = vpack.c.bf16 %v2693, %v2692
        %v2755 = vpack.c.bf16 %v2695, %v2694
        %v2756 = vpack.c.bf16 %v2697, %v2696
        %v2757 = vpack.c.bf16 %v2699, %v2698
        %v2758 = vpack.c.bf16 %v2701, %v2700
        %v2759 = vpack.c.bf16 %v2703, %v2702
        %v2760 = vpack.c.bf16 %v2705, %v2704
        %v2761 = vpack.c.bf16 %v2707, %v2706
        %v2762 = vpack.c.bf16 %v2709, %v2708
        %v2763 = vpack.c.bf16 %v2711, %v2710
        %v2764 = vpack.c.bf16 %v2713, %v2712
        %v2765 = vpack.c.bf16 %v2715, %v2714
        %v2766 = vpack.c.bf16 %v2717, %v2716
        %v2767 = vpack.c.bf16 %v2719, %v2718
        %v2768 = vld [vmem:[#allocation4] sm:$0xff]
        %v2769 = vld [vmem:[#allocation4 + $0x8] sm:$0xff]
        %v2770 = vld [vmem:[#allocation4 + $0x10] sm:$0xff]
        %v2771 = vld [vmem:[#allocation4 + $0x18] sm:$0xff]
        %v2772 = vld [vmem:[#allocation4 + $0x20] sm:$0xff]
        %v2773 = vld [vmem:[#allocation4 + $0x28] sm:$0xff]
        %v2774 = vld [vmem:[#allocation4 + $0x30] sm:$0xff]
        %v2775 = vld [vmem:[#allocation4 + $0x38] sm:$0xff]
        %2776 = vmatprep.subr.bf16.mxu0 0
        %2777 = vmatpush1.bf16.msra.mxu0 %v2768
        %2778 = vmatprep.subr.bf16.mxu0 0
        %2779 = vmatpush1.bf16.msra.mxu0 %v2769
        %2780 = vmatprep.subr.bf16.mxu0 0
        %2781 = vmatpush1.bf16.msra.mxu0 %v2770
        %2782 = vmatprep.subr.bf16.mxu0 0
        %2783 = vmatpush1.bf16.msra.mxu0 %v2771
        %2784 = vmatprep.subr.bf16.mxu0 0
        %2785 = vmatpush1.bf16.msra.mxu0 %v2772
        %2786 = vmatprep.subr.bf16.mxu0 0
        %2787 = vmatpush1.bf16.msra.mxu0 %v2773
        %2788 = vmatprep.subr.bf16.mxu0 0
        %2789 = vmatpush1.bf16.msra.mxu0 %v2774
        %2790 = vmatprep.subr.bf16.mxu0 0
        %2791 = vmatpush1.bf16.msra.mxu0 %v2775
        %2792 = vmatprep.subr.bf16.mxu0 0
        %2793 = vmatpush1.bf16.msra.mxu0 0
        %2794 = vmatprep.subr.bf16.mxu0 0
        %2795 = vmatpush1.bf16.msra.mxu0 0
        %2796 = vmatprep.subr.bf16.mxu0 0
        %2797 = vmatpush1.bf16.msra.mxu0 0
        %2798 = vmatprep.subr.bf16.mxu0 0
        %2799 = vmatpush1.bf16.msra.mxu0 0
        %2800 = vmatprep.subr.bf16.mxu0 0
        %2801 = vmatpush1.bf16.msra.mxu0 0
        %2802 = vmatprep.subr.bf16.mxu0 0
        %2803 = vmatpush1.bf16.msra.mxu0 0
        %2804 = vmatprep.subr.bf16.mxu0 0
        %2805 = vmatpush1.bf16.msra.mxu0 0
        %2806 = vmatprep.subr.bf16.mxu0 0
        %2807 = vmatpush1.bf16.msra.mxu0 0
        %2808 = vmatprep.mubr.bf16.mxu0 0
        %2809 = vmatmul.mubr.bf16.gmra.mrb[0].mxu0 %v2752
        %v2810 = vpop.f32.mrb[0].mxu0
        %v2811 = vadd.f32 0.0, %v2810
        %v2812 = vpop.f32.mrb[0].mxu0
        %v2813 = vpop.f32.mrb[0].mxu0
        %v2814 = vadd.f32 0.0, %v2813
        %v2815 = vpop.f32.mrb[0].mxu0
        %2816 = vmatprep.mubr.bf16.mxu0 0
        %2817 = vmatmul.mubr.bf16.gmra.mrb[0].mxu0 %v2753
        %v2818 = vpop.f32.mrb[0].mxu0
        %v2819 = vadd.f32 0.0, %v2818
        %v2820 = vpop.f32.mrb[0].mxu0
        %v2821 = vpop.f32.mrb[0].mxu0
        %v2822 = vadd.f32 0.0, %v2821
        %v2823 = vpop.f32.mrb[0].mxu0
        %2824 = vmatprep.mubr.bf16.mxu0 0
        %2825 = vmatmul.mubr.bf16.gmra.mrb[0].mxu0 %v2754
        %v2826 = vpop.f32.mrb[0].mxu0
        %v2827 = vadd.f32 0.0, %v2826
        %v2828 = vpop.f32.mrb[0].mxu0
        %v2829 = vpop.f32.mrb[0].mxu0
        %v2830 = vadd.f32 0.0, %v2829
        %v2831 = vpop.f32.mrb[0].mxu0
        %2832 = vmatprep.mubr.bf16.mxu0 0
        %2833 = vmatmul.mubr.bf16.gmra.mrb[0].mxu0 %v2755
        %v2834 = vpop.f32.mrb[0].mxu0
        %v2835 = vadd.f32 0.0, %v2834
        %v2836 = vpop.f32.mrb[0].mxu0
        %v2837 = vpop.f32.mrb[0].mxu0
        %v2838 = vadd.f32 0.0, %v2837
        %v2839 = vpop.f32.mrb[0].mxu0
        %2840 = vmatprep.mubr.bf16.mxu0 0
        %2841 = vmatmul.mubr.bf16.gmra.mrb[0].mxu0 %v2756
        %v2842 = vpop.f32.mrb[0].mxu0
        %v2843 = vadd.f32 0.0, %v2842
        %v2844 = vpop.f32.mrb[0].mxu0
        %v2845 = vpop.f32.mrb[0].mxu0
        %v2846 = vadd.f32 0.0, %v2845
        %v2847 = vpop.f32.mrb[0].mxu0
        %2848 = vmatprep.mubr.bf16.mxu0 0
        %2849 = vmatmul.mubr.bf16.gmra.mrb[0].mxu0 %v2757
        %v2850 = vpop.f32.mrb[0].mxu0
        %v2851 = vadd.f32 0.0, %v2850
        %v2852 = vpop.f32.mrb[0].mxu0
        %v2853 = vpop.f32.mrb[0].mxu0
        %v2854 = vadd.f32 0.0, %v2853
        %v2855 = vpop.f32.mrb[0].mxu0
        %2856 = vmatprep.mubr.bf16.mxu0 0
        %2857 = vmatmul.mubr.bf16.gmra.mrb[0].mxu0 %v2758
        %v2858 = vpop.f32.mrb[0].mxu0
        %v2859 = vadd.f32 0.0, %v2858
        %v2860 = vpop.f32.mrb[0].mxu0
        %v2861 = vpop.f32.mrb[0].mxu0
        %v2862 = vadd.f32 0.0, %v2861
        %v2863 = vpop.f32.mrb[0].mxu0
        %2864 = vmatprep.mubr.bf16.mxu0 0
        %2865 = vmatmul.mubr.bf16.gmra.mrb[0].mxu0 %v2759
        %v2866 = vpop.f32.mrb[0].mxu0
        %v2867 = vadd.f32 0.0, %v2866
        %v2868 = vpop.f32.mrb[0].mxu0
        %v2869 = vpop.f32.mrb[0].mxu0
        %v2870 = vadd.f32 0.0, %v2869
        %v2871 = vpop.f32.mrb[0].mxu0
        %2872 = vmatprep.mubr.bf16.mxu0 0
        %2873 = vmatmul.mubr.bf16.gmra.mrb[0].mxu0 %v2760
        %v2874 = vpop.f32.mrb[0].mxu0
        %v2875 = vadd.f32 0.0, %v2874
        %v2876 = vpop.f32.mrb[0].mxu0
        %v2877 = vpop.f32.mrb[0].mxu0
        %v2878 = vadd.f32 0.0, %v2877
        %v2879 = vpop.f32.mrb[0].mxu0
        %2880 = vmatprep.mubr.bf16.mxu0 0
        %2881 = vmatmul.mubr.bf16.gmra.mrb[0].mxu0 %v2761
        %v2882 = vpop.f32.mrb[0].mxu0
        %v2883 = vadd.f32 0.0, %v2882
        %v2884 = vpop.f32.mrb[0].mxu0
        %v2885 = vpop.f32.mrb[0].mxu0
        %v2886 = vadd.f32 0.0, %v2885
        %v2887 = vpop.f32.mrb[0].mxu0
        %2888 = vmatprep.mubr.bf16.mxu0 0
        %2889 = vmatmul.mubr.bf16.gmra.mrb[0].mxu0 %v2762
        %v2890 = vpop.f32.mrb[0].mxu0
        %v2891 = vadd.f32 0.0, %v2890
        %v2892 = vpop.f32.mrb[0].mxu0
        %v2893 = vpop.f32.mrb[0].mxu0
        %v2894 = vadd.f32 0.0, %v2893
        %v2895 = vpop.f32.mrb[0].mxu0
        %2896 = vmatprep.mubr.bf16.mxu0 0
        %2897 = vmatmul.mubr.bf16.gmra.mrb[0].mxu0 %v2763
        %v2898 = vpop.f32.mrb[0].mxu0
        %v2899 = vadd.f32 0.0, %v2898
        %v2900 = vpop.f32.mrb[0].mxu0
        %v2901 = vpop.f32.mrb[0].mxu0
        %v2902 = vadd.f32 0.0, %v2901
        %v2903 = vpop.f32.mrb[0].mxu0
        %2904 = vmatprep.mubr.bf16.mxu0 0
        %2905 = vmatmul.mubr.bf16.gmra.mrb[0].mxu0 %v2764
        %v2906 = vpop.f32.mrb[0].mxu0
        %v2907 = vadd.f32 0.0, %v2906
        %v2908 = vpop.f32.mrb[0].mxu0
        %v2909 = vpop.f32.mrb[0].mxu0
        %v2910 = vadd.f32 0.0, %v2909
        %v2911 = vpop.f32.mrb[0].mxu0
        %2912 = vmatprep.mubr.bf16.mxu0 0
        %2913 = vmatmul.mubr.bf16.gmra.mrb[0].mxu0 %v2765
        %v2914 = vpop.f32.mrb[0].mxu0
        %v2915 = vadd.f32 0.0, %v2914
        %v2916 = vpop.f32.mrb[0].mxu0
        %v2917 = vpop.f32.mrb[0].mxu0
        %v2918 = vadd.f32 0.0, %v2917
        %v2919 = vpop.f32.mrb[0].mxu0
        %2920 = vmatprep.mubr.bf16.mxu0 0
        %2921 = vmatmul.mubr.bf16.gmra.mrb[0].mxu0 %v2766
        %v2922 = vpop.f32.mrb[0].mxu0
        %v2923 = vadd.f32 0.0, %v2922
        %v2924 = vpop.f32.mrb[0].mxu0
        %v2925 = vpop.f32.mrb[0].mxu0
        %v2926 = vadd.f32 0.0, %v2925
        %v2927 = vpop.f32.mrb[0].mxu0
        %2928 = vmatprep.mubr.bf16.mxu0 0
        %2929 = vmatmul.mubr.bf16.gmra.mrb[0].mxu0 %v2767
        %v2930 = vpop.f32.mrb[0].mxu0
        %v2931 = vadd.f32 0.0, %v2930
        %v2932 = vpop.f32.mrb[0].mxu0
        %v2933 = vpop.f32.mrb[0].mxu0
        %v2934 = vadd.f32 0.0, %v2933
        %v2935 = vpop.f32.mrb[0].mxu0
        %2936 = vdwg.mxu0
        %v2937 = vadd.f32 %v2720, %v2811
        %v2938 = vadd.f32 %v2721, %v2814
        %v2939 = vadd.f32 %v2722, %v2819
        %v2940 = vadd.f32 %v2723, %v2822
        %v2941 = vadd.f32 %v2724, %v2827
        %v2942 = vadd.f32 %v2725, %v2830
        %v2943 = vadd.f32 %v2726, %v2835
        %v2944 = vadd.f32 %v2727, %v2838
        %v2945 = vadd.f32 %v2728, %v2843
        %v2946 = vadd.f32 %v2729, %v2846
        %v2947 = vadd.f32 %v2730, %v2851
        %v2948 = vadd.f32 %v2731, %v2854
        %v2949 = vadd.f32 %v2732, %v2859
        %v2950 = vadd.f32 %v2733, %v2862
        %v2951 = vadd.f32 %v2734, %v2867
        %v2952 = vadd.f32 %v2735, %v2870
        %v2953 = vadd.f32 %v2736, %v2875
        %v2954 = vadd.f32 %v2737, %v2878
        %v2955 = vadd.f32 %v2738, %v2883
        %v2956 = vadd.f32 %v2739, %v2886
        %v2957 = vadd.f32 %v2740, %v2891
        %v2958 = vadd.f32 %v2741, %v2894
        %v2959 = vadd.f32 %v2742, %v2899
        %v2960 = vadd.f32 %v2743, %v2902
        %v2961 = vadd.f32 %v2744, %v2907
        %v2962 = vadd.f32 %v2745, %v2910
        %v2963 = vadd.f32 %v2746, %v2915
        %v2964 = vadd.f32 %v2747, %v2918
        %v2965 = vadd.f32 %v2748, %v2923
        %v2966 = vadd.f32 %v2749, %v2926
        %v2967 = vadd.f32 %v2750, %v2931
        %v2968 = vadd.f32 %v2751, %v2934
        %2969 = vst [vmem:[#allocation5] sm:$0xff] %v2937
        %2970 = vst [vmem:[#allocation5 + $0x8] sm:$0xff] %v2938
        %2971 = vst [vmem:[#allocation5 + $0x10] sm:$0xff] %v2939
        %2972 = vst [vmem:[#allocation5 + $0x18] sm:$0xff] %v2940
        %2973 = vst [vmem:[#allocation5 + $0x20] sm:$0xff] %v2941
        %2974 = vst [vmem:[#allocation5 + $0x28] sm:$0xff] %v2942
        %2975 = vst [vmem:[#allocation5 + $0x30] sm:$0xff] %v2943
        %2976 = vst [vmem:[#allocation5 + $0x38] sm:$0xff] %v2944
        %2977 = vst [vmem:[#allocation5 + $0x40] sm:$0xff] %v2945
        %2978 = vst [vmem:[#allocation5 + $0x48] sm:$0xff] %v2946
        %2979 = vst [vmem:[#allocation5 + $0x50] sm:$0xff] %v2947
        %2980 = vst [vmem:[#allocation5 + $0x58] sm:$0xff] %v2948
        %2981 = vst [vmem:[#allocation5 + $0x60] sm:$0xff] %v2949
        %2982 = vst [vmem:[#allocation5 + $0x68] sm:$0xff] %v2950
        %2983 = vst [vmem:[#allocation5 + $0x70] sm:$0xff] %v2951
        %2984 = vst [vmem:[#allocation5 + $0x78] sm:$0xff] %v2952
        %2985 = vst [vmem:[#allocation5 + $0x80] sm:$0xff] %v2953
        %2986 = vst [vmem:[#allocation5 + $0x88] sm:$0xff] %v2954
        %2987 = vst [vmem:[#allocation5 + $0x90] sm:$0xff] %v2955
        %2988 = vst [vmem:[#allocation5 + $0x98] sm:$0xff] %v2956
        %2989 = vst [vmem:[#allocation5 + $0xa0] sm:$0xff] %v2957
        %2990 = vst [vmem:[#allocation5 + $0xa8] sm:$0xff] %v2958
        %2991 = vst [vmem:[#allocation5 + $0xb0] sm:$0xff] %v2959
        %2992 = vst [vmem:[#allocation5 + $0xb8] sm:$0xff] %v2960
        %2993 = vst [vmem:[#allocation5 + $0xc0] sm:$0xff] %v2961
        %2994 = vst [vmem:[#allocation5 + $0xc8] sm:$0xff] %v2962
        %2995 = vst [vmem:[#allocation5 + $0xd0] sm:$0xff] %v2963
        %2996 = vst [vmem:[#allocation5 + $0xd8] sm:$0xff] %v2964
        %2997 = vst [vmem:[#allocation5 + $0xe0] sm:$0xff] %v2965
        %2998 = vst [vmem:[#allocation5 + $0xe8] sm:$0xff] %v2966
        %2999 = vst [vmem:[#allocation5 + $0xf0] sm:$0xff] %v2967
        %3000 = vst [vmem:[#allocation5 + $0xf8] sm:$0xff] %v2968
        %v3001 = vld [vmem:[#allocation2] sm:$0xff]
        %v3002 = vld [vmem:[#allocation2 + $0x8] sm:$0xff]
        %v3003 = vld [vmem:[#allocation2 + $0x10] sm:$0xff]
        %v3004 = vld [vmem:[#allocation2 + $0x18] sm:$0xff]
        %v3005 = vld [vmem:[#allocation2 + $0x20] sm:$0xff]
        %v3006 = vld [vmem:[#allocation2 + $0x28] sm:$0xff]
        %v3007 = vld [vmem:[#allocation2 + $0x30] sm:$0xff]
        %v3008 = vld [vmem:[#allocation2 + $0x38] sm:$0xff]
        %v3009 = vld [vmem:[#allocation2 + $0x40] sm:$0xff]
        %v3010 = vld [vmem:[#allocation2 + $0x48] sm:$0xff]
        %v3011 = vld [vmem:[#allocation2 + $0x50] sm:$0xff]
        %v3012 = vld [vmem:[#allocation2 + $0x58] sm:$0xff]
        %v3013 = vld [vmem:[#allocation2 + $0x60] sm:$0xff]
        %v3014 = vld [vmem:[#allocation2 + $0x68] sm:$0xff]
        %v3015 = vld [vmem:[#allocation2 + $0x70] sm:$0xff]
        %v3016 = vld [vmem:[#allocation2 + $0x78] sm:$0xff]
        %v3017 = vld [vmem:[#allocation3] sm:$0xff]
        %v3018 = vld [vmem:[#allocation3 + $0x8] sm:$0xff]
        %v3019 = vld [vmem:[#allocation3 + $0x10] sm:$0xff]
        %v3020 = vld [vmem:[#allocation3 + $0x18] sm:$0xff]
        %v3021 = vld [vmem:[#allocation3 + $0x20] sm:$0xff]
        %v3022 = vld [vmem:[#allocation3 + $0x28] sm:$0xff]
        %v3023 = vld [vmem:[#allocation3 + $0x30] sm:$0xff]
        %v3024 = vld [vmem:[#allocation3 + $0x38] sm:$0xff]
        %3041 = vrot.lane.b32.xlu0 %v3001, 112
        %v3042 = vpop.permute.xlu0 %3041
        %3043 = vrot.lane.b32.xlu0 %v3002, 112
        %v3044 = vpop.permute.xlu0 %3043
        %3045 = vrot.lane.b32.xlu0 %v3003, 112
        %v3046 = vpop.permute.xlu0 %3045
        %3047 = vrot.lane.b32.xlu0 %v3004, 112
        %v3048 = vpop.permute.xlu0 %3047
        %3049 = vrot.lane.b32.xlu0 %v3005, 112
        %v3050 = vpop.permute.xlu0 %3049
        %3051 = vrot.lane.b32.xlu0 %v3006, 112
        %v3052 = vpop.permute.xlu0 %3051
        %3053 = vrot.lane.b32.xlu0 %v3007, 112
        %v3054 = vpop.permute.xlu0 %3053
        %3055 = vrot.lane.b32.xlu0 %v3008, 112
        %v3056 = vpop.permute.xlu0 %3055
        %3057 = vrot.lane.b32.xlu0 %v3009, 112
        %v3058 = vpop.permute.xlu0 %3057
        %3059 = vrot.lane.b32.xlu0 %v3010, 112
        %v3060 = vpop.permute.xlu0 %3059
        %3061 = vrot.lane.b32.xlu0 %v3011, 112
        %v3062 = vpop.permute.xlu0 %3061
        %3063 = vrot.lane.b32.xlu0 %v3012, 112
        %v3064 = vpop.permute.xlu0 %3063
        %3065 = vrot.lane.b32.xlu0 %v3013, 112
        %v3066 = vpop.permute.xlu0 %3065
        %3067 = vrot.lane.b32.xlu0 %v3014, 112
        %v3068 = vpop.permute.xlu0 %3067
        %3069 = vrot.lane.b32.xlu0 %v3015, 112
        %v3070 = vpop.permute.xlu0 %3069
        %3071 = vrot.lane.b32.xlu0 %v3016, 112
        %v3072 = vpop.permute.xlu0 %3071
        %3081 = vrot.lane.b32.xlu0 %v3017, 112
        %v3082 = vpop.permute.xlu0 %3081
        %3083 = vrot.lane.b32.xlu0 %v3018, 112
        %v3084 = vpop.permute.xlu0 %3083
        %3085 = vrot.lane.b32.xlu0 %v3019, 112
        %v3086 = vpop.permute.xlu0 %3085
        %3087 = vrot.lane.b32.xlu0 %v3020, 112
        %v3088 = vpop.permute.xlu0 %3087
        %3089 = vrot.lane.b32.xlu0 %v3021, 112
        %v3090 = vpop.permute.xlu0 %3089
        %3091 = vrot.lane.b32.xlu0 %v3022, 112
        %v3092 = vpop.permute.xlu0 %3091
        %3093 = vrot.lane.b32.xlu0 %v3023, 112
        %v3094 = vpop.permute.xlu0 %3093
        %3095 = vrot.lane.b32.xlu0 %v3024, 112
        %v3096 = vpop.permute.xlu0 %3095
        %v3098 = vsel %vm2198, %v3042, 0
        %v3101 = vsel %vm2198, %v3044, 0
        %v3104 = vsel %vm2198, %v3046, 0
        %v3107 = vsel %vm2198, %v3048, 0
        %v3110 = vsel %vm2198, %v3050, 0
        %v3113 = vsel %vm2198, %v3052, 0
        %v3116 = vsel %vm2198, %v3054, 0
        %v3119 = vsel %vm2198, %v3056, 0
        %v3122 = vsel %vm2198, %v3058, 0
        %v3125 = vsel %vm2198, %v3060, 0
        %v3128 = vsel %vm2198, %v3062, 0
        %v3131 = vsel %vm2198, %v3064, 0
        %v3134 = vsel %vm2198, %v3066, 0
        %v3137 = vsel %vm2198, %v3068, 0
        %v3140 = vsel %vm2198, %v3070, 0
        %v3143 = vsel %vm2198, %v3072, 0
        %v3146 = vsel %vm2198, %v3082, 0
        %v3149 = vsel %vm2198, %v3084, 0
        %v3152 = vsel %vm2198, %v3086, 0
        %v3155 = vsel %vm2198, %v3088, 0
        %v3158 = vsel %vm2198, %v3090, 0
        %v3161 = vsel %vm2198, %v3092, 0
        %v3164 = vsel %vm2198, %v3094, 0
        %v3167 = vsel %vm2198, %v3096, 0
        %3169 = vmatprep.subr.bf16.mxu0 0
        %3170 = vmatpush1.bf16.xpose.msra.mxu0 %v3146
        %3171 = vmatprep.subr.bf16.mxu0 0
        %3172 = vmatpush1.bf16.xpose.msra.mxu0 %v3149
        %3173 = vmatprep.subr.bf16.mxu0 0
        %3174 = vmatpush1.bf16.xpose.msra.mxu0 %v3152
        %3175 = vmatprep.subr.bf16.mxu0 0
        %3176 = vmatpush1.bf16.xpose.msra.mxu0 %v3155
        %3177 = vmatprep.subr.bf16.mxu0 0
        %3178 = vmatpush1.bf16.xpose.msra.mxu0 %v3158
        %3179 = vmatprep.subr.bf16.mxu0 0
        %3180 = vmatpush1.bf16.xpose.msra.mxu0 %v3161
        %3181 = vmatprep.subr.bf16.mxu0 0
        %3182 = vmatpush1.bf16.xpose.msra.mxu0 %v3164
        %3183 = vmatprep.subr.bf16.mxu0 0
        %3184 = vmatpush1.bf16.xpose.msra.mxu0 %v3167
        %3185 = vmatprep.subr.bf16.mxu0 0
        %3186 = vmatpush1.bf16.xpose.msra.mxu0 0
        %3187 = vmatprep.subr.bf16.mxu0 0
        %3188 = vmatpush1.bf16.xpose.msra.mxu0 0
        %3189 = vmatprep.subr.bf16.mxu0 0
        %3190 = vmatpush1.bf16.xpose.msra.mxu0 0
        %3191 = vmatprep.subr.bf16.mxu0 0
        %3192 = vmatpush1.bf16.xpose.msra.mxu0 0
        %3193 = vmatprep.subr.bf16.mxu0 0
        %3194 = vmatpush1.bf16.xpose.msra.mxu0 0
        %3195 = vmatprep.subr.bf16.mxu0 0
        %3196 = vmatpush1.bf16.xpose.msra.mxu0 0
        %3197 = vmatprep.subr.bf16.mxu0 0
        %3198 = vmatpush1.bf16.xpose.msra.mxu0 0
        %3199 = vmatprep.subr.bf16.mxu0 0
        %3200 = vmatpush1.bf16.xpose.msra.mxu0 0
        %3201 = vmatprep.mubr.bf16.mxu0 0
        %3202 = vmatmul.mubr.bf16.gmra.mrb[0].mxu0 %v3098
        %v3203 = vpop.f32.mrb[0].mxu0
        %v3204 = vadd.f32 0.0, %v3203
        %v3205 = vpop.f32.mrb[0].mxu0
        %v3206 = vpop.f32.mrb[0].mxu0
        %v3207 = vadd.f32 0.0, %v3206
        %v3208 = vpop.f32.mrb[0].mxu0
        %3209 = vmatprep.mubr.bf16.mxu0 0
        %3210 = vmatmul.mubr.bf16.gmra.mrb[0].mxu0 %v3101
        %v3211 = vpop.f32.mrb[0].mxu0
        %v3212 = vadd.f32 0.0, %v3211
        %v3213 = vpop.f32.mrb[0].mxu0
        %v3214 = vpop.f32.mrb[0].mxu0
        %v3215 = vadd.f32 0.0, %v3214
        %v3216 = vpop.f32.mrb[0].mxu0
        %3217 = vmatprep.mubr.bf16.mxu0 0
        %3218 = vmatmul.mubr.bf16.gmra.mrb[0].mxu0 %v3104
        %v3219 = vpop.f32.mrb[0].mxu0
        %v3220 = vadd.f32 0.0, %v3219
        %v3221 = vpop.f32.mrb[0].mxu0
        %v3222 = vpop.f32.mrb[0].mxu0
        %v3223 = vadd.f32 0.0, %v3222
        %v3224 = vpop.f32.mrb[0].mxu0
        %3225 = vmatprep.mubr.bf16.mxu0 0
        %3226 = vmatmul.mubr.bf16.gmra.mrb[0].mxu0 %v3107
        %v3227 = vpop.f32.mrb[0].mxu0
        %v3228 = vadd.f32 0.0, %v3227
        %v3229 = vpop.f32.mrb[0].mxu0
        %v3230 = vpop.f32.mrb[0].mxu0
        %v3231 = vadd.f32 0.0, %v3230
        %v3232 = vpop.f32.mrb[0].mxu0
        %3233 = vmatprep.mubr.bf16.mxu0 0
        %3234 = vmatmul.mubr.bf16.gmra.mrb[0].mxu0 %v3110
        %v3235 = vpop.f32.mrb[0].mxu0
        %v3236 = vadd.f32 0.0, %v3235
        %v3237 = vpop.f32.mrb[0].mxu0
        %v3238 = vpop.f32.mrb[0].mxu0
        %v3239 = vadd.f32 0.0, %v3238
        %v3240 = vpop.f32.mrb[0].mxu0
        %3241 = vmatprep.mubr.bf16.mxu0 0
        %3242 = vmatmul.mubr.bf16.gmra.mrb[0].mxu0 %v3113
        %v3243 = vpop.f32.mrb[0].mxu0
        %v3244 = vadd.f32 0.0, %v3243
        %v3245 = vpop.f32.mrb[0].mxu0
        %v3246 = vpop.f32.mrb[0].mxu0
        %v3247 = vadd.f32 0.0, %v3246
        %v3248 = vpop.f32.mrb[0].mxu0
        %3249 = vmatprep.mubr.bf16.mxu0 0
        %3250 = vmatmul.mubr.bf16.gmra.mrb[0].mxu0 %v3116
        %v3251 = vpop.f32.mrb[0].mxu0
        %v3252 = vadd.f32 0.0, %v3251
        %v3253 = vpop.f32.mrb[0].mxu0
        %v3254 = vpop.f32.mrb[0].mxu0
        %v3255 = vadd.f32 0.0, %v3254
        %v3256 = vpop.f32.mrb[0].mxu0
        %3257 = vmatprep.mubr.bf16.mxu0 0
        %3258 = vmatmul.mubr.bf16.gmra.mrb[0].mxu0 %v3119
        %v3259 = vpop.f32.mrb[0].mxu0
        %v3260 = vadd.f32 0.0, %v3259
        %v3261 = vpop.f32.mrb[0].mxu0
        %v3262 = vpop.f32.mrb[0].mxu0
        %v3263 = vadd.f32 0.0, %v3262
        %v3264 = vpop.f32.mrb[0].mxu0
        %3265 = vmatprep.mubr.bf16.mxu0 0
        %3266 = vmatmul.mubr.bf16.gmra.mrb[0].mxu0 %v3122
        %v3267 = vpop.f32.mrb[0].mxu0
        %v3268 = vadd.f32 0.0, %v3267
        %v3269 = vpop.f32.mrb[0].mxu0
        %v3270 = vpop.f32.mrb[0].mxu0
        %v3271 = vadd.f32 0.0, %v3270
        %v3272 = vpop.f32.mrb[0].mxu0
        %3273 = vmatprep.mubr.bf16.mxu0 0
        %3274 = vmatmul.mubr.bf16.gmra.mrb[0].mxu0 %v3125
        %v3275 = vpop.f32.mrb[0].mxu0
        %v3276 = vadd.f32 0.0, %v3275
        %v3277 = vpop.f32.mrb[0].mxu0
        %v3278 = vpop.f32.mrb[0].mxu0
        %v3279 = vadd.f32 0.0, %v3278
        %v3280 = vpop.f32.mrb[0].mxu0
        %3281 = vmatprep.mubr.bf16.mxu0 0
        %3282 = vmatmul.mubr.bf16.gmra.mrb[0].mxu0 %v3128
        %v3283 = vpop.f32.mrb[0].mxu0
        %v3284 = vadd.f32 0.0, %v3283
        %v3285 = vpop.f32.mrb[0].mxu0
        %v3286 = vpop.f32.mrb[0].mxu0
        %v3287 = vadd.f32 0.0, %v3286
        %v3288 = vpop.f32.mrb[0].mxu0
        %3289 = vmatprep.mubr.bf16.mxu0 0
        %3290 = vmatmul.mubr.bf16.gmra.mrb[0].mxu0 %v3131
        %v3291 = vpop.f32.mrb[0].mxu0
        %v3292 = vadd.f32 0.0, %v3291
        %v3293 = vpop.f32.mrb[0].mxu0
        %v3294 = vpop.f32.mrb[0].mxu0
        %v3295 = vadd.f32 0.0, %v3294
        %v3296 = vpop.f32.mrb[0].mxu0
        %3297 = vmatprep.mubr.bf16.mxu0 0
        %3298 = vmatmul.mubr.bf16.gmra.mrb[0].mxu0 %v3134
        %v3299 = vpop.f32.mrb[0].mxu0
        %v3300 = vadd.f32 0.0, %v3299
        %v3301 = vpop.f32.mrb[0].mxu0
        %v3302 = vpop.f32.mrb[0].mxu0
        %v3303 = vadd.f32 0.0, %v3302
        %v3304 = vpop.f32.mrb[0].mxu0
        %3305 = vmatprep.mubr.bf16.mxu0 0
        %3306 = vmatmul.mubr.bf16.gmra.mrb[0].mxu0 %v3137
        %v3307 = vpop.f32.mrb[0].mxu0
        %v3308 = vadd.f32 0.0, %v3307
        %v3309 = vpop.f32.mrb[0].mxu0
        %v3310 = vpop.f32.mrb[0].mxu0
        %v3311 = vadd.f32 0.0, %v3310
        %v3312 = vpop.f32.mrb[0].mxu0
        %3313 = vmatprep.mubr.bf16.mxu0 0
        %3314 = vmatmul.mubr.bf16.gmra.mrb[0].mxu0 %v3140
        %v3315 = vpop.f32.mrb[0].mxu0
        %v3316 = vadd.f32 0.0, %v3315
        %v3317 = vpop.f32.mrb[0].mxu0
        %v3318 = vpop.f32.mrb[0].mxu0
        %v3319 = vadd.f32 0.0, %v3318
        %v3320 = vpop.f32.mrb[0].mxu0
        %3321 = vmatprep.mubr.bf16.mxu0 0
        %3322 = vmatmul.mubr.bf16.gmra.mrb[0].mxu0 %v3143
        %v3323 = vpop.f32.mrb[0].mxu0
        %v3324 = vadd.f32 0.0, %v3323
        %v3325 = vpop.f32.mrb[0].mxu0
        %v3326 = vpop.f32.mrb[0].mxu0
        %v3327 = vadd.f32 0.0, %v3326
        %v3328 = vpop.f32.mrb[0].mxu0
        %3329 = vdwg.mxu0
        %3330 = vmax.xlane.f32.xlu0 %v3204
        %v3331 = vpop.xlane.xlu0 %3330
        %3332 = vmax.xlane.f32.xlu0 %v3207
        %v3333 = vpop.xlane.xlu0 %3332
        %3334 = vmax.xlane.f32.xlu0 %v3212
        %v3335 = vpop.xlane.xlu0 %3334
        %3336 = vmax.xlane.f32.xlu0 %v3215
        %v3337 = vpop.xlane.xlu0 %3336
        %3338 = vmax.xlane.f32.xlu0 %v3220
        %v3339 = vpop.xlane.xlu0 %3338
        %3340 = vmax.xlane.f32.xlu0 %v3223
        %v3341 = vpop.xlane.xlu0 %3340
        %3342 = vmax.xlane.f32.xlu0 %v3228
        %v3343 = vpop.xlane.xlu0 %3342
        %3344 = vmax.xlane.f32.xlu0 %v3231
        %v3345 = vpop.xlane.xlu0 %3344
        %3346 = vmax.xlane.f32.xlu0 %v3236
        %v3347 = vpop.xlane.xlu0 %3346
        %3348 = vmax.xlane.f32.xlu0 %v3239
        %v3349 = vpop.xlane.xlu0 %3348
        %3350 = vmax.xlane.f32.xlu0 %v3244
        %v3351 = vpop.xlane.xlu0 %3350
        %3352 = vmax.xlane.f32.xlu0 %v3247
        %v3353 = vpop.xlane.xlu0 %3352
        %3354 = vmax.xlane.f32.xlu0 %v3252
        %v3355 = vpop.xlane.xlu0 %3354
        %3356 = vmax.xlane.f32.xlu0 %v3255
        %v3357 = vpop.xlane.xlu0 %3356
        %3358 = vmax.xlane.f32.xlu0 %v3260
        %v3359 = vpop.xlane.xlu0 %3358
        %3360 = vmax.xlane.f32.xlu0 %v3263
        %v3361 = vpop.xlane.xlu0 %3360
        %3362 = vmax.xlane.f32.xlu0 %v3268
        %v3363 = vpop.xlane.xlu0 %3362
        %3364 = vmax.xlane.f32.xlu0 %v3271
        %v3365 = vpop.xlane.xlu0 %3364
        %3366 = vmax.xlane.f32.xlu0 %v3276
        %v3367 = vpop.xlane.xlu0 %3366
        %3368 = vmax.xlane.f32.xlu0 %v3279
        %v3369 = vpop.xlane.xlu0 %3368
        %3370 = vmax.xlane.f32.xlu0 %v3284
        %v3371 = vpop.xlane.xlu0 %3370
        %3372 = vmax.xlane.f32.xlu0 %v3287
        %v3373 = vpop.xlane.xlu0 %3372
        %3374 = vmax.xlane.f32.xlu0 %v3292
        %v3375 = vpop.xlane.xlu0 %3374
        %3376 = vmax.xlane.f32.xlu0 %v3295
        %v3377 = vpop.xlane.xlu0 %3376
        %3378 = vmax.xlane.f32.xlu0 %v3300
        %v3379 = vpop.xlane.xlu0 %3378
        %3380 = vmax.xlane.f32.xlu0 %v3303
        %v3381 = vpop.xlane.xlu0 %3380
        %3382 = vmax.xlane.f32.xlu0 %v3308
        %v3383 = vpop.xlane.xlu0 %3382
        %3384 = vmax.xlane.f32.xlu0 %v3311
        %v3385 = vpop.xlane.xlu0 %3384
        %3386 = vmax.xlane.f32.xlu0 %v3316
        %v3387 = vpop.xlane.xlu0 %3386
        %3388 = vmax.xlane.f32.xlu0 %v3319
        %v3389 = vpop.xlane.xlu0 %3388
        %3390 = vmax.xlane.f32.xlu0 %v3324
        %v3391 = vpop.xlane.xlu0 %3390
        %3392 = vmax.xlane.f32.xlu0 %v3327
        %v3393 = vpop.xlane.xlu0 %3392
        %v3394 = vsub.f32 %v3204, %v3331
        %v3395 = vsub.f32 %v3207, %v3333
        %v3396 = vsub.f32 %v3212, %v3335
        %v3397 = vsub.f32 %v3215, %v3337
        %v3398 = vsub.f32 %v3220, %v3339
        %v3399 = vsub.f32 %v3223, %v3341
        %v3400 = vsub.f32 %v3228, %v3343
        %v3401 = vsub.f32 %v3231, %v3345
        %v3402 = vsub.f32 %v3236, %v3347
        %v3403 = vsub.f32 %v3239, %v3349
        %v3404 = vsub.f32 %v3244, %v3351
        %v3405 = vsub.f32 %v3247, %v3353
        %v3406 = vsub.f32 %v3252, %v3355
        %v3407 = vsub.f32 %v3255, %v3357
        %v3408 = vsub.f32 %v3260, %v3359
        %v3409 = vsub.f32 %v3263, %v3361
        %v3410 = vsub.f32 %v3268, %v3363
        %v3411 = vsub.f32 %v3271, %v3365
        %v3412 = vsub.f32 %v3276, %v3367
        %v3413 = vsub.f32 %v3279, %v3369
        %v3414 = vsub.f32 %v3284, %v3371
        %v3415 = vsub.f32 %v3287, %v3373
        %v3416 = vsub.f32 %v3292, %v3375
        %v3417 = vsub.f32 %v3295, %v3377
        %v3418 = vsub.f32 %v3300, %v3379
        %v3419 = vsub.f32 %v3303, %v3381
        %v3420 = vsub.f32 %v3308, %v3383
        %v3421 = vsub.f32 %v3311, %v3385
        %v3422 = vsub.f32 %v3316, %v3387
        %v3423 = vsub.f32 %v3319, %v3389
        %v3424 = vsub.f32 %v3324, %v3391
        %v3425 = vsub.f32 %v3327, %v3393
        %v3426 = vmul.f32 %v3394, 1.442695
        %v3427 = vpow.pop %v3426
        %v3428 = vmul.f32 %v3395, 1.442695
        %v3429 = vpow.pop %v3428
        %v3430 = vmul.f32 %v3396, 1.442695
        %v3431 = vpow.pop %v3430
        %v3432 = vmul.f32 %v3397, 1.442695
        %v3433 = vpow.pop %v3432
        %v3434 = vmul.f32 %v3398, 1.442695
        %v3435 = vpow.pop %v3434
        %v3436 = vmul.f32 %v3399, 1.442695
        %v3437 = vpow.pop %v3436
        %v3438 = vmul.f32 %v3400, 1.442695
        %v3439 = vpow.pop %v3438
        %v3440 = vmul.f32 %v3401, 1.442695
        %v3441 = vpow.pop %v3440
        %v3442 = vmul.f32 %v3402, 1.442695
        %v3443 = vpow.pop %v3442
        %v3444 = vmul.f32 %v3403, 1.442695
        %v3445 = vpow.pop %v3444
        %v3446 = vmul.f32 %v3404, 1.442695
        %v3447 = vpow.pop %v3446
        %v3448 = vmul.f32 %v3405, 1.442695
        %v3449 = vpow.pop %v3448
        %v3450 = vmul.f32 %v3406, 1.442695
        %v3451 = vpow.pop %v3450
        %v3452 = vmul.f32 %v3407, 1.442695
        %v3453 = vpow.pop %v3452
        %v3454 = vmul.f32 %v3408, 1.442695
        %v3455 = vpow.pop %v3454
        %v3456 = vmul.f32 %v3409, 1.442695
        %v3457 = vpow.pop %v3456
        %v3458 = vmul.f32 %v3410, 1.442695
        %v3459 = vpow.pop %v3458
        %v3460 = vmul.f32 %v3411, 1.442695
        %v3461 = vpow.pop %v3460
        %v3462 = vmul.f32 %v3412, 1.442695
        %v3463 = vpow.pop %v3462
        %v3464 = vmul.f32 %v3413, 1.442695
        %v3465 = vpow.pop %v3464
        %v3466 = vmul.f32 %v3414, 1.442695
        %v3467 = vpow.pop %v3466
        %v3468 = vmul.f32 %v3415, 1.442695
        %v3469 = vpow.pop %v3468
        %v3470 = vmul.f32 %v3416, 1.442695
        %v3471 = vpow.pop %v3470
        %v3472 = vmul.f32 %v3417, 1.442695
        %v3473 = vpow.pop %v3472
        %v3474 = vmul.f32 %v3418, 1.442695
        %v3475 = vpow.pop %v3474
        %v3476 = vmul.f32 %v3419, 1.442695
        %v3477 = vpow.pop %v3476
        %v3478 = vmul.f32 %v3420, 1.442695
        %v3479 = vpow.pop %v3478
        %v3480 = vmul.f32 %v3421, 1.442695
        %v3481 = vpow.pop %v3480
        %v3482 = vmul.f32 %v3422, 1.442695
        %v3483 = vpow.pop %v3482
        %v3484 = vmul.f32 %v3423, 1.442695
        %v3485 = vpow.pop %v3484
        %v3486 = vmul.f32 %v3424, 1.442695
        %v3487 = vpow.pop %v3486
        %v3488 = vmul.f32 %v3425, 1.442695
        %v3489 = vpow.pop %v3488
        %3490 = vadd.xlane.f32.xlu0 %v3427
        %v3491 = vpop.xlane.xlu0 %3490
        %3492 = vadd.xlane.f32.xlu0 %v3429
        %v3493 = vpop.xlane.xlu0 %3492
        %3494 = vadd.xlane.f32.xlu0 %v3431
        %v3495 = vpop.xlane.xlu0 %3494
        %3496 = vadd.xlane.f32.xlu0 %v3433
        %v3497 = vpop.xlane.xlu0 %3496
        %3498 = vadd.xlane.f32.xlu0 %v3435
        %v3499 = vpop.xlane.xlu0 %3498
        %3500 = vadd.xlane.f32.xlu0 %v3437
        %v3501 = vpop.xlane.xlu0 %3500
        %3502 = vadd.xlane.f32.xlu0 %v3439
        %v3503 = vpop.xlane.xlu0 %3502
        %3504 = vadd.xlane.f32.xlu0 %v3441
        %v3505 = vpop.xlane.xlu0 %3504
        %3506 = vadd.xlane.f32.xlu0 %v3443
        %v3507 = vpop.xlane.xlu0 %3506
        %3508 = vadd.xlane.f32.xlu0 %v3445
        %v3509 = vpop.xlane.xlu0 %3508
        %3510 = vadd.xlane.f32.xlu0 %v3447
        %v3511 = vpop.xlane.xlu0 %3510
        %3512 = vadd.xlane.f32.xlu0 %v3449
        %v3513 = vpop.xlane.xlu0 %3512
        %3514 = vadd.xlane.f32.xlu0 %v3451
        %v3515 = vpop.xlane.xlu0 %3514
        %3516 = vadd.xlane.f32.xlu0 %v3453
        %v3517 = vpop.xlane.xlu0 %3516
        %3518 = vadd.xlane.f32.xlu0 %v3455
        %v3519 = vpop.xlane.xlu0 %3518
        %3520 = vadd.xlane.f32.xlu0 %v3457
        %v3521 = vpop.xlane.xlu0 %3520
        %3522 = vadd.xlane.f32.xlu0 %v3459
        %v3523 = vpop.xlane.xlu0 %3522
        %3524 = vadd.xlane.f32.xlu0 %v3461
        %v3525 = vpop.xlane.xlu0 %3524
        %3526 = vadd.xlane.f32.xlu0 %v3463
        %v3527 = vpop.xlane.xlu0 %3526
        %3528 = vadd.xlane.f32.xlu0 %v3465
        %v3529 = vpop.xlane.xlu0 %3528
        %3530 = vadd.xlane.f32.xlu0 %v3467
        %v3531 = vpop.xlane.xlu0 %3530
        %3532 = vadd.xlane.f32.xlu0 %v3469
        %v3533 = vpop.xlane.xlu0 %3532
        %3534 = vadd.xlane.f32.xlu0 %v3471
        %v3535 = vpop.xlane.xlu0 %3534
        %3536 = vadd.xlane.f32.xlu0 %v3473
        %v3537 = vpop.xlane.xlu0 %3536
        %3538 = vadd.xlane.f32.xlu0 %v3475
        %v3539 = vpop.xlane.xlu0 %3538
        %3540 = vadd.xlane.f32.xlu0 %v3477
        %v3541 = vpop.xlane.xlu0 %3540
        %3542 = vadd.xlane.f32.xlu0 %v3479
        %v3543 = vpop.xlane.xlu0 %3542
        %3544 = vadd.xlane.f32.xlu0 %v3481
        %v3545 = vpop.xlane.xlu0 %3544
        %3546 = vadd.xlane.f32.xlu0 %v3483
        %v3547 = vpop.xlane.xlu0 %3546
        %3548 = vadd.xlane.f32.xlu0 %v3485
        %v3549 = vpop.xlane.xlu0 %3548
        %3550 = vadd.xlane.f32.xlu0 %v3487
        %v3551 = vpop.xlane.xlu0 %3550
        %3552 = vadd.xlane.f32.xlu0 %v3489
        %v3553 = vpop.xlane.xlu0 %3552
        %v3554 = vrcp.pop %v3491
        %v3555 = vrcp.pop %v3493
        %v3556 = vrcp.pop %v3495
        %v3557 = vrcp.pop %v3497
        %v3558 = vrcp.pop %v3499
        %v3559 = vrcp.pop %v3501
        %v3560 = vrcp.pop %v3503
        %v3561 = vrcp.pop %v3505
        %v3562 = vrcp.pop %v3507
        %v3563 = vrcp.pop %v3509
        %v3564 = vrcp.pop %v3511
        %v3565 = vrcp.pop %v3513
        %v3566 = vrcp.pop %v3515
        %v3567 = vrcp.pop %v3517
        %v3568 = vrcp.pop %v3519
        %v3569 = vrcp.pop %v3521
        %v3570 = vrcp.pop %v3523
        %v3571 = vrcp.pop %v3525
        %v3572 = vrcp.pop %v3527
        %v3573 = vrcp.pop %v3529
        %v3574 = vrcp.pop %v3531
        %v3575 = vrcp.pop %v3533
        %v3576 = vrcp.pop %v3535
        %v3577 = vrcp.pop %v3537
        %v3578 = vrcp.pop %v3539
        %v3579 = vrcp.pop %v3541
        %v3580 = vrcp.pop %v3543
        %v3581 = vrcp.pop %v3545
        %v3582 = vrcp.pop %v3547
        %v3583 = vrcp.pop %v3549
        %v3584 = vrcp.pop %v3551
        %v3585 = vrcp.pop %v3553
        %v3586 = vmul.f32 %v3427, %v3554
        %v3587 = vmul.f32 %v3429, %v3555
        %v3588 = vmul.f32 %v3431, %v3556
        %v3589 = vmul.f32 %v3433, %v3557
        %v3590 = vmul.f32 %v3435, %v3558
        %v3591 = vmul.f32 %v3437, %v3559
        %v3592 = vmul.f32 %v3439, %v3560
        %v3593 = vmul.f32 %v3441, %v3561
        %v3594 = vmul.f32 %v3443, %v3562
        %v3595 = vmul.f32 %v3445, %v3563
        %v3596 = vmul.f32 %v3447, %v3564
        %v3597 = vmul.f32 %v3449, %v3565
        %v3598 = vmul.f32 %v3451, %v3566
        %v3599 = vmul.f32 %v3453, %v3567
        %v3600 = vmul.f32 %v3455, %v3568
        %v3601 = vmul.f32 %v3457, %v3569
        %v3602 = vmul.f32 %v3459, %v3570
        %v3603 = vmul.f32 %v3461, %v3571
        %v3604 = vmul.f32 %v3463, %v3572
        %v3605 = vmul.f32 %v3465, %v3573
        %v3606 = vmul.f32 %v3467, %v3574
        %v3607 = vmul.f32 %v3469, %v3575
        %v3608 = vmul.f32 %v3471, %v3576
        %v3609 = vmul.f32 %v3473, %v3577
        %v3610 = vmul.f32 %v3475, %v3578
        %v3611 = vmul.f32 %v3477, %v3579
        %v3612 = vmul.f32 %v3479, %v3580
        %v3613 = vmul.f32 %v3481, %v3581
        %v3614 = vmul.f32 %v3483, %v3582
        %v3615 = vmul.f32 %v3485, %v3583
        %v3616 = vmul.f32 %v3487, %v3584
        %v3617 = vmul.f32 %v3489, %v3585
        %v3618 = vld [vmem:[#allocation5] sm:$0xff]
        %v3619 = vld [vmem:[#allocation5 + $0x8] sm:$0xff]
        %v3620 = vld [vmem:[#allocation5 + $0x10] sm:$0xff]
        %v3621 = vld [vmem:[#allocation5 + $0x18] sm:$0xff]
        %v3622 = vld [vmem:[#allocation5 + $0x20] sm:$0xff]
        %v3623 = vld [vmem:[#allocation5 + $0x28] sm:$0xff]
        %v3624 = vld [vmem:[#allocation5 + $0x30] sm:$0xff]
        %v3625 = vld [vmem:[#allocation5 + $0x38] sm:$0xff]
        %v3626 = vld [vmem:[#allocation5 + $0x40] sm:$0xff]
        %v3627 = vld [vmem:[#allocation5 + $0x48] sm:$0xff]
        %v3628 = vld [vmem:[#allocation5 + $0x50] sm:$0xff]
        %v3629 = vld [vmem:[#allocation5 + $0x58] sm:$0xff]
        %v3630 = vld [vmem:[#allocation5 + $0x60] sm:$0xff]
        %v3631 = vld [vmem:[#allocation5 + $0x68] sm:$0xff]
        %v3632 = vld [vmem:[#allocation5 + $0x70] sm:$0xff]
        %v3633 = vld [vmem:[#allocation5 + $0x78] sm:$0xff]
        %v3634 = vld [vmem:[#allocation5 + $0x80] sm:$0xff]
        %v3635 = vld [vmem:[#allocation5 + $0x88] sm:$0xff]
        %v3636 = vld [vmem:[#allocation5 + $0x90] sm:$0xff]
        %v3637 = vld [vmem:[#allocation5 + $0x98] sm:$0xff]
        %v3638 = vld [vmem:[#allocation5 + $0xa0] sm:$0xff]
        %v3639 = vld [vmem:[#allocation5 + $0xa8] sm:$0xff]
        %v3640 = vld [vmem:[#allocation5 + $0xb0] sm:$0xff]
        %v3641 = vld [vmem:[#allocation5 + $0xb8] sm:$0xff]
        %v3642 = vld [vmem:[#allocation5 + $0xc0] sm:$0xff]
        %v3643 = vld [vmem:[#allocation5 + $0xc8] sm:$0xff]
        %v3644 = vld [vmem:[#allocation5 + $0xd0] sm:$0xff]
        %v3645 = vld [vmem:[#allocation5 + $0xd8] sm:$0xff]
        %v3646 = vld [vmem:[#allocation5 + $0xe0] sm:$0xff]
        %v3647 = vld [vmem:[#allocation5 + $0xe8] sm:$0xff]
        %v3648 = vld [vmem:[#allocation5 + $0xf0] sm:$0xff]
        %v3649 = vld [vmem:[#allocation5 + $0xf8] sm:$0xff]
        %v3650 = vpack.c.bf16 %v3587, %v3586
        %v3651 = vpack.c.bf16 %v3589, %v3588
        %v3652 = vpack.c.bf16 %v3591, %v3590
        %v3653 = vpack.c.bf16 %v3593, %v3592
        %v3654 = vpack.c.bf16 %v3595, %v3594
        %v3655 = vpack.c.bf16 %v3597, %v3596
        %v3656 = vpack.c.bf16 %v3599, %v3598
        %v3657 = vpack.c.bf16 %v3601, %v3600
        %v3658 = vpack.c.bf16 %v3603, %v3602
        %v3659 = vpack.c.bf16 %v3605, %v3604
        %v3660 = vpack.c.bf16 %v3607, %v3606
        %v3661 = vpack.c.bf16 %v3609, %v3608
        %v3662 = vpack.c.bf16 %v3611, %v3610
        %v3663 = vpack.c.bf16 %v3613, %v3612
        %v3664 = vpack.c.bf16 %v3615, %v3614
        %v3665 = vpack.c.bf16 %v3617, %v3616
        %s3666 = scalar_lea.vmem [#allocation4], 64
        %v3667 = vld [vmem:[%s3666] sm:$0xff]
        %v3668 = vld [vmem:[%s3666 + $0x8] sm:$0xff]
        %v3669 = vld [vmem:[%s3666 + $0x10] sm:$0xff]
        %v3670 = vld [vmem:[%s3666 + $0x18] sm:$0xff]
        %v3671 = vld [vmem:[%s3666 + $0x20] sm:$0xff]
        %v3672 = vld [vmem:[%s3666 + $0x28] sm:$0xff]
        %v3673 = vld [vmem:[%s3666 + $0x30] sm:$0xff]
        %v3674 = vld [vmem:[%s3666 + $0x38] sm:$0xff]
        %3675 = vmatprep.subr.bf16.mxu0 0
        %3676 = vmatpush1.bf16.msra.mxu0 %v3667
        %3677 = vmatprep.subr.bf16.mxu0 0
        %3678 = vmatpush1.bf16.msra.mxu0 %v3668
        %3679 = vmatprep.subr.bf16.mxu0 0
        %3680 = vmatpush1.bf16.msra.mxu0 %v3669
        %3681 = vmatprep.subr.bf16.mxu0 0
        %3682 = vmatpush1.bf16.msra.mxu0 %v3670
        %3683 = vmatprep.subr.bf16.mxu0 0
        %3684 = vmatpush1.bf16.msra.mxu0 %v3671
        %3685 = vmatprep.subr.bf16.mxu0 0
        %3686 = vmatpush1.bf16.msra.mxu0 %v3672
        %3687 = vmatprep.subr.bf16.mxu0 0
        %3688 = vmatpush1.bf16.msra.mxu0 %v3673
        %3689 = vmatprep.subr.bf16.mxu0 0
        %3690 = vmatpush1.bf16.msra.mxu0 %v3674
        %3691 = vmatprep.subr.bf16.mxu0 0
        %3692 = vmatpush1.bf16.msra.mxu0 0
        %3693 = vmatprep.subr.bf16.mxu0 0
        %3694 = vmatpush1.bf16.msra.mxu0 0
        %3695 = vmatprep.subr.bf16.mxu0 0
        %3696 = vmatpush1.bf16.msra.mxu0 0
        %3697 = vmatprep.subr.bf16.mxu0 0
        %3698 = vmatpush1.bf16.msra.mxu0 0
        %3699 = vmatprep.subr.bf16.mxu0 0
        %3700 = vmatpush1.bf16.msra.mxu0 0
        %3701 = vmatprep.subr.bf16.mxu0 0
        %3702 = vmatpush1.bf16.msra.mxu0 0
        %3703 = vmatprep.subr.bf16.mxu0 0
        %3704 = vmatpush1.bf16.msra.mxu0 0
        %3705 = vmatprep.subr.bf16.mxu0 0
        %3706 = vmatpush1.bf16.msra.mxu0 0
        %3707 = vmatprep.mubr.bf16.mxu0 0
        %3708 = vmatmul.mubr.bf16.gmra.mrb[0].mxu0 %v3650
        %v3709 = vpop.f32.mrb[0].mxu0
        %v3710 = vadd.f32 0.0, %v3709
        %v3711 = vpop.f32.mrb[0].mxu0
        %v3712 = vpop.f32.mrb[0].mxu0
        %v3713 = vadd.f32 0.0, %v3712
        %v3714 = vpop.f32.mrb[0].mxu0
        %3715 = vmatprep.mubr.bf16.mxu0 0
        %3716 = vmatmul.mubr.bf16.gmra.mrb[0].mxu0 %v3651
        %v3717 = vpop.f32.mrb[0].mxu0
        %v3718 = vadd.f32 0.0, %v3717
        %v3719 = vpop.f32.mrb[0].mxu0
        %v3720 = vpop.f32.mrb[0].mxu0
        %v3721 = vadd.f32 0.0, %v3720
        %v3722 = vpop.f32.mrb[0].mxu0
        %3723 = vmatprep.mubr.bf16.mxu0 0
        %3724 = vmatmul.mubr.bf16.gmra.mrb[0].mxu0 %v3652
        %v3725 = vpop.f32.mrb[0].mxu0
        %v3726 = vadd.f32 0.0, %v3725
        %v3727 = vpop.f32.mrb[0].mxu0
        %v3728 = vpop.f32.mrb[0].mxu0
        %v3729 = vadd.f32 0.0, %v3728
        %v3730 = vpop.f32.mrb[0].mxu0
        %3731 = vmatprep.mubr.bf16.mxu0 0
        %3732 = vmatmul.mubr.bf16.gmra.mrb[0].mxu0 %v3653
        %v3733 = vpop.f32.mrb[0].mxu0
        %v3734 = vadd.f32 0.0, %v3733
        %v3735 = vpop.f32.mrb[0].mxu0
        %v3736 = vpop.f32.mrb[0].mxu0
        %v3737 = vadd.f32 0.0, %v3736
        %v3738 = vpop.f32.mrb[0].mxu0
        %3739 = vmatprep.mubr.bf16.mxu0 0
        %3740 = vmatmul.mubr.bf16.gmra.mrb[0].mxu0 %v3654
        %v3741 = vpop.f32.mrb[0].mxu0
        %v3742 = vadd.f32 0.0, %v3741
        %v3743 = vpop.f32.mrb[0].mxu0
        %v3744 = vpop.f32.mrb[0].mxu0
        %v3745 = vadd.f32 0.0, %v3744
        %v3746 = vpop.f32.mrb[0].mxu0
        %3747 = vmatprep.mubr.bf16.mxu0 0
        %3748 = vmatmul.mubr.bf16.gmra.mrb[0].mxu0 %v3655
        %v3749 = vpop.f32.mrb[0].mxu0
        %v3750 = vadd.f32 0.0, %v3749
        %v3751 = vpop.f32.mrb[0].mxu0
        %v3752 = vpop.f32.mrb[0].mxu0
        %v3753 = vadd.f32 0.0, %v3752
        %v3754 = vpop.f32.mrb[0].mxu0
        %3755 = vmatprep.mubr.bf16.mxu0 0
        %3756 = vmatmul.mubr.bf16.gmra.mrb[0].mxu0 %v3656
        %v3757 = vpop.f32.mrb[0].mxu0
        %v3758 = vadd.f32 0.0, %v3757
        %v3759 = vpop.f32.mrb[0].mxu0
        %v3760 = vpop.f32.mrb[0].mxu0
        %v3761 = vadd.f32 0.0, %v3760
        %v3762 = vpop.f32.mrb[0].mxu0
        %3763 = vmatprep.mubr.bf16.mxu0 0
        %3764 = vmatmul.mubr.bf16.gmra.mrb[0].mxu0 %v3657
        %v3765 = vpop.f32.mrb[0].mxu0
        %v3766 = vadd.f32 0.0, %v3765
        %v3767 = vpop.f32.mrb[0].mxu0
        %v3768 = vpop.f32.mrb[0].mxu0
        %v3769 = vadd.f32 0.0, %v3768
        %v3770 = vpop.f32.mrb[0].mxu0
        %3771 = vmatprep.mubr.bf16.mxu0 0
        %3772 = vmatmul.mubr.bf16.gmra.mrb[0].mxu0 %v3658
        %v3773 = vpop.f32.mrb[0].mxu0
        %v3774 = vadd.f32 0.0, %v3773
        %v3775 = vpop.f32.mrb[0].mxu0
        %v3776 = vpop.f32.mrb[0].mxu0
        %v3777 = vadd.f32 0.0, %v3776
        %v3778 = vpop.f32.mrb[0].mxu0
        %3779 = vmatprep.mubr.bf16.mxu0 0
        %3780 = vmatmul.mubr.bf16.gmra.mrb[0].mxu0 %v3659
        %v3781 = vpop.f32.mrb[0].mxu0
        %v3782 = vadd.f32 0.0, %v3781
        %v3783 = vpop.f32.mrb[0].mxu0
        %v3784 = vpop.f32.mrb[0].mxu0
        %v3785 = vadd.f32 0.0, %v3784
        %v3786 = vpop.f32.mrb[0].mxu0
        %3787 = vmatprep.mubr.bf16.mxu0 0
        %3788 = vmatmul.mubr.bf16.gmra.mrb[0].mxu0 %v3660
        %v3789 = vpop.f32.mrb[0].mxu0
        %v3790 = vadd.f32 0.0, %v3789
        %v3791 = vpop.f32.mrb[0].mxu0
        %v3792 = vpop.f32.mrb[0].mxu0
        %v3793 = vadd.f32 0.0, %v3792
        %v3794 = vpop.f32.mrb[0].mxu0
        %3795 = vmatprep.mubr.bf16.mxu0 0
        %3796 = vmatmul.mubr.bf16.gmra.mrb[0].mxu0 %v3661
        %v3797 = vpop.f32.mrb[0].mxu0
        %v3798 = vadd.f32 0.0, %v3797
        %v3799 = vpop.f32.mrb[0].mxu0
        %v3800 = vpop.f32.mrb[0].mxu0
        %v3801 = vadd.f32 0.0, %v3800
        %v3802 = vpop.f32.mrb[0].mxu0
        %3803 = vmatprep.mubr.bf16.mxu0 0
        %3804 = vmatmul.mubr.bf16.gmra.mrb[0].mxu0 %v3662
        %v3805 = vpop.f32.mrb[0].mxu0
        %v3806 = vadd.f32 0.0, %v3805
        %v3807 = vpop.f32.mrb[0].mxu0
        %v3808 = vpop.f32.mrb[0].mxu0
        %v3809 = vadd.f32 0.0, %v3808
        %v3810 = vpop.f32.mrb[0].mxu0
        %3811 = vmatprep.mubr.bf16.mxu0 0
        %3812 = vmatmul.mubr.bf16.gmra.mrb[0].mxu0 %v3663
        %v3813 = vpop.f32.mrb[0].mxu0
        %v3814 = vadd.f32 0.0, %v3813
        %v3815 = vpop.f32.mrb[0].mxu0
        %v3816 = vpop.f32.mrb[0].mxu0
        %v3817 = vadd.f32 0.0, %v3816
        %v3818 = vpop.f32.mrb[0].mxu0
        %3819 = vmatprep.mubr.bf16.mxu0 0
        %3820 = vmatmul.mubr.bf16.gmra.mrb[0].mxu0 %v3664
        %v3821 = vpop.f32.mrb[0].mxu0
        %v3822 = vadd.f32 0.0, %v3821
        %v3823 = vpop.f32.mrb[0].mxu0
        %v3824 = vpop.f32.mrb[0].mxu0
        %v3825 = vadd.f32 0.0, %v3824
        %v3826 = vpop.f32.mrb[0].mxu0
        %3827 = vmatprep.mubr.bf16.mxu0 0
        %3828 = vmatmul.mubr.bf16.gmra.mrb[0].mxu0 %v3665
        %v3829 = vpop.f32.mrb[0].mxu0
        %v3830 = vadd.f32 0.0, %v3829
        %v3831 = vpop.f32.mrb[0].mxu0
        %v3832 = vpop.f32.mrb[0].mxu0
        %v3833 = vadd.f32 0.0, %v3832
        %v3834 = vpop.f32.mrb[0].mxu0
        %3835 = vdwg.mxu0
        %v3836 = vadd.f32 %v3618, %v3710
        %v3837 = vadd.f32 %v3619, %v3713
        %v3838 = vadd.f32 %v3620, %v3718
        %v3839 = vadd.f32 %v3621, %v3721
        %v3840 = vadd.f32 %v3622, %v3726
        %v3841 = vadd.f32 %v3623, %v3729
        %v3842 = vadd.f32 %v3624, %v3734
        %v3843 = vadd.f32 %v3625, %v3737
        %v3844 = vadd.f32 %v3626, %v3742
        %v3845 = vadd.f32 %v3627, %v3745
        %v3846 = vadd.f32 %v3628, %v3750
        %v3847 = vadd.f32 %v3629, %v3753
        %v3848 = vadd.f32 %v3630, %v3758
        %v3849 = vadd.f32 %v3631, %v3761
        %v3850 = vadd.f32 %v3632, %v3766
        %v3851 = vadd.f32 %v3633, %v3769
        %v3852 = vadd.f32 %v3634, %v3774
        %v3853 = vadd.f32 %v3635, %v3777
        %v3854 = vadd.f32 %v3636, %v3782
        %v3855 = vadd.f32 %v3637, %v3785
        %v3856 = vadd.f32 %v3638, %v3790
        %v3857 = vadd.f32 %v3639, %v3793
        %v3858 = vadd.f32 %v3640, %v3798
        %v3859 = vadd.f32 %v3641, %v3801
        %v3860 = vadd.f32 %v3642, %v3806
        %v3861 = vadd.f32 %v3643, %v3809
        %v3862 = vadd.f32 %v3644, %v3814
        %v3863 = vadd.f32 %v3645, %v3817
        %v3864 = vadd.f32 %v3646, %v3822
        %v3865 = vadd.f32 %v3647, %v3825
        %v3866 = vadd.f32 %v3648, %v3830
        %v3867 = vadd.f32 %v3649, %v3833
        %3868 = vst [vmem:[#allocation5] sm:$0xff] %v3836
        %3869 = vst [vmem:[#allocation5 + $0x8] sm:$0xff] %v3837
        %3870 = vst [vmem:[#allocation5 + $0x10] sm:$0xff] %v3838
        %3871 = vst [vmem:[#allocation5 + $0x18] sm:$0xff] %v3839
        %3872 = vst [vmem:[#allocation5 + $0x20] sm:$0xff] %v3840
        %3873 = vst [vmem:[#allocation5 + $0x28] sm:$0xff] %v3841
        %3874 = vst [vmem:[#allocation5 + $0x30] sm:$0xff] %v3842
        %3875 = vst [vmem:[#allocation5 + $0x38] sm:$0xff] %v3843
        %3876 = vst [vmem:[#allocation5 + $0x40] sm:$0xff] %v3844
        %3877 = vst [vmem:[#allocation5 + $0x48] sm:$0xff] %v3845
        %3878 = vst [vmem:[#allocation5 + $0x50] sm:$0xff] %v3846
        %3879 = vst [vmem:[#allocation5 + $0x58] sm:$0xff] %v3847
        %3880 = vst [vmem:[#allocation5 + $0x60] sm:$0xff] %v3848
        %3881 = vst [vmem:[#allocation5 + $0x68] sm:$0xff] %v3849
        %3882 = vst [vmem:[#allocation5 + $0x70] sm:$0xff] %v3850
        %3883 = vst [vmem:[#allocation5 + $0x78] sm:$0xff] %v3851
        %3884 = vst [vmem:[#allocation5 + $0x80] sm:$0xff] %v3852
        %3885 = vst [vmem:[#allocation5 + $0x88] sm:$0xff] %v3853
        %3886 = vst [vmem:[#allocation5 + $0x90] sm:$0xff] %v3854
        %3887 = vst [vmem:[#allocation5 + $0x98] sm:$0xff] %v3855
        %3888 = vst [vmem:[#allocation5 + $0xa0] sm:$0xff] %v3856
        %3889 = vst [vmem:[#allocation5 + $0xa8] sm:$0xff] %v3857
        %3890 = vst [vmem:[#allocation5 + $0xb0] sm:$0xff] %v3858
        %3891 = vst [vmem:[#allocation5 + $0xb8] sm:$0xff] %v3859
        %3892 = vst [vmem:[#allocation5 + $0xc0] sm:$0xff] %v3860
        %3893 = vst [vmem:[#allocation5 + $0xc8] sm:$0xff] %v3861
        %3894 = vst [vmem:[#allocation5 + $0xd0] sm:$0xff] %v3862
        %3895 = vst [vmem:[#allocation5 + $0xd8] sm:$0xff] %v3863
        %3896 = vst [vmem:[#allocation5 + $0xe0] sm:$0xff] %v3864
        %3897 = vst [vmem:[#allocation5 + $0xe8] sm:$0xff] %v3865
        %3898 = vst [vmem:[#allocation5 + $0xf0] sm:$0xff] %v3866
        %3899 = vst [vmem:[#allocation5 + $0xf8] sm:$0xff] %v3867
        %v3900 = vld [vmem:[#allocation2] sm:$0xff]
        %v3901 = vld [vmem:[#allocation2 + $0x8] sm:$0xff]
        %v3902 = vld [vmem:[#allocation2 + $0x10] sm:$0xff]
        %v3903 = vld [vmem:[#allocation2 + $0x18] sm:$0xff]
        %v3904 = vld [vmem:[#allocation2 + $0x20] sm:$0xff]
        %v3905 = vld [vmem:[#allocation2 + $0x28] sm:$0xff]
        %v3906 = vld [vmem:[#allocation2 + $0x30] sm:$0xff]
        %v3907 = vld [vmem:[#allocation2 + $0x38] sm:$0xff]
        %v3908 = vld [vmem:[#allocation2 + $0x40] sm:$0xff]
        %v3909 = vld [vmem:[#allocation2 + $0x48] sm:$0xff]
        %v3910 = vld [vmem:[#allocation2 + $0x50] sm:$0xff]
        %v3911 = vld [vmem:[#allocation2 + $0x58] sm:$0xff]
        %v3912 = vld [vmem:[#allocation2 + $0x60] sm:$0xff]
        %v3913 = vld [vmem:[#allocation2 + $0x68] sm:$0xff]
        %v3914 = vld [vmem:[#allocation2 + $0x70] sm:$0xff]
        %v3915 = vld [vmem:[#allocation2 + $0x78] sm:$0xff]
        %v3916 = vld [vmem:[#allocation3] sm:$0xff]
        %v3917 = vld [vmem:[#allocation3 + $0x8] sm:$0xff]
        %v3918 = vld [vmem:[#allocation3 + $0x10] sm:$0xff]
        %v3919 = vld [vmem:[#allocation3 + $0x18] sm:$0xff]
        %v3920 = vld [vmem:[#allocation3 + $0x20] sm:$0xff]
        %v3921 = vld [vmem:[#allocation3 + $0x28] sm:$0xff]
        %v3922 = vld [vmem:[#allocation3 + $0x30] sm:$0xff]
        %v3923 = vld [vmem:[#allocation3 + $0x38] sm:$0xff]
        %3940 = vrot.lane.b32.xlu0 %v3900, 96
        %v3941 = vpop.permute.xlu0 %3940
        %3942 = vrot.lane.b32.xlu0 %v3901, 96
        %v3943 = vpop.permute.xlu0 %3942
        %3944 = vrot.lane.b32.xlu0 %v3902, 96
        %v3945 = vpop.permute.xlu0 %3944
        %3946 = vrot.lane.b32.xlu0 %v3903, 96
        %v3947 = vpop.permute.xlu0 %3946
        %3948 = vrot.lane.b32.xlu0 %v3904, 96
        %v3949 = vpop.permute.xlu0 %3948
        %3950 = vrot.lane.b32.xlu0 %v3905, 96
        %v3951 = vpop.permute.xlu0 %3950
        %3952 = vrot.lane.b32.xlu0 %v3906, 96
        %v3953 = vpop.permute.xlu0 %3952
        %3954 = vrot.lane.b32.xlu0 %v3907, 96
        %v3955 = vpop.permute.xlu0 %3954
        %3956 = vrot.lane.b32.xlu0 %v3908, 96
        %v3957 = vpop.permute.xlu0 %3956
        %3958 = vrot.lane.b32.xlu0 %v3909, 96
        %v3959 = vpop.permute.xlu0 %3958
        %3960 = vrot.lane.b32.xlu0 %v3910, 96
        %v3961 = vpop.permute.xlu0 %3960
        %3962 = vrot.lane.b32.xlu0 %v3911, 96
        %v3963 = vpop.permute.xlu0 %3962
        %3964 = vrot.lane.b32.xlu0 %v3912, 96
        %v3965 = vpop.permute.xlu0 %3964
        %3966 = vrot.lane.b32.xlu0 %v3913, 96
        %v3967 = vpop.permute.xlu0 %3966
        %3968 = vrot.lane.b32.xlu0 %v3914, 96
        %v3969 = vpop.permute.xlu0 %3968
        %3970 = vrot.lane.b32.xlu0 %v3915, 96
        %v3971 = vpop.permute.xlu0 %3970
        %3980 = vrot.lane.b32.xlu0 %v3916, 96
        %v3981 = vpop.permute.xlu0 %3980
        %3982 = vrot.lane.b32.xlu0 %v3917, 96
        %v3983 = vpop.permute.xlu0 %3982
        %3984 = vrot.lane.b32.xlu0 %v3918, 96
        %v3985 = vpop.permute.xlu0 %3984
        %3986 = vrot.lane.b32.xlu0 %v3919, 96
        %v3987 = vpop.permute.xlu0 %3986
        %3988 = vrot.lane.b32.xlu0 %v3920, 96
        %v3989 = vpop.permute.xlu0 %3988
        %3990 = vrot.lane.b32.xlu0 %v3921, 96
        %v3991 = vpop.permute.xlu0 %3990
        %3992 = vrot.lane.b32.xlu0 %v3922, 96
        %v3993 = vpop.permute.xlu0 %3992
        %3994 = vrot.lane.b32.xlu0 %v3923, 96
        %v3995 = vpop.permute.xlu0 %3994
        %v3997 = vsel %vm2198, %v3941, 0
        %v4000 = vsel %vm2198, %v3943, 0
        %v4003 = vsel %vm2198, %v3945, 0
        %v4006 = vsel %vm2198, %v3947, 0
        %v4009 = vsel %vm2198, %v3949, 0
        %v4012 = vsel %vm2198, %v3951, 0
        %v4015 = vsel %vm2198, %v3953, 0
        %v4018 = vsel %vm2198, %v3955, 0
        %v4021 = vsel %vm2198, %v3957, 0
        %v4024 = vsel %vm2198, %v3959, 0
        %v4027 = vsel %vm2198, %v3961, 0
        %v4030 = vsel %vm2198, %v3963, 0
        %v4033 = vsel %vm2198, %v3965, 0
        %v4036 = vsel %vm2198, %v3967, 0
        %v4039 = vsel %vm2198, %v3969, 0
        %v4042 = vsel %vm2198, %v3971, 0
        %v4045 = vsel %vm2198, %v3981, 0
        %v4048 = vsel %vm2198, %v3983, 0
        %v4051 = vsel %vm2198, %v3985, 0
        %v4054 = vsel %vm2198, %v3987, 0
        %v4057 = vsel %vm2198, %v3989, 0
        %v4060 = vsel %vm2198, %v3991, 0
        %v4063 = vsel %vm2198, %v3993, 0
        %v4066 = vsel %vm2198, %v3995, 0
        %4068 = vmatprep.subr.bf16.mxu0 0
        %4069 = vmatpush1.bf16.xpose.msra.mxu0 %v4045
        %4070 = vmatprep.subr.bf16.mxu0 0
        %4071 = vmatpush1.bf16.xpose.msra.mxu0 %v4048
        %4072 = vmatprep.subr.bf16.mxu0 0
        %4073 = vmatpush1.bf16.xpose.msra.mxu0 %v4051
        %4074 = vmatprep.subr.bf16.mxu0 0
        %4075 = vmatpush1.bf16.xpose.msra.mxu0 %v4054
        %4076 = vmatprep.subr.bf16.mxu0 0
        %4077 = vmatpush1.bf16.xpose.msra.mxu0 %v4057
        %4078 = vmatprep.subr.bf16.mxu0 0
        %4079 = vmatpush1.bf16.xpose.msra.mxu0 %v4060
        %4080 = vmatprep.subr.bf16.mxu0 0
        %4081 = vmatpush1.bf16.xpose.msra.mxu0 %v4063
        %4082 = vmatprep.subr.bf16.mxu0 0
        %4083 = vmatpush1.bf16.xpose.msra.mxu0 %v4066
        %4084 = vmatprep.subr.bf16.mxu0 0
        %4085 = vmatpush1.bf16.xpose.msra.mxu0 0
        %4086 = vmatprep.subr.bf16.mxu0 0
        %4087 = vmatpush1.bf16.xpose.msra.mxu0 0
        %4088 = vmatprep.subr.bf16.mxu0 0
        %4089 = vmatpush1.bf16.xpose.msra.mxu0 0
        %4090 = vmatprep.subr.bf16.mxu0 0
        %4091 = vmatpush1.bf16.xpose.msra.mxu0 0
        %4092 = vmatprep.subr.bf16.mxu0 0
        %4093 = vmatpush1.bf16.xpose.msra.mxu0 0
        %4094 = vmatprep.subr.bf16.mxu0 0
        %4095 = vmatpush1.bf16.xpose.msra.mxu0 0
        %4096 = vmatprep.subr.bf16.mxu0 0
        %4097 = vmatpush1.bf16.xpose.msra.mxu0 0
        %4098 = vmatprep.subr.bf16.mxu0 0
        %4099 = vmatpush1.bf16.xpose.msra.mxu0 0
        %4100 = vmatprep.mubr.bf16.mxu0 0
        %4101 = vmatmul.mubr.bf16.gmra.mrb[0].mxu0 %v3997
        %v4102 = vpop.f32.mrb[0].mxu0
        %v4103 = vadd.f32 0.0, %v4102
        %v4104 = vpop.f32.mrb[0].mxu0
        %v4105 = vpop.f32.mrb[0].mxu0
        %v4106 = vadd.f32 0.0, %v4105
        %v4107 = vpop.f32.mrb[0].mxu0
        %4108 = vmatprep.mubr.bf16.mxu0 0
        %4109 = vmatmul.mubr.bf16.gmra.mrb[0].mxu0 %v4000
        %v4110 = vpop.f32.mrb[0].mxu0
        %v4111 = vadd.f32 0.0, %v4110
        %v4112 = vpop.f32.mrb[0].mxu0
        %v4113 = vpop.f32.mrb[0].mxu0
        %v4114 = vadd.f32 0.0, %v4113
        %v4115 = vpop.f32.mrb[0].mxu0
        %4116 = vmatprep.mubr.bf16.mxu0 0
        %4117 = vmatmul.mubr.bf16.gmra.mrb[0].mxu0 %v4003
        %v4118 = vpop.f32.mrb[0].mxu0
        %v4119 = vadd.f32 0.0, %v4118
        %v4120 = vpop.f32.mrb[0].mxu0
        %v4121 = vpop.f32.mrb[0].mxu0
        %v4122 = vadd.f32 0.0, %v4121
        %v4123 = vpop.f32.mrb[0].mxu0
        %4124 = vmatprep.mubr.bf16.mxu0 0
        %4125 = vmatmul.mubr.bf16.gmra.mrb[0].mxu0 %v4006
        %v4126 = vpop.f32.mrb[0].mxu0
        %v4127 = vadd.f32 0.0, %v4126
        %v4128 = vpop.f32.mrb[0].mxu0
        %v4129 = vpop.f32.mrb[0].mxu0
        %v4130 = vadd.f32 0.0, %v4129
        %v4131 = vpop.f32.mrb[0].mxu0
        %4132 = vmatprep.mubr.bf16.mxu0 0
        %4133 = vmatmul.mubr.bf16.gmra.mrb[0].mxu0 %v4009
        %v4134 = vpop.f32.mrb[0].mxu0
        %v4135 = vadd.f32 0.0, %v4134
        %v4136 = vpop.f32.mrb[0].mxu0
        %v4137 = vpop.f32.mrb[0].mxu0
        %v4138 = vadd.f32 0.0, %v4137
        %v4139 = vpop.f32.mrb[0].mxu0
        %4140 = vmatprep.mubr.bf16.mxu0 0
        %4141 = vmatmul.mubr.bf16.gmra.mrb[0].mxu0 %v4012
        %v4142 = vpop.f32.mrb[0].mxu0
        %v4143 = vadd.f32 0.0, %v4142
        %v4144 = vpop.f32.mrb[0].mxu0
        %v4145 = vpop.f32.mrb[0].mxu0
        %v4146 = vadd.f32 0.0, %v4145
        %v4147 = vpop.f32.mrb[0].mxu0
        %4148 = vmatprep.mubr.bf16.mxu0 0
        %4149 = vmatmul.mubr.bf16.gmra.mrb[0].mxu0 %v4015
        %v4150 = vpop.f32.mrb[0].mxu0
        %v4151 = vadd.f32 0.0, %v4150
        %v4152 = vpop.f32.mrb[0].mxu0
        %v4153 = vpop.f32.mrb[0].mxu0
        %v4154 = vadd.f32 0.0, %v4153
        %v4155 = vpop.f32.mrb[0].mxu0
        %4156 = vmatprep.mubr.bf16.mxu0 0
        %4157 = vmatmul.mubr.bf16.gmra.mrb[0].mxu0 %v4018
        %v4158 = vpop.f32.mrb[0].mxu0
        %v4159 = vadd.f32 0.0, %v4158
        %v4160 = vpop.f32.mrb[0].mxu0
        %v4161 = vpop.f32.mrb[0].mxu0
        %v4162 = vadd.f32 0.0, %v4161
        %v4163 = vpop.f32.mrb[0].mxu0
        %4164 = vmatprep.mubr.bf16.mxu0 0
        %4165 = vmatmul.mubr.bf16.gmra.mrb[0].mxu0 %v4021
        %v4166 = vpop.f32.mrb[0].mxu0
        %v4167 = vadd.f32 0.0, %v4166
        %v4168 = vpop.f32.mrb[0].mxu0
        %v4169 = vpop.f32.mrb[0].mxu0
        %v4170 = vadd.f32 0.0, %v4169
        %v4171 = vpop.f32.mrb[0].mxu0
        %4172 = vmatprep.mubr.bf16.mxu0 0
        %4173 = vmatmul.mubr.bf16.gmra.mrb[0].mxu0 %v4024
        %v4174 = vpop.f32.mrb[0].mxu0
        %v4175 = vadd.f32 0.0, %v4174
        %v4176 = vpop.f32.mrb[0].mxu0
        %v4177 = vpop.f32.mrb[0].mxu0
        %v4178 = vadd.f32 0.0, %v4177
        %v4179 = vpop.f32.mrb[0].mxu0
        %4180 = vmatprep.mubr.bf16.mxu0 0
        %4181 = vmatmul.mubr.bf16.gmra.mrb[0].mxu0 %v4027
        %v4182 = vpop.f32.mrb[0].mxu0
        %v4183 = vadd.f32 0.0, %v4182
        %v4184 = vpop.f32.mrb[0].mxu0
        %v4185 = vpop.f32.mrb[0].mxu0
        %v4186 = vadd.f32 0.0, %v4185
        %v4187 = vpop.f32.mrb[0].mxu0
        %4188 = vmatprep.mubr.bf16.mxu0 0
        %4189 = vmatmul.mubr.bf16.gmra.mrb[0].mxu0 %v4030
        %v4190 = vpop.f32.mrb[0].mxu0
        %v4191 = vadd.f32 0.0, %v4190
        %v4192 = vpop.f32.mrb[0].mxu0
        %v4193 = vpop.f32.mrb[0].mxu0
        %v4194 = vadd.f32 0.0, %v4193
        %v4195 = vpop.f32.mrb[0].mxu0
        %4196 = vmatprep.mubr.bf16.mxu0 0
        %4197 = vmatmul.mubr.bf16.gmra.mrb[0].mxu0 %v4033
        %v4198 = vpop.f32.mrb[0].mxu0
        %v4199 = vadd.f32 0.0, %v4198
        %v4200 = vpop.f32.mrb[0].mxu0
        %v4201 = vpop.f32.mrb[0].mxu0
        %v4202 = vadd.f32 0.0, %v4201
        %v4203 = vpop.f32.mrb[0].mxu0
        %4204 = vmatprep.mubr.bf16.mxu0 0
        %4205 = vmatmul.mubr.bf16.gmra.mrb[0].mxu0 %v4036
        %v4206 = vpop.f32.mrb[0].mxu0
        %v4207 = vadd.f32 0.0, %v4206
        %v4208 = vpop.f32.mrb[0].mxu0
        %v4209 = vpop.f32.mrb[0].mxu0
        %v4210 = vadd.f32 0.0, %v4209
        %v4211 = vpop.f32.mrb[0].mxu0
        %4212 = vmatprep.mubr.bf16.mxu0 0
        %4213 = vmatmul.mubr.bf16.gmra.mrb[0].mxu0 %v4039
        %v4214 = vpop.f32.mrb[0].mxu0
        %v4215 = vadd.f32 0.0, %v4214
        %v4216 = vpop.f32.mrb[0].mxu0
        %v4217 = vpop.f32.mrb[0].mxu0
        %v4218 = vadd.f32 0.0, %v4217
        %v4219 = vpop.f32.mrb[0].mxu0
        %4220 = vmatprep.mubr.bf16.mxu0 0
        %4221 = vmatmul.mubr.bf16.gmra.mrb[0].mxu0 %v4042
        %v4222 = vpop.f32.mrb[0].mxu0
        %v4223 = vadd.f32 0.0, %v4222
        %v4224 = vpop.f32.mrb[0].mxu0
        %v4225 = vpop.f32.mrb[0].mxu0
        %v4226 = vadd.f32 0.0, %v4225
        %v4227 = vpop.f32.mrb[0].mxu0
        %4228 = vdwg.mxu0
        %4229 = vmax.xlane.f32.xlu0 %v4103
        %v4230 = vpop.xlane.xlu0 %4229
        %4231 = vmax.xlane.f32.xlu0 %v4106
        %v4232 = vpop.xlane.xlu0 %4231
        %4233 = vmax.xlane.f32.xlu0 %v4111
        %v4234 = vpop.xlane.xlu0 %4233
        %4235 = vmax.xlane.f32.xlu0 %v4114
        %v4236 = vpop.xlane.xlu0 %4235
        %4237 = vmax.xlane.f32.xlu0 %v4119
        %v4238 = vpop.xlane.xlu0 %4237
        %4239 = vmax.xlane.f32.xlu0 %v4122
        %v4240 = vpop.xlane.xlu0 %4239
        %4241 = vmax.xlane.f32.xlu0 %v4127
        %v4242 = vpop.xlane.xlu0 %4241
        %4243 = vmax.xlane.f32.xlu0 %v4130
        %v4244 = vpop.xlane.xlu0 %4243
        %4245 = vmax.xlane.f32.xlu0 %v4135
        %v4246 = vpop.xlane.xlu0 %4245
        %4247 = vmax.xlane.f32.xlu0 %v4138
        %v4248 = vpop.xlane.xlu0 %4247
        %4249 = vmax.xlane.f32.xlu0 %v4143
        %v4250 = vpop.xlane.xlu0 %4249
        %4251 = vmax.xlane.f32.xlu0 %v4146
        %v4252 = vpop.xlane.xlu0 %4251
        %4253 = vmax.xlane.f32.xlu0 %v4151
        %v4254 = vpop.xlane.xlu0 %4253
        %4255 = vmax.xlane.f32.xlu0 %v4154
        %v4256 = vpop.xlane.xlu0 %4255
        %4257 = vmax.xlane.f32.xlu0 %v4159
        %v4258 = vpop.xlane.xlu0 %4257
        %4259 = vmax.xlane.f32.xlu0 %v4162
        %v4260 = vpop.xlane.xlu0 %4259
        %4261 = vmax.xlane.f32.xlu0 %v4167
        %v4262 = vpop.xlane.xlu0 %4261
        %4263 = vmax.xlane.f32.xlu0 %v4170
        %v4264 = vpop.xlane.xlu0 %4263
        %4265 = vmax.xlane.f32.xlu0 %v4175
        %v4266 = vpop.xlane.xlu0 %4265
        %4267 = vmax.xlane.f32.xlu0 %v4178
        %v4268 = vpop.xlane.xlu0 %4267
        %4269 = vmax.xlane.f32.xlu0 %v4183
        %v4270 = vpop.xlane.xlu0 %4269
        %4271 = vmax.xlane.f32.xlu0 %v4186
        %v4272 = vpop.xlane.xlu0 %4271
        %4273 = vmax.xlane.f32.xlu0 %v4191
        %v4274 = vpop.xlane.xlu0 %4273
        %4275 = vmax.xlane.f32.xlu0 %v4194
        %v4276 = vpop.xlane.xlu0 %4275
        %4277 = vmax.xlane.f32.xlu0 %v4199
        %v4278 = vpop.xlane.xlu0 %4277
        %4279 = vmax.xlane.f32.xlu0 %v4202
        %v4280 = vpop.xlane.xlu0 %4279
        %4281 = vmax.xlane.f32.xlu0 %v4207
        %v4282 = vpop.xlane.xlu0 %4281
        %4283 = vmax.xlane.f32.xlu0 %v4210
        %v4284 = vpop.xlane.xlu0 %4283
        %4285 = vmax.xlane.f32.xlu0 %v4215
        %v4286 = vpop.xlane.xlu0 %4285
        %4287 = vmax.xlane.f32.xlu0 %v4218
        %v4288 = vpop.xlane.xlu0 %4287
        %4289 = vmax.xlane.f32.xlu0 %v4223
        %v4290 = vpop.xlane.xlu0 %4289
        %4291 = vmax.xlane.f32.xlu0 %v4226
        %v4292 = vpop.xlane.xlu0 %4291
        %v4293 = vsub.f32 %v4103, %v4230
        %v4294 = vsub.f32 %v4106, %v4232
        %v4295 = vsub.f32 %v4111, %v4234
        %v4296 = vsub.f32 %v4114, %v4236
        %v4297 = vsub.f32 %v4119, %v4238
        %v4298 = vsub.f32 %v4122, %v4240
        %v4299 = vsub.f32 %v4127, %v4242
        %v4300 = vsub.f32 %v4130, %v4244
        %v4301 = vsub.f32 %v4135, %v4246
        %v4302 = vsub.f32 %v4138, %v4248
        %v4303 = vsub.f32 %v4143, %v4250
        %v4304 = vsub.f32 %v4146, %v4252
        %v4305 = vsub.f32 %v4151, %v4254
        %v4306 = vsub.f32 %v4154, %v4256
        %v4307 = vsub.f32 %v4159, %v4258
        %v4308 = vsub.f32 %v4162, %v4260
        %v4309 = vsub.f32 %v4167, %v4262
        %v4310 = vsub.f32 %v4170, %v4264
        %v4311 = vsub.f32 %v4175, %v4266
        %v4312 = vsub.f32 %v4178, %v4268
        %v4313 = vsub.f32 %v4183, %v4270
        %v4314 = vsub.f32 %v4186, %v4272
        %v4315 = vsub.f32 %v4191, %v4274
        %v4316 = vsub.f32 %v4194, %v4276
        %v4317 = vsub.f32 %v4199, %v4278
        %v4318 = vsub.f32 %v4202, %v4280
        %v4319 = vsub.f32 %v4207, %v4282
        %v4320 = vsub.f32 %v4210, %v4284
        %v4321 = vsub.f32 %v4215, %v4286
        %v4322 = vsub.f32 %v4218, %v4288
        %v4323 = vsub.f32 %v4223, %v4290
        %v4324 = vsub.f32 %v4226, %v4292
        %v4325 = vmul.f32 %v4293, 1.442695
        %v4326 = vpow.pop %v4325
        %v4327 = vmul.f32 %v4294, 1.442695
        %v4328 = vpow.pop %v4327
        %v4329 = vmul.f32 %v4295, 1.442695
        %v4330 = vpow.pop %v4329
        %v4331 = vmul.f32 %v4296, 1.442695
        %v4332 = vpow.pop %v4331
        %v4333 = vmul.f32 %v4297, 1.442695
        %v4334 = vpow.pop %v4333
        %v4335 = vmul.f32 %v4298, 1.442695
        %v4336 = vpow.pop %v4335
        %v4337 = vmul.f32 %v4299, 1.442695
        %v4338 = vpow.pop %v4337
        %v4339 = vmul.f32 %v4300, 1.442695
        %v4340 = vpow.pop %v4339
        %v4341 = vmul.f32 %v4301, 1.442695
        %v4342 = vpow.pop %v4341
        %v4343 = vmul.f32 %v4302, 1.442695
        %v4344 = vpow.pop %v4343
        %v4345 = vmul.f32 %v4303, 1.442695
        %v4346 = vpow.pop %v4345
        %v4347 = vmul.f32 %v4304, 1.442695
        %v4348 = vpow.pop %v4347
        %v4349 = vmul.f32 %v4305, 1.442695
        %v4350 = vpow.pop %v4349
        %v4351 = vmul.f32 %v4306, 1.442695
        %v4352 = vpow.pop %v4351
        %v4353 = vmul.f32 %v4307, 1.442695
        %v4354 = vpow.pop %v4353
        %v4355 = vmul.f32 %v4308, 1.442695
        %v4356 = vpow.pop %v4355
        %v4357 = vmul.f32 %v4309, 1.442695
        %v4358 = vpow.pop %v4357
        %v4359 = vmul.f32 %v4310, 1.442695
        %v4360 = vpow.pop %v4359
        %v4361 = vmul.f32 %v4311, 1.442695
        %v4362 = vpow.pop %v4361
        %v4363 = vmul.f32 %v4312, 1.442695
        %v4364 = vpow.pop %v4363
        %v4365 = vmul.f32 %v4313, 1.442695
        %v4366 = vpow.pop %v4365
        %v4367 = vmul.f32 %v4314, 1.442695
        %v4368 = vpow.pop %v4367
        %v4369 = vmul.f32 %v4315, 1.442695
        %v4370 = vpow.pop %v4369
        %v4371 = vmul.f32 %v4316, 1.442695
        %v4372 = vpow.pop %v4371
        %v4373 = vmul.f32 %v4317, 1.442695
        %v4374 = vpow.pop %v4373
        %v4375 = vmul.f32 %v4318, 1.442695
        %v4376 = vpow.pop %v4375
        %v4377 = vmul.f32 %v4319, 1.442695
        %v4378 = vpow.pop %v4377
        %v4379 = vmul.f32 %v4320, 1.442695
        %v4380 = vpow.pop %v4379
        %v4381 = vmul.f32 %v4321, 1.442695
        %v4382 = vpow.pop %v4381
        %v4383 = vmul.f32 %v4322, 1.442695
        %v4384 = vpow.pop %v4383
        %v4385 = vmul.f32 %v4323, 1.442695
        %v4386 = vpow.pop %v4385
        %v4387 = vmul.f32 %v4324, 1.442695
        %v4388 = vpow.pop %v4387
        %4389 = vadd.xlane.f32.xlu0 %v4326
        %v4390 = vpop.xlane.xlu0 %4389
        %4391 = vadd.xlane.f32.xlu0 %v4328
        %v4392 = vpop.xlane.xlu0 %4391
        %4393 = vadd.xlane.f32.xlu0 %v4330
        %v4394 = vpop.xlane.xlu0 %4393
        %4395 = vadd.xlane.f32.xlu0 %v4332
        %v4396 = vpop.xlane.xlu0 %4395
        %4397 = vadd.xlane.f32.xlu0 %v4334
        %v4398 = vpop.xlane.xlu0 %4397
        %4399 = vadd.xlane.f32.xlu0 %v4336
        %v4400 = vpop.xlane.xlu0 %4399
        %4401 = vadd.xlane.f32.xlu0 %v4338
        %v4402 = vpop.xlane.xlu0 %4401
        %4403 = vadd.xlane.f32.xlu0 %v4340
        %v4404 = vpop.xlane.xlu0 %4403
        %4405 = vadd.xlane.f32.xlu0 %v4342
        %v4406 = vpop.xlane.xlu0 %4405
        %4407 = vadd.xlane.f32.xlu0 %v4344
        %v4408 = vpop.xlane.xlu0 %4407
        %4409 = vadd.xlane.f32.xlu0 %v4346
        %v4410 = vpop.xlane.xlu0 %4409
        %4411 = vadd.xlane.f32.xlu0 %v4348
        %v4412 = vpop.xlane.xlu0 %4411
        %4413 = vadd.xlane.f32.xlu0 %v4350
        %v4414 = vpop.xlane.xlu0 %4413
        %4415 = vadd.xlane.f32.xlu0 %v4352
        %v4416 = vpop.xlane.xlu0 %4415
        %4417 = vadd.xlane.f32.xlu0 %v4354
        %v4418 = vpop.xlane.xlu0 %4417
        %4419 = vadd.xlane.f32.xlu0 %v4356
        %v4420 = vpop.xlane.xlu0 %4419
        %4421 = vadd.xlane.f32.xlu0 %v4358
        %v4422 = vpop.xlane.xlu0 %4421
        %4423 = vadd.xlane.f32.xlu0 %v4360
        %v4424 = vpop.xlane.xlu0 %4423
        %4425 = vadd.xlane.f32.xlu0 %v4362
        %v4426 = vpop.xlane.xlu0 %4425
        %4427 = vadd.xlane.f32.xlu0 %v4364
        %v4428 = vpop.xlane.xlu0 %4427
        %4429 = vadd.xlane.f32.xlu0 %v4366
        %v4430 = vpop.xlane.xlu0 %4429
        %4431 = vadd.xlane.f32.xlu0 %v4368
        %v4432 = vpop.xlane.xlu0 %4431
        %4433 = vadd.xlane.f32.xlu0 %v4370
        %v4434 = vpop.xlane.xlu0 %4433
        %4435 = vadd.xlane.f32.xlu0 %v4372
        %v4436 = vpop.xlane.xlu0 %4435
        %4437 = vadd.xlane.f32.xlu0 %v4374
        %v4438 = vpop.xlane.xlu0 %4437
        %4439 = vadd.xlane.f32.xlu0 %v4376
        %v4440 = vpop.xlane.xlu0 %4439
        %4441 = vadd.xlane.f32.xlu0 %v4378
        %v4442 = vpop.xlane.xlu0 %4441
        %4443 = vadd.xlane.f32.xlu0 %v4380
        %v4444 = vpop.xlane.xlu0 %4443
        %4445 = vadd.xlane.f32.xlu0 %v4382
        %v4446 = vpop.xlane.xlu0 %4445
        %4447 = vadd.xlane.f32.xlu0 %v4384
        %v4448 = vpop.xlane.xlu0 %4447
        %4449 = vadd.xlane.f32.xlu0 %v4386
        %v4450 = vpop.xlane.xlu0 %4449
        %4451 = vadd.xlane.f32.xlu0 %v4388
        %v4452 = vpop.xlane.xlu0 %4451
        %v4453 = vrcp.pop %v4390
        %v4454 = vrcp.pop %v4392
        %v4455 = vrcp.pop %v4394
        %v4456 = vrcp.pop %v4396
        %v4457 = vrcp.pop %v4398
        %v4458 = vrcp.pop %v4400
        %v4459 = vrcp.pop %v4402
        %v4460 = vrcp.pop %v4404
        %v4461 = vrcp.pop %v4406
        %v4462 = vrcp.pop %v4408
        %v4463 = vrcp.pop %v4410
        %v4464 = vrcp.pop %v4412
        %v4465 = vrcp.pop %v4414
        %v4466 = vrcp.pop %v4416
        %v4467 = vrcp.pop %v4418
        %v4468 = vrcp.pop %v4420
        %v4469 = vrcp.pop %v4422
        %v4470 = vrcp.pop %v4424
        %v4471 = vrcp.pop %v4426
        %v4472 = vrcp.pop %v4428
        %v4473 = vrcp.pop %v4430
        %v4474 = vrcp.pop %v4432
        %v4475 = vrcp.pop %v4434
        %v4476 = vrcp.pop %v4436
        %v4477 = vrcp.pop %v4438
        %v4478 = vrcp.pop %v4440
        %v4479 = vrcp.pop %v4442
        %v4480 = vrcp.pop %v4444
        %v4481 = vrcp.pop %v4446
        %v4482 = vrcp.pop %v4448
        %v4483 = vrcp.pop %v4450
        %v4484 = vrcp.pop %v4452
        %v4485 = vmul.f32 %v4326, %v4453
        %v4486 = vmul.f32 %v4328, %v4454
        %v4487 = vmul.f32 %v4330, %v4455
        %v4488 = vmul.f32 %v4332, %v4456
        %v4489 = vmul.f32 %v4334, %v4457
        %v4490 = vmul.f32 %v4336, %v4458
        %v4491 = vmul.f32 %v4338, %v4459
        %v4492 = vmul.f32 %v4340, %v4460
        %v4493 = vmul.f32 %v4342, %v4461
        %v4494 = vmul.f32 %v4344, %v4462
        %v4495 = vmul.f32 %v4346, %v4463
        %v4496 = vmul.f32 %v4348, %v4464
        %v4497 = vmul.f32 %v4350, %v4465
        %v4498 = vmul.f32 %v4352, %v4466
        %v4499 = vmul.f32 %v4354, %v4467
        %v4500 = vmul.f32 %v4356, %v4468
        %v4501 = vmul.f32 %v4358, %v4469
        %v4502 = vmul.f32 %v4360, %v4470
        %v4503 = vmul.f32 %v4362, %v4471
        %v4504 = vmul.f32 %v4364, %v4472
        %v4505 = vmul.f32 %v4366, %v4473
        %v4506 = vmul.f32 %v4368, %v4474
        %v4507 = vmul.f32 %v4370, %v4475
        %v4508 = vmul.f32 %v4372, %v4476
        %v4509 = vmul.f32 %v4374, %v4477
        %v4510 = vmul.f32 %v4376, %v4478
        %v4511 = vmul.f32 %v4378, %v4479
        %v4512 = vmul.f32 %v4380, %v4480
        %v4513 = vmul.f32 %v4382, %v4481
        %v4514 = vmul.f32 %v4384, %v4482
        %v4515 = vmul.f32 %v4386, %v4483
        %v4516 = vmul.f32 %v4388, %v4484
        %v4517 = vld [vmem:[#allocation5] sm:$0xff]
        %v4518 = vld [vmem:[#allocation5 + $0x8] sm:$0xff]
        %v4519 = vld [vmem:[#allocation5 + $0x10] sm:$0xff]
        %v4520 = vld [vmem:[#allocation5 + $0x18] sm:$0xff]
        %v4521 = vld [vmem:[#allocation5 + $0x20] sm:$0xff]
        %v4522 = vld [vmem:[#allocation5 + $0x28] sm:$0xff]
        %v4523 = vld [vmem:[#allocation5 + $0x30] sm:$0xff]
        %v4524 = vld [vmem:[#allocation5 + $0x38] sm:$0xff]
        %v4525 = vld [vmem:[#allocation5 + $0x40] sm:$0xff]
        %v4526 = vld [vmem:[#allocation5 + $0x48] sm:$0xff]
        %v4527 = vld [vmem:[#allocation5 + $0x50] sm:$0xff]
        %v4528 = vld [vmem:[#allocation5 + $0x58] sm:$0xff]
        %v4529 = vld [vmem:[#allocation5 + $0x60] sm:$0xff]
        %v4530 = vld [vmem:[#allocation5 + $0x68] sm:$0xff]
        %v4531 = vld [vmem:[#allocation5 + $0x70] sm:$0xff]
        %v4532 = vld [vmem:[#allocation5 + $0x78] sm:$0xff]
        %v4533 = vld [vmem:[#allocation5 + $0x80] sm:$0xff]
        %v4534 = vld [vmem:[#allocation5 + $0x88] sm:$0xff]
        %v4535 = vld [vmem:[#allocation5 + $0x90] sm:$0xff]
        %v4536 = vld [vmem:[#allocation5 + $0x98] sm:$0xff]
        %v4537 = vld [vmem:[#allocation5 + $0xa0] sm:$0xff]
        %v4538 = vld [vmem:[#allocation5 + $0xa8] sm:$0xff]
        %v4539 = vld [vmem:[#allocation5 + $0xb0] sm:$0xff]
        %v4540 = vld [vmem:[#allocation5 + $0xb8] sm:$0xff]
        %v4541 = vld [vmem:[#allocation5 + $0xc0] sm:$0xff]
        %v4542 = vld [vmem:[#allocation5 + $0xc8] sm:$0xff]
        %v4543 = vld [vmem:[#allocation5 + $0xd0] sm:$0xff]
        %v4544 = vld [vmem:[#allocation5 + $0xd8] sm:$0xff]
        %v4545 = vld [vmem:[#allocation5 + $0xe0] sm:$0xff]
        %v4546 = vld [vmem:[#allocation5 + $0xe8] sm:$0xff]
        %v4547 = vld [vmem:[#allocation5 + $0xf0] sm:$0xff]
        %v4548 = vld [vmem:[#allocation5 + $0xf8] sm:$0xff]
        %v4549 = vpack.c.bf16 %v4486, %v4485
        %v4550 = vpack.c.bf16 %v4488, %v4487
        %v4551 = vpack.c.bf16 %v4490, %v4489
        %v4552 = vpack.c.bf16 %v4492, %v4491
        %v4553 = vpack.c.bf16 %v4494, %v4493
        %v4554 = vpack.c.bf16 %v4496, %v4495
        %v4555 = vpack.c.bf16 %v4498, %v4497
        %v4556 = vpack.c.bf16 %v4500, %v4499
        %v4557 = vpack.c.bf16 %v4502, %v4501
        %v4558 = vpack.c.bf16 %v4504, %v4503
        %v4559 = vpack.c.bf16 %v4506, %v4505
        %v4560 = vpack.c.bf16 %v4508, %v4507
        %v4561 = vpack.c.bf16 %v4510, %v4509
        %v4562 = vpack.c.bf16 %v4512, %v4511
        %v4563 = vpack.c.bf16 %v4514, %v4513
        %v4564 = vpack.c.bf16 %v4516, %v4515
        %s4565 = scalar_lea.vmem [#allocation4], 128
        %v4566 = vld [vmem:[%s4565] sm:$0xff]
        %v4567 = vld [vmem:[%s4565 + $0x8] sm:$0xff]
        %v4568 = vld [vmem:[%s4565 + $0x10] sm:$0xff]
        %v4569 = vld [vmem:[%s4565 + $0x18] sm:$0xff]
        %v4570 = vld [vmem:[%s4565 + $0x20] sm:$0xff]
        %v4571 = vld [vmem:[%s4565 + $0x28] sm:$0xff]
        %v4572 = vld [vmem:[%s4565 + $0x30] sm:$0xff]
        %v4573 = vld [vmem:[%s4565 + $0x38] sm:$0xff]
        %4574 = vmatprep.subr.bf16.mxu0 0
        %4575 = vmatpush1.bf16.msra.mxu0 %v4566
        %4576 = vmatprep.subr.bf16.mxu0 0
        %4577 = vmatpush1.bf16.msra.mxu0 %v4567
        %4578 = vmatprep.subr.bf16.mxu0 0
        %4579 = vmatpush1.bf16.msra.mxu0 %v4568
        %4580 = vmatprep.subr.bf16.mxu0 0
        %4581 = vmatpush1.bf16.msra.mxu0 %v4569
        %4582 = vmatprep.subr.bf16.mxu0 0
        %4583 = vmatpush1.bf16.msra.mxu0 %v4570
        %4584 = vmatprep.subr.bf16.mxu0 0
        %4585 = vmatpush1.bf16.msra.mxu0 %v4571
        %4586 = vmatprep.subr.bf16.mxu0 0
        %4587 = vmatpush1.bf16.msra.mxu0 %v4572
        %4588 = vmatprep.subr.bf16.mxu0 0
        %4589 = vmatpush1.bf16.msra.mxu0 %v4573
        %4590 = vmatprep.subr.bf16.mxu0 0
        %4591 = vmatpush1.bf16.msra.mxu0 0
        %4592 = vmatprep.subr.bf16.mxu0 0
        %4593 = vmatpush1.bf16.msra.mxu0 0
        %4594 = vmatprep.subr.bf16.mxu0 0
        %4595 = vmatpush1.bf16.msra.mxu0 0
        %4596 = vmatprep.subr.bf16.mxu0 0
        %4597 = vmatpush1.bf16.msra.mxu0 0
        %4598 = vmatprep.subr.bf16.mxu0 0
        %4599 = vmatpush1.bf16.msra.mxu0 0
        %4600 = vmatprep.subr.bf16.mxu0 0
        %4601 = vmatpush1.bf16.msra.mxu0 0
        %4602 = vmatprep.subr.bf16.mxu0 0
        %4603 = vmatpush1.bf16.msra.mxu0 0
        %4604 = vmatprep.subr.bf16.mxu0 0
        %4605 = vmatpush1.bf16.msra.mxu0 0
        %4606 = vmatprep.mubr.bf16.mxu0 0
        %4607 = vmatmul.mubr.bf16.gmra.mrb[0].mxu0 %v4549
        %v4608 = vpop.f32.mrb[0].mxu0
        %v4609 = vadd.f32 0.0, %v4608
        %v4610 = vpop.f32.mrb[0].mxu0
        %v4611 = vpop.f32.mrb[0].mxu0
        %v4612 = vadd.f32 0.0, %v4611
        %v4613 = vpop.f32.mrb[0].mxu0
        %4614 = vmatprep.mubr.bf16.mxu0 0
        %4615 = vmatmul.mubr.bf16.gmra.mrb[0].mxu0 %v4550
        %v4616 = vpop.f32.mrb[0].mxu0
        %v4617 = vadd.f32 0.0, %v4616
        %v4618 = vpop.f32.mrb[0].mxu0
        %v4619 = vpop.f32.mrb[0].mxu0
        %v4620 = vadd.f32 0.0, %v4619
        %v4621 = vpop.f32.mrb[0].mxu0
        %4622 = vmatprep.mubr.bf16.mxu0 0
        %4623 = vmatmul.mubr.bf16.gmra.mrb[0].mxu0 %v4551
        %v4624 = vpop.f32.mrb[0].mxu0
        %v4625 = vadd.f32 0.0, %v4624
        %v4626 = vpop.f32.mrb[0].mxu0
        %v4627 = vpop.f32.mrb[0].mxu0
        %v4628 = vadd.f32 0.0, %v4627
        %v4629 = vpop.f32.mrb[0].mxu0
        %4630 = vmatprep.mubr.bf16.mxu0 0
        %4631 = vmatmul.mubr.bf16.gmra.mrb[0].mxu0 %v4552
        %v4632 = vpop.f32.mrb[0].mxu0
        %v4633 = vadd.f32 0.0, %v4632
        %v4634 = vpop.f32.mrb[0].mxu0
        %v4635 = vpop.f32.mrb[0].mxu0
        %v4636 = vadd.f32 0.0, %v4635
        %v4637 = vpop.f32.mrb[0].mxu0
        %4638 = vmatprep.mubr.bf16.mxu0 0
        %4639 = vmatmul.mubr.bf16.gmra.mrb[0].mxu0 %v4553
        %v4640 = vpop.f32.mrb[0].mxu0
        %v4641 = vadd.f32 0.0, %v4640
        %v4642 = vpop.f32.mrb[0].mxu0
        %v4643 = vpop.f32.mrb[0].mxu0
        %v4644 = vadd.f32 0.0, %v4643
        %v4645 = vpop.f32.mrb[0].mxu0
        %4646 = vmatprep.mubr.bf16.mxu0 0
        %4647 = vmatmul.mubr.bf16.gmra.mrb[0].mxu0 %v4554
        %v4648 = vpop.f32.mrb[0].mxu0
        %v4649 = vadd.f32 0.0, %v4648
        %v4650 = vpop.f32.mrb[0].mxu0
        %v4651 = vpop.f32.mrb[0].mxu0
        %v4652 = vadd.f32 0.0, %v4651
        %v4653 = vpop.f32.mrb[0].mxu0
        %4654 = vmatprep.mubr.bf16.mxu0 0
        %4655 = vmatmul.mubr.bf16.gmra.mrb[0].mxu0 %v4555
        %v4656 = vpop.f32.mrb[0].mxu0
        %v4657 = vadd.f32 0.0, %v4656
        %v4658 = vpop.f32.mrb[0].mxu0
        %v4659 = vpop.f32.mrb[0].mxu0
        %v4660 = vadd.f32 0.0, %v4659
        %v4661 = vpop.f32.mrb[0].mxu0
        %4662 = vmatprep.mubr.bf16.mxu0 0
        %4663 = vmatmul.mubr.bf16.gmra.mrb[0].mxu0 %v4556
        %v4664 = vpop.f32.mrb[0].mxu0
        %v4665 = vadd.f32 0.0, %v4664
        %v4666 = vpop.f32.mrb[0].mxu0
        %v4667 = vpop.f32.mrb[0].mxu0
        %v4668 = vadd.f32 0.0, %v4667
        %v4669 = vpop.f32.mrb[0].mxu0
        %4670 = vmatprep.mubr.bf16.mxu0 0
        %4671 = vmatmul.mubr.bf16.gmra.mrb[0].mxu0 %v4557
        %v4672 = vpop.f32.mrb[0].mxu0
        %v4673 = vadd.f32 0.0, %v4672
        %v4674 = vpop.f32.mrb[0].mxu0
        %v4675 = vpop.f32.mrb[0].mxu0
        %v4676 = vadd.f32 0.0, %v4675
        %v4677 = vpop.f32.mrb[0].mxu0
        %4678 = vmatprep.mubr.bf16.mxu0 0
        %4679 = vmatmul.mubr.bf16.gmra.mrb[0].mxu0 %v4558
        %v4680 = vpop.f32.mrb[0].mxu0
        %v4681 = vadd.f32 0.0, %v4680
        %v4682 = vpop.f32.mrb[0].mxu0
        %v4683 = vpop.f32.mrb[0].mxu0
        %v4684 = vadd.f32 0.0, %v4683
        %v4685 = vpop.f32.mrb[0].mxu0
        %4686 = vmatprep.mubr.bf16.mxu0 0
        %4687 = vmatmul.mubr.bf16.gmra.mrb[0].mxu0 %v4559
        %v4688 = vpop.f32.mrb[0].mxu0
        %v4689 = vadd.f32 0.0, %v4688
        %v4690 = vpop.f32.mrb[0].mxu0
        %v4691 = vpop.f32.mrb[0].mxu0
        %v4692 = vadd.f32 0.0, %v4691
        %v4693 = vpop.f32.mrb[0].mxu0
        %4694 = vmatprep.mubr.bf16.mxu0 0
        %4695 = vmatmul.mubr.bf16.gmra.mrb[0].mxu0 %v4560
        %v4696 = vpop.f32.mrb[0].mxu0
        %v4697 = vadd.f32 0.0, %v4696
        %v4698 = vpop.f32.mrb[0].mxu0
        %v4699 = vpop.f32.mrb[0].mxu0
        %v4700 = vadd.f32 0.0, %v4699
        %v4701 = vpop.f32.mrb[0].mxu0
        %4702 = vmatprep.mubr.bf16.mxu0 0
        %4703 = vmatmul.mubr.bf16.gmra.mrb[0].mxu0 %v4561
        %v4704 = vpop.f32.mrb[0].mxu0
        %v4705 = vadd.f32 0.0, %v4704
        %v4706 = vpop.f32.mrb[0].mxu0
        %v4707 = vpop.f32.mrb[0].mxu0
        %v4708 = vadd.f32 0.0, %v4707
        %v4709 = vpop.f32.mrb[0].mxu0
        %4710 = vmatprep.mubr.bf16.mxu0 0
        %4711 = vmatmul.mubr.bf16.gmra.mrb[0].mxu0 %v4562
        %v4712 = vpop.f32.mrb[0].mxu0
        %v4713 = vadd.f32 0.0, %v4712
        %v4714 = vpop.f32.mrb[0].mxu0
        %v4715 = vpop.f32.mrb[0].mxu0
        %v4716 = vadd.f32 0.0, %v4715
        %v4717 = vpop.f32.mrb[0].mxu0
        %4718 = vmatprep.mubr.bf16.mxu0 0
        %4719 = vmatmul.mubr.bf16.gmra.mrb[0].mxu0 %v4563
        %v4720 = vpop.f32.mrb[0].mxu0
        %v4721 = vadd.f32 0.0, %v4720
        %v4722 = vpop.f32.mrb[0].mxu0
        %v4723 = vpop.f32.mrb[0].mxu0
        %v4724 = vadd.f32 0.0, %v4723
        %v4725 = vpop.f32.mrb[0].mxu0
        %4726 = vmatprep.mubr.bf16.mxu0 0
        %4727 = vmatmul.mubr.bf16.gmra.mrb[0].mxu0 %v4564
        %v4728 = vpop.f32.mrb[0].mxu0
        %v4729 = vadd.f32 0.0, %v4728
        %v4730 = vpop.f32.mrb[0].mxu0
        %v4731 = vpop.f32.mrb[0].mxu0
        %v4732 = vadd.f32 0.0, %v4731
        %v4733 = vpop.f32.mrb[0].mxu0
        %4734 = vdwg.mxu0
        %v4735 = vadd.f32 %v4517, %v4609
        %v4736 = vadd.f32 %v4518, %v4612
        %v4737 = vadd.f32 %v4519, %v4617
        %v4738 = vadd.f32 %v4520, %v4620
        %v4739 = vadd.f32 %v4521, %v4625
        %v4740 = vadd.f32 %v4522, %v4628
        %v4741 = vadd.f32 %v4523, %v4633
        %v4742 = vadd.f32 %v4524, %v4636
        %v4743 = vadd.f32 %v4525, %v4641
        %v4744 = vadd.f32 %v4526, %v4644
        %v4745 = vadd.f32 %v4527, %v4649
        %v4746 = vadd.f32 %v4528, %v4652
        %v4747 = vadd.f32 %v4529, %v4657
        %v4748 = vadd.f32 %v4530, %v4660
        %v4749 = vadd.f32 %v4531, %v4665
        %v4750 = vadd.f32 %v4532, %v4668
        %v4751 = vadd.f32 %v4533, %v4673
        %v4752 = vadd.f32 %v4534, %v4676
        %v4753 = vadd.f32 %v4535, %v4681
        %v4754 = vadd.f32 %v4536, %v4684
        %v4755 = vadd.f32 %v4537, %v4689
        %v4756 = vadd.f32 %v4538, %v4692
        %v4757 = vadd.f32 %v4539, %v4697
        %v4758 = vadd.f32 %v4540, %v4700
        %v4759 = vadd.f32 %v4541, %v4705
        %v4760 = vadd.f32 %v4542, %v4708
        %v4761 = vadd.f32 %v4543, %v4713
        %v4762 = vadd.f32 %v4544, %v4716
        %v4763 = vadd.f32 %v4545, %v4721
        %v4764 = vadd.f32 %v4546, %v4724
        %v4765 = vadd.f32 %v4547, %v4729
        %v4766 = vadd.f32 %v4548, %v4732
        %4767 = vst [vmem:[#allocation5] sm:$0xff] %v4735
        %4768 = vst [vmem:[#allocation5 + $0x8] sm:$0xff] %v4736
        %4769 = vst [vmem:[#allocation5 + $0x10] sm:$0xff] %v4737
        %4770 = vst [vmem:[#allocation5 + $0x18] sm:$0xff] %v4738
        %4771 = vst [vmem:[#allocation5 + $0x20] sm:$0xff] %v4739
        %4772 = vst [vmem:[#allocation5 + $0x28] sm:$0xff] %v4740
        %4773 = vst [vmem:[#allocation5 + $0x30] sm:$0xff] %v4741
        %4774 = vst [vmem:[#allocation5 + $0x38] sm:$0xff] %v4742
        %4775 = vst [vmem:[#allocation5 + $0x40] sm:$0xff] %v4743
        %4776 = vst [vmem:[#allocation5 + $0x48] sm:$0xff] %v4744
        %4777 = vst [vmem:[#allocation5 + $0x50] sm:$0xff] %v4745
        %4778 = vst [vmem:[#allocation5 + $0x58] sm:$0xff] %v4746
        %4779 = vst [vmem:[#allocation5 + $0x60] sm:$0xff] %v4747
        %4780 = vst [vmem:[#allocation5 + $0x68] sm:$0xff] %v4748
        %4781 = vst [vmem:[#allocation5 + $0x70] sm:$0xff] %v4749
        %4782 = vst [vmem:[#allocation5 + $0x78] sm:$0xff] %v4750
        %4783 = vst [vmem:[#allocation5 + $0x80] sm:$0xff] %v4751
        %4784 = vst [vmem:[#allocation5 + $0x88] sm:$0xff] %v4752
        %4785 = vst [vmem:[#allocation5 + $0x90] sm:$0xff] %v4753
        %4786 = vst [vmem:[#allocation5 + $0x98] sm:$0xff] %v4754
        %4787 = vst [vmem:[#allocation5 + $0xa0] sm:$0xff] %v4755
        %4788 = vst [vmem:[#allocation5 + $0xa8] sm:$0xff] %v4756
        %4789 = vst [vmem:[#allocation5 + $0xb0] sm:$0xff] %v4757
        %4790 = vst [vmem:[#allocation5 + $0xb8] sm:$0xff] %v4758
        %4791 = vst [vmem:[#allocation5 + $0xc0] sm:$0xff] %v4759
        %4792 = vst [vmem:[#allocation5 + $0xc8] sm:$0xff] %v4760
        %4793 = vst [vmem:[#allocation5 + $0xd0] sm:$0xff] %v4761
        %4794 = vst [vmem:[#allocation5 + $0xd8] sm:$0xff] %v4762
        %4795 = vst [vmem:[#allocation5 + $0xe0] sm:$0xff] %v4763
        %4796 = vst [vmem:[#allocation5 + $0xe8] sm:$0xff] %v4764
        %4797 = vst [vmem:[#allocation5 + $0xf0] sm:$0xff] %v4765
        %4798 = vst [vmem:[#allocation5 + $0xf8] sm:$0xff] %v4766
        %v4799 = vld [vmem:[#allocation2] sm:$0xff]
        %v4800 = vld [vmem:[#allocation2 + $0x8] sm:$0xff]
        %v4801 = vld [vmem:[#allocation2 + $0x10] sm:$0xff]
        %v4802 = vld [vmem:[#allocation2 + $0x18] sm:$0xff]
        %v4803 = vld [vmem:[#allocation2 + $0x20] sm:$0xff]
        %v4804 = vld [vmem:[#allocation2 + $0x28] sm:$0xff]
        %v4805 = vld [vmem:[#allocation2 + $0x30] sm:$0xff]
        %v4806 = vld [vmem:[#allocation2 + $0x38] sm:$0xff]
        %v4807 = vld [vmem:[#allocation2 + $0x40] sm:$0xff]
        %v4808 = vld [vmem:[#allocation2 + $0x48] sm:$0xff]
        %v4809 = vld [vmem:[#allocation2 + $0x50] sm:$0xff]
        %v4810 = vld [vmem:[#allocation2 + $0x58] sm:$0xff]
        %v4811 = vld [vmem:[#allocation2 + $0x60] sm:$0xff]
        %v4812 = vld [vmem:[#allocation2 + $0x68] sm:$0xff]
        %v4813 = vld [vmem:[#allocation2 + $0x70] sm:$0xff]
        %v4814 = vld [vmem:[#allocation2 + $0x78] sm:$0xff]
        %v4815 = vld [vmem:[#allocation3] sm:$0xff]
        %v4816 = vld [vmem:[#allocation3 + $0x8] sm:$0xff]
        %v4817 = vld [vmem:[#allocation3 + $0x10] sm:$0xff]
        %v4818 = vld [vmem:[#allocation3 + $0x18] sm:$0xff]
        %v4819 = vld [vmem:[#allocation3 + $0x20] sm:$0xff]
        %v4820 = vld [vmem:[#allocation3 + $0x28] sm:$0xff]
        %v4821 = vld [vmem:[#allocation3 + $0x30] sm:$0xff]
        %v4822 = vld [vmem:[#allocation3 + $0x38] sm:$0xff]
        %4839 = vrot.lane.b32.xlu0 %v4799, 80
        %v4840 = vpop.permute.xlu0 %4839
        %4841 = vrot.lane.b32.xlu0 %v4800, 80
        %v4842 = vpop.permute.xlu0 %4841
        %4843 = vrot.lane.b32.xlu0 %v4801, 80
        %v4844 = vpop.permute.xlu0 %4843
        %4845 = vrot.lane.b32.xlu0 %v4802, 80
        %v4846 = vpop.permute.xlu0 %4845
        %4847 = vrot.lane.b32.xlu0 %v4803, 80
        %v4848 = vpop.permute.xlu0 %4847
        %4849 = vrot.lane.b32.xlu0 %v4804, 80
        %v4850 = vpop.permute.xlu0 %4849
        %4851 = vrot.lane.b32.xlu0 %v4805, 80
        %v4852 = vpop.permute.xlu0 %4851
        %4853 = vrot.lane.b32.xlu0 %v4806, 80
        %v4854 = vpop.permute.xlu0 %4853
        %4855 = vrot.lane.b32.xlu0 %v4807, 80
        %v4856 = vpop.permute.xlu0 %4855
        %4857 = vrot.lane.b32.xlu0 %v4808, 80
        %v4858 = vpop.permute.xlu0 %4857
        %4859 = vrot.lane.b32.xlu0 %v4809, 80
        %v4860 = vpop.permute.xlu0 %4859
        %4861 = vrot.lane.b32.xlu0 %v4810, 80
        %v4862 = vpop.permute.xlu0 %4861
        %4863 = vrot.lane.b32.xlu0 %v4811, 80
        %v4864 = vpop.permute.xlu0 %4863
        %4865 = vrot.lane.b32.xlu0 %v4812, 80
        %v4866 = vpop.permute.xlu0 %4865
        %4867 = vrot.lane.b32.xlu0 %v4813, 80
        %v4868 = vpop.permute.xlu0 %4867
        %4869 = vrot.lane.b32.xlu0 %v4814, 80
        %v4870 = vpop.permute.xlu0 %4869
        %4879 = vrot.lane.b32.xlu0 %v4815, 80
        %v4880 = vpop.permute.xlu0 %4879
        %4881 = vrot.lane.b32.xlu0 %v4816, 80
        %v4882 = vpop.permute.xlu0 %4881
        %4883 = vrot.lane.b32.xlu0 %v4817, 80
        %v4884 = vpop.permute.xlu0 %4883
        %4885 = vrot.lane.b32.xlu0 %v4818, 80
        %v4886 = vpop.permute.xlu0 %4885
        %4887 = vrot.lane.b32.xlu0 %v4819, 80
        %v4888 = vpop.permute.xlu0 %4887
        %4889 = vrot.lane.b32.xlu0 %v4820, 80
        %v4890 = vpop.permute.xlu0 %4889
        %4891 = vrot.lane.b32.xlu0 %v4821, 80
        %v4892 = vpop.permute.xlu0 %4891
        %4893 = vrot.lane.b32.xlu0 %v4822, 80
        %v4894 = vpop.permute.xlu0 %4893
        %v4896 = vsel %vm2198, %v4840, 0
        %v4899 = vsel %vm2198, %v4842, 0
        %v4902 = vsel %vm2198, %v4844, 0
        %v4905 = vsel %vm2198, %v4846, 0
        %v4908 = vsel %vm2198, %v4848, 0
        %v4911 = vsel %vm2198, %v4850, 0
        %v4914 = vsel %vm2198, %v4852, 0
        %v4917 = vsel %vm2198, %v4854, 0
        %v4920 = vsel %vm2198, %v4856, 0
        %v4923 = vsel %vm2198, %v4858, 0
        %v4926 = vsel %vm2198, %v4860, 0
        %v4929 = vsel %vm2198, %v4862, 0
        %v4932 = vsel %vm2198, %v4864, 0
        %v4935 = vsel %vm2198, %v4866, 0
        %v4938 = vsel %vm2198, %v4868, 0
        %v4941 = vsel %vm2198, %v4870, 0
        %v4944 = vsel %vm2198, %v4880, 0
        %v4947 = vsel %vm2198, %v4882, 0
        %v4950 = vsel %vm2198, %v4884, 0
        %v4953 = vsel %vm2198, %v4886, 0
        %v4956 = vsel %vm2198, %v4888, 0
        %v4959 = vsel %vm2198, %v4890, 0
        %v4962 = vsel %vm2198, %v4892, 0
        %v4965 = vsel %vm2198, %v4894, 0
        %4967 = vmatprep.subr.bf16.mxu0 0
        %4968 = vmatpush1.bf16.xpose.msra.mxu0 %v4944
        %4969 = vmatprep.subr.bf16.mxu0 0
        %4970 = vmatpush1.bf16.xpose.msra.mxu0 %v4947
        %4971 = vmatprep.subr.bf16.mxu0 0
        %4972 = vmatpush1.bf16.xpose.msra.mxu0 %v4950
        %4973 = vmatprep.subr.bf16.mxu0 0
        %4974 = vmatpush1.bf16.xpose.msra.mxu0 %v4953
        %4975 = vmatprep.subr.bf16.mxu0 0
        %4976 = vmatpush1.bf16.xpose.msra.mxu0 %v4956
        %4977 = vmatprep.subr.bf16.mxu0 0
        %4978 = vmatpush1.bf16.xpose.msra.mxu0 %v4959
        %4979 = vmatprep.subr.bf16.mxu0 0
        %4980 = vmatpush1.bf16.xpose.msra.mxu0 %v4962
        %4981 = vmatprep.subr.bf16.mxu0 0
        %4982 = vmatpush1.bf16.xpose.msra.mxu0 %v4965
        %4983 = vmatprep.subr.bf16.mxu0 0
        %4984 = vmatpush1.bf16.xpose.msra.mxu0 0
        %4985 = vmatprep.subr.bf16.mxu0 0
        %4986 = vmatpush1.bf16.xpose.msra.mxu0 0
        %4987 = vmatprep.subr.bf16.mxu0 0
        %4988 = vmatpush1.bf16.xpose.msra.mxu0 0
        %4989 = vmatprep.subr.bf16.mxu0 0
        %4990 = vmatpush1.bf16.xpose.msra.mxu0 0
        %4991 = vmatprep.subr.bf16.mxu0 0
        %4992 = vmatpush1.bf16.xpose.msra.mxu0 0
        %4993 = vmatprep.subr.bf16.mxu0 0
        %4994 = vmatpush1.bf16.xpose.msra.mxu0 0
        %4995 = vmatprep.subr.bf16.mxu0 0
        %4996 = vmatpush1.bf16.xpose.msra.mxu0 0
        %4997 = vmatprep.subr.bf16.mxu0 0
        %4998 = vmatpush1.bf16.xpose.msra.mxu0 0
        %4999 = vmatprep.mubr.bf16.mxu0 0
        %5000 = vmatmul.mubr.bf16.gmra.mrb[0].mxu0 %v4896
        %v5001 = vpop.f32.mrb[0].mxu0
        %v5002 = vadd.f32 0.0, %v5001
        %v5003 = vpop.f32.mrb[0].mxu0
        %v5004 = vpop.f32.mrb[0].mxu0
        %v5005 = vadd.f32 0.0, %v5004
        %v5006 = vpop.f32.mrb[0].mxu0
        %5007 = vmatprep.mubr.bf16.mxu0 0
        %5008 = vmatmul.mubr.bf16.gmra.mrb[0].mxu0 %v4899
        %v5009 = vpop.f32.mrb[0].mxu0
        %v5010 = vadd.f32 0.0, %v5009
        %v5011 = vpop.f32.mrb[0].mxu0
        %v5012 = vpop.f32.mrb[0].mxu0
        %v5013 = vadd.f32 0.0, %v5012
        %v5014 = vpop.f32.mrb[0].mxu0
        %5015 = vmatprep.mubr.bf16.mxu0 0
        %5016 = vmatmul.mubr.bf16.gmra.mrb[0].mxu0 %v4902
        %v5017 = vpop.f32.mrb[0].mxu0
        %v5018 = vadd.f32 0.0, %v5017
        %v5019 = vpop.f32.mrb[0].mxu0
        %v5020 = vpop.f32.mrb[0].mxu0
        %v5021 = vadd.f32 0.0, %v5020
        %v5022 = vpop.f32.mrb[0].mxu0
        %5023 = vmatprep.mubr.bf16.mxu0 0
        %5024 = vmatmul.mubr.bf16.gmra.mrb[0].mxu0 %v4905
        %v5025 = vpop.f32.mrb[0].mxu0
        %v5026 = vadd.f32 0.0, %v5025
        %v5027 = vpop.f32.mrb[0].mxu0
        %v5028 = vpop.f32.mrb[0].mxu0
        %v5029 = vadd.f32 0.0, %v5028
        %v5030 = vpop.f32.mrb[0].mxu0
        %5031 = vmatprep.mubr.bf16.mxu0 0
        %5032 = vmatmul.mubr.bf16.gmra.mrb[0].mxu0 %v4908
        %v5033 = vpop.f32.mrb[0].mxu0
        %v5034 = vadd.f32 0.0, %v5033
        %v5035 = vpop.f32.mrb[0].mxu0
        %v5036 = vpop.f32.mrb[0].mxu0
        %v5037 = vadd.f32 0.0, %v5036
        %v5038 = vpop.f32.mrb[0].mxu0
        %5039 = vmatprep.mubr.bf16.mxu0 0
        %5040 = vmatmul.mubr.bf16.gmra.mrb[0].mxu0 %v4911
        %v5041 = vpop.f32.mrb[0].mxu0
        %v5042 = vadd.f32 0.0, %v5041
        %v5043 = vpop.f32.mrb[0].mxu0
        %v5044 = vpop.f32.mrb[0].mxu0
        %v5045 = vadd.f32 0.0, %v5044
        %v5046 = vpop.f32.mrb[0].mxu0
        %5047 = vmatprep.mubr.bf16.mxu0 0
        %5048 = vmatmul.mubr.bf16.gmra.mrb[0].mxu0 %v4914
        %v5049 = vpop.f32.mrb[0].mxu0
        %v5050 = vadd.f32 0.0, %v5049
        %v5051 = vpop.f32.mrb[0].mxu0
        %v5052 = vpop.f32.mrb[0].mxu0
        %v5053 = vadd.f32 0.0, %v5052
        %v5054 = vpop.f32.mrb[0].mxu0
        %5055 = vmatprep.mubr.bf16.mxu0 0
        %5056 = vmatmul.mubr.bf16.gmra.mrb[0].mxu0 %v4917
        %v5057 = vpop.f32.mrb[0].mxu0
        %v5058 = vadd.f32 0.0, %v5057
        %v5059 = vpop.f32.mrb[0].mxu0
        %v5060 = vpop.f32.mrb[0].mxu0
        %v5061 = vadd.f32 0.0, %v5060
        %v5062 = vpop.f32.mrb[0].mxu0
        %5063 = vmatprep.mubr.bf16.mxu0 0
        %5064 = vmatmul.mubr.bf16.gmra.mrb[0].mxu0 %v4920
        %v5065 = vpop.f32.mrb[0].mxu0
        %v5066 = vadd.f32 0.0, %v5065
        %v5067 = vpop.f32.mrb[0].mxu0
        %v5068 = vpop.f32.mrb[0].mxu0
        %v5069 = vadd.f32 0.0, %v5068
        %v5070 = vpop.f32.mrb[0].mxu0
        %5071 = vmatprep.mubr.bf16.mxu0 0
        %5072 = vmatmul.mubr.bf16.gmra.mrb[0].mxu0 %v4923
        %v5073 = vpop.f32.mrb[0].mxu0
        %v5074 = vadd.f32 0.0, %v5073
        %v5075 = vpop.f32.mrb[0].mxu0
        %v5076 = vpop.f32.mrb[0].mxu0
        %v5077 = vadd.f32 0.0, %v5076
        %v5078 = vpop.f32.mrb[0].mxu0
        %5079 = vmatprep.mubr.bf16.mxu0 0
        %5080 = vmatmul.mubr.bf16.gmra.mrb[0].mxu0 %v4926
        %v5081 = vpop.f32.mrb[0].mxu0
        %v5082 = vadd.f32 0.0, %v5081
        %v5083 = vpop.f32.mrb[0].mxu0
        %v5084 = vpop.f32.mrb[0].mxu0
        %v5085 = vadd.f32 0.0, %v5084
        %v5086 = vpop.f32.mrb[0].mxu0
        %5087 = vmatprep.mubr.bf16.mxu0 0
        %5088 = vmatmul.mubr.bf16.gmra.mrb[0].mxu0 %v4929
        %v5089 = vpop.f32.mrb[0].mxu0
        %v5090 = vadd.f32 0.0, %v5089
        %v5091 = vpop.f32.mrb[0].mxu0
        %v5092 = vpop.f32.mrb[0].mxu0
        %v5093 = vadd.f32 0.0, %v5092
        %v5094 = vpop.f32.mrb[0].mxu0
        %5095 = vmatprep.mubr.bf16.mxu0 0
        %5096 = vmatmul.mubr.bf16.gmra.mrb[0].mxu0 %v4932
        %v5097 = vpop.f32.mrb[0].mxu0
        %v5098 = vadd.f32 0.0, %v5097
        %v5099 = vpop.f32.mrb[0].mxu0
        %v5100 = vpop.f32.mrb[0].mxu0
        %v5101 = vadd.f32 0.0, %v5100
        %v5102 = vpop.f32.mrb[0].mxu0
        %5103 = vmatprep.mubr.bf16.mxu0 0
        %5104 = vmatmul.mubr.bf16.gmra.mrb[0].mxu0 %v4935
        %v5105 = vpop.f32.mrb[0].mxu0
        %v5106 = vadd.f32 0.0, %v5105
        %v5107 = vpop.f32.mrb[0].mxu0
        %v5108 = vpop.f32.mrb[0].mxu0
        %v5109 = vadd.f32 0.0, %v5108
        %v5110 = vpop.f32.mrb[0].mxu0
        %5111 = vmatprep.mubr.bf16.mxu0 0
        %5112 = vmatmul.mubr.bf16.gmra.mrb[0].mxu0 %v4938
        %v5113 = vpop.f32.mrb[0].mxu0
        %v5114 = vadd.f32 0.0, %v5113
        %v5115 = vpop.f32.mrb[0].mxu0
        %v5116 = vpop.f32.mrb[0].mxu0
        %v5117 = vadd.f32 0.0, %v5116
        %v5118 = vpop.f32.mrb[0].mxu0
        %5119 = vmatprep.mubr.bf16.mxu0 0
        %5120 = vmatmul.mubr.bf16.gmra.mrb[0].mxu0 %v4941
        %v5121 = vpop.f32.mrb[0].mxu0
        %v5122 = vadd.f32 0.0, %v5121
        %v5123 = vpop.f32.mrb[0].mxu0
        %v5124 = vpop.f32.mrb[0].mxu0
        %v5125 = vadd.f32 0.0, %v5124
        %v5126 = vpop.f32.mrb[0].mxu0
        %5127 = vdwg.mxu0
        %5128 = vmax.xlane.f32.xlu0 %v5002
        %v5129 = vpop.xlane.xlu0 %5128
        %5130 = vmax.xlane.f32.xlu0 %v5005
        %v5131 = vpop.xlane.xlu0 %5130
        %5132 = vmax.xlane.f32.xlu0 %v5010
        %v5133 = vpop.xlane.xlu0 %5132
        %5134 = vmax.xlane.f32.xlu0 %v5013
        %v5135 = vpop.xlane.xlu0 %5134
        %5136 = vmax.xlane.f32.xlu0 %v5018
        %v5137 = vpop.xlane.xlu0 %5136
        %5138 = vmax.xlane.f32.xlu0 %v5021
        %v5139 = vpop.xlane.xlu0 %5138
        %5140 = vmax.xlane.f32.xlu0 %v5026
        %v5141 = vpop.xlane.xlu0 %5140
        %5142 = vmax.xlane.f32.xlu0 %v5029
        %v5143 = vpop.xlane.xlu0 %5142
        %5144 = vmax.xlane.f32.xlu0 %v5034
        %v5145 = vpop.xlane.xlu0 %5144
        %5146 = vmax.xlane.f32.xlu0 %v5037
        %v5147 = vpop.xlane.xlu0 %5146
        %5148 = vmax.xlane.f32.xlu0 %v5042
        %v5149 = vpop.xlane.xlu0 %5148
        %5150 = vmax.xlane.f32.xlu0 %v5045
        %v5151 = vpop.xlane.xlu0 %5150
        %5152 = vmax.xlane.f32.xlu0 %v5050
        %v5153 = vpop.xlane.xlu0 %5152
        %5154 = vmax.xlane.f32.xlu0 %v5053
        %v5155 = vpop.xlane.xlu0 %5154
        %5156 = vmax.xlane.f32.xlu0 %v5058
        %v5157 = vpop.xlane.xlu0 %5156
        %5158 = vmax.xlane.f32.xlu0 %v5061
        %v5159 = vpop.xlane.xlu0 %5158
        %5160 = vmax.xlane.f32.xlu0 %v5066
        %v5161 = vpop.xlane.xlu0 %5160
        %5162 = vmax.xlane.f32.xlu0 %v5069
        %v5163 = vpop.xlane.xlu0 %5162
        %5164 = vmax.xlane.f32.xlu0 %v5074
        %v5165 = vpop.xlane.xlu0 %5164
        %5166 = vmax.xlane.f32.xlu0 %v5077
        %v5167 = vpop.xlane.xlu0 %5166
        %5168 = vmax.xlane.f32.xlu0 %v5082
        %v5169 = vpop.xlane.xlu0 %5168
        %5170 = vmax.xlane.f32.xlu0 %v5085
        %v5171 = vpop.xlane.xlu0 %5170
        %5172 = vmax.xlane.f32.xlu0 %v5090
        %v5173 = vpop.xlane.xlu0 %5172
        %5174 = vmax.xlane.f32.xlu0 %v5093
        %v5175 = vpop.xlane.xlu0 %5174
        %5176 = vmax.xlane.f32.xlu0 %v5098
        %v5177 = vpop.xlane.xlu0 %5176
        %5178 = vmax.xlane.f32.xlu0 %v5101
        %v5179 = vpop.xlane.xlu0 %5178
        %5180 = vmax.xlane.f32.xlu0 %v5106
        %v5181 = vpop.xlane.xlu0 %5180
        %5182 = vmax.xlane.f32.xlu0 %v5109
        %v5183 = vpop.xlane.xlu0 %5182
        %5184 = vmax.xlane.f32.xlu0 %v5114
        %v5185 = vpop.xlane.xlu0 %5184
        %5186 = vmax.xlane.f32.xlu0 %v5117
        %v5187 = vpop.xlane.xlu0 %5186
        %5188 = vmax.xlane.f32.xlu0 %v5122
        %v5189 = vpop.xlane.xlu0 %5188
        %5190 = vmax.xlane.f32.xlu0 %v5125
        %v5191 = vpop.xlane.xlu0 %5190
        %v5192 = vsub.f32 %v5002, %v5129
        %v5193 = vsub.f32 %v5005, %v5131
        %v5194 = vsub.f32 %v5010, %v5133
        %v5195 = vsub.f32 %v5013, %v5135
        %v5196 = vsub.f32 %v5018, %v5137
        %v5197 = vsub.f32 %v5021, %v5139
        %v5198 = vsub.f32 %v5026, %v5141
        %v5199 = vsub.f32 %v5029, %v5143
        %v5200 = vsub.f32 %v5034, %v5145
        %v5201 = vsub.f32 %v5037, %v5147
        %v5202 = vsub.f32 %v5042, %v5149
        %v5203 = vsub.f32 %v5045, %v5151
        %v5204 = vsub.f32 %v5050, %v5153
        %v5205 = vsub.f32 %v5053, %v5155
        %v5206 = vsub.f32 %v5058, %v5157
        %v5207 = vsub.f32 %v5061, %v5159
        %v5208 = vsub.f32 %v5066, %v5161
        %v5209 = vsub.f32 %v5069, %v5163
        %v5210 = vsub.f32 %v5074, %v5165
        %v5211 = vsub.f32 %v5077, %v5167
        %v5212 = vsub.f32 %v5082, %v5169
        %v5213 = vsub.f32 %v5085, %v5171
        %v5214 = vsub.f32 %v5090, %v5173
        %v5215 = vsub.f32 %v5093, %v5175
        %v5216 = vsub.f32 %v5098, %v5177
        %v5217 = vsub.f32 %v5101, %v5179
        %v5218 = vsub.f32 %v5106, %v5181
        %v5219 = vsub.f32 %v5109, %v5183
        %v5220 = vsub.f32 %v5114, %v5185
        %v5221 = vsub.f32 %v5117, %v5187
        %v5222 = vsub.f32 %v5122, %v5189
        %v5223 = vsub.f32 %v5125, %v5191
        %v5224 = vmul.f32 %v5192, 1.442695
        %v5225 = vpow.pop %v5224
        %v5226 = vmul.f32 %v5193, 1.442695
        %v5227 = vpow.pop %v5226
        %v5228 = vmul.f32 %v5194, 1.442695
        %v5229 = vpow.pop %v5228
        %v5230 = vmul.f32 %v5195, 1.442695
        %v5231 = vpow.pop %v5230
        %v5232 = vmul.f32 %v5196, 1.442695
        %v5233 = vpow.pop %v5232
        %v5234 = vmul.f32 %v5197, 1.442695
        %v5235 = vpow.pop %v5234
        %v5236 = vmul.f32 %v5198, 1.442695
        %v5237 = vpow.pop %v5236
        %v5238 = vmul.f32 %v5199, 1.442695
        %v5239 = vpow.pop %v5238
        %v5240 = vmul.f32 %v5200, 1.442695
        %v5241 = vpow.pop %v5240
        %v5242 = vmul.f32 %v5201, 1.442695
        %v5243 = vpow.pop %v5242
        %v5244 = vmul.f32 %v5202, 1.442695
        %v5245 = vpow.pop %v5244
        %v5246 = vmul.f32 %v5203, 1.442695
        %v5247 = vpow.pop %v5246
        %v5248 = vmul.f32 %v5204, 1.442695
        %v5249 = vpow.pop %v5248
        %v5250 = vmul.f32 %v5205, 1.442695
        %v5251 = vpow.pop %v5250
        %v5252 = vmul.f32 %v5206, 1.442695
        %v5253 = vpow.pop %v5252
        %v5254 = vmul.f32 %v5207, 1.442695
        %v5255 = vpow.pop %v5254
        %v5256 = vmul.f32 %v5208, 1.442695
        %v5257 = vpow.pop %v5256
        %v5258 = vmul.f32 %v5209, 1.442695
        %v5259 = vpow.pop %v5258
        %v5260 = vmul.f32 %v5210, 1.442695
        %v5261 = vpow.pop %v5260
        %v5262 = vmul.f32 %v5211, 1.442695
        %v5263 = vpow.pop %v5262
        %v5264 = vmul.f32 %v5212, 1.442695
        %v5265 = vpow.pop %v5264
        %v5266 = vmul.f32 %v5213, 1.442695
        %v5267 = vpow.pop %v5266
        %v5268 = vmul.f32 %v5214, 1.442695
        %v5269 = vpow.pop %v5268
        %v5270 = vmul.f32 %v5215, 1.442695
        %v5271 = vpow.pop %v5270
        %v5272 = vmul.f32 %v5216, 1.442695
        %v5273 = vpow.pop %v5272
        %v5274 = vmul.f32 %v5217, 1.442695
        %v5275 = vpow.pop %v5274
        %v5276 = vmul.f32 %v5218, 1.442695
        %v5277 = vpow.pop %v5276
        %v5278 = vmul.f32 %v5219, 1.442695
        %v5279 = vpow.pop %v5278
        %v5280 = vmul.f32 %v5220, 1.442695
        %v5281 = vpow.pop %v5280
        %v5282 = vmul.f32 %v5221, 1.442695
        %v5283 = vpow.pop %v5282
        %v5284 = vmul.f32 %v5222, 1.442695
        %v5285 = vpow.pop %v5284
        %v5286 = vmul.f32 %v5223, 1.442695
        %v5287 = vpow.pop %v5286
        %5288 = vadd.xlane.f32.xlu0 %v5225
        %v5289 = vpop.xlane.xlu0 %5288
        %5290 = vadd.xlane.f32.xlu0 %v5227
        %v5291 = vpop.xlane.xlu0 %5290
        %5292 = vadd.xlane.f32.xlu0 %v5229
        %v5293 = vpop.xlane.xlu0 %5292
        %5294 = vadd.xlane.f32.xlu0 %v5231
        %v5295 = vpop.xlane.xlu0 %5294
        %5296 = vadd.xlane.f32.xlu0 %v5233
        %v5297 = vpop.xlane.xlu0 %5296
        %5298 = vadd.xlane.f32.xlu0 %v5235
        %v5299 = vpop.xlane.xlu0 %5298
        %5300 = vadd.xlane.f32.xlu0 %v5237
        %v5301 = vpop.xlane.xlu0 %5300
        %5302 = vadd.xlane.f32.xlu0 %v5239
        %v5303 = vpop.xlane.xlu0 %5302
        %5304 = vadd.xlane.f32.xlu0 %v5241
        %v5305 = vpop.xlane.xlu0 %5304
        %5306 = vadd.xlane.f32.xlu0 %v5243
        %v5307 = vpop.xlane.xlu0 %5306
        %5308 = vadd.xlane.f32.xlu0 %v5245
        %v5309 = vpop.xlane.xlu0 %5308
        %5310 = vadd.xlane.f32.xlu0 %v5247
        %v5311 = vpop.xlane.xlu0 %5310
        %5312 = vadd.xlane.f32.xlu0 %v5249
        %v5313 = vpop.xlane.xlu0 %5312
        %5314 = vadd.xlane.f32.xlu0 %v5251
        %v5315 = vpop.xlane.xlu0 %5314
        %5316 = vadd.xlane.f32.xlu0 %v5253
        %v5317 = vpop.xlane.xlu0 %5316
        %5318 = vadd.xlane.f32.xlu0 %v5255
        %v5319 = vpop.xlane.xlu0 %5318
        %5320 = vadd.xlane.f32.xlu0 %v5257
        %v5321 = vpop.xlane.xlu0 %5320
        %5322 = vadd.xlane.f32.xlu0 %v5259
        %v5323 = vpop.xlane.xlu0 %5322
        %5324 = vadd.xlane.f32.xlu0 %v5261
        %v5325 = vpop.xlane.xlu0 %5324
        %5326 = vadd.xlane.f32.xlu0 %v5263
        %v5327 = vpop.xlane.xlu0 %5326
        %5328 = vadd.xlane.f32.xlu0 %v5265
        %v5329 = vpop.xlane.xlu0 %5328
        %5330 = vadd.xlane.f32.xlu0 %v5267
        %v5331 = vpop.xlane.xlu0 %5330
        %5332 = vadd.xlane.f32.xlu0 %v5269
        %v5333 = vpop.xlane.xlu0 %5332
        %5334 = vadd.xlane.f32.xlu0 %v5271
        %v5335 = vpop.xlane.xlu0 %5334
        %5336 = vadd.xlane.f32.xlu0 %v5273
        %v5337 = vpop.xlane.xlu0 %5336
        %5338 = vadd.xlane.f32.xlu0 %v5275
        %v5339 = vpop.xlane.xlu0 %5338
        %5340 = vadd.xlane.f32.xlu0 %v5277
        %v5341 = vpop.xlane.xlu0 %5340
        %5342 = vadd.xlane.f32.xlu0 %v5279
        %v5343 = vpop.xlane.xlu0 %5342
        %5344 = vadd.xlane.f32.xlu0 %v5281
        %v5345 = vpop.xlane.xlu0 %5344
        %5346 = vadd.xlane.f32.xlu0 %v5283
        %v5347 = vpop.xlane.xlu0 %5346
        %5348 = vadd.xlane.f32.xlu0 %v5285
        %v5349 = vpop.xlane.xlu0 %5348
        %5350 = vadd.xlane.f32.xlu0 %v5287
        %v5351 = vpop.xlane.xlu0 %5350
        %v5352 = vrcp.pop %v5289
        %v5353 = vrcp.pop %v5291
        %v5354 = vrcp.pop %v5293
        %v5355 = vrcp.pop %v5295
        %v5356 = vrcp.pop %v5297
        %v5357 = vrcp.pop %v5299
        %v5358 = vrcp.pop %v5301
        %v5359 = vrcp.pop %v5303
        %v5360 = vrcp.pop %v5305
        %v5361 = vrcp.pop %v5307
        %v5362 = vrcp.pop %v5309
        %v5363 = vrcp.pop %v5311
        %v5364 = vrcp.pop %v5313
        %v5365 = vrcp.pop %v5315
        %v5366 = vrcp.pop %v5317
        %v5367 = vrcp.pop %v5319
        %v5368 = vrcp.pop %v5321
        %v5369 = vrcp.pop %v5323
        %v5370 = vrcp.pop %v5325
        %v5371 = vrcp.pop %v5327
        %v5372 = vrcp.pop %v5329
        %v5373 = vrcp.pop %v5331
        %v5374 = vrcp.pop %v5333
        %v5375 = vrcp.pop %v5335
        %v5376 = vrcp.pop %v5337
        %v5377 = vrcp.pop %v5339
        %v5378 = vrcp.pop %v5341
        %v5379 = vrcp.pop %v5343
        %v5380 = vrcp.pop %v5345
        %v5381 = vrcp.pop %v5347
        %v5382 = vrcp.pop %v5349
        %v5383 = vrcp.pop %v5351
        %v5384 = vmul.f32 %v5225, %v5352
        %v5385 = vmul.f32 %v5227, %v5353
        %v5386 = vmul.f32 %v5229, %v5354
        %v5387 = vmul.f32 %v5231, %v5355
        %v5388 = vmul.f32 %v5233, %v5356
        %v5389 = vmul.f32 %v5235, %v5357
        %v5390 = vmul.f32 %v5237, %v5358
        %v5391 = vmul.f32 %v5239, %v5359
        %v5392 = vmul.f32 %v5241, %v5360
        %v5393 = vmul.f32 %v5243, %v5361
        %v5394 = vmul.f32 %v5245, %v5362
        %v5395 = vmul.f32 %v5247, %v5363
        %v5396 = vmul.f32 %v5249, %v5364
        %v5397 = vmul.f32 %v5251, %v5365
        %v5398 = vmul.f32 %v5253, %v5366
        %v5399 = vmul.f32 %v5255, %v5367
        %v5400 = vmul.f32 %v5257, %v5368
        %v5401 = vmul.f32 %v5259, %v5369
        %v5402 = vmul.f32 %v5261, %v5370
        %v5403 = vmul.f32 %v5263, %v5371
        %v5404 = vmul.f32 %v5265, %v5372
        %v5405 = vmul.f32 %v5267, %v5373
        %v5406 = vmul.f32 %v5269, %v5374
        %v5407 = vmul.f32 %v5271, %v5375
        %v5408 = vmul.f32 %v5273, %v5376
        %v5409 = vmul.f32 %v5275, %v5377
        %v5410 = vmul.f32 %v5277, %v5378
        %v5411 = vmul.f32 %v5279, %v5379
        %v5412 = vmul.f32 %v5281, %v5380
        %v5413 = vmul.f32 %v5283, %v5381
        %v5414 = vmul.f32 %v5285, %v5382
        %v5415 = vmul.f32 %v5287, %v5383
        %v5416 = vld [vmem:[#allocation5] sm:$0xff]
        %v5417 = vld [vmem:[#allocation5 + $0x8] sm:$0xff]
        %v5418 = vld [vmem:[#allocation5 + $0x10] sm:$0xff]
        %v5419 = vld [vmem:[#allocation5 + $0x18] sm:$0xff]
        %v5420 = vld [vmem:[#allocation5 + $0x20] sm:$0xff]
        %v5421 = vld [vmem:[#allocation5 + $0x28] sm:$0xff]
        %v5422 = vld [vmem:[#allocation5 + $0x30] sm:$0xff]
        %v5423 = vld [vmem:[#allocation5 + $0x38] sm:$0xff]
        %v5424 = vld [vmem:[#allocation5 + $0x40] sm:$0xff]
        %v5425 = vld [vmem:[#allocation5 + $0x48] sm:$0xff]
        %v5426 = vld [vmem:[#allocation5 + $0x50] sm:$0xff]
        %v5427 = vld [vmem:[#allocation5 + $0x58] sm:$0xff]
        %v5428 = vld [vmem:[#allocation5 + $0x60] sm:$0xff]
        %v5429 = vld [vmem:[#allocation5 + $0x68] sm:$0xff]
        %v5430 = vld [vmem:[#allocation5 + $0x70] sm:$0xff]
        %v5431 = vld [vmem:[#allocation5 + $0x78] sm:$0xff]
        %v5432 = vld [vmem:[#allocation5 + $0x80] sm:$0xff]
        %v5433 = vld [vmem:[#allocation5 + $0x88] sm:$0xff]
        %v5434 = vld [vmem:[#allocation5 + $0x90] sm:$0xff]
        %v5435 = vld [vmem:[#allocation5 + $0x98] sm:$0xff]
        %v5436 = vld [vmem:[#allocation5 + $0xa0] sm:$0xff]
        %v5437 = vld [vmem:[#allocation5 + $0xa8] sm:$0xff]
        %v5438 = vld [vmem:[#allocation5 + $0xb0] sm:$0xff]
        %v5439 = vld [vmem:[#allocation5 + $0xb8] sm:$0xff]
        %v5440 = vld [vmem:[#allocation5 + $0xc0] sm:$0xff]
        %v5441 = vld [vmem:[#allocation5 + $0xc8] sm:$0xff]
        %v5442 = vld [vmem:[#allocation5 + $0xd0] sm:$0xff]
        %v5443 = vld [vmem:[#allocation5 + $0xd8] sm:$0xff]
        %v5444 = vld [vmem:[#allocation5 + $0xe0] sm:$0xff]
        %v5445 = vld [vmem:[#allocation5 + $0xe8] sm:$0xff]
        %v5446 = vld [vmem:[#allocation5 + $0xf0] sm:$0xff]
        %v5447 = vld [vmem:[#allocation5 + $0xf8] sm:$0xff]
        %v5448 = vpack.c.bf16 %v5385, %v5384
        %v5449 = vpack.c.bf16 %v5387, %v5386
        %v5450 = vpack.c.bf16 %v5389, %v5388
        %v5451 = vpack.c.bf16 %v5391, %v5390
        %v5452 = vpack.c.bf16 %v5393, %v5392
        %v5453 = vpack.c.bf16 %v5395, %v5394
        %v5454 = vpack.c.bf16 %v5397, %v5396
        %v5455 = vpack.c.bf16 %v5399, %v5398
        %v5456 = vpack.c.bf16 %v5401, %v5400
        %v5457 = vpack.c.bf16 %v5403, %v5402
        %v5458 = vpack.c.bf16 %v5405, %v5404
        %v5459 = vpack.c.bf16 %v5407, %v5406
        %v5460 = vpack.c.bf16 %v5409, %v5408
        %v5461 = vpack.c.bf16 %v5411, %v5410
        %v5462 = vpack.c.bf16 %v5413, %v5412
        %v5463 = vpack.c.bf16 %v5415, %v5414
        %s5464 = scalar_lea.vmem [#allocation4], 192
        %v5465 = vld [vmem:[%s5464] sm:$0xff]
        %v5466 = vld [vmem:[%s5464 + $0x8] sm:$0xff]
        %v5467 = vld [vmem:[%s5464 + $0x10] sm:$0xff]
        %v5468 = vld [vmem:[%s5464 + $0x18] sm:$0xff]
        %v5469 = vld [vmem:[%s5464 + $0x20] sm:$0xff]
        %v5470 = vld [vmem:[%s5464 + $0x28] sm:$0xff]
        %v5471 = vld [vmem:[%s5464 + $0x30] sm:$0xff]
        %v5472 = vld [vmem:[%s5464 + $0x38] sm:$0xff]
        %5473 = vmatprep.subr.bf16.mxu0 0
        %5474 = vmatpush1.bf16.msra.mxu0 %v5465
        %5475 = vmatprep.subr.bf16.mxu0 0
        %5476 = vmatpush1.bf16.msra.mxu0 %v5466
        %5477 = vmatprep.subr.bf16.mxu0 0
        %5478 = vmatpush1.bf16.msra.mxu0 %v5467
        %5479 = vmatprep.subr.bf16.mxu0 0
        %5480 = vmatpush1.bf16.msra.mxu0 %v5468
        %5481 = vmatprep.subr.bf16.mxu0 0
        %5482 = vmatpush1.bf16.msra.mxu0 %v5469
        %5483 = vmatprep.subr.bf16.mxu0 0
        %5484 = vmatpush1.bf16.msra.mxu0 %v5470
        %5485 = vmatprep.subr.bf16.mxu0 0
        %5486 = vmatpush1.bf16.msra.mxu0 %v5471
        %5487 = vmatprep.subr.bf16.mxu0 0
        %5488 = vmatpush1.bf16.msra.mxu0 %v5472
        %5489 = vmatprep.subr.bf16.mxu0 0
        %5490 = vmatpush1.bf16.msra.mxu0 0
        %5491 = vmatprep.subr.bf16.mxu0 0
        %5492 = vmatpush1.bf16.msra.mxu0 0
        %5493 = vmatprep.subr.bf16.mxu0 0
        %5494 = vmatpush1.bf16.msra.mxu0 0
        %5495 = vmatprep.subr.bf16.mxu0 0
        %5496 = vmatpush1.bf16.msra.mxu0 0
        %5497 = vmatprep.subr.bf16.mxu0 0
        %5498 = vmatpush1.bf16.msra.mxu0 0
        %5499 = vmatprep.subr.bf16.mxu0 0
        %5500 = vmatpush1.bf16.msra.mxu0 0
        %5501 = vmatprep.subr.bf16.mxu0 0
        %5502 = vmatpush1.bf16.msra.mxu0 0
        %5503 = vmatprep.subr.bf16.mxu0 0
        %5504 = vmatpush1.bf16.msra.mxu0 0
        %5505 = vmatprep.mubr.bf16.mxu0 0
        %5506 = vmatmul.mubr.bf16.gmra.mrb[0].mxu0 %v5448
        %v5507 = vpop.f32.mrb[0].mxu0
        %v5508 = vadd.f32 0.0, %v5507
        %v5509 = vpop.f32.mrb[0].mxu0
        %v5510 = vpop.f32.mrb[0].mxu0
        %v5511 = vadd.f32 0.0, %v5510
        %v5512 = vpop.f32.mrb[0].mxu0
        %5513 = vmatprep.mubr.bf16.mxu0 0
        %5514 = vmatmul.mubr.bf16.gmra.mrb[0].mxu0 %v5449
        %v5515 = vpop.f32.mrb[0].mxu0
        %v5516 = vadd.f32 0.0, %v5515
        %v5517 = vpop.f32.mrb[0].mxu0
        %v5518 = vpop.f32.mrb[0].mxu0
        %v5519 = vadd.f32 0.0, %v5518
        %v5520 = vpop.f32.mrb[0].mxu0
        %5521 = vmatprep.mubr.bf16.mxu0 0
        %5522 = vmatmul.mubr.bf16.gmra.mrb[0].mxu0 %v5450
        %v5523 = vpop.f32.mrb[0].mxu0
        %v5524 = vadd.f32 0.0, %v5523
        %v5525 = vpop.f32.mrb[0].mxu0
        %v5526 = vpop.f32.mrb[0].mxu0
        %v5527 = vadd.f32 0.0, %v5526
        %v5528 = vpop.f32.mrb[0].mxu0
        %5529 = vmatprep.mubr.bf16.mxu0 0
        %5530 = vmatmul.mubr.bf16.gmra.mrb[0].mxu0 %v5451
        %v5531 = vpop.f32.mrb[0].mxu0
        %v5532 = vadd.f32 0.0, %v5531
        %v5533 = vpop.f32.mrb[0].mxu0
        %v5534 = vpop.f32.mrb[0].mxu0
        %v5535 = vadd.f32 0.0, %v5534
        %v5536 = vpop.f32.mrb[0].mxu0
        %5537 = vmatprep.mubr.bf16.mxu0 0
        %5538 = vmatmul.mubr.bf16.gmra.mrb[0].mxu0 %v5452
        %v5539 = vpop.f32.mrb[0].mxu0
        %v5540 = vadd.f32 0.0, %v5539
        %v5541 = vpop.f32.mrb[0].mxu0
        %v5542 = vpop.f32.mrb[0].mxu0
        %v5543 = vadd.f32 0.0, %v5542
        %v5544 = vpop.f32.mrb[0].mxu0
        %5545 = vmatprep.mubr.bf16.mxu0 0
        %5546 = vmatmul.mubr.bf16.gmra.mrb[0].mxu0 %v5453
        %v5547 = vpop.f32.mrb[0].mxu0
        %v5548 = vadd.f32 0.0, %v5547
        %v5549 = vpop.f32.mrb[0].mxu0
        %v5550 = vpop.f32.mrb[0].mxu0
        %v5551 = vadd.f32 0.0, %v5550
        %v5552 = vpop.f32.mrb[0].mxu0
        %5553 = vmatprep.mubr.bf16.mxu0 0
        %5554 = vmatmul.mubr.bf16.gmra.mrb[0].mxu0 %v5454
        %v5555 = vpop.f32.mrb[0].mxu0
        %v5556 = vadd.f32 0.0, %v5555
        %v5557 = vpop.f32.mrb[0].mxu0
        %v5558 = vpop.f32.mrb[0].mxu0
        %v5559 = vadd.f32 0.0, %v5558
        %v5560 = vpop.f32.mrb[0].mxu0
        %5561 = vmatprep.mubr.bf16.mxu0 0
        %5562 = vmatmul.mubr.bf16.gmra.mrb[0].mxu0 %v5455
        %v5563 = vpop.f32.mrb[0].mxu0
        %v5564 = vadd.f32 0.0, %v5563
        %v5565 = vpop.f32.mrb[0].mxu0
        %v5566 = vpop.f32.mrb[0].mxu0
        %v5567 = vadd.f32 0.0, %v5566
        %v5568 = vpop.f32.mrb[0].mxu0
        %5569 = vmatprep.mubr.bf16.mxu0 0
        %5570 = vmatmul.mubr.bf16.gmra.mrb[0].mxu0 %v5456
        %v5571 = vpop.f32.mrb[0].mxu0
        %v5572 = vadd.f32 0.0, %v5571
        %v5573 = vpop.f32.mrb[0].mxu0
        %v5574 = vpop.f32.mrb[0].mxu0
        %v5575 = vadd.f32 0.0, %v5574
        %v5576 = vpop.f32.mrb[0].mxu0
        %5577 = vmatprep.mubr.bf16.mxu0 0
        %5578 = vmatmul.mubr.bf16.gmra.mrb[0].mxu0 %v5457
        %v5579 = vpop.f32.mrb[0].mxu0
        %v5580 = vadd.f32 0.0, %v5579
        %v5581 = vpop.f32.mrb[0].mxu0
        %v5582 = vpop.f32.mrb[0].mxu0
        %v5583 = vadd.f32 0.0, %v5582
        %v5584 = vpop.f32.mrb[0].mxu0
        %5585 = vmatprep.mubr.bf16.mxu0 0
        %5586 = vmatmul.mubr.bf16.gmra.mrb[0].mxu0 %v5458
        %v5587 = vpop.f32.mrb[0].mxu0
        %v5588 = vadd.f32 0.0, %v5587
        %v5589 = vpop.f32.mrb[0].mxu0
        %v5590 = vpop.f32.mrb[0].mxu0
        %v5591 = vadd.f32 0.0, %v5590
        %v5592 = vpop.f32.mrb[0].mxu0
        %5593 = vmatprep.mubr.bf16.mxu0 0
        %5594 = vmatmul.mubr.bf16.gmra.mrb[0].mxu0 %v5459
        %v5595 = vpop.f32.mrb[0].mxu0
        %v5596 = vadd.f32 0.0, %v5595
        %v5597 = vpop.f32.mrb[0].mxu0
        %v5598 = vpop.f32.mrb[0].mxu0
        %v5599 = vadd.f32 0.0, %v5598
        %v5600 = vpop.f32.mrb[0].mxu0
        %5601 = vmatprep.mubr.bf16.mxu0 0
        %5602 = vmatmul.mubr.bf16.gmra.mrb[0].mxu0 %v5460
        %v5603 = vpop.f32.mrb[0].mxu0
        %v5604 = vadd.f32 0.0, %v5603
        %v5605 = vpop.f32.mrb[0].mxu0
        %v5606 = vpop.f32.mrb[0].mxu0
        %v5607 = vadd.f32 0.0, %v5606
        %v5608 = vpop.f32.mrb[0].mxu0
        %5609 = vmatprep.mubr.bf16.mxu0 0
        %5610 = vmatmul.mubr.bf16.gmra.mrb[0].mxu0 %v5461
        %v5611 = vpop.f32.mrb[0].mxu0
        %v5612 = vadd.f32 0.0, %v5611
        %v5613 = vpop.f32.mrb[0].mxu0
        %v5614 = vpop.f32.mrb[0].mxu0
        %v5615 = vadd.f32 0.0, %v5614
        %v5616 = vpop.f32.mrb[0].mxu0
        %5617 = vmatprep.mubr.bf16.mxu0 0
        %5618 = vmatmul.mubr.bf16.gmra.mrb[0].mxu0 %v5462
        %v5619 = vpop.f32.mrb[0].mxu0
        %v5620 = vadd.f32 0.0, %v5619
        %v5621 = vpop.f32.mrb[0].mxu0
        %v5622 = vpop.f32.mrb[0].mxu0
        %v5623 = vadd.f32 0.0, %v5622
        %v5624 = vpop.f32.mrb[0].mxu0
        %5625 = vmatprep.mubr.bf16.mxu0 0
        %5626 = vmatmul.mubr.bf16.gmra.mrb[0].mxu0 %v5463
        %v5627 = vpop.f32.mrb[0].mxu0
        %v5628 = vadd.f32 0.0, %v5627
        %v5629 = vpop.f32.mrb[0].mxu0
        %v5630 = vpop.f32.mrb[0].mxu0
        %v5631 = vadd.f32 0.0, %v5630
        %v5632 = vpop.f32.mrb[0].mxu0
        %5633 = vdwg.mxu0
        %v5634 = vadd.f32 %v5416, %v5508
        %v5635 = vadd.f32 %v5417, %v5511
        %v5636 = vadd.f32 %v5418, %v5516
        %v5637 = vadd.f32 %v5419, %v5519
        %v5638 = vadd.f32 %v5420, %v5524
        %v5639 = vadd.f32 %v5421, %v5527
        %v5640 = vadd.f32 %v5422, %v5532
        %v5641 = vadd.f32 %v5423, %v5535
        %v5642 = vadd.f32 %v5424, %v5540
        %v5643 = vadd.f32 %v5425, %v5543
        %v5644 = vadd.f32 %v5426, %v5548
        %v5645 = vadd.f32 %v5427, %v5551
        %v5646 = vadd.f32 %v5428, %v5556
        %v5647 = vadd.f32 %v5429, %v5559
        %v5648 = vadd.f32 %v5430, %v5564
        %v5649 = vadd.f32 %v5431, %v5567
        %v5650 = vadd.f32 %v5432, %v5572
        %v5651 = vadd.f32 %v5433, %v5575
        %v5652 = vadd.f32 %v5434, %v5580
        %v5653 = vadd.f32 %v5435, %v5583
        %v5654 = vadd.f32 %v5436, %v5588
        %v5655 = vadd.f32 %v5437, %v5591
        %v5656 = vadd.f32 %v5438, %v5596
        %v5657 = vadd.f32 %v5439, %v5599
        %v5658 = vadd.f32 %v5440, %v5604
        %v5659 = vadd.f32 %v5441, %v5607
        %v5660 = vadd.f32 %v5442, %v5612
        %v5661 = vadd.f32 %v5443, %v5615
        %v5662 = vadd.f32 %v5444, %v5620
        %v5663 = vadd.f32 %v5445, %v5623
        %v5664 = vadd.f32 %v5446, %v5628
        %v5665 = vadd.f32 %v5447, %v5631
        %5666 = vst [vmem:[#allocation5] sm:$0xff] %v5634
        %5667 = vst [vmem:[#allocation5 + $0x8] sm:$0xff] %v5635
        %5668 = vst [vmem:[#allocation5 + $0x10] sm:$0xff] %v5636
        %5669 = vst [vmem:[#allocation5 + $0x18] sm:$0xff] %v5637
        %5670 = vst [vmem:[#allocation5 + $0x20] sm:$0xff] %v5638
        %5671 = vst [vmem:[#allocation5 + $0x28] sm:$0xff] %v5639
        %5672 = vst [vmem:[#allocation5 + $0x30] sm:$0xff] %v5640
        %5673 = vst [vmem:[#allocation5 + $0x38] sm:$0xff] %v5641
        %5674 = vst [vmem:[#allocation5 + $0x40] sm:$0xff] %v5642
        %5675 = vst [vmem:[#allocation5 + $0x48] sm:$0xff] %v5643
        %5676 = vst [vmem:[#allocation5 + $0x50] sm:$0xff] %v5644
        %5677 = vst [vmem:[#allocation5 + $0x58] sm:$0xff] %v5645
        %5678 = vst [vmem:[#allocation5 + $0x60] sm:$0xff] %v5646
        %5679 = vst [vmem:[#allocation5 + $0x68] sm:$0xff] %v5647
        %5680 = vst [vmem:[#allocation5 + $0x70] sm:$0xff] %v5648
        %5681 = vst [vmem:[#allocation5 + $0x78] sm:$0xff] %v5649
        %5682 = vst [vmem:[#allocation5 + $0x80] sm:$0xff] %v5650
        %5683 = vst [vmem:[#allocation5 + $0x88] sm:$0xff] %v5651
        %5684 = vst [vmem:[#allocation5 + $0x90] sm:$0xff] %v5652
        %5685 = vst [vmem:[#allocation5 + $0x98] sm:$0xff] %v5653
        %5686 = vst [vmem:[#allocation5 + $0xa0] sm:$0xff] %v5654
        %5687 = vst [vmem:[#allocation5 + $0xa8] sm:$0xff] %v5655
        %5688 = vst [vmem:[#allocation5 + $0xb0] sm:$0xff] %v5656
        %5689 = vst [vmem:[#allocation5 + $0xb8] sm:$0xff] %v5657
        %5690 = vst [vmem:[#allocation5 + $0xc0] sm:$0xff] %v5658
        %5691 = vst [vmem:[#allocation5 + $0xc8] sm:$0xff] %v5659
        %5692 = vst [vmem:[#allocation5 + $0xd0] sm:$0xff] %v5660
        %5693 = vst [vmem:[#allocation5 + $0xd8] sm:$0xff] %v5661
        %5694 = vst [vmem:[#allocation5 + $0xe0] sm:$0xff] %v5662
        %5695 = vst [vmem:[#allocation5 + $0xe8] sm:$0xff] %v5663
        %5696 = vst [vmem:[#allocation5 + $0xf0] sm:$0xff] %v5664
        %5697 = vst [vmem:[#allocation5 + $0xf8] sm:$0xff] %v5665
        %v5698 = vld [vmem:[#allocation2] sm:$0xff]
        %v5699 = vld [vmem:[#allocation2 + $0x8] sm:$0xff]
        %v5700 = vld [vmem:[#allocation2 + $0x10] sm:$0xff]
        %v5701 = vld [vmem:[#allocation2 + $0x18] sm:$0xff]
        %v5702 = vld [vmem:[#allocation2 + $0x20] sm:$0xff]
        %v5703 = vld [vmem:[#allocation2 + $0x28] sm:$0xff]
        %v5704 = vld [vmem:[#allocation2 + $0x30] sm:$0xff]
        %v5705 = vld [vmem:[#allocation2 + $0x38] sm:$0xff]
        %v5706 = vld [vmem:[#allocation2 + $0x40] sm:$0xff]
        %v5707 = vld [vmem:[#allocation2 + $0x48] sm:$0xff]
        %v5708 = vld [vmem:[#allocation2 + $0x50] sm:$0xff]
        %v5709 = vld [vmem:[#allocation2 + $0x58] sm:$0xff]
        %v5710 = vld [vmem:[#allocation2 + $0x60] sm:$0xff]
        %v5711 = vld [vmem:[#allocation2 + $0x68] sm:$0xff]
        %v5712 = vld [vmem:[#allocation2 + $0x70] sm:$0xff]
        %v5713 = vld [vmem:[#allocation2 + $0x78] sm:$0xff]
        %v5714 = vld [vmem:[#allocation3] sm:$0xff]
        %v5715 = vld [vmem:[#allocation3 + $0x8] sm:$0xff]
        %v5716 = vld [vmem:[#allocation3 + $0x10] sm:$0xff]
        %v5717 = vld [vmem:[#allocation3 + $0x18] sm:$0xff]
        %v5718 = vld [vmem:[#allocation3 + $0x20] sm:$0xff]
        %v5719 = vld [vmem:[#allocation3 + $0x28] sm:$0xff]
        %v5720 = vld [vmem:[#allocation3 + $0x30] sm:$0xff]
        %v5721 = vld [vmem:[#allocation3 + $0x38] sm:$0xff]
        %5738 = vrot.lane.b32.xlu0 %v5698, 64
        %v5739 = vpop.permute.xlu0 %5738
        %5740 = vrot.lane.b32.xlu0 %v5699, 64
        %v5741 = vpop.permute.xlu0 %5740
        %5742 = vrot.lane.b32.xlu0 %v5700, 64
        %v5743 = vpop.permute.xlu0 %5742
        %5744 = vrot.lane.b32.xlu0 %v5701, 64
        %v5745 = vpop.permute.xlu0 %5744
        %5746 = vrot.lane.b32.xlu0 %v5702, 64
        %v5747 = vpop.permute.xlu0 %5746
        %5748 = vrot.lane.b32.xlu0 %v5703, 64
        %v5749 = vpop.permute.xlu0 %5748
        %5750 = vrot.lane.b32.xlu0 %v5704, 64
        %v5751 = vpop.permute.xlu0 %5750
        %5752 = vrot.lane.b32.xlu0 %v5705, 64
        %v5753 = vpop.permute.xlu0 %5752
        %5754 = vrot.lane.b32.xlu0 %v5706, 64
        %v5755 = vpop.permute.xlu0 %5754
        %5756 = vrot.lane.b32.xlu0 %v5707, 64
        %v5757 = vpop.permute.xlu0 %5756
        %5758 = vrot.lane.b32.xlu0 %v5708, 64
        %v5759 = vpop.permute.xlu0 %5758
        %5760 = vrot.lane.b32.xlu0 %v5709, 64
        %v5761 = vpop.permute.xlu0 %5760
        %5762 = vrot.lane.b32.xlu0 %v5710, 64
        %v5763 = vpop.permute.xlu0 %5762
        %5764 = vrot.lane.b32.xlu0 %v5711, 64
        %v5765 = vpop.permute.xlu0 %5764
        %5766 = vrot.lane.b32.xlu0 %v5712, 64
        %v5767 = vpop.permute.xlu0 %5766
        %5768 = vrot.lane.b32.xlu0 %v5713, 64
        %v5769 = vpop.permute.xlu0 %5768
        %5778 = vrot.lane.b32.xlu0 %v5714, 64
        %v5779 = vpop.permute.xlu0 %5778
        %5780 = vrot.lane.b32.xlu0 %v5715, 64
        %v5781 = vpop.permute.xlu0 %5780
        %5782 = vrot.lane.b32.xlu0 %v5716, 64
        %v5783 = vpop.permute.xlu0 %5782
        %5784 = vrot.lane.b32.xlu0 %v5717, 64
        %v5785 = vpop.permute.xlu0 %5784
        %5786 = vrot.lane.b32.xlu0 %v5718, 64
        %v5787 = vpop.permute.xlu0 %5786
        %5788 = vrot.lane.b32.xlu0 %v5719, 64
        %v5789 = vpop.permute.xlu0 %5788
        %5790 = vrot.lane.b32.xlu0 %v5720, 64
        %v5791 = vpop.permute.xlu0 %5790
        %5792 = vrot.lane.b32.xlu0 %v5721, 64
        %v5793 = vpop.permute.xlu0 %5792
        %v5795 = vsel %vm2198, %v5739, 0
        %v5798 = vsel %vm2198, %v5741, 0
        %v5801 = vsel %vm2198, %v5743, 0
        %v5804 = vsel %vm2198, %v5745, 0
        %v5807 = vsel %vm2198, %v5747, 0
        %v5810 = vsel %vm2198, %v5749, 0
        %v5813 = vsel %vm2198, %v5751, 0
        %v5816 = vsel %vm2198, %v5753, 0
        %v5819 = vsel %vm2198, %v5755, 0
        %v5822 = vsel %vm2198, %v5757, 0
        %v5825 = vsel %vm2198, %v5759, 0
        %v5828 = vsel %vm2198, %v5761, 0
        %v5831 = vsel %vm2198, %v5763, 0
        %v5834 = vsel %vm2198, %v5765, 0
        %v5837 = vsel %vm2198, %v5767, 0
        %v5840 = vsel %vm2198, %v5769, 0
        %v5843 = vsel %vm2198, %v5779, 0
        %v5846 = vsel %vm2198, %v5781, 0
        %v5849 = vsel %vm2198, %v5783, 0
        %v5852 = vsel %vm2198, %v5785, 0
        %v5855 = vsel %vm2198, %v5787, 0
        %v5858 = vsel %vm2198, %v5789, 0
        %v5861 = vsel %vm2198, %v5791, 0
        %v5864 = vsel %vm2198, %v5793, 0
        %5866 = vmatprep.subr.bf16.mxu0 0
        %5867 = vmatpush1.bf16.xpose.msra.mxu0 %v5843
        %5868 = vmatprep.subr.bf16.mxu0 0
        %5869 = vmatpush1.bf16.xpose.msra.mxu0 %v5846
        %5870 = vmatprep.subr.bf16.mxu0 0
        %5871 = vmatpush1.bf16.xpose.msra.mxu0 %v5849
        %5872 = vmatprep.subr.bf16.mxu0 0
        %5873 = vmatpush1.bf16.xpose.msra.mxu0 %v5852
        %5874 = vmatprep.subr.bf16.mxu0 0
        %5875 = vmatpush1.bf16.xpose.msra.mxu0 %v5855
        %5876 = vmatprep.subr.bf16.mxu0 0
        %5877 = vmatpush1.bf16.xpose.msra.mxu0 %v5858
        %5878 = vmatprep.subr.bf16.mxu0 0
        %5879 = vmatpush1.bf16.xpose.msra.mxu0 %v5861
        %5880 = vmatprep.subr.bf16.mxu0 0
        %5881 = vmatpush1.bf16.xpose.msra.mxu0 %v5864
        %5882 = vmatprep.subr.bf16.mxu0 0
        %5883 = vmatpush1.bf16.xpose.msra.mxu0 0
        %5884 = vmatprep.subr.bf16.mxu0 0
        %5885 = vmatpush1.bf16.xpose.msra.mxu0 0
        %5886 = vmatprep.subr.bf16.mxu0 0
        %5887 = vmatpush1.bf16.xpose.msra.mxu0 0
        %5888 = vmatprep.subr.bf16.mxu0 0
        %5889 = vmatpush1.bf16.xpose.msra.mxu0 0
        %5890 = vmatprep.subr.bf16.mxu0 0
        %5891 = vmatpush1.bf16.xpose.msra.mxu0 0
        %5892 = vmatprep.subr.bf16.mxu0 0
        %5893 = vmatpush1.bf16.xpose.msra.mxu0 0
        %5894 = vmatprep.subr.bf16.mxu0 0
        %5895 = vmatpush1.bf16.xpose.msra.mxu0 0
        %5896 = vmatprep.subr.bf16.mxu0 0
        %5897 = vmatpush1.bf16.xpose.msra.mxu0 0
        %5898 = vmatprep.mubr.bf16.mxu0 0
        %5899 = vmatmul.mubr.bf16.gmra.mrb[0].mxu0 %v5795
        %v5900 = vpop.f32.mrb[0].mxu0
        %v5901 = vadd.f32 0.0, %v5900
        %v5902 = vpop.f32.mrb[0].mxu0
        %v5903 = vpop.f32.mrb[0].mxu0
        %v5904 = vadd.f32 0.0, %v5903
        %v5905 = vpop.f32.mrb[0].mxu0
        %5906 = vmatprep.mubr.bf16.mxu0 0
        %5907 = vmatmul.mubr.bf16.gmra.mrb[0].mxu0 %v5798
        %v5908 = vpop.f32.mrb[0].mxu0
        %v5909 = vadd.f32 0.0, %v5908
        %v5910 = vpop.f32.mrb[0].mxu0
        %v5911 = vpop.f32.mrb[0].mxu0
        %v5912 = vadd.f32 0.0, %v5911
        %v5913 = vpop.f32.mrb[0].mxu0
        %5914 = vmatprep.mubr.bf16.mxu0 0
        %5915 = vmatmul.mubr.bf16.gmra.mrb[0].mxu0 %v5801
        %v5916 = vpop.f32.mrb[0].mxu0
        %v5917 = vadd.f32 0.0, %v5916
        %v5918 = vpop.f32.mrb[0].mxu0
        %v5919 = vpop.f32.mrb[0].mxu0
        %v5920 = vadd.f32 0.0, %v5919
        %v5921 = vpop.f32.mrb[0].mxu0
        %5922 = vmatprep.mubr.bf16.mxu0 0
        %5923 = vmatmul.mubr.bf16.gmra.mrb[0].mxu0 %v5804
        %v5924 = vpop.f32.mrb[0].mxu0
        %v5925 = vadd.f32 0.0, %v5924
        %v5926 = vpop.f32.mrb[0].mxu0
        %v5927 = vpop.f32.mrb[0].mxu0
        %v5928 = vadd.f32 0.0, %v5927
        %v5929 = vpop.f32.mrb[0].mxu0
        %5930 = vmatprep.mubr.bf16.mxu0 0
        %5931 = vmatmul.mubr.bf16.gmra.mrb[0].mxu0 %v5807
        %v5932 = vpop.f32.mrb[0].mxu0
        %v5933 = vadd.f32 0.0, %v5932
        %v5934 = vpop.f32.mrb[0].mxu0
        %v5935 = vpop.f32.mrb[0].mxu0
        %v5936 = vadd.f32 0.0, %v5935
        %v5937 = vpop.f32.mrb[0].mxu0
        %5938 = vmatprep.mubr.bf16.mxu0 0
        %5939 = vmatmul.mubr.bf16.gmra.mrb[0].mxu0 %v5810
        %v5940 = vpop.f32.mrb[0].mxu0
        %v5941 = vadd.f32 0.0, %v5940
        %v5942 = vpop.f32.mrb[0].mxu0
        %v5943 = vpop.f32.mrb[0].mxu0
        %v5944 = vadd.f32 0.0, %v5943
        %v5945 = vpop.f32.mrb[0].mxu0
        %5946 = vmatprep.mubr.bf16.mxu0 0
        %5947 = vmatmul.mubr.bf16.gmra.mrb[0].mxu0 %v5813
        %v5948 = vpop.f32.mrb[0].mxu0
        %v5949 = vadd.f32 0.0, %v5948
        %v5950 = vpop.f32.mrb[0].mxu0
        %v5951 = vpop.f32.mrb[0].mxu0
        %v5952 = vadd.f32 0.0, %v5951
        %v5953 = vpop.f32.mrb[0].mxu0
        %5954 = vmatprep.mubr.bf16.mxu0 0
        %5955 = vmatmul.mubr.bf16.gmra.mrb[0].mxu0 %v5816
        %v5956 = vpop.f32.mrb[0].mxu0
        %v5957 = vadd.f32 0.0, %v5956
        %v5958 = vpop.f32.mrb[0].mxu0
        %v5959 = vpop.f32.mrb[0].mxu0
        %v5960 = vadd.f32 0.0, %v5959
        %v5961 = vpop.f32.mrb[0].mxu0
        %5962 = vmatprep.mubr.bf16.mxu0 0
        %5963 = vmatmul.mubr.bf16.gmra.mrb[0].mxu0 %v5819
        %v5964 = vpop.f32.mrb[0].mxu0
        %v5965 = vadd.f32 0.0, %v5964
        %v5966 = vpop.f32.mrb[0].mxu0
        %v5967 = vpop.f32.mrb[0].mxu0
        %v5968 = vadd.f32 0.0, %v5967
        %v5969 = vpop.f32.mrb[0].mxu0
        %5970 = vmatprep.mubr.bf16.mxu0 0
        %5971 = vmatmul.mubr.bf16.gmra.mrb[0].mxu0 %v5822
        %v5972 = vpop.f32.mrb[0].mxu0
        %v5973 = vadd.f32 0.0, %v5972
        %v5974 = vpop.f32.mrb[0].mxu0
        %v5975 = vpop.f32.mrb[0].mxu0
        %v5976 = vadd.f32 0.0, %v5975
        %v5977 = vpop.f32.mrb[0].mxu0
        %5978 = vmatprep.mubr.bf16.mxu0 0
        %5979 = vmatmul.mubr.bf16.gmra.mrb[0].mxu0 %v5825
        %v5980 = vpop.f32.mrb[0].mxu0
        %v5981 = vadd.f32 0.0, %v5980
        %v5982 = vpop.f32.mrb[0].mxu0
        %v5983 = vpop.f32.mrb[0].mxu0
        %v5984 = vadd.f32 0.0, %v5983
        %v5985 = vpop.f32.mrb[0].mxu0
        %5986 = vmatprep.mubr.bf16.mxu0 0
        %5987 = vmatmul.mubr.bf16.gmra.mrb[0].mxu0 %v5828
        %v5988 = vpop.f32.mrb[0].mxu0
        %v5989 = vadd.f32 0.0, %v5988
        %v5990 = vpop.f32.mrb[0].mxu0
        %v5991 = vpop.f32.mrb[0].mxu0
        %v5992 = vadd.f32 0.0, %v5991
        %v5993 = vpop.f32.mrb[0].mxu0
        %5994 = vmatprep.mubr.bf16.mxu0 0
        %5995 = vmatmul.mubr.bf16.gmra.mrb[0].mxu0 %v5831
        %v5996 = vpop.f32.mrb[0].mxu0
        %v5997 = vadd.f32 0.0, %v5996
        %v5998 = vpop.f32.mrb[0].mxu0
        %v5999 = vpop.f32.mrb[0].mxu0
        %v6000 = vadd.f32 0.0, %v5999
        %v6001 = vpop.f32.mrb[0].mxu0
        %6002 = vmatprep.mubr.bf16.mxu0 0
        %6003 = vmatmul.mubr.bf16.gmra.mrb[0].mxu0 %v5834
        %v6004 = vpop.f32.mrb[0].mxu0
        %v6005 = vadd.f32 0.0, %v6004
        %v6006 = vpop.f32.mrb[0].mxu0
        %v6007 = vpop.f32.mrb[0].mxu0
        %v6008 = vadd.f32 0.0, %v6007
        %v6009 = vpop.f32.mrb[0].mxu0
        %6010 = vmatprep.mubr.bf16.mxu0 0
        %6011 = vmatmul.mubr.bf16.gmra.mrb[0].mxu0 %v5837
        %v6012 = vpop.f32.mrb[0].mxu0
        %v6013 = vadd.f32 0.0, %v6012
        %v6014 = vpop.f32.mrb[0].mxu0
        %v6015 = vpop.f32.mrb[0].mxu0
        %v6016 = vadd.f32 0.0, %v6015
        %v6017 = vpop.f32.mrb[0].mxu0
        %6018 = vmatprep.mubr.bf16.mxu0 0
        %6019 = vmatmul.mubr.bf16.gmra.mrb[0].mxu0 %v5840
        %v6020 = vpop.f32.mrb[0].mxu0
        %v6021 = vadd.f32 0.0, %v6020
        %v6022 = vpop.f32.mrb[0].mxu0
        %v6023 = vpop.f32.mrb[0].mxu0
        %v6024 = vadd.f32 0.0, %v6023
        %v6025 = vpop.f32.mrb[0].mxu0
        %6026 = vdwg.mxu0
        %6027 = vmax.xlane.f32.xlu0 %v5901
        %v6028 = vpop.xlane.xlu0 %6027
        %6029 = vmax.xlane.f32.xlu0 %v5904
        %v6030 = vpop.xlane.xlu0 %6029
        %6031 = vmax.xlane.f32.xlu0 %v5909
        %v6032 = vpop.xlane.xlu0 %6031
        %6033 = vmax.xlane.f32.xlu0 %v5912
        %v6034 = vpop.xlane.xlu0 %6033
        %6035 = vmax.xlane.f32.xlu0 %v5917
        %v6036 = vpop.xlane.xlu0 %6035
        %6037 = vmax.xlane.f32.xlu0 %v5920
        %v6038 = vpop.xlane.xlu0 %6037
        %6039 = vmax.xlane.f32.xlu0 %v5925
        %v6040 = vpop.xlane.xlu0 %6039
        %6041 = vmax.xlane.f32.xlu0 %v5928
        %v6042 = vpop.xlane.xlu0 %6041
        %6043 = vmax.xlane.f32.xlu0 %v5933
        %v6044 = vpop.xlane.xlu0 %6043
        %6045 = vmax.xlane.f32.xlu0 %v5936
        %v6046 = vpop.xlane.xlu0 %6045
        %6047 = vmax.xlane.f32.xlu0 %v5941
        %v6048 = vpop.xlane.xlu0 %6047
        %6049 = vmax.xlane.f32.xlu0 %v5944
        %v6050 = vpop.xlane.xlu0 %6049
        %6051 = vmax.xlane.f32.xlu0 %v5949
        %v6052 = vpop.xlane.xlu0 %6051
        %6053 = vmax.xlane.f32.xlu0 %v5952
        %v6054 = vpop.xlane.xlu0 %6053
        %6055 = vmax.xlane.f32.xlu0 %v5957
        %v6056 = vpop.xlane.xlu0 %6055
        %6057 = vmax.xlane.f32.xlu0 %v5960
        %v6058 = vpop.xlane.xlu0 %6057
        %6059 = vmax.xlane.f32.xlu0 %v5965
        %v6060 = vpop.xlane.xlu0 %6059
        %6061 = vmax.xlane.f32.xlu0 %v5968
        %v6062 = vpop.xlane.xlu0 %6061
        %6063 = vmax.xlane.f32.xlu0 %v5973
        %v6064 = vpop.xlane.xlu0 %6063
        %6065 = vmax.xlane.f32.xlu0 %v5976
        %v6066 = vpop.xlane.xlu0 %6065
        %6067 = vmax.xlane.f32.xlu0 %v5981
        %v6068 = vpop.xlane.xlu0 %6067
        %6069 = vmax.xlane.f32.xlu0 %v5984
        %v6070 = vpop.xlane.xlu0 %6069
        %6071 = vmax.xlane.f32.xlu0 %v5989
        %v6072 = vpop.xlane.xlu0 %6071
        %6073 = vmax.xlane.f32.xlu0 %v5992
        %v6074 = vpop.xlane.xlu0 %6073
        %6075 = vmax.xlane.f32.xlu0 %v5997
        %v6076 = vpop.xlane.xlu0 %6075
        %6077 = vmax.xlane.f32.xlu0 %v6000
        %v6078 = vpop.xlane.xlu0 %6077
        %6079 = vmax.xlane.f32.xlu0 %v6005
        %v6080 = vpop.xlane.xlu0 %6079
        %6081 = vmax.xlane.f32.xlu0 %v6008
        %v6082 = vpop.xlane.xlu0 %6081
        %6083 = vmax.xlane.f32.xlu0 %v6013
        %v6084 = vpop.xlane.xlu0 %6083
        %6085 = vmax.xlane.f32.xlu0 %v6016
        %v6086 = vpop.xlane.xlu0 %6085
        %6087 = vmax.xlane.f32.xlu0 %v6021
        %v6088 = vpop.xlane.xlu0 %6087
        %6089 = vmax.xlane.f32.xlu0 %v6024
        %v6090 = vpop.xlane.xlu0 %6089
        %v6091 = vsub.f32 %v5901, %v6028
        %v6092 = vsub.f32 %v5904, %v6030
        %v6093 = vsub.f32 %v5909, %v6032
        %v6094 = vsub.f32 %v5912, %v6034
        %v6095 = vsub.f32 %v5917, %v6036
        %v6096 = vsub.f32 %v5920, %v6038
        %v6097 = vsub.f32 %v5925, %v6040
        %v6098 = vsub.f32 %v5928, %v6042
        %v6099 = vsub.f32 %v5933, %v6044
        %v6100 = vsub.f32 %v5936, %v6046
        %v6101 = vsub.f32 %v5941, %v6048
        %v6102 = vsub.f32 %v5944, %v6050
        %v6103 = vsub.f32 %v5949, %v6052
        %v6104 = vsub.f32 %v5952, %v6054
        %v6105 = vsub.f32 %v5957, %v6056
        %v6106 = vsub.f32 %v5960, %v6058
        %v6107 = vsub.f32 %v5965, %v6060
        %v6108 = vsub.f32 %v5968, %v6062
        %v6109 = vsub.f32 %v5973, %v6064
        %v6110 = vsub.f32 %v5976, %v6066
        %v6111 = vsub.f32 %v5981, %v6068
        %v6112 = vsub.f32 %v5984, %v6070
        %v6113 = vsub.f32 %v5989, %v6072
        %v6114 = vsub.f32 %v5992, %v6074
        %v6115 = vsub.f32 %v5997, %v6076
        %v6116 = vsub.f32 %v6000, %v6078
        %v6117 = vsub.f32 %v6005, %v6080
        %v6118 = vsub.f32 %v6008, %v6082
        %v6119 = vsub.f32 %v6013, %v6084
        %v6120 = vsub.f32 %v6016, %v6086
        %v6121 = vsub.f32 %v6021, %v6088
        %v6122 = vsub.f32 %v6024, %v6090
        %v6123 = vmul.f32 %v6091, 1.442695
        %v6124 = vpow.pop %v6123
        %v6125 = vmul.f32 %v6092, 1.442695
        %v6126 = vpow.pop %v6125
        %v6127 = vmul.f32 %v6093, 1.442695
        %v6128 = vpow.pop %v6127
        %v6129 = vmul.f32 %v6094, 1.442695
        %v6130 = vpow.pop %v6129
        %v6131 = vmul.f32 %v6095, 1.442695
        %v6132 = vpow.pop %v6131
        %v6133 = vmul.f32 %v6096, 1.442695
        %v6134 = vpow.pop %v6133
        %v6135 = vmul.f32 %v6097, 1.442695
        %v6136 = vpow.pop %v6135
        %v6137 = vmul.f32 %v6098, 1.442695
        %v6138 = vpow.pop %v6137
        %v6139 = vmul.f32 %v6099, 1.442695
        %v6140 = vpow.pop %v6139
        %v6141 = vmul.f32 %v6100, 1.442695
        %v6142 = vpow.pop %v6141
        %v6143 = vmul.f32 %v6101, 1.442695
        %v6144 = vpow.pop %v6143
        %v6145 = vmul.f32 %v6102, 1.442695
        %v6146 = vpow.pop %v6145
        %v6147 = vmul.f32 %v6103, 1.442695
        %v6148 = vpow.pop %v6147
        %v6149 = vmul.f32 %v6104, 1.442695
        %v6150 = vpow.pop %v6149
        %v6151 = vmul.f32 %v6105, 1.442695
        %v6152 = vpow.pop %v6151
        %v6153 = vmul.f32 %v6106, 1.442695
        %v6154 = vpow.pop %v6153
        %v6155 = vmul.f32 %v6107, 1.442695
        %v6156 = vpow.pop %v6155
        %v6157 = vmul.f32 %v6108, 1.442695
        %v6158 = vpow.pop %v6157
        %v6159 = vmul.f32 %v6109, 1.442695
        %v6160 = vpow.pop %v6159
        %v6161 = vmul.f32 %v6110, 1.442695
        %v6162 = vpow.pop %v6161
        %v6163 = vmul.f32 %v6111, 1.442695
        %v6164 = vpow.pop %v6163
        %v6165 = vmul.f32 %v6112, 1.442695
        %v6166 = vpow.pop %v6165
        %v6167 = vmul.f32 %v6113, 1.442695
        %v6168 = vpow.pop %v6167
        %v6169 = vmul.f32 %v6114, 1.442695
        %v6170 = vpow.pop %v6169
        %v6171 = vmul.f32 %v6115, 1.442695
        %v6172 = vpow.pop %v6171
        %v6173 = vmul.f32 %v6116, 1.442695
        %v6174 = vpow.pop %v6173
        %v6175 = vmul.f32 %v6117, 1.442695
        %v6176 = vpow.pop %v6175
        %v6177 = vmul.f32 %v6118, 1.442695
        %v6178 = vpow.pop %v6177
        %v6179 = vmul.f32 %v6119, 1.442695
        %v6180 = vpow.pop %v6179
        %v6181 = vmul.f32 %v6120, 1.442695
        %v6182 = vpow.pop %v6181
        %v6183 = vmul.f32 %v6121, 1.442695
        %v6184 = vpow.pop %v6183
        %v6185 = vmul.f32 %v6122, 1.442695
        %v6186 = vpow.pop %v6185
        %6187 = vadd.xlane.f32.xlu0 %v6124
        %v6188 = vpop.xlane.xlu0 %6187
        %6189 = vadd.xlane.f32.xlu0 %v6126
        %v6190 = vpop.xlane.xlu0 %6189
        %6191 = vadd.xlane.f32.xlu0 %v6128
        %v6192 = vpop.xlane.xlu0 %6191
        %6193 = vadd.xlane.f32.xlu0 %v6130
        %v6194 = vpop.xlane.xlu0 %6193
        %6195 = vadd.xlane.f32.xlu0 %v6132
        %v6196 = vpop.xlane.xlu0 %6195
        %6197 = vadd.xlane.f32.xlu0 %v6134
        %v6198 = vpop.xlane.xlu0 %6197
        %6199 = vadd.xlane.f32.xlu0 %v6136
        %v6200 = vpop.xlane.xlu0 %6199
        %6201 = vadd.xlane.f32.xlu0 %v6138
        %v6202 = vpop.xlane.xlu0 %6201
        %6203 = vadd.xlane.f32.xlu0 %v6140
        %v6204 = vpop.xlane.xlu0 %6203
        %6205 = vadd.xlane.f32.xlu0 %v6142
        %v6206 = vpop.xlane.xlu0 %6205
        %6207 = vadd.xlane.f32.xlu0 %v6144
        %v6208 = vpop.xlane.xlu0 %6207
        %6209 = vadd.xlane.f32.xlu0 %v6146
        %v6210 = vpop.xlane.xlu0 %6209
        %6211 = vadd.xlane.f32.xlu0 %v6148
        %v6212 = vpop.xlane.xlu0 %6211
        %6213 = vadd.xlane.f32.xlu0 %v6150
        %v6214 = vpop.xlane.xlu0 %6213
        %6215 = vadd.xlane.f32.xlu0 %v6152
        %v6216 = vpop.xlane.xlu0 %6215
        %6217 = vadd.xlane.f32.xlu0 %v6154
        %v6218 = vpop.xlane.xlu0 %6217
        %6219 = vadd.xlane.f32.xlu0 %v6156
        %v6220 = vpop.xlane.xlu0 %6219
        %6221 = vadd.xlane.f32.xlu0 %v6158
        %v6222 = vpop.xlane.xlu0 %6221
        %6223 = vadd.xlane.f32.xlu0 %v6160
        %v6224 = vpop.xlane.xlu0 %6223
        %6225 = vadd.xlane.f32.xlu0 %v6162
        %v6226 = vpop.xlane.xlu0 %6225
        %6227 = vadd.xlane.f32.xlu0 %v6164
        %v6228 = vpop.xlane.xlu0 %6227
        %6229 = vadd.xlane.f32.xlu0 %v6166
        %v6230 = vpop.xlane.xlu0 %6229
        %6231 = vadd.xlane.f32.xlu0 %v6168
        %v6232 = vpop.xlane.xlu0 %6231
        %6233 = vadd.xlane.f32.xlu0 %v6170
        %v6234 = vpop.xlane.xlu0 %6233
        %6235 = vadd.xlane.f32.xlu0 %v6172
        %v6236 = vpop.xlane.xlu0 %6235
        %6237 = vadd.xlane.f32.xlu0 %v6174
        %v6238 = vpop.xlane.xlu0 %6237
        %6239 = vadd.xlane.f32.xlu0 %v6176
        %v6240 = vpop.xlane.xlu0 %6239
        %6241 = vadd.xlane.f32.xlu0 %v6178
        %v6242 = vpop.xlane.xlu0 %6241
        %6243 = vadd.xlane.f32.xlu0 %v6180
        %v6244 = vpop.xlane.xlu0 %6243
        %6245 = vadd.xlane.f32.xlu0 %v6182
        %v6246 = vpop.xlane.xlu0 %6245
        %6247 = vadd.xlane.f32.xlu0 %v6184
        %v6248 = vpop.xlane.xlu0 %6247
        %6249 = vadd.xlane.f32.xlu0 %v6186
        %v6250 = vpop.xlane.xlu0 %6249
        %v6251 = vrcp.pop %v6188
        %v6252 = vrcp.pop %v6190
        %v6253 = vrcp.pop %v6192
        %v6254 = vrcp.pop %v6194
        %v6255 = vrcp.pop %v6196
        %v6256 = vrcp.pop %v6198
        %v6257 = vrcp.pop %v6200
        %v6258 = vrcp.pop %v6202
        %v6259 = vrcp.pop %v6204
        %v6260 = vrcp.pop %v6206
        %v6261 = vrcp.pop %v6208
        %v6262 = vrcp.pop %v6210
        %v6263 = vrcp.pop %v6212
        %v6264 = vrcp.pop %v6214
        %v6265 = vrcp.pop %v6216
        %v6266 = vrcp.pop %v6218
        %v6267 = vrcp.pop %v6220
        %v6268 = vrcp.pop %v6222
        %v6269 = vrcp.pop %v6224
        %v6270 = vrcp.pop %v6226
        %v6271 = vrcp.pop %v6228
        %v6272 = vrcp.pop %v6230
        %v6273 = vrcp.pop %v6232
        %v6274 = vrcp.pop %v6234
        %v6275 = vrcp.pop %v6236
        %v6276 = vrcp.pop %v6238
        %v6277 = vrcp.pop %v6240
        %v6278 = vrcp.pop %v6242
        %v6279 = vrcp.pop %v6244
        %v6280 = vrcp.pop %v6246
        %v6281 = vrcp.pop %v6248
        %v6282 = vrcp.pop %v6250
        %v6283 = vmul.f32 %v6124, %v6251
        %v6284 = vmul.f32 %v6126, %v6252
        %v6285 = vmul.f32 %v6128, %v6253
        %v6286 = vmul.f32 %v6130, %v6254
        %v6287 = vmul.f32 %v6132, %v6255
        %v6288 = vmul.f32 %v6134, %v6256
        %v6289 = vmul.f32 %v6136, %v6257
        %v6290 = vmul.f32 %v6138, %v6258
        %v6291 = vmul.f32 %v6140, %v6259
        %v6292 = vmul.f32 %v6142, %v6260
        %v6293 = vmul.f32 %v6144, %v6261
        %v6294 = vmul.f32 %v6146, %v6262
        %v6295 = vmul.f32 %v6148, %v6263
        %v6296 = vmul.f32 %v6150, %v6264
        %v6297 = vmul.f32 %v6152, %v6265
        %v6298 = vmul.f32 %v6154, %v6266
        %v6299 = vmul.f32 %v6156, %v6267
        %v6300 = vmul.f32 %v6158, %v6268
        %v6301 = vmul.f32 %v6160, %v6269
        %v6302 = vmul.f32 %v6162, %v6270
        %v6303 = vmul.f32 %v6164, %v6271
        %v6304 = vmul.f32 %v6166, %v6272
        %v6305 = vmul.f32 %v6168, %v6273
        %v6306 = vmul.f32 %v6170, %v6274
        %v6307 = vmul.f32 %v6172, %v6275
        %v6308 = vmul.f32 %v6174, %v6276
        %v6309 = vmul.f32 %v6176, %v6277
        %v6310 = vmul.f32 %v6178, %v6278
        %v6311 = vmul.f32 %v6180, %v6279
        %v6312 = vmul.f32 %v6182, %v6280
        %v6313 = vmul.f32 %v6184, %v6281
        %v6314 = vmul.f32 %v6186, %v6282
        %v6315 = vld [vmem:[#allocation5] sm:$0xff]
        %v6316 = vld [vmem:[#allocation5 + $0x8] sm:$0xff]
        %v6317 = vld [vmem:[#allocation5 + $0x10] sm:$0xff]
        %v6318 = vld [vmem:[#allocation5 + $0x18] sm:$0xff]
        %v6319 = vld [vmem:[#allocation5 + $0x20] sm:$0xff]
        %v6320 = vld [vmem:[#allocation5 + $0x28] sm:$0xff]
        %v6321 = vld [vmem:[#allocation5 + $0x30] sm:$0xff]
        %v6322 = vld [vmem:[#allocation5 + $0x38] sm:$0xff]
        %v6323 = vld [vmem:[#allocation5 + $0x40] sm:$0xff]
        %v6324 = vld [vmem:[#allocation5 + $0x48] sm:$0xff]
        %v6325 = vld [vmem:[#allocation5 + $0x50] sm:$0xff]
        %v6326 = vld [vmem:[#allocation5 + $0x58] sm:$0xff]
        %v6327 = vld [vmem:[#allocation5 + $0x60] sm:$0xff]
        %v6328 = vld [vmem:[#allocation5 + $0x68] sm:$0xff]
        %v6329 = vld [vmem:[#allocation5 + $0x70] sm:$0xff]
        %v6330 = vld [vmem:[#allocation5 + $0x78] sm:$0xff]
        %v6331 = vld [vmem:[#allocation5 + $0x80] sm:$0xff]
        %v6332 = vld [vmem:[#allocation5 + $0x88] sm:$0xff]
        %v6333 = vld [vmem:[#allocation5 + $0x90] sm:$0xff]
        %v6334 = vld [vmem:[#allocation5 + $0x98] sm:$0xff]
        %v6335 = vld [vmem:[#allocation5 + $0xa0] sm:$0xff]
        %v6336 = vld [vmem:[#allocation5 + $0xa8] sm:$0xff]
        %v6337 = vld [vmem:[#allocation5 + $0xb0] sm:$0xff]
        %v6338 = vld [vmem:[#allocation5 + $0xb8] sm:$0xff]
        %v6339 = vld [vmem:[#allocation5 + $0xc0] sm:$0xff]
        %v6340 = vld [vmem:[#allocation5 + $0xc8] sm:$0xff]
        %v6341 = vld [vmem:[#allocation5 + $0xd0] sm:$0xff]
        %v6342 = vld [vmem:[#allocation5 + $0xd8] sm:$0xff]
        %v6343 = vld [vmem:[#allocation5 + $0xe0] sm:$0xff]
        %v6344 = vld [vmem:[#allocation5 + $0xe8] sm:$0xff]
        %v6345 = vld [vmem:[#allocation5 + $0xf0] sm:$0xff]
        %v6346 = vld [vmem:[#allocation5 + $0xf8] sm:$0xff]
        %v6347 = vpack.c.bf16 %v6284, %v6283
        %v6348 = vpack.c.bf16 %v6286, %v6285
        %v6349 = vpack.c.bf16 %v6288, %v6287
        %v6350 = vpack.c.bf16 %v6290, %v6289
        %v6351 = vpack.c.bf16 %v6292, %v6291
        %v6352 = vpack.c.bf16 %v6294, %v6293
        %v6353 = vpack.c.bf16 %v6296, %v6295
        %v6354 = vpack.c.bf16 %v6298, %v6297
        %v6355 = vpack.c.bf16 %v6300, %v6299
        %v6356 = vpack.c.bf16 %v6302, %v6301
        %v6357 = vpack.c.bf16 %v6304, %v6303
        %v6358 = vpack.c.bf16 %v6306, %v6305
        %v6359 = vpack.c.bf16 %v6308, %v6307
        %v6360 = vpack.c.bf16 %v6310, %v6309
        %v6361 = vpack.c.bf16 %v6312, %v6311
        %v6362 = vpack.c.bf16 %v6314, %v6313
        %s6363 = scalar_lea.vmem [#allocation4], 256
        %v6364 = vld [vmem:[%s6363] sm:$0xff]
        %v6365 = vld [vmem:[%s6363 + $0x8] sm:$0xff]
        %v6366 = vld [vmem:[%s6363 + $0x10] sm:$0xff]
        %v6367 = vld [vmem:[%s6363 + $0x18] sm:$0xff]
        %v6368 = vld [vmem:[%s6363 + $0x20] sm:$0xff]
        %v6369 = vld [vmem:[%s6363 + $0x28] sm:$0xff]
        %v6370 = vld [vmem:[%s6363 + $0x30] sm:$0xff]
        %v6371 = vld [vmem:[%s6363 + $0x38] sm:$0xff]
        %6372 = vmatprep.subr.bf16.mxu0 0
        %6373 = vmatpush1.bf16.msra.mxu0 %v6364
        %6374 = vmatprep.subr.bf16.mxu0 0
        %6375 = vmatpush1.bf16.msra.mxu0 %v6365
        %6376 = vmatprep.subr.bf16.mxu0 0
        %6377 = vmatpush1.bf16.msra.mxu0 %v6366
        %6378 = vmatprep.subr.bf16.mxu0 0
        %6379 = vmatpush1.bf16.msra.mxu0 %v6367
        %6380 = vmatprep.subr.bf16.mxu0 0
        %6381 = vmatpush1.bf16.msra.mxu0 %v6368
        %6382 = vmatprep.subr.bf16.mxu0 0
        %6383 = vmatpush1.bf16.msra.mxu0 %v6369
        %6384 = vmatprep.subr.bf16.mxu0 0
        %6385 = vmatpush1.bf16.msra.mxu0 %v6370
        %6386 = vmatprep.subr.bf16.mxu0 0
        %6387 = vmatpush1.bf16.msra.mxu0 %v6371
        %6388 = vmatprep.subr.bf16.mxu0 0
        %6389 = vmatpush1.bf16.msra.mxu0 0
        %6390 = vmatprep.subr.bf16.mxu0 0
        %6391 = vmatpush1.bf16.msra.mxu0 0
        %6392 = vmatprep.subr.bf16.mxu0 0
        %6393 = vmatpush1.bf16.msra.mxu0 0
        %6394 = vmatprep.subr.bf16.mxu0 0
        %6395 = vmatpush1.bf16.msra.mxu0 0
        %6396 = vmatprep.subr.bf16.mxu0 0
        %6397 = vmatpush1.bf16.msra.mxu0 0
        %6398 = vmatprep.subr.bf16.mxu0 0
        %6399 = vmatpush1.bf16.msra.mxu0 0
        %6400 = vmatprep.subr.bf16.mxu0 0
        %6401 = vmatpush1.bf16.msra.mxu0 0
        %6402 = vmatprep.subr.bf16.mxu0 0
        %6403 = vmatpush1.bf16.msra.mxu0 0
        %6404 = vmatprep.mubr.bf16.mxu0 0
        %6405 = vmatmul.mubr.bf16.gmra.mrb[0].mxu0 %v6347
        %v6406 = vpop.f32.mrb[0].mxu0
        %v6407 = vadd.f32 0.0, %v6406
        %v6408 = vpop.f32.mrb[0].mxu0
        %v6409 = vpop.f32.mrb[0].mxu0
        %v6410 = vadd.f32 0.0, %v6409
        %v6411 = vpop.f32.mrb[0].mxu0
        %6412 = vmatprep.mubr.bf16.mxu0 0
        %6413 = vmatmul.mubr.bf16.gmra.mrb[0].mxu0 %v6348
        %v6414 = vpop.f32.mrb[0].mxu0
        %v6415 = vadd.f32 0.0, %v6414
        %v6416 = vpop.f32.mrb[0].mxu0
        %v6417 = vpop.f32.mrb[0].mxu0
        %v6418 = vadd.f32 0.0, %v6417
        %v6419 = vpop.f32.mrb[0].mxu0
        %6420 = vmatprep.mubr.bf16.mxu0 0
        %6421 = vmatmul.mubr.bf16.gmra.mrb[0].mxu0 %v6349
        %v6422 = vpop.f32.mrb[0].mxu0
        %v6423 = vadd.f32 0.0, %v6422
        %v6424 = vpop.f32.mrb[0].mxu0
        %v6425 = vpop.f32.mrb[0].mxu0
        %v6426 = vadd.f32 0.0, %v6425
        %v6427 = vpop.f32.mrb[0].mxu0
        %6428 = vmatprep.mubr.bf16.mxu0 0
        %6429 = vmatmul.mubr.bf16.gmra.mrb[0].mxu0 %v6350
        %v6430 = vpop.f32.mrb[0].mxu0
        %v6431 = vadd.f32 0.0, %v6430
        %v6432 = vpop.f32.mrb[0].mxu0
        %v6433 = vpop.f32.mrb[0].mxu0
        %v6434 = vadd.f32 0.0, %v6433
        %v6435 = vpop.f32.mrb[0].mxu0
        %6436 = vmatprep.mubr.bf16.mxu0 0
        %6437 = vmatmul.mubr.bf16.gmra.mrb[0].mxu0 %v6351
        %v6438 = vpop.f32.mrb[0].mxu0
        %v6439 = vadd.f32 0.0, %v6438
        %v6440 = vpop.f32.mrb[0].mxu0
        %v6441 = vpop.f32.mrb[0].mxu0
        %v6442 = vadd.f32 0.0, %v6441
        %v6443 = vpop.f32.mrb[0].mxu0
        %6444 = vmatprep.mubr.bf16.mxu0 0
        %6445 = vmatmul.mubr.bf16.gmra.mrb[0].mxu0 %v6352
        %v6446 = vpop.f32.mrb[0].mxu0
        %v6447 = vadd.f32 0.0, %v6446
        %v6448 = vpop.f32.mrb[0].mxu0
        %v6449 = vpop.f32.mrb[0].mxu0
        %v6450 = vadd.f32 0.0, %v6449
        %v6451 = vpop.f32.mrb[0].mxu0
        %6452 = vmatprep.mubr.bf16.mxu0 0
        %6453 = vmatmul.mubr.bf16.gmra.mrb[0].mxu0 %v6353
        %v6454 = vpop.f32.mrb[0].mxu0
        %v6455 = vadd.f32 0.0, %v6454
        %v6456 = vpop.f32.mrb[0].mxu0
        %v6457 = vpop.f32.mrb[0].mxu0
        %v6458 = vadd.f32 0.0, %v6457
        %v6459 = vpop.f32.mrb[0].mxu0
        %6460 = vmatprep.mubr.bf16.mxu0 0
        %6461 = vmatmul.mubr.bf16.gmra.mrb[0].mxu0 %v6354
        %v6462 = vpop.f32.mrb[0].mxu0
        %v6463 = vadd.f32 0.0, %v6462
        %v6464 = vpop.f32.mrb[0].mxu0
        %v6465 = vpop.f32.mrb[0].mxu0
        %v6466 = vadd.f32 0.0, %v6465
        %v6467 = vpop.f32.mrb[0].mxu0
        %6468 = vmatprep.mubr.bf16.mxu0 0
        %6469 = vmatmul.mubr.bf16.gmra.mrb[0].mxu0 %v6355
        %v6470 = vpop.f32.mrb[0].mxu0
        %v6471 = vadd.f32 0.0, %v6470
        %v6472 = vpop.f32.mrb[0].mxu0
        %v6473 = vpop.f32.mrb[0].mxu0
        %v6474 = vadd.f32 0.0, %v6473
        %v6475 = vpop.f32.mrb[0].mxu0
        %6476 = vmatprep.mubr.bf16.mxu0 0
        %6477 = vmatmul.mubr.bf16.gmra.mrb[0].mxu0 %v6356
        %v6478 = vpop.f32.mrb[0].mxu0
        %v6479 = vadd.f32 0.0, %v6478
        %v6480 = vpop.f32.mrb[0].mxu0
        %v6481 = vpop.f32.mrb[0].mxu0
        %v6482 = vadd.f32 0.0, %v6481
        %v6483 = vpop.f32.mrb[0].mxu0
        %6484 = vmatprep.mubr.bf16.mxu0 0
        %6485 = vmatmul.mubr.bf16.gmra.mrb[0].mxu0 %v6357
        %v6486 = vpop.f32.mrb[0].mxu0
        %v6487 = vadd.f32 0.0, %v6486
        %v6488 = vpop.f32.mrb[0].mxu0
        %v6489 = vpop.f32.mrb[0].mxu0
        %v6490 = vadd.f32 0.0, %v6489
        %v6491 = vpop.f32.mrb[0].mxu0
        %6492 = vmatprep.mubr.bf16.mxu0 0
        %6493 = vmatmul.mubr.bf16.gmra.mrb[0].mxu0 %v6358
        %v6494 = vpop.f32.mrb[0].mxu0
        %v6495 = vadd.f32 0.0, %v6494
        %v6496 = vpop.f32.mrb[0].mxu0
        %v6497 = vpop.f32.mrb[0].mxu0
        %v6498 = vadd.f32 0.0, %v6497
        %v6499 = vpop.f32.mrb[0].mxu0
        %6500 = vmatprep.mubr.bf16.mxu0 0
        %6501 = vmatmul.mubr.bf16.gmra.mrb[0].mxu0 %v6359
        %v6502 = vpop.f32.mrb[0].mxu0
        %v6503 = vadd.f32 0.0, %v6502
        %v6504 = vpop.f32.mrb[0].mxu0
        %v6505 = vpop.f32.mrb[0].mxu0
        %v6506 = vadd.f32 0.0, %v6505
        %v6507 = vpop.f32.mrb[0].mxu0
        %6508 = vmatprep.mubr.bf16.mxu0 0
        %6509 = vmatmul.mubr.bf16.gmra.mrb[0].mxu0 %v6360
        %v6510 = vpop.f32.mrb[0].mxu0
        %v6511 = vadd.f32 0.0, %v6510
        %v6512 = vpop.f32.mrb[0].mxu0
        %v6513 = vpop.f32.mrb[0].mxu0
        %v6514 = vadd.f32 0.0, %v6513
        %v6515 = vpop.f32.mrb[0].mxu0
        %6516 = vmatprep.mubr.bf16.mxu0 0
        %6517 = vmatmul.mubr.bf16.gmra.mrb[0].mxu0 %v6361
        %v6518 = vpop.f32.mrb[0].mxu0
        %v6519 = vadd.f32 0.0, %v6518
        %v6520 = vpop.f32.mrb[0].mxu0
        %v6521 = vpop.f32.mrb[0].mxu0
        %v6522 = vadd.f32 0.0, %v6521
        %v6523 = vpop.f32.mrb[0].mxu0
        %6524 = vmatprep.mubr.bf16.mxu0 0
        %6525 = vmatmul.mubr.bf16.gmra.mrb[0].mxu0 %v6362
        %v6526 = vpop.f32.mrb[0].mxu0
        %v6527 = vadd.f32 0.0, %v6526
        %v6528 = vpop.f32.mrb[0].mxu0
        %v6529 = vpop.f32.mrb[0].mxu0
        %v6530 = vadd.f32 0.0, %v6529
        %v6531 = vpop.f32.mrb[0].mxu0
        %6532 = vdwg.mxu0
        %v6533 = vadd.f32 %v6315, %v6407
        %v6534 = vadd.f32 %v6316, %v6410
        %v6535 = vadd.f32 %v6317, %v6415
        %v6536 = vadd.f32 %v6318, %v6418
        %v6537 = vadd.f32 %v6319, %v6423
        %v6538 = vadd.f32 %v6320, %v6426
        %v6539 = vadd.f32 %v6321, %v6431
        %v6540 = vadd.f32 %v6322, %v6434
        %v6541 = vadd.f32 %v6323, %v6439
        %v6542 = vadd.f32 %v6324, %v6442
        %v6543 = vadd.f32 %v6325, %v6447
        %v6544 = vadd.f32 %v6326, %v6450
        %v6545 = vadd.f32 %v6327, %v6455
        %v6546 = vadd.f32 %v6328, %v6458
        %v6547 = vadd.f32 %v6329, %v6463
        %v6548 = vadd.f32 %v6330, %v6466
        %v6549 = vadd.f32 %v6331, %v6471
        %v6550 = vadd.f32 %v6332, %v6474
        %v6551 = vadd.f32 %v6333, %v6479
        %v6552 = vadd.f32 %v6334, %v6482
        %v6553 = vadd.f32 %v6335, %v6487
        %v6554 = vadd.f32 %v6336, %v6490
        %v6555 = vadd.f32 %v6337, %v6495
        %v6556 = vadd.f32 %v6338, %v6498
        %v6557 = vadd.f32 %v6339, %v6503
        %v6558 = vadd.f32 %v6340, %v6506
        %v6559 = vadd.f32 %v6341, %v6511
        %v6560 = vadd.f32 %v6342, %v6514
        %v6561 = vadd.f32 %v6343, %v6519
        %v6562 = vadd.f32 %v6344, %v6522
        %v6563 = vadd.f32 %v6345, %v6527
        %v6564 = vadd.f32 %v6346, %v6530
        %6565 = vst [vmem:[#allocation5] sm:$0xff] %v6533
        %6566 = vst [vmem:[#allocation5 + $0x8] sm:$0xff] %v6534
        %6567 = vst [vmem:[#allocation5 + $0x10] sm:$0xff] %v6535
        %6568 = vst [vmem:[#allocation5 + $0x18] sm:$0xff] %v6536
        %6569 = vst [vmem:[#allocation5 + $0x20] sm:$0xff] %v6537
        %6570 = vst [vmem:[#allocation5 + $0x28] sm:$0xff] %v6538
        %6571 = vst [vmem:[#allocation5 + $0x30] sm:$0xff] %v6539
        %6572 = vst [vmem:[#allocation5 + $0x38] sm:$0xff] %v6540
        %6573 = vst [vmem:[#allocation5 + $0x40] sm:$0xff] %v6541
        %6574 = vst [vmem:[#allocation5 + $0x48] sm:$0xff] %v6542
        %6575 = vst [vmem:[#allocation5 + $0x50] sm:$0xff] %v6543
        %6576 = vst [vmem:[#allocation5 + $0x58] sm:$0xff] %v6544
        %6577 = vst [vmem:[#allocation5 + $0x60] sm:$0xff] %v6545
        %6578 = vst [vmem:[#allocation5 + $0x68] sm:$0xff] %v6546
        %6579 = vst [vmem:[#allocation5 + $0x70] sm:$0xff] %v6547
        %6580 = vst [vmem:[#allocation5 + $0x78] sm:$0xff] %v6548
        %6581 = vst [vmem:[#allocation5 + $0x80] sm:$0xff] %v6549
        %6582 = vst [vmem:[#allocation5 + $0x88] sm:$0xff] %v6550
        %6583 = vst [vmem:[#allocation5 + $0x90] sm:$0xff] %v6551
        %6584 = vst [vmem:[#allocation5 + $0x98] sm:$0xff] %v6552
        %6585 = vst [vmem:[#allocation5 + $0xa0] sm:$0xff] %v6553
        %6586 = vst [vmem:[#allocation5 + $0xa8] sm:$0xff] %v6554
        %6587 = vst [vmem:[#allocation5 + $0xb0] sm:$0xff] %v6555
        %6588 = vst [vmem:[#allocation5 + $0xb8] sm:$0xff] %v6556
        %6589 = vst [vmem:[#allocation5 + $0xc0] sm:$0xff] %v6557
        %6590 = vst [vmem:[#allocation5 + $0xc8] sm:$0xff] %v6558
        %6591 = vst [vmem:[#allocation5 + $0xd0] sm:$0xff] %v6559
        %6592 = vst [vmem:[#allocation5 + $0xd8] sm:$0xff] %v6560
        %6593 = vst [vmem:[#allocation5 + $0xe0] sm:$0xff] %v6561
        %6594 = vst [vmem:[#allocation5 + $0xe8] sm:$0xff] %v6562
        %6595 = vst [vmem:[#allocation5 + $0xf0] sm:$0xff] %v6563
        %6596 = vst [vmem:[#allocation5 + $0xf8] sm:$0xff] %v6564
        %v6597 = vld [vmem:[#allocation2] sm:$0xff]
        %v6598 = vld [vmem:[#allocation2 + $0x8] sm:$0xff]
        %v6599 = vld [vmem:[#allocation2 + $0x10] sm:$0xff]
        %v6600 = vld [vmem:[#allocation2 + $0x18] sm:$0xff]
        %v6601 = vld [vmem:[#allocation2 + $0x20] sm:$0xff]
        %v6602 = vld [vmem:[#allocation2 + $0x28] sm:$0xff]
        %v6603 = vld [vmem:[#allocation2 + $0x30] sm:$0xff]
        %v6604 = vld [vmem:[#allocation2 + $0x38] sm:$0xff]
        %v6605 = vld [vmem:[#allocation2 + $0x40] sm:$0xff]
        %v6606 = vld [vmem:[#allocation2 + $0x48] sm:$0xff]
        %v6607 = vld [vmem:[#allocation2 + $0x50] sm:$0xff]
        %v6608 = vld [vmem:[#allocation2 + $0x58] sm:$0xff]
        %v6609 = vld [vmem:[#allocation2 + $0x60] sm:$0xff]
        %v6610 = vld [vmem:[#allocation2 + $0x68] sm:$0xff]
        %v6611 = vld [vmem:[#allocation2 + $0x70] sm:$0xff]
        %v6612 = vld [vmem:[#allocation2 + $0x78] sm:$0xff]
        %v6613 = vld [vmem:[#allocation3] sm:$0xff]
        %v6614 = vld [vmem:[#allocation3 + $0x8] sm:$0xff]
        %v6615 = vld [vmem:[#allocation3 + $0x10] sm:$0xff]
        %v6616 = vld [vmem:[#allocation3 + $0x18] sm:$0xff]
        %v6617 = vld [vmem:[#allocation3 + $0x20] sm:$0xff]
        %v6618 = vld [vmem:[#allocation3 + $0x28] sm:$0xff]
        %v6619 = vld [vmem:[#allocation3 + $0x30] sm:$0xff]
        %v6620 = vld [vmem:[#allocation3 + $0x38] sm:$0xff]
        %6637 = vrot.lane.b32.xlu0 %v6597, 48
        %v6638 = vpop.permute.xlu0 %6637
        %6639 = vrot.lane.b32.xlu0 %v6598, 48
        %v6640 = vpop.permute.xlu0 %6639
        %6641 = vrot.lane.b32.xlu0 %v6599, 48
        %v6642 = vpop.permute.xlu0 %6641
        %6643 = vrot.lane.b32.xlu0 %v6600, 48
        %v6644 = vpop.permute.xlu0 %6643
        %6645 = vrot.lane.b32.xlu0 %v6601, 48
        %v6646 = vpop.permute.xlu0 %6645
        %6647 = vrot.lane.b32.xlu0 %v6602, 48
        %v6648 = vpop.permute.xlu0 %6647
        %6649 = vrot.lane.b32.xlu0 %v6603, 48
        %v6650 = vpop.permute.xlu0 %6649
        %6651 = vrot.lane.b32.xlu0 %v6604, 48
        %v6652 = vpop.permute.xlu0 %6651
        %6653 = vrot.lane.b32.xlu0 %v6605, 48
        %v6654 = vpop.permute.xlu0 %6653
        %6655 = vrot.lane.b32.xlu0 %v6606, 48
        %v6656 = vpop.permute.xlu0 %6655
        %6657 = vrot.lane.b32.xlu0 %v6607, 48
        %v6658 = vpop.permute.xlu0 %6657
        %6659 = vrot.lane.b32.xlu0 %v6608, 48
        %v6660 = vpop.permute.xlu0 %6659
        %6661 = vrot.lane.b32.xlu0 %v6609, 48
        %v6662 = vpop.permute.xlu0 %6661
        %6663 = vrot.lane.b32.xlu0 %v6610, 48
        %v6664 = vpop.permute.xlu0 %6663
        %6665 = vrot.lane.b32.xlu0 %v6611, 48
        %v6666 = vpop.permute.xlu0 %6665
        %6667 = vrot.lane.b32.xlu0 %v6612, 48
        %v6668 = vpop.permute.xlu0 %6667
        %6677 = vrot.lane.b32.xlu0 %v6613, 48
        %v6678 = vpop.permute.xlu0 %6677
        %6679 = vrot.lane.b32.xlu0 %v6614, 48
        %v6680 = vpop.permute.xlu0 %6679
        %6681 = vrot.lane.b32.xlu0 %v6615, 48
        %v6682 = vpop.permute.xlu0 %6681
        %6683 = vrot.lane.b32.xlu0 %v6616, 48
        %v6684 = vpop.permute.xlu0 %6683
        %6685 = vrot.lane.b32.xlu0 %v6617, 48
        %v6686 = vpop.permute.xlu0 %6685
        %6687 = vrot.lane.b32.xlu0 %v6618, 48
        %v6688 = vpop.permute.xlu0 %6687
        %6689 = vrot.lane.b32.xlu0 %v6619, 48
        %v6690 = vpop.permute.xlu0 %6689
        %6691 = vrot.lane.b32.xlu0 %v6620, 48
        %v6692 = vpop.permute.xlu0 %6691
        %v6694 = vsel %vm2198, %v6638, 0
        %v6697 = vsel %vm2198, %v6640, 0
        %v6700 = vsel %vm2198, %v6642, 0
        %v6703 = vsel %vm2198, %v6644, 0
        %v6706 = vsel %vm2198, %v6646, 0
        %v6709 = vsel %vm2198, %v6648, 0
        %v6712 = vsel %vm2198, %v6650, 0
        %v6715 = vsel %vm2198, %v6652, 0
        %v6718 = vsel %vm2198, %v6654, 0
        %v6721 = vsel %vm2198, %v6656, 0
        %v6724 = vsel %vm2198, %v6658, 0
        %v6727 = vsel %vm2198, %v6660, 0
        %v6730 = vsel %vm2198, %v6662, 0
        %v6733 = vsel %vm2198, %v6664, 0
        %v6736 = vsel %vm2198, %v6666, 0
        %v6739 = vsel %vm2198, %v6668, 0
        %v6742 = vsel %vm2198, %v6678, 0
        %v6745 = vsel %vm2198, %v6680, 0
        %v6748 = vsel %vm2198, %v6682, 0
        %v6751 = vsel %vm2198, %v6684, 0
        %v6754 = vsel %vm2198, %v6686, 0
        %v6757 = vsel %vm2198, %v6688, 0
        %v6760 = vsel %vm2198, %v6690, 0
        %v6763 = vsel %vm2198, %v6692, 0
        %6765 = vmatprep.subr.bf16.mxu0 0
        %6766 = vmatpush1.bf16.xpose.msra.mxu0 %v6742
        %6767 = vmatprep.subr.bf16.mxu0 0
        %6768 = vmatpush1.bf16.xpose.msra.mxu0 %v6745
        %6769 = vmatprep.subr.bf16.mxu0 0
        %6770 = vmatpush1.bf16.xpose.msra.mxu0 %v6748
        %6771 = vmatprep.subr.bf16.mxu0 0
        %6772 = vmatpush1.bf16.xpose.msra.mxu0 %v6751
        %6773 = vmatprep.subr.bf16.mxu0 0
        %6774 = vmatpush1.bf16.xpose.msra.mxu0 %v6754
        %6775 = vmatprep.subr.bf16.mxu0 0
        %6776 = vmatpush1.bf16.xpose.msra.mxu0 %v6757
        %6777 = vmatprep.subr.bf16.mxu0 0
        %6778 = vmatpush1.bf16.xpose.msra.mxu0 %v6760
        %6779 = vmatprep.subr.bf16.mxu0 0
        %6780 = vmatpush1.bf16.xpose.msra.mxu0 %v6763
        %6781 = vmatprep.subr.bf16.mxu0 0
        %6782 = vmatpush1.bf16.xpose.msra.mxu0 0
        %6783 = vmatprep.subr.bf16.mxu0 0
        %6784 = vmatpush1.bf16.xpose.msra.mxu0 0
        %6785 = vmatprep.subr.bf16.mxu0 0
        %6786 = vmatpush1.bf16.xpose.msra.mxu0 0
        %6787 = vmatprep.subr.bf16.mxu0 0
        %6788 = vmatpush1.bf16.xpose.msra.mxu0 0
        %6789 = vmatprep.subr.bf16.mxu0 0
        %6790 = vmatpush1.bf16.xpose.msra.mxu0 0
        %6791 = vmatprep.subr.bf16.mxu0 0
        %6792 = vmatpush1.bf16.xpose.msra.mxu0 0
        %6793 = vmatprep.subr.bf16.mxu0 0
        %6794 = vmatpush1.bf16.xpose.msra.mxu0 0
        %6795 = vmatprep.subr.bf16.mxu0 0
        %6796 = vmatpush1.bf16.xpose.msra.mxu0 0
        %6797 = vmatprep.mubr.bf16.mxu0 0
        %6798 = vmatmul.mubr.bf16.gmra.mrb[0].mxu0 %v6694
        %v6799 = vpop.f32.mrb[0].mxu0
        %v6800 = vadd.f32 0.0, %v6799
        %v6801 = vpop.f32.mrb[0].mxu0
        %v6802 = vpop.f32.mrb[0].mxu0
        %v6803 = vadd.f32 0.0, %v6802
        %v6804 = vpop.f32.mrb[0].mxu0
        %6805 = vmatprep.mubr.bf16.mxu0 0
        %6806 = vmatmul.mubr.bf16.gmra.mrb[0].mxu0 %v6697
        %v6807 = vpop.f32.mrb[0].mxu0
        %v6808 = vadd.f32 0.0, %v6807
        %v6809 = vpop.f32.mrb[0].mxu0
        %v6810 = vpop.f32.mrb[0].mxu0
        %v6811 = vadd.f32 0.0, %v6810
        %v6812 = vpop.f32.mrb[0].mxu0
        %6813 = vmatprep.mubr.bf16.mxu0 0
        %6814 = vmatmul.mubr.bf16.gmra.mrb[0].mxu0 %v6700
        %v6815 = vpop.f32.mrb[0].mxu0
        %v6816 = vadd.f32 0.0, %v6815
        %v6817 = vpop.f32.mrb[0].mxu0
        %v6818 = vpop.f32.mrb[0].mxu0
        %v6819 = vadd.f32 0.0, %v6818
        %v6820 = vpop.f32.mrb[0].mxu0
        %6821 = vmatprep.mubr.bf16.mxu0 0
        %6822 = vmatmul.mubr.bf16.gmra.mrb[0].mxu0 %v6703
        %v6823 = vpop.f32.mrb[0].mxu0
        %v6824 = vadd.f32 0.0, %v6823
        %v6825 = vpop.f32.mrb[0].mxu0
        %v6826 = vpop.f32.mrb[0].mxu0
        %v6827 = vadd.f32 0.0, %v6826
        %v6828 = vpop.f32.mrb[0].mxu0
        %6829 = vmatprep.mubr.bf16.mxu0 0
        %6830 = vmatmul.mubr.bf16.gmra.mrb[0].mxu0 %v6706
        %v6831 = vpop.f32.mrb[0].mxu0
        %v6832 = vadd.f32 0.0, %v6831
        %v6833 = vpop.f32.mrb[0].mxu0
        %v6834 = vpop.f32.mrb[0].mxu0
        %v6835 = vadd.f32 0.0, %v6834
        %v6836 = vpop.f32.mrb[0].mxu0
        %6837 = vmatprep.mubr.bf16.mxu0 0
        %6838 = vmatmul.mubr.bf16.gmra.mrb[0].mxu0 %v6709
        %v6839 = vpop.f32.mrb[0].mxu0
        %v6840 = vadd.f32 0.0, %v6839
        %v6841 = vpop.f32.mrb[0].mxu0
        %v6842 = vpop.f32.mrb[0].mxu0
        %v6843 = vadd.f32 0.0, %v6842
        %v6844 = vpop.f32.mrb[0].mxu0
        %6845 = vmatprep.mubr.bf16.mxu0 0
        %6846 = vmatmul.mubr.bf16.gmra.mrb[0].mxu0 %v6712
        %v6847 = vpop.f32.mrb[0].mxu0
        %v6848 = vadd.f32 0.0, %v6847
        %v6849 = vpop.f32.mrb[0].mxu0
        %v6850 = vpop.f32.mrb[0].mxu0
        %v6851 = vadd.f32 0.0, %v6850
        %v6852 = vpop.f32.mrb[0].mxu0
        %6853 = vmatprep.mubr.bf16.mxu0 0
        %6854 = vmatmul.mubr.bf16.gmra.mrb[0].mxu0 %v6715
        %v6855 = vpop.f32.mrb[0].mxu0
        %v6856 = vadd.f32 0.0, %v6855
        %v6857 = vpop.f32.mrb[0].mxu0
        %v6858 = vpop.f32.mrb[0].mxu0
        %v6859 = vadd.f32 0.0, %v6858
        %v6860 = vpop.f32.mrb[0].mxu0
        %6861 = vmatprep.mubr.bf16.mxu0 0
        %6862 = vmatmul.mubr.bf16.gmra.mrb[0].mxu0 %v6718
        %v6863 = vpop.f32.mrb[0].mxu0
        %v6864 = vadd.f32 0.0, %v6863
        %v6865 = vpop.f32.mrb[0].mxu0
        %v6866 = vpop.f32.mrb[0].mxu0
        %v6867 = vadd.f32 0.0, %v6866
        %v6868 = vpop.f32.mrb[0].mxu0
        %6869 = vmatprep.mubr.bf16.mxu0 0
        %6870 = vmatmul.mubr.bf16.gmra.mrb[0].mxu0 %v6721
        %v6871 = vpop.f32.mrb[0].mxu0
        %v6872 = vadd.f32 0.0, %v6871
        %v6873 = vpop.f32.mrb[0].mxu0
        %v6874 = vpop.f32.mrb[0].mxu0
        %v6875 = vadd.f32 0.0, %v6874
        %v6876 = vpop.f32.mrb[0].mxu0
        %6877 = vmatprep.mubr.bf16.mxu0 0
        %6878 = vmatmul.mubr.bf16.gmra.mrb[0].mxu0 %v6724
        %v6879 = vpop.f32.mrb[0].mxu0
        %v6880 = vadd.f32 0.0, %v6879
        %v6881 = vpop.f32.mrb[0].mxu0
        %v6882 = vpop.f32.mrb[0].mxu0
        %v6883 = vadd.f32 0.0, %v6882
        %v6884 = vpop.f32.mrb[0].mxu0
        %6885 = vmatprep.mubr.bf16.mxu0 0
        %6886 = vmatmul.mubr.bf16.gmra.mrb[0].mxu0 %v6727
        %v6887 = vpop.f32.mrb[0].mxu0
        %v6888 = vadd.f32 0.0, %v6887
        %v6889 = vpop.f32.mrb[0].mxu0
        %v6890 = vpop.f32.mrb[0].mxu0
        %v6891 = vadd.f32 0.0, %v6890
        %v6892 = vpop.f32.mrb[0].mxu0
        %6893 = vmatprep.mubr.bf16.mxu0 0
        %6894 = vmatmul.mubr.bf16.gmra.mrb[0].mxu0 %v6730
        %v6895 = vpop.f32.mrb[0].mxu0
        %v6896 = vadd.f32 0.0, %v6895
        %v6897 = vpop.f32.mrb[0].mxu0
        %v6898 = vpop.f32.mrb[0].mxu0
        %v6899 = vadd.f32 0.0, %v6898
        %v6900 = vpop.f32.mrb[0].mxu0
        %6901 = vmatprep.mubr.bf16.mxu0 0
        %6902 = vmatmul.mubr.bf16.gmra.mrb[0].mxu0 %v6733
        %v6903 = vpop.f32.mrb[0].mxu0
        %v6904 = vadd.f32 0.0, %v6903
        %v6905 = vpop.f32.mrb[0].mxu0
        %v6906 = vpop.f32.mrb[0].mxu0
        %v6907 = vadd.f32 0.0, %v6906
        %v6908 = vpop.f32.mrb[0].mxu0
        %6909 = vmatprep.mubr.bf16.mxu0 0
        %6910 = vmatmul.mubr.bf16.gmra.mrb[0].mxu0 %v6736
        %v6911 = vpop.f32.mrb[0].mxu0
        %v6912 = vadd.f32 0.0, %v6911
        %v6913 = vpop.f32.mrb[0].mxu0
        %v6914 = vpop.f32.mrb[0].mxu0
        %v6915 = vadd.f32 0.0, %v6914
        %v6916 = vpop.f32.mrb[0].mxu0
        %6917 = vmatprep.mubr.bf16.mxu0 0
        %6918 = vmatmul.mubr.bf16.gmra.mrb[0].mxu0 %v6739
        %v6919 = vpop.f32.mrb[0].mxu0
        %v6920 = vadd.f32 0.0, %v6919
        %v6921 = vpop.f32.mrb[0].mxu0
        %v6922 = vpop.f32.mrb[0].mxu0
        %v6923 = vadd.f32 0.0, %v6922
        %v6924 = vpop.f32.mrb[0].mxu0
        %6925 = vdwg.mxu0
        %6926 = vmax.xlane.f32.xlu0 %v6800
        %v6927 = vpop.xlane.xlu0 %6926
        %6928 = vmax.xlane.f32.xlu0 %v6803
        %v6929 = vpop.xlane.xlu0 %6928
        %6930 = vmax.xlane.f32.xlu0 %v6808
        %v6931 = vpop.xlane.xlu0 %6930
        %6932 = vmax.xlane.f32.xlu0 %v6811
        %v6933 = vpop.xlane.xlu0 %6932
        %6934 = vmax.xlane.f32.xlu0 %v6816
        %v6935 = vpop.xlane.xlu0 %6934
        %6936 = vmax.xlane.f32.xlu0 %v6819
        %v6937 = vpop.xlane.xlu0 %6936
        %6938 = vmax.xlane.f32.xlu0 %v6824
        %v6939 = vpop.xlane.xlu0 %6938
        %6940 = vmax.xlane.f32.xlu0 %v6827
        %v6941 = vpop.xlane.xlu0 %6940
        %6942 = vmax.xlane.f32.xlu0 %v6832
        %v6943 = vpop.xlane.xlu0 %6942
        %6944 = vmax.xlane.f32.xlu0 %v6835
        %v6945 = vpop.xlane.xlu0 %6944
        %6946 = vmax.xlane.f32.xlu0 %v6840
        %v6947 = vpop.xlane.xlu0 %6946
        %6948 = vmax.xlane.f32.xlu0 %v6843
        %v6949 = vpop.xlane.xlu0 %6948
        %6950 = vmax.xlane.f32.xlu0 %v6848
        %v6951 = vpop.xlane.xlu0 %6950
        %6952 = vmax.xlane.f32.xlu0 %v6851
        %v6953 = vpop.xlane.xlu0 %6952
        %6954 = vmax.xlane.f32.xlu0 %v6856
        %v6955 = vpop.xlane.xlu0 %6954
        %6956 = vmax.xlane.f32.xlu0 %v6859
        %v6957 = vpop.xlane.xlu0 %6956
        %6958 = vmax.xlane.f32.xlu0 %v6864
        %v6959 = vpop.xlane.xlu0 %6958
        %6960 = vmax.xlane.f32.xlu0 %v6867
        %v6961 = vpop.xlane.xlu0 %6960
        %6962 = vmax.xlane.f32.xlu0 %v6872
        %v6963 = vpop.xlane.xlu0 %6962
        %6964 = vmax.xlane.f32.xlu0 %v6875
        %v6965 = vpop.xlane.xlu0 %6964
        %6966 = vmax.xlane.f32.xlu0 %v6880
        %v6967 = vpop.xlane.xlu0 %6966
        %6968 = vmax.xlane.f32.xlu0 %v6883
        %v6969 = vpop.xlane.xlu0 %6968
        %6970 = vmax.xlane.f32.xlu0 %v6888
        %v6971 = vpop.xlane.xlu0 %6970
        %6972 = vmax.xlane.f32.xlu0 %v6891
        %v6973 = vpop.xlane.xlu0 %6972
        %6974 = vmax.xlane.f32.xlu0 %v6896
        %v6975 = vpop.xlane.xlu0 %6974
        %6976 = vmax.xlane.f32.xlu0 %v6899
        %v6977 = vpop.xlane.xlu0 %6976
        %6978 = vmax.xlane.f32.xlu0 %v6904
        %v6979 = vpop.xlane.xlu0 %6978
        %6980 = vmax.xlane.f32.xlu0 %v6907
        %v6981 = vpop.xlane.xlu0 %6980
        %6982 = vmax.xlane.f32.xlu0 %v6912
        %v6983 = vpop.xlane.xlu0 %6982
        %6984 = vmax.xlane.f32.xlu0 %v6915
        %v6985 = vpop.xlane.xlu0 %6984
        %6986 = vmax.xlane.f32.xlu0 %v6920
        %v6987 = vpop.xlane.xlu0 %6986
        %6988 = vmax.xlane.f32.xlu0 %v6923
        %v6989 = vpop.xlane.xlu0 %6988
        %v6990 = vsub.f32 %v6800, %v6927
        %v6991 = vsub.f32 %v6803, %v6929
        %v6992 = vsub.f32 %v6808, %v6931
        %v6993 = vsub.f32 %v6811, %v6933
        %v6994 = vsub.f32 %v6816, %v6935
        %v6995 = vsub.f32 %v6819, %v6937
        %v6996 = vsub.f32 %v6824, %v6939
        %v6997 = vsub.f32 %v6827, %v6941
        %v6998 = vsub.f32 %v6832, %v6943
        %v6999 = vsub.f32 %v6835, %v6945
        %v7000 = vsub.f32 %v6840, %v6947
        %v7001 = vsub.f32 %v6843, %v6949
        %v7002 = vsub.f32 %v6848, %v6951
        %v7003 = vsub.f32 %v6851, %v6953
        %v7004 = vsub.f32 %v6856, %v6955
        %v7005 = vsub.f32 %v6859, %v6957
        %v7006 = vsub.f32 %v6864, %v6959
        %v7007 = vsub.f32 %v6867, %v6961
        %v7008 = vsub.f32 %v6872, %v6963
        %v7009 = vsub.f32 %v6875, %v6965
        %v7010 = vsub.f32 %v6880, %v6967
        %v7011 = vsub.f32 %v6883, %v6969
        %v7012 = vsub.f32 %v6888, %v6971
        %v7013 = vsub.f32 %v6891, %v6973
        %v7014 = vsub.f32 %v6896, %v6975
        %v7015 = vsub.f32 %v6899, %v6977
        %v7016 = vsub.f32 %v6904, %v6979
        %v7017 = vsub.f32 %v6907, %v6981
        %v7018 = vsub.f32 %v6912, %v6983
        %v7019 = vsub.f32 %v6915, %v6985
        %v7020 = vsub.f32 %v6920, %v6987
        %v7021 = vsub.f32 %v6923, %v6989
        %v7022 = vmul.f32 %v6990, 1.442695
        %v7023 = vpow.pop %v7022
        %v7024 = vmul.f32 %v6991, 1.442695
        %v7025 = vpow.pop %v7024
        %v7026 = vmul.f32 %v6992, 1.442695
        %v7027 = vpow.pop %v7026
        %v7028 = vmul.f32 %v6993, 1.442695
        %v7029 = vpow.pop %v7028
        %v7030 = vmul.f32 %v6994, 1.442695
        %v7031 = vpow.pop %v7030
        %v7032 = vmul.f32 %v6995, 1.442695
        %v7033 = vpow.pop %v7032
        %v7034 = vmul.f32 %v6996, 1.442695
        %v7035 = vpow.pop %v7034
        %v7036 = vmul.f32 %v6997, 1.442695
        %v7037 = vpow.pop %v7036
        %v7038 = vmul.f32 %v6998, 1.442695
        %v7039 = vpow.pop %v7038
        %v7040 = vmul.f32 %v6999, 1.442695
        %v7041 = vpow.pop %v7040
        %v7042 = vmul.f32 %v7000, 1.442695
        %v7043 = vpow.pop %v7042
        %v7044 = vmul.f32 %v7001, 1.442695
        %v7045 = vpow.pop %v7044
        %v7046 = vmul.f32 %v7002, 1.442695
        %v7047 = vpow.pop %v7046
        %v7048 = vmul.f32 %v7003, 1.442695
        %v7049 = vpow.pop %v7048
        %v7050 = vmul.f32 %v7004, 1.442695
        %v7051 = vpow.pop %v7050
        %v7052 = vmul.f32 %v7005, 1.442695
        %v7053 = vpow.pop %v7052
        %v7054 = vmul.f32 %v7006, 1.442695
        %v7055 = vpow.pop %v7054
        %v7056 = vmul.f32 %v7007, 1.442695
        %v7057 = vpow.pop %v7056
        %v7058 = vmul.f32 %v7008, 1.442695
        %v7059 = vpow.pop %v7058
        %v7060 = vmul.f32 %v7009, 1.442695
        %v7061 = vpow.pop %v7060
        %v7062 = vmul.f32 %v7010, 1.442695
        %v7063 = vpow.pop %v7062
        %v7064 = vmul.f32 %v7011, 1.442695
        %v7065 = vpow.pop %v7064
        %v7066 = vmul.f32 %v7012, 1.442695
        %v7067 = vpow.pop %v7066
        %v7068 = vmul.f32 %v7013, 1.442695
        %v7069 = vpow.pop %v7068
        %v7070 = vmul.f32 %v7014, 1.442695
        %v7071 = vpow.pop %v7070
        %v7072 = vmul.f32 %v7015, 1.442695
        %v7073 = vpow.pop %v7072
        %v7074 = vmul.f32 %v7016, 1.442695
        %v7075 = vpow.pop %v7074
        %v7076 = vmul.f32 %v7017, 1.442695
        %v7077 = vpow.pop %v7076
        %v7078 = vmul.f32 %v7018, 1.442695
        %v7079 = vpow.pop %v7078
        %v7080 = vmul.f32 %v7019, 1.442695
        %v7081 = vpow.pop %v7080
        %v7082 = vmul.f32 %v7020, 1.442695
        %v7083 = vpow.pop %v7082
        %v7084 = vmul.f32 %v7021, 1.442695
        %v7085 = vpow.pop %v7084
        %7086 = vadd.xlane.f32.xlu0 %v7023
        %v7087 = vpop.xlane.xlu0 %7086
        %7088 = vadd.xlane.f32.xlu0 %v7025
        %v7089 = vpop.xlane.xlu0 %7088
        %7090 = vadd.xlane.f32.xlu0 %v7027
        %v7091 = vpop.xlane.xlu0 %7090
        %7092 = vadd.xlane.f32.xlu0 %v7029
        %v7093 = vpop.xlane.xlu0 %7092
        %7094 = vadd.xlane.f32.xlu0 %v7031
        %v7095 = vpop.xlane.xlu0 %7094
        %7096 = vadd.xlane.f32.xlu0 %v7033
        %v7097 = vpop.xlane.xlu0 %7096
        %7098 = vadd.xlane.f32.xlu0 %v7035
        %v7099 = vpop.xlane.xlu0 %7098
        %7100 = vadd.xlane.f32.xlu0 %v7037
        %v7101 = vpop.xlane.xlu0 %7100
        %7102 = vadd.xlane.f32.xlu0 %v7039
        %v7103 = vpop.xlane.xlu0 %7102
        %7104 = vadd.xlane.f32.xlu0 %v7041
        %v7105 = vpop.xlane.xlu0 %7104
        %7106 = vadd.xlane.f32.xlu0 %v7043
        %v7107 = vpop.xlane.xlu0 %7106
        %7108 = vadd.xlane.f32.xlu0 %v7045
        %v7109 = vpop.xlane.xlu0 %7108
        %7110 = vadd.xlane.f32.xlu0 %v7047
        %v7111 = vpop.xlane.xlu0 %7110
        %7112 = vadd.xlane.f32.xlu0 %v7049
        %v7113 = vpop.xlane.xlu0 %7112
        %7114 = vadd.xlane.f32.xlu0 %v7051
        %v7115 = vpop.xlane.xlu0 %7114
        %7116 = vadd.xlane.f32.xlu0 %v7053
        %v7117 = vpop.xlane.xlu0 %7116
        %7118 = vadd.xlane.f32.xlu0 %v7055
        %v7119 = vpop.xlane.xlu0 %7118
        %7120 = vadd.xlane.f32.xlu0 %v7057
        %v7121 = vpop.xlane.xlu0 %7120
        %7122 = vadd.xlane.f32.xlu0 %v7059
        %v7123 = vpop.xlane.xlu0 %7122
        %7124 = vadd.xlane.f32.xlu0 %v7061
        %v7125 = vpop.xlane.xlu0 %7124
        %7126 = vadd.xlane.f32.xlu0 %v7063
        %v7127 = vpop.xlane.xlu0 %7126
        %7128 = vadd.xlane.f32.xlu0 %v7065
        %v7129 = vpop.xlane.xlu0 %7128
        %7130 = vadd.xlane.f32.xlu0 %v7067
        %v7131 = vpop.xlane.xlu0 %7130
        %7132 = vadd.xlane.f32.xlu0 %v7069
        %v7133 = vpop.xlane.xlu0 %7132
        %7134 = vadd.xlane.f32.xlu0 %v7071
        %v7135 = vpop.xlane.xlu0 %7134
        %7136 = vadd.xlane.f32.xlu0 %v7073
        %v7137 = vpop.xlane.xlu0 %7136
        %7138 = vadd.xlane.f32.xlu0 %v7075
        %v7139 = vpop.xlane.xlu0 %7138
        %7140 = vadd.xlane.f32.xlu0 %v7077
        %v7141 = vpop.xlane.xlu0 %7140
        %7142 = vadd.xlane.f32.xlu0 %v7079
        %v7143 = vpop.xlane.xlu0 %7142
        %7144 = vadd.xlane.f32.xlu0 %v7081
        %v7145 = vpop.xlane.xlu0 %7144
        %7146 = vadd.xlane.f32.xlu0 %v7083
        %v7147 = vpop.xlane.xlu0 %7146
        %7148 = vadd.xlane.f32.xlu0 %v7085
        %v7149 = vpop.xlane.xlu0 %7148
        %v7150 = vrcp.pop %v7087
        %v7151 = vrcp.pop %v7089
        %v7152 = vrcp.pop %v7091
        %v7153 = vrcp.pop %v7093
        %v7154 = vrcp.pop %v7095
        %v7155 = vrcp.pop %v7097
        %v7156 = vrcp.pop %v7099
        %v7157 = vrcp.pop %v7101
        %v7158 = vrcp.pop %v7103
        %v7159 = vrcp.pop %v7105
        %v7160 = vrcp.pop %v7107
        %v7161 = vrcp.pop %v7109
        %v7162 = vrcp.pop %v7111
        %v7163 = vrcp.pop %v7113
        %v7164 = vrcp.pop %v7115
        %v7165 = vrcp.pop %v7117
        %v7166 = vrcp.pop %v7119
        %v7167 = vrcp.pop %v7121
        %v7168 = vrcp.pop %v7123
        %v7169 = vrcp.pop %v7125
        %v7170 = vrcp.pop %v7127
        %v7171 = vrcp.pop %v7129
        %v7172 = vrcp.pop %v7131
        %v7173 = vrcp.pop %v7133
        %v7174 = vrcp.pop %v7135
        %v7175 = vrcp.pop %v7137
        %v7176 = vrcp.pop %v7139
        %v7177 = vrcp.pop %v7141
        %v7178 = vrcp.pop %v7143
        %v7179 = vrcp.pop %v7145
        %v7180 = vrcp.pop %v7147
        %v7181 = vrcp.pop %v7149
        %v7182 = vmul.f32 %v7023, %v7150
        %v7183 = vmul.f32 %v7025, %v7151
        %v7184 = vmul.f32 %v7027, %v7152
        %v7185 = vmul.f32 %v7029, %v7153
        %v7186 = vmul.f32 %v7031, %v7154
        %v7187 = vmul.f32 %v7033, %v7155
        %v7188 = vmul.f32 %v7035, %v7156
        %v7189 = vmul.f32 %v7037, %v7157
        %v7190 = vmul.f32 %v7039, %v7158
        %v7191 = vmul.f32 %v7041, %v7159
        %v7192 = vmul.f32 %v7043, %v7160
        %v7193 = vmul.f32 %v7045, %v7161
        %v7194 = vmul.f32 %v7047, %v7162
        %v7195 = vmul.f32 %v7049, %v7163
        %v7196 = vmul.f32 %v7051, %v7164
        %v7197 = vmul.f32 %v7053, %v7165
        %v7198 = vmul.f32 %v7055, %v7166
        %v7199 = vmul.f32 %v7057, %v7167
        %v7200 = vmul.f32 %v7059, %v7168
        %v7201 = vmul.f32 %v7061, %v7169
        %v7202 = vmul.f32 %v7063, %v7170
        %v7203 = vmul.f32 %v7065, %v7171
        %v7204 = vmul.f32 %v7067, %v7172
        %v7205 = vmul.f32 %v7069, %v7173
        %v7206 = vmul.f32 %v7071, %v7174
        %v7207 = vmul.f32 %v7073, %v7175
        %v7208 = vmul.f32 %v7075, %v7176
        %v7209 = vmul.f32 %v7077, %v7177
        %v7210 = vmul.f32 %v7079, %v7178
        %v7211 = vmul.f32 %v7081, %v7179
        %v7212 = vmul.f32 %v7083, %v7180
        %v7213 = vmul.f32 %v7085, %v7181
        %v7214 = vld [vmem:[#allocation5] sm:$0xff]
        %v7215 = vld [vmem:[#allocation5 + $0x8] sm:$0xff]
        %v7216 = vld [vmem:[#allocation5 + $0x10] sm:$0xff]
        %v7217 = vld [vmem:[#allocation5 + $0x18] sm:$0xff]
        %v7218 = vld [vmem:[#allocation5 + $0x20] sm:$0xff]
        %v7219 = vld [vmem:[#allocation5 + $0x28] sm:$0xff]
        %v7220 = vld [vmem:[#allocation5 + $0x30] sm:$0xff]
        %v7221 = vld [vmem:[#allocation5 + $0x38] sm:$0xff]
        %v7222 = vld [vmem:[#allocation5 + $0x40] sm:$0xff]
        %v7223 = vld [vmem:[#allocation5 + $0x48] sm:$0xff]
        %v7224 = vld [vmem:[#allocation5 + $0x50] sm:$0xff]
        %v7225 = vld [vmem:[#allocation5 + $0x58] sm:$0xff]
        %v7226 = vld [vmem:[#allocation5 + $0x60] sm:$0xff]
        %v7227 = vld [vmem:[#allocation5 + $0x68] sm:$0xff]
        %v7228 = vld [vmem:[#allocation5 + $0x70] sm:$0xff]
        %v7229 = vld [vmem:[#allocation5 + $0x78] sm:$0xff]
        %v7230 = vld [vmem:[#allocation5 + $0x80] sm:$0xff]
        %v7231 = vld [vmem:[#allocation5 + $0x88] sm:$0xff]
        %v7232 = vld [vmem:[#allocation5 + $0x90] sm:$0xff]
        %v7233 = vld [vmem:[#allocation5 + $0x98] sm:$0xff]
        %v7234 = vld [vmem:[#allocation5 + $0xa0] sm:$0xff]
        %v7235 = vld [vmem:[#allocation5 + $0xa8] sm:$0xff]
        %v7236 = vld [vmem:[#allocation5 + $0xb0] sm:$0xff]
        %v7237 = vld [vmem:[#allocation5 + $0xb8] sm:$0xff]
        %v7238 = vld [vmem:[#allocation5 + $0xc0] sm:$0xff]
        %v7239 = vld [vmem:[#allocation5 + $0xc8] sm:$0xff]
        %v7240 = vld [vmem:[#allocation5 + $0xd0] sm:$0xff]
        %v7241 = vld [vmem:[#allocation5 + $0xd8] sm:$0xff]
        %v7242 = vld [vmem:[#allocation5 + $0xe0] sm:$0xff]
        %v7243 = vld [vmem:[#allocation5 + $0xe8] sm:$0xff]
        %v7244 = vld [vmem:[#allocation5 + $0xf0] sm:$0xff]
        %v7245 = vld [vmem:[#allocation5 + $0xf8] sm:$0xff]
        %v7246 = vpack.c.bf16 %v7183, %v7182
        %v7247 = vpack.c.bf16 %v7185, %v7184
        %v7248 = vpack.c.bf16 %v7187, %v7186
        %v7249 = vpack.c.bf16 %v7189, %v7188
        %v7250 = vpack.c.bf16 %v7191, %v7190
        %v7251 = vpack.c.bf16 %v7193, %v7192
        %v7252 = vpack.c.bf16 %v7195, %v7194
        %v7253 = vpack.c.bf16 %v7197, %v7196
        %v7254 = vpack.c.bf16 %v7199, %v7198
        %v7255 = vpack.c.bf16 %v7201, %v7200
        %v7256 = vpack.c.bf16 %v7203, %v7202
        %v7257 = vpack.c.bf16 %v7205, %v7204
        %v7258 = vpack.c.bf16 %v7207, %v7206
        %v7259 = vpack.c.bf16 %v7209, %v7208
        %v7260 = vpack.c.bf16 %v7211, %v7210
        %v7261 = vpack.c.bf16 %v7213, %v7212
        %s7262 = scalar_lea.vmem [#allocation4], 320
        %v7263 = vld [vmem:[%s7262] sm:$0xff]
        %v7264 = vld [vmem:[%s7262 + $0x8] sm:$0xff]
        %v7265 = vld [vmem:[%s7262 + $0x10] sm:$0xff]
        %v7266 = vld [vmem:[%s7262 + $0x18] sm:$0xff]
        %v7267 = vld [vmem:[%s7262 + $0x20] sm:$0xff]
        %v7268 = vld [vmem:[%s7262 + $0x28] sm:$0xff]
        %v7269 = vld [vmem:[%s7262 + $0x30] sm:$0xff]
        %v7270 = vld [vmem:[%s7262 + $0x38] sm:$0xff]
        %7271 = vmatprep.subr.bf16.mxu0 0
        %7272 = vmatpush1.bf16.msra.mxu0 %v7263
        %7273 = vmatprep.subr.bf16.mxu0 0
        %7274 = vmatpush1.bf16.msra.mxu0 %v7264
        %7275 = vmatprep.subr.bf16.mxu0 0
        %7276 = vmatpush1.bf16.msra.mxu0 %v7265
        %7277 = vmatprep.subr.bf16.mxu0 0
        %7278 = vmatpush1.bf16.msra.mxu0 %v7266
        %7279 = vmatprep.subr.bf16.mxu0 0
        %7280 = vmatpush1.bf16.msra.mxu0 %v7267
        %7281 = vmatprep.subr.bf16.mxu0 0
        %7282 = vmatpush1.bf16.msra.mxu0 %v7268
        %7283 = vmatprep.subr.bf16.mxu0 0
        %7284 = vmatpush1.bf16.msra.mxu0 %v7269
        %7285 = vmatprep.subr.bf16.mxu0 0
        %7286 = vmatpush1.bf16.msra.mxu0 %v7270
        %7287 = vmatprep.subr.bf16.mxu0 0
        %7288 = vmatpush1.bf16.msra.mxu0 0
        %7289 = vmatprep.subr.bf16.mxu0 0
        %7290 = vmatpush1.bf16.msra.mxu0 0
        %7291 = vmatprep.subr.bf16.mxu0 0
        %7292 = vmatpush1.bf16.msra.mxu0 0
        %7293 = vmatprep.subr.bf16.mxu0 0
        %7294 = vmatpush1.bf16.msra.mxu0 0
        %7295 = vmatprep.subr.bf16.mxu0 0
        %7296 = vmatpush1.bf16.msra.mxu0 0
        %7297 = vmatprep.subr.bf16.mxu0 0
        %7298 = vmatpush1.bf16.msra.mxu0 0
        %7299 = vmatprep.subr.bf16.mxu0 0
        %7300 = vmatpush1.bf16.msra.mxu0 0
        %7301 = vmatprep.subr.bf16.mxu0 0
        %7302 = vmatpush1.bf16.msra.mxu0 0
        %7303 = vmatprep.mubr.bf16.mxu0 0
        %7304 = vmatmul.mubr.bf16.gmra.mrb[0].mxu0 %v7246
        %v7305 = vpop.f32.mrb[0].mxu0
        %v7306 = vadd.f32 0.0, %v7305
        %v7307 = vpop.f32.mrb[0].mxu0
        %v7308 = vpop.f32.mrb[0].mxu0
        %v7309 = vadd.f32 0.0, %v7308
        %v7310 = vpop.f32.mrb[0].mxu0
        %7311 = vmatprep.mubr.bf16.mxu0 0
        %7312 = vmatmul.mubr.bf16.gmra.mrb[0].mxu0 %v7247
        %v7313 = vpop.f32.mrb[0].mxu0
        %v7314 = vadd.f32 0.0, %v7313
        %v7315 = vpop.f32.mrb[0].mxu0
        %v7316 = vpop.f32.mrb[0].mxu0
        %v7317 = vadd.f32 0.0, %v7316
        %v7318 = vpop.f32.mrb[0].mxu0
        %7319 = vmatprep.mubr.bf16.mxu0 0
        %7320 = vmatmul.mubr.bf16.gmra.mrb[0].mxu0 %v7248
        %v7321 = vpop.f32.mrb[0].mxu0
        %v7322 = vadd.f32 0.0, %v7321
        %v7323 = vpop.f32.mrb[0].mxu0
        %v7324 = vpop.f32.mrb[0].mxu0
        %v7325 = vadd.f32 0.0, %v7324
        %v7326 = vpop.f32.mrb[0].mxu0
        %7327 = vmatprep.mubr.bf16.mxu0 0
        %7328 = vmatmul.mubr.bf16.gmra.mrb[0].mxu0 %v7249
        %v7329 = vpop.f32.mrb[0].mxu0
        %v7330 = vadd.f32 0.0, %v7329
        %v7331 = vpop.f32.mrb[0].mxu0
        %v7332 = vpop.f32.mrb[0].mxu0
        %v7333 = vadd.f32 0.0, %v7332
        %v7334 = vpop.f32.mrb[0].mxu0
        %7335 = vmatprep.mubr.bf16.mxu0 0
        %7336 = vmatmul.mubr.bf16.gmra.mrb[0].mxu0 %v7250
        %v7337 = vpop.f32.mrb[0].mxu0
        %v7338 = vadd.f32 0.0, %v7337
        %v7339 = vpop.f32.mrb[0].mxu0
        %v7340 = vpop.f32.mrb[0].mxu0
        %v7341 = vadd.f32 0.0, %v7340
        %v7342 = vpop.f32.mrb[0].mxu0
        %7343 = vmatprep.mubr.bf16.mxu0 0
        %7344 = vmatmul.mubr.bf16.gmra.mrb[0].mxu0 %v7251
        %v7345 = vpop.f32.mrb[0].mxu0
        %v7346 = vadd.f32 0.0, %v7345
        %v7347 = vpop.f32.mrb[0].mxu0
        %v7348 = vpop.f32.mrb[0].mxu0
        %v7349 = vadd.f32 0.0, %v7348
        %v7350 = vpop.f32.mrb[0].mxu0
        %7351 = vmatprep.mubr.bf16.mxu0 0
        %7352 = vmatmul.mubr.bf16.gmra.mrb[0].mxu0 %v7252
        %v7353 = vpop.f32.mrb[0].mxu0
        %v7354 = vadd.f32 0.0, %v7353
        %v7355 = vpop.f32.mrb[0].mxu0
        %v7356 = vpop.f32.mrb[0].mxu0
        %v7357 = vadd.f32 0.0, %v7356
        %v7358 = vpop.f32.mrb[0].mxu0
        %7359 = vmatprep.mubr.bf16.mxu0 0
        %7360 = vmatmul.mubr.bf16.gmra.mrb[0].mxu0 %v7253
        %v7361 = vpop.f32.mrb[0].mxu0
        %v7362 = vadd.f32 0.0, %v7361
        %v7363 = vpop.f32.mrb[0].mxu0
        %v7364 = vpop.f32.mrb[0].mxu0
        %v7365 = vadd.f32 0.0, %v7364
        %v7366 = vpop.f32.mrb[0].mxu0
        %7367 = vmatprep.mubr.bf16.mxu0 0
        %7368 = vmatmul.mubr.bf16.gmra.mrb[0].mxu0 %v7254
        %v7369 = vpop.f32.mrb[0].mxu0
        %v7370 = vadd.f32 0.0, %v7369
        %v7371 = vpop.f32.mrb[0].mxu0
        %v7372 = vpop.f32.mrb[0].mxu0
        %v7373 = vadd.f32 0.0, %v7372
        %v7374 = vpop.f32.mrb[0].mxu0
        %7375 = vmatprep.mubr.bf16.mxu0 0
        %7376 = vmatmul.mubr.bf16.gmra.mrb[0].mxu0 %v7255
        %v7377 = vpop.f32.mrb[0].mxu0
        %v7378 = vadd.f32 0.0, %v7377
        %v7379 = vpop.f32.mrb[0].mxu0
        %v7380 = vpop.f32.mrb[0].mxu0
        %v7381 = vadd.f32 0.0, %v7380
        %v7382 = vpop.f32.mrb[0].mxu0
        %7383 = vmatprep.mubr.bf16.mxu0 0
        %7384 = vmatmul.mubr.bf16.gmra.mrb[0].mxu0 %v7256
        %v7385 = vpop.f32.mrb[0].mxu0
        %v7386 = vadd.f32 0.0, %v7385
        %v7387 = vpop.f32.mrb[0].mxu0
        %v7388 = vpop.f32.mrb[0].mxu0
        %v7389 = vadd.f32 0.0, %v7388
        %v7390 = vpop.f32.mrb[0].mxu0
        %7391 = vmatprep.mubr.bf16.mxu0 0
        %7392 = vmatmul.mubr.bf16.gmra.mrb[0].mxu0 %v7257
        %v7393 = vpop.f32.mrb[0].mxu0
        %v7394 = vadd.f32 0.0, %v7393
        %v7395 = vpop.f32.mrb[0].mxu0
        %v7396 = vpop.f32.mrb[0].mxu0
        %v7397 = vadd.f32 0.0, %v7396
        %v7398 = vpop.f32.mrb[0].mxu0
        %7399 = vmatprep.mubr.bf16.mxu0 0
        %7400 = vmatmul.mubr.bf16.gmra.mrb[0].mxu0 %v7258
        %v7401 = vpop.f32.mrb[0].mxu0
        %v7402 = vadd.f32 0.0, %v7401
        %v7403 = vpop.f32.mrb[0].mxu0
        %v7404 = vpop.f32.mrb[0].mxu0
        %v7405 = vadd.f32 0.0, %v7404
        %v7406 = vpop.f32.mrb[0].mxu0
        %7407 = vmatprep.mubr.bf16.mxu0 0
        %7408 = vmatmul.mubr.bf16.gmra.mrb[0].mxu0 %v7259
        %v7409 = vpop.f32.mrb[0].mxu0
        %v7410 = vadd.f32 0.0, %v7409
        %v7411 = vpop.f32.mrb[0].mxu0
        %v7412 = vpop.f32.mrb[0].mxu0
        %v7413 = vadd.f32 0.0, %v7412
        %v7414 = vpop.f32.mrb[0].mxu0
        %7415 = vmatprep.mubr.bf16.mxu0 0
        %7416 = vmatmul.mubr.bf16.gmra.mrb[0].mxu0 %v7260
        %v7417 = vpop.f32.mrb[0].mxu0
        %v7418 = vadd.f32 0.0, %v7417
        %v7419 = vpop.f32.mrb[0].mxu0
        %v7420 = vpop.f32.mrb[0].mxu0
        %v7421 = vadd.f32 0.0, %v7420
        %v7422 = vpop.f32.mrb[0].mxu0
        %7423 = vmatprep.mubr.bf16.mxu0 0
        %7424 = vmatmul.mubr.bf16.gmra.mrb[0].mxu0 %v7261
        %v7425 = vpop.f32.mrb[0].mxu0
        %v7426 = vadd.f32 0.0, %v7425
        %v7427 = vpop.f32.mrb[0].mxu0
        %v7428 = vpop.f32.mrb[0].mxu0
        %v7429 = vadd.f32 0.0, %v7428
        %v7430 = vpop.f32.mrb[0].mxu0
        %7431 = vdwg.mxu0
        %v7432 = vadd.f32 %v7214, %v7306
        %v7433 = vadd.f32 %v7215, %v7309
        %v7434 = vadd.f32 %v7216, %v7314
        %v7435 = vadd.f32 %v7217, %v7317
        %v7436 = vadd.f32 %v7218, %v7322
        %v7437 = vadd.f32 %v7219, %v7325
        %v7438 = vadd.f32 %v7220, %v7330
        %v7439 = vadd.f32 %v7221, %v7333
        %v7440 = vadd.f32 %v7222, %v7338
        %v7441 = vadd.f32 %v7223, %v7341
        %v7442 = vadd.f32 %v7224, %v7346
        %v7443 = vadd.f32 %v7225, %v7349
        %v7444 = vadd.f32 %v7226, %v7354
        %v7445 = vadd.f32 %v7227, %v7357
        %v7446 = vadd.f32 %v7228, %v7362
        %v7447 = vadd.f32 %v7229, %v7365
        %v7448 = vadd.f32 %v7230, %v7370
        %v7449 = vadd.f32 %v7231, %v7373
        %v7450 = vadd.f32 %v7232, %v7378
        %v7451 = vadd.f32 %v7233, %v7381
        %v7452 = vadd.f32 %v7234, %v7386
        %v7453 = vadd.f32 %v7235, %v7389
        %v7454 = vadd.f32 %v7236, %v7394
        %v7455 = vadd.f32 %v7237, %v7397
        %v7456 = vadd.f32 %v7238, %v7402
        %v7457 = vadd.f32 %v7239, %v7405
        %v7458 = vadd.f32 %v7240, %v7410
        %v7459 = vadd.f32 %v7241, %v7413
        %v7460 = vadd.f32 %v7242, %v7418
        %v7461 = vadd.f32 %v7243, %v7421
        %v7462 = vadd.f32 %v7244, %v7426
        %v7463 = vadd.f32 %v7245, %v7429
        %7464 = vst [vmem:[#allocation5] sm:$0xff] %v7432
        %7465 = vst [vmem:[#allocation5 + $0x8] sm:$0xff] %v7433
        %7466 = vst [vmem:[#allocation5 + $0x10] sm:$0xff] %v7434
        %7467 = vst [vmem:[#allocation5 + $0x18] sm:$0xff] %v7435
        %7468 = vst [vmem:[#allocation5 + $0x20] sm:$0xff] %v7436
        %7469 = vst [vmem:[#allocation5 + $0x28] sm:$0xff] %v7437
        %7470 = vst [vmem:[#allocation5 + $0x30] sm:$0xff] %v7438
        %7471 = vst [vmem:[#allocation5 + $0x38] sm:$0xff] %v7439
        %7472 = vst [vmem:[#allocation5 + $0x40] sm:$0xff] %v7440
        %7473 = vst [vmem:[#allocation5 + $0x48] sm:$0xff] %v7441
        %7474 = vst [vmem:[#allocation5 + $0x50] sm:$0xff] %v7442
        %7475 = vst [vmem:[#allocation5 + $0x58] sm:$0xff] %v7443
        %7476 = vst [vmem:[#allocation5 + $0x60] sm:$0xff] %v7444
        %7477 = vst [vmem:[#allocation5 + $0x68] sm:$0xff] %v7445
        %7478 = vst [vmem:[#allocation5 + $0x70] sm:$0xff] %v7446
        %7479 = vst [vmem:[#allocation5 + $0x78] sm:$0xff] %v7447
        %7480 = vst [vmem:[#allocation5 + $0x80] sm:$0xff] %v7448
        %7481 = vst [vmem:[#allocation5 + $0x88] sm:$0xff] %v7449
        %7482 = vst [vmem:[#allocation5 + $0x90] sm:$0xff] %v7450
        %7483 = vst [vmem:[#allocation5 + $0x98] sm:$0xff] %v7451
        %7484 = vst [vmem:[#allocation5 + $0xa0] sm:$0xff] %v7452
        %7485 = vst [vmem:[#allocation5 + $0xa8] sm:$0xff] %v7453
        %7486 = vst [vmem:[#allocation5 + $0xb0] sm:$0xff] %v7454
        %7487 = vst [vmem:[#allocation5 + $0xb8] sm:$0xff] %v7455
        %7488 = vst [vmem:[#allocation5 + $0xc0] sm:$0xff] %v7456
        %7489 = vst [vmem:[#allocation5 + $0xc8] sm:$0xff] %v7457
        %7490 = vst [vmem:[#allocation5 + $0xd0] sm:$0xff] %v7458
        %7491 = vst [vmem:[#allocation5 + $0xd8] sm:$0xff] %v7459
        %7492 = vst [vmem:[#allocation5 + $0xe0] sm:$0xff] %v7460
        %7493 = vst [vmem:[#allocation5 + $0xe8] sm:$0xff] %v7461
        %7494 = vst [vmem:[#allocation5 + $0xf0] sm:$0xff] %v7462
        %7495 = vst [vmem:[#allocation5 + $0xf8] sm:$0xff] %v7463
        %v7496 = vld [vmem:[#allocation2] sm:$0xff]
        %v7497 = vld [vmem:[#allocation2 + $0x8] sm:$0xff]
        %v7498 = vld [vmem:[#allocation2 + $0x10] sm:$0xff]
        %v7499 = vld [vmem:[#allocation2 + $0x18] sm:$0xff]
        %v7500 = vld [vmem:[#allocation2 + $0x20] sm:$0xff]
        %v7501 = vld [vmem:[#allocation2 + $0x28] sm:$0xff]
        %v7502 = vld [vmem:[#allocation2 + $0x30] sm:$0xff]
        %v7503 = vld [vmem:[#allocation2 + $0x38] sm:$0xff]
        %v7504 = vld [vmem:[#allocation2 + $0x40] sm:$0xff]
        %v7505 = vld [vmem:[#allocation2 + $0x48] sm:$0xff]
        %v7506 = vld [vmem:[#allocation2 + $0x50] sm:$0xff]
        %v7507 = vld [vmem:[#allocation2 + $0x58] sm:$0xff]
        %v7508 = vld [vmem:[#allocation2 + $0x60] sm:$0xff]
        %v7509 = vld [vmem:[#allocation2 + $0x68] sm:$0xff]
        %v7510 = vld [vmem:[#allocation2 + $0x70] sm:$0xff]
        %v7511 = vld [vmem:[#allocation2 + $0x78] sm:$0xff]
        %v7512 = vld [vmem:[#allocation3] sm:$0xff]
        %v7513 = vld [vmem:[#allocation3 + $0x8] sm:$0xff]
        %v7514 = vld [vmem:[#allocation3 + $0x10] sm:$0xff]
        %v7515 = vld [vmem:[#allocation3 + $0x18] sm:$0xff]
        %v7516 = vld [vmem:[#allocation3 + $0x20] sm:$0xff]
        %v7517 = vld [vmem:[#allocation3 + $0x28] sm:$0xff]
        %v7518 = vld [vmem:[#allocation3 + $0x30] sm:$0xff]
        %v7519 = vld [vmem:[#allocation3 + $0x38] sm:$0xff]
        %7536 = vrot.lane.b32.xlu0 %v7496, 32
        %v7537 = vpop.permute.xlu0 %7536
        %7538 = vrot.lane.b32.xlu0 %v7497, 32
        %v7539 = vpop.permute.xlu0 %7538
        %7540 = vrot.lane.b32.xlu0 %v7498, 32
        %v7541 = vpop.permute.xlu0 %7540
        %7542 = vrot.lane.b32.xlu0 %v7499, 32
        %v7543 = vpop.permute.xlu0 %7542
        %7544 = vrot.lane.b32.xlu0 %v7500, 32
        %v7545 = vpop.permute.xlu0 %7544
        %7546 = vrot.lane.b32.xlu0 %v7501, 32
        %v7547 = vpop.permute.xlu0 %7546
        %7548 = vrot.lane.b32.xlu0 %v7502, 32
        %v7549 = vpop.permute.xlu0 %7548
        %7550 = vrot.lane.b32.xlu0 %v7503, 32
        %v7551 = vpop.permute.xlu0 %7550
        %7552 = vrot.lane.b32.xlu0 %v7504, 32
        %v7553 = vpop.permute.xlu0 %7552
        %7554 = vrot.lane.b32.xlu0 %v7505, 32
        %v7555 = vpop.permute.xlu0 %7554
        %7556 = vrot.lane.b32.xlu0 %v7506, 32
        %v7557 = vpop.permute.xlu0 %7556
        %7558 = vrot.lane.b32.xlu0 %v7507, 32
        %v7559 = vpop.permute.xlu0 %7558
        %7560 = vrot.lane.b32.xlu0 %v7508, 32
        %v7561 = vpop.permute.xlu0 %7560
        %7562 = vrot.lane.b32.xlu0 %v7509, 32
        %v7563 = vpop.permute.xlu0 %7562
        %7564 = vrot.lane.b32.xlu0 %v7510, 32
        %v7565 = vpop.permute.xlu0 %7564
        %7566 = vrot.lane.b32.xlu0 %v7511, 32
        %v7567 = vpop.permute.xlu0 %7566
        %7576 = vrot.lane.b32.xlu0 %v7512, 32
        %v7577 = vpop.permute.xlu0 %7576
        %7578 = vrot.lane.b32.xlu0 %v7513, 32
        %v7579 = vpop.permute.xlu0 %7578
        %7580 = vrot.lane.b32.xlu0 %v7514, 32
        %v7581 = vpop.permute.xlu0 %7580
        %7582 = vrot.lane.b32.xlu0 %v7515, 32
        %v7583 = vpop.permute.xlu0 %7582
        %7584 = vrot.lane.b32.xlu0 %v7516, 32
        %v7585 = vpop.permute.xlu0 %7584
        %7586 = vrot.lane.b32.xlu0 %v7517, 32
        %v7587 = vpop.permute.xlu0 %7586
        %7588 = vrot.lane.b32.xlu0 %v7518, 32
        %v7589 = vpop.permute.xlu0 %7588
        %7590 = vrot.lane.b32.xlu0 %v7519, 32
        %v7591 = vpop.permute.xlu0 %7590
        %v7593 = vsel %vm2198, %v7537, 0
        %v7596 = vsel %vm2198, %v7539, 0
        %v7599 = vsel %vm2198, %v7541, 0
        %v7602 = vsel %vm2198, %v7543, 0
        %v7605 = vsel %vm2198, %v7545, 0
        %v7608 = vsel %vm2198, %v7547, 0
        %v7611 = vsel %vm2198, %v7549, 0
        %v7614 = vsel %vm2198, %v7551, 0
        %v7617 = vsel %vm2198, %v7553, 0
        %v7620 = vsel %vm2198, %v7555, 0
        %v7623 = vsel %vm2198, %v7557, 0
        %v7626 = vsel %vm2198, %v7559, 0
        %v7629 = vsel %vm2198, %v7561, 0
        %v7632 = vsel %vm2198, %v7563, 0
        %v7635 = vsel %vm2198, %v7565, 0
        %v7638 = vsel %vm2198, %v7567, 0
        %v7641 = vsel %vm2198, %v7577, 0
        %v7644 = vsel %vm2198, %v7579, 0
        %v7647 = vsel %vm2198, %v7581, 0
        %v7650 = vsel %vm2198, %v7583, 0
        %v7653 = vsel %vm2198, %v7585, 0
        %v7656 = vsel %vm2198, %v7587, 0
        %v7659 = vsel %vm2198, %v7589, 0
        %v7662 = vsel %vm2198, %v7591, 0
        %7664 = vmatprep.subr.bf16.mxu0 0
        %7665 = vmatpush1.bf16.xpose.msra.mxu0 %v7641
        %7666 = vmatprep.subr.bf16.mxu0 0
        %7667 = vmatpush1.bf16.xpose.msra.mxu0 %v7644
        %7668 = vmatprep.subr.bf16.mxu0 0
        %7669 = vmatpush1.bf16.xpose.msra.mxu0 %v7647
        %7670 = vmatprep.subr.bf16.mxu0 0
        %7671 = vmatpush1.bf16.xpose.msra.mxu0 %v7650
        %7672 = vmatprep.subr.bf16.mxu0 0
        %7673 = vmatpush1.bf16.xpose.msra.mxu0 %v7653
        %7674 = vmatprep.subr.bf16.mxu0 0
        %7675 = vmatpush1.bf16.xpose.msra.mxu0 %v7656
        %7676 = vmatprep.subr.bf16.mxu0 0
        %7677 = vmatpush1.bf16.xpose.msra.mxu0 %v7659
        %7678 = vmatprep.subr.bf16.mxu0 0
        %7679 = vmatpush1.bf16.xpose.msra.mxu0 %v7662
        %7680 = vmatprep.subr.bf16.mxu0 0
        %7681 = vmatpush1.bf16.xpose.msra.mxu0 0
        %7682 = vmatprep.subr.bf16.mxu0 0
        %7683 = vmatpush1.bf16.xpose.msra.mxu0 0
        %7684 = vmatprep.subr.bf16.mxu0 0
        %7685 = vmatpush1.bf16.xpose.msra.mxu0 0
        %7686 = vmatprep.subr.bf16.mxu0 0
        %7687 = vmatpush1.bf16.xpose.msra.mxu0 0
        %7688 = vmatprep.subr.bf16.mxu0 0
        %7689 = vmatpush1.bf16.xpose.msra.mxu0 0
        %7690 = vmatprep.subr.bf16.mxu0 0
        %7691 = vmatpush1.bf16.xpose.msra.mxu0 0
        %7692 = vmatprep.subr.bf16.mxu0 0
        %7693 = vmatpush1.bf16.xpose.msra.mxu0 0
        %7694 = vmatprep.subr.bf16.mxu0 0
        %7695 = vmatpush1.bf16.xpose.msra.mxu0 0
        %7696 = vmatprep.mubr.bf16.mxu0 0
        %7697 = vmatmul.mubr.bf16.gmra.mrb[0].mxu0 %v7593
        %v7698 = vpop.f32.mrb[0].mxu0
        %v7699 = vadd.f32 0.0, %v7698
        %v7700 = vpop.f32.mrb[0].mxu0
        %v7701 = vpop.f32.mrb[0].mxu0
        %v7702 = vadd.f32 0.0, %v7701
        %v7703 = vpop.f32.mrb[0].mxu0
        %7704 = vmatprep.mubr.bf16.mxu0 0
        %7705 = vmatmul.mubr.bf16.gmra.mrb[0].mxu0 %v7596
        %v7706 = vpop.f32.mrb[0].mxu0
        %v7707 = vadd.f32 0.0, %v7706
        %v7708 = vpop.f32.mrb[0].mxu0
        %v7709 = vpop.f32.mrb[0].mxu0
        %v7710 = vadd.f32 0.0, %v7709
        %v7711 = vpop.f32.mrb[0].mxu0
        %7712 = vmatprep.mubr.bf16.mxu0 0
        %7713 = vmatmul.mubr.bf16.gmra.mrb[0].mxu0 %v7599
        %v7714 = vpop.f32.mrb[0].mxu0
        %v7715 = vadd.f32 0.0, %v7714
        %v7716 = vpop.f32.mrb[0].mxu0
        %v7717 = vpop.f32.mrb[0].mxu0
        %v7718 = vadd.f32 0.0, %v7717
        %v7719 = vpop.f32.mrb[0].mxu0
        %7720 = vmatprep.mubr.bf16.mxu0 0
        %7721 = vmatmul.mubr.bf16.gmra.mrb[0].mxu0 %v7602
        %v7722 = vpop.f32.mrb[0].mxu0
        %v7723 = vadd.f32 0.0, %v7722
        %v7724 = vpop.f32.mrb[0].mxu0
        %v7725 = vpop.f32.mrb[0].mxu0
        %v7726 = vadd.f32 0.0, %v7725
        %v7727 = vpop.f32.mrb[0].mxu0
        %7728 = vmatprep.mubr.bf16.mxu0 0
        %7729 = vmatmul.mubr.bf16.gmra.mrb[0].mxu0 %v7605
        %v7730 = vpop.f32.mrb[0].mxu0
        %v7731 = vadd.f32 0.0, %v7730
        %v7732 = vpop.f32.mrb[0].mxu0
        %v7733 = vpop.f32.mrb[0].mxu0
        %v7734 = vadd.f32 0.0, %v7733
        %v7735 = vpop.f32.mrb[0].mxu0
        %7736 = vmatprep.mubr.bf16.mxu0 0
        %7737 = vmatmul.mubr.bf16.gmra.mrb[0].mxu0 %v7608
        %v7738 = vpop.f32.mrb[0].mxu0
        %v7739 = vadd.f32 0.0, %v7738
        %v7740 = vpop.f32.mrb[0].mxu0
        %v7741 = vpop.f32.mrb[0].mxu0
        %v7742 = vadd.f32 0.0, %v7741
        %v7743 = vpop.f32.mrb[0].mxu0
        %7744 = vmatprep.mubr.bf16.mxu0 0
        %7745 = vmatmul.mubr.bf16.gmra.mrb[0].mxu0 %v7611
        %v7746 = vpop.f32.mrb[0].mxu0
        %v7747 = vadd.f32 0.0, %v7746
        %v7748 = vpop.f32.mrb[0].mxu0
        %v7749 = vpop.f32.mrb[0].mxu0
        %v7750 = vadd.f32 0.0, %v7749
        %v7751 = vpop.f32.mrb[0].mxu0
        %7752 = vmatprep.mubr.bf16.mxu0 0
        %7753 = vmatmul.mubr.bf16.gmra.mrb[0].mxu0 %v7614
        %v7754 = vpop.f32.mrb[0].mxu0
        %v7755 = vadd.f32 0.0, %v7754
        %v7756 = vpop.f32.mrb[0].mxu0
        %v7757 = vpop.f32.mrb[0].mxu0
        %v7758 = vadd.f32 0.0, %v7757
        %v7759 = vpop.f32.mrb[0].mxu0
        %7760 = vmatprep.mubr.bf16.mxu0 0
        %7761 = vmatmul.mubr.bf16.gmra.mrb[0].mxu0 %v7617
        %v7762 = vpop.f32.mrb[0].mxu0
        %v7763 = vadd.f32 0.0, %v7762
        %v7764 = vpop.f32.mrb[0].mxu0
        %v7765 = vpop.f32.mrb[0].mxu0
        %v7766 = vadd.f32 0.0, %v7765
        %v7767 = vpop.f32.mrb[0].mxu0
        %7768 = vmatprep.mubr.bf16.mxu0 0
        %7769 = vmatmul.mubr.bf16.gmra.mrb[0].mxu0 %v7620
        %v7770 = vpop.f32.mrb[0].mxu0
        %v7771 = vadd.f32 0.0, %v7770
        %v7772 = vpop.f32.mrb[0].mxu0
        %v7773 = vpop.f32.mrb[0].mxu0
        %v7774 = vadd.f32 0.0, %v7773
        %v7775 = vpop.f32.mrb[0].mxu0
        %7776 = vmatprep.mubr.bf16.mxu0 0
        %7777 = vmatmul.mubr.bf16.gmra.mrb[0].mxu0 %v7623
        %v7778 = vpop.f32.mrb[0].mxu0
        %v7779 = vadd.f32 0.0, %v7778
        %v7780 = vpop.f32.mrb[0].mxu0
        %v7781 = vpop.f32.mrb[0].mxu0
        %v7782 = vadd.f32 0.0, %v7781
        %v7783 = vpop.f32.mrb[0].mxu0
        %7784 = vmatprep.mubr.bf16.mxu0 0
        %7785 = vmatmul.mubr.bf16.gmra.mrb[0].mxu0 %v7626
        %v7786 = vpop.f32.mrb[0].mxu0
        %v7787 = vadd.f32 0.0, %v7786
        %v7788 = vpop.f32.mrb[0].mxu0
        %v7789 = vpop.f32.mrb[0].mxu0
        %v7790 = vadd.f32 0.0, %v7789
        %v7791 = vpop.f32.mrb[0].mxu0
        %7792 = vmatprep.mubr.bf16.mxu0 0
        %7793 = vmatmul.mubr.bf16.gmra.mrb[0].mxu0 %v7629
        %v7794 = vpop.f32.mrb[0].mxu0
        %v7795 = vadd.f32 0.0, %v7794
        %v7796 = vpop.f32.mrb[0].mxu0
        %v7797 = vpop.f32.mrb[0].mxu0
        %v7798 = vadd.f32 0.0, %v7797
        %v7799 = vpop.f32.mrb[0].mxu0
        %7800 = vmatprep.mubr.bf16.mxu0 0
        %7801 = vmatmul.mubr.bf16.gmra.mrb[0].mxu0 %v7632
        %v7802 = vpop.f32.mrb[0].mxu0
        %v7803 = vadd.f32 0.0, %v7802
        %v7804 = vpop.f32.mrb[0].mxu0
        %v7805 = vpop.f32.mrb[0].mxu0
        %v7806 = vadd.f32 0.0, %v7805
        %v7807 = vpop.f32.mrb[0].mxu0
        %7808 = vmatprep.mubr.bf16.mxu0 0
        %7809 = vmatmul.mubr.bf16.gmra.mrb[0].mxu0 %v7635
        %v7810 = vpop.f32.mrb[0].mxu0
        %v7811 = vadd.f32 0.0, %v7810
        %v7812 = vpop.f32.mrb[0].mxu0
        %v7813 = vpop.f32.mrb[0].mxu0
        %v7814 = vadd.f32 0.0, %v7813
        %v7815 = vpop.f32.mrb[0].mxu0
        %7816 = vmatprep.mubr.bf16.mxu0 0
        %7817 = vmatmul.mubr.bf16.gmra.mrb[0].mxu0 %v7638
        %v7818 = vpop.f32.mrb[0].mxu0
        %v7819 = vadd.f32 0.0, %v7818
        %v7820 = vpop.f32.mrb[0].mxu0
        %v7821 = vpop.f32.mrb[0].mxu0
        %v7822 = vadd.f32 0.0, %v7821
        %v7823 = vpop.f32.mrb[0].mxu0
        %7824 = vdwg.mxu0
        %7825 = vmax.xlane.f32.xlu0 %v7699
        %v7826 = vpop.xlane.xlu0 %7825
        %7827 = vmax.xlane.f32.xlu0 %v7702
        %v7828 = vpop.xlane.xlu0 %7827
        %7829 = vmax.xlane.f32.xlu0 %v7707
        %v7830 = vpop.xlane.xlu0 %7829
        %7831 = vmax.xlane.f32.xlu0 %v7710
        %v7832 = vpop.xlane.xlu0 %7831
        %7833 = vmax.xlane.f32.xlu0 %v7715
        %v7834 = vpop.xlane.xlu0 %7833
        %7835 = vmax.xlane.f32.xlu0 %v7718
        %v7836 = vpop.xlane.xlu0 %7835
        %7837 = vmax.xlane.f32.xlu0 %v7723
        %v7838 = vpop.xlane.xlu0 %7837
        %7839 = vmax.xlane.f32.xlu0 %v7726
        %v7840 = vpop.xlane.xlu0 %7839
        %7841 = vmax.xlane.f32.xlu0 %v7731
        %v7842 = vpop.xlane.xlu0 %7841
        %7843 = vmax.xlane.f32.xlu0 %v7734
        %v7844 = vpop.xlane.xlu0 %7843
        %7845 = vmax.xlane.f32.xlu0 %v7739
        %v7846 = vpop.xlane.xlu0 %7845
        %7847 = vmax.xlane.f32.xlu0 %v7742
        %v7848 = vpop.xlane.xlu0 %7847
        %7849 = vmax.xlane.f32.xlu0 %v7747
        %v7850 = vpop.xlane.xlu0 %7849
        %7851 = vmax.xlane.f32.xlu0 %v7750
        %v7852 = vpop.xlane.xlu0 %7851
        %7853 = vmax.xlane.f32.xlu0 %v7755
        %v7854 = vpop.xlane.xlu0 %7853
        %7855 = vmax.xlane.f32.xlu0 %v7758
        %v7856 = vpop.xlane.xlu0 %7855
        %7857 = vmax.xlane.f32.xlu0 %v7763
        %v7858 = vpop.xlane.xlu0 %7857
        %7859 = vmax.xlane.f32.xlu0 %v7766
        %v7860 = vpop.xlane.xlu0 %7859
        %7861 = vmax.xlane.f32.xlu0 %v7771
        %v7862 = vpop.xlane.xlu0 %7861
        %7863 = vmax.xlane.f32.xlu0 %v7774
        %v7864 = vpop.xlane.xlu0 %7863
        %7865 = vmax.xlane.f32.xlu0 %v7779
        %v7866 = vpop.xlane.xlu0 %7865
        %7867 = vmax.xlane.f32.xlu0 %v7782
        %v7868 = vpop.xlane.xlu0 %7867
        %7869 = vmax.xlane.f32.xlu0 %v7787
        %v7870 = vpop.xlane.xlu0 %7869
        %7871 = vmax.xlane.f32.xlu0 %v7790
        %v7872 = vpop.xlane.xlu0 %7871
        %7873 = vmax.xlane.f32.xlu0 %v7795
        %v7874 = vpop.xlane.xlu0 %7873
        %7875 = vmax.xlane.f32.xlu0 %v7798
        %v7876 = vpop.xlane.xlu0 %7875
        %7877 = vmax.xlane.f32.xlu0 %v7803
        %v7878 = vpop.xlane.xlu0 %7877
        %7879 = vmax.xlane.f32.xlu0 %v7806
        %v7880 = vpop.xlane.xlu0 %7879
        %7881 = vmax.xlane.f32.xlu0 %v7811
        %v7882 = vpop.xlane.xlu0 %7881
        %7883 = vmax.xlane.f32.xlu0 %v7814
        %v7884 = vpop.xlane.xlu0 %7883
        %7885 = vmax.xlane.f32.xlu0 %v7819
        %v7886 = vpop.xlane.xlu0 %7885
        %7887 = vmax.xlane.f32.xlu0 %v7822
        %v7888 = vpop.xlane.xlu0 %7887
        %v7889 = vsub.f32 %v7699, %v7826
        %v7890 = vsub.f32 %v7702, %v7828
        %v7891 = vsub.f32 %v7707, %v7830
        %v7892 = vsub.f32 %v7710, %v7832
        %v7893 = vsub.f32 %v7715, %v7834
        %v7894 = vsub.f32 %v7718, %v7836
        %v7895 = vsub.f32 %v7723, %v7838
        %v7896 = vsub.f32 %v7726, %v7840
        %v7897 = vsub.f32 %v7731, %v7842
        %v7898 = vsub.f32 %v7734, %v7844
        %v7899 = vsub.f32 %v7739, %v7846
        %v7900 = vsub.f32 %v7742, %v7848
        %v7901 = vsub.f32 %v7747, %v7850
        %v7902 = vsub.f32 %v7750, %v7852
        %v7903 = vsub.f32 %v7755, %v7854
        %v7904 = vsub.f32 %v7758, %v7856
        %v7905 = vsub.f32 %v7763, %v7858
        %v7906 = vsub.f32 %v7766, %v7860
        %v7907 = vsub.f32 %v7771, %v7862
        %v7908 = vsub.f32 %v7774, %v7864
        %v7909 = vsub.f32 %v7779, %v7866
        %v7910 = vsub.f32 %v7782, %v7868
        %v7911 = vsub.f32 %v7787, %v7870
        %v7912 = vsub.f32 %v7790, %v7872
        %v7913 = vsub.f32 %v7795, %v7874
        %v7914 = vsub.f32 %v7798, %v7876
        %v7915 = vsub.f32 %v7803, %v7878
        %v7916 = vsub.f32 %v7806, %v7880
        %v7917 = vsub.f32 %v7811, %v7882
        %v7918 = vsub.f32 %v7814, %v7884
        %v7919 = vsub.f32 %v7819, %v7886
        %v7920 = vsub.f32 %v7822, %v7888
        %v7921 = vmul.f32 %v7889, 1.442695
        %v7922 = vpow.pop %v7921
        %v7923 = vmul.f32 %v7890, 1.442695
        %v7924 = vpow.pop %v7923
        %v7925 = vmul.f32 %v7891, 1.442695
        %v7926 = vpow.pop %v7925
        %v7927 = vmul.f32 %v7892, 1.442695
        %v7928 = vpow.pop %v7927
        %v7929 = vmul.f32 %v7893, 1.442695
        %v7930 = vpow.pop %v7929
        %v7931 = vmul.f32 %v7894, 1.442695
        %v7932 = vpow.pop %v7931
        %v7933 = vmul.f32 %v7895, 1.442695
        %v7934 = vpow.pop %v7933
        %v7935 = vmul.f32 %v7896, 1.442695
        %v7936 = vpow.pop %v7935
        %v7937 = vmul.f32 %v7897, 1.442695
        %v7938 = vpow.pop %v7937
        %v7939 = vmul.f32 %v7898, 1.442695
        %v7940 = vpow.pop %v7939
        %v7941 = vmul.f32 %v7899, 1.442695
        %v7942 = vpow.pop %v7941
        %v7943 = vmul.f32 %v7900, 1.442695
        %v7944 = vpow.pop %v7943
        %v7945 = vmul.f32 %v7901, 1.442695
        %v7946 = vpow.pop %v7945
        %v7947 = vmul.f32 %v7902, 1.442695
        %v7948 = vpow.pop %v7947
        %v7949 = vmul.f32 %v7903, 1.442695
        %v7950 = vpow.pop %v7949
        %v7951 = vmul.f32 %v7904, 1.442695
        %v7952 = vpow.pop %v7951
        %v7953 = vmul.f32 %v7905, 1.442695
        %v7954 = vpow.pop %v7953
        %v7955 = vmul.f32 %v7906, 1.442695
        %v7956 = vpow.pop %v7955
        %v7957 = vmul.f32 %v7907, 1.442695
        %v7958 = vpow.pop %v7957
        %v7959 = vmul.f32 %v7908, 1.442695
        %v7960 = vpow.pop %v7959
        %v7961 = vmul.f32 %v7909, 1.442695
        %v7962 = vpow.pop %v7961
        %v7963 = vmul.f32 %v7910, 1.442695
        %v7964 = vpow.pop %v7963
        %v7965 = vmul.f32 %v7911, 1.442695
        %v7966 = vpow.pop %v7965
        %v7967 = vmul.f32 %v7912, 1.442695
        %v7968 = vpow.pop %v7967
        %v7969 = vmul.f32 %v7913, 1.442695
        %v7970 = vpow.pop %v7969
        %v7971 = vmul.f32 %v7914, 1.442695
        %v7972 = vpow.pop %v7971
        %v7973 = vmul.f32 %v7915, 1.442695
        %v7974 = vpow.pop %v7973
        %v7975 = vmul.f32 %v7916, 1.442695
        %v7976 = vpow.pop %v7975
        %v7977 = vmul.f32 %v7917, 1.442695
        %v7978 = vpow.pop %v7977
        %v7979 = vmul.f32 %v7918, 1.442695
        %v7980 = vpow.pop %v7979
        %v7981 = vmul.f32 %v7919, 1.442695
        %v7982 = vpow.pop %v7981
        %v7983 = vmul.f32 %v7920, 1.442695
        %v7984 = vpow.pop %v7983
        %7985 = vadd.xlane.f32.xlu0 %v7922
        %v7986 = vpop.xlane.xlu0 %7985
        %7987 = vadd.xlane.f32.xlu0 %v7924
        %v7988 = vpop.xlane.xlu0 %7987
        %7989 = vadd.xlane.f32.xlu0 %v7926
        %v7990 = vpop.xlane.xlu0 %7989
        %7991 = vadd.xlane.f32.xlu0 %v7928
        %v7992 = vpop.xlane.xlu0 %7991
        %7993 = vadd.xlane.f32.xlu0 %v7930
        %v7994 = vpop.xlane.xlu0 %7993
        %7995 = vadd.xlane.f32.xlu0 %v7932
        %v7996 = vpop.xlane.xlu0 %7995
        %7997 = vadd.xlane.f32.xlu0 %v7934
        %v7998 = vpop.xlane.xlu0 %7997
        %7999 = vadd.xlane.f32.xlu0 %v7936
        %v8000 = vpop.xlane.xlu0 %7999
        %8001 = vadd.xlane.f32.xlu0 %v7938
        %v8002 = vpop.xlane.xlu0 %8001
        %8003 = vadd.xlane.f32.xlu0 %v7940
        %v8004 = vpop.xlane.xlu0 %8003
        %8005 = vadd.xlane.f32.xlu0 %v7942
        %v8006 = vpop.xlane.xlu0 %8005
        %8007 = vadd.xlane.f32.xlu0 %v7944
        %v8008 = vpop.xlane.xlu0 %8007
        %8009 = vadd.xlane.f32.xlu0 %v7946
        %v8010 = vpop.xlane.xlu0 %8009
        %8011 = vadd.xlane.f32.xlu0 %v7948
        %v8012 = vpop.xlane.xlu0 %8011
        %8013 = vadd.xlane.f32.xlu0 %v7950
        %v8014 = vpop.xlane.xlu0 %8013
        %8015 = vadd.xlane.f32.xlu0 %v7952
        %v8016 = vpop.xlane.xlu0 %8015
        %8017 = vadd.xlane.f32.xlu0 %v7954
        %v8018 = vpop.xlane.xlu0 %8017
        %8019 = vadd.xlane.f32.xlu0 %v7956
        %v8020 = vpop.xlane.xlu0 %8019
        %8021 = vadd.xlane.f32.xlu0 %v7958
        %v8022 = vpop.xlane.xlu0 %8021
        %8023 = vadd.xlane.f32.xlu0 %v7960
        %v8024 = vpop.xlane.xlu0 %8023
        %8025 = vadd.xlane.f32.xlu0 %v7962
        %v8026 = vpop.xlane.xlu0 %8025
        %8027 = vadd.xlane.f32.xlu0 %v7964
        %v8028 = vpop.xlane.xlu0 %8027
        %8029 = vadd.xlane.f32.xlu0 %v7966
        %v8030 = vpop.xlane.xlu0 %8029
        %8031 = vadd.xlane.f32.xlu0 %v7968
        %v8032 = vpop.xlane.xlu0 %8031
        %8033 = vadd.xlane.f32.xlu0 %v7970
        %v8034 = vpop.xlane.xlu0 %8033
        %8035 = vadd.xlane.f32.xlu0 %v7972
        %v8036 = vpop.xlane.xlu0 %8035
        %8037 = vadd.xlane.f32.xlu0 %v7974
        %v8038 = vpop.xlane.xlu0 %8037
        %8039 = vadd.xlane.f32.xlu0 %v7976
        %v8040 = vpop.xlane.xlu0 %8039
        %8041 = vadd.xlane.f32.xlu0 %v7978
        %v8042 = vpop.xlane.xlu0 %8041
        %8043 = vadd.xlane.f32.xlu0 %v7980
        %v8044 = vpop.xlane.xlu0 %8043
        %8045 = vadd.xlane.f32.xlu0 %v7982
        %v8046 = vpop.xlane.xlu0 %8045
        %8047 = vadd.xlane.f32.xlu0 %v7984
        %v8048 = vpop.xlane.xlu0 %8047
        %v8049 = vrcp.pop %v7986
        %v8050 = vrcp.pop %v7988
        %v8051 = vrcp.pop %v7990
        %v8052 = vrcp.pop %v7992
        %v8053 = vrcp.pop %v7994
        %v8054 = vrcp.pop %v7996
        %v8055 = vrcp.pop %v7998
        %v8056 = vrcp.pop %v8000
        %v8057 = vrcp.pop %v8002
        %v8058 = vrcp.pop %v8004
        %v8059 = vrcp.pop %v8006
        %v8060 = vrcp.pop %v8008
        %v8061 = vrcp.pop %v8010
        %v8062 = vrcp.pop %v8012
        %v8063 = vrcp.pop %v8014
        %v8064 = vrcp.pop %v8016
        %v8065 = vrcp.pop %v8018
        %v8066 = vrcp.pop %v8020
        %v8067 = vrcp.pop %v8022
        %v8068 = vrcp.pop %v8024
        %v8069 = vrcp.pop %v8026
        %v8070 = vrcp.pop %v8028
        %v8071 = vrcp.pop %v8030
        %v8072 = vrcp.pop %v8032
        %v8073 = vrcp.pop %v8034
        %v8074 = vrcp.pop %v8036
        %v8075 = vrcp.pop %v8038
        %v8076 = vrcp.pop %v8040
        %v8077 = vrcp.pop %v8042
        %v8078 = vrcp.pop %v8044
        %v8079 = vrcp.pop %v8046
        %v8080 = vrcp.pop %v8048
        %v8081 = vmul.f32 %v7922, %v8049
        %v8082 = vmul.f32 %v7924, %v8050
        %v8083 = vmul.f32 %v7926, %v8051
        %v8084 = vmul.f32 %v7928, %v8052
        %v8085 = vmul.f32 %v7930, %v8053
        %v8086 = vmul.f32 %v7932, %v8054
        %v8087 = vmul.f32 %v7934, %v8055
        %v8088 = vmul.f32 %v7936, %v8056
        %v8089 = vmul.f32 %v7938, %v8057
        %v8090 = vmul.f32 %v7940, %v8058
        %v8091 = vmul.f32 %v7942, %v8059
        %v8092 = vmul.f32 %v7944, %v8060
        %v8093 = vmul.f32 %v7946, %v8061
        %v8094 = vmul.f32 %v7948, %v8062
        %v8095 = vmul.f32 %v7950, %v8063
        %v8096 = vmul.f32 %v7952, %v8064
        %v8097 = vmul.f32 %v7954, %v8065
        %v8098 = vmul.f32 %v7956, %v8066
        %v8099 = vmul.f32 %v7958, %v8067
        %v8100 = vmul.f32 %v7960, %v8068
        %v8101 = vmul.f32 %v7962, %v8069
        %v8102 = vmul.f32 %v7964, %v8070
        %v8103 = vmul.f32 %v7966, %v8071
        %v8104 = vmul.f32 %v7968, %v8072
        %v8105 = vmul.f32 %v7970, %v8073
        %v8106 = vmul.f32 %v7972, %v8074
        %v8107 = vmul.f32 %v7974, %v8075
        %v8108 = vmul.f32 %v7976, %v8076
        %v8109 = vmul.f32 %v7978, %v8077
        %v8110 = vmul.f32 %v7980, %v8078
        %v8111 = vmul.f32 %v7982, %v8079
        %v8112 = vmul.f32 %v7984, %v8080
        %v8113 = vld [vmem:[#allocation5] sm:$0xff]
        %v8114 = vld [vmem:[#allocation5 + $0x8] sm:$0xff]
        %v8115 = vld [vmem:[#allocation5 + $0x10] sm:$0xff]
        %v8116 = vld [vmem:[#allocation5 + $0x18] sm:$0xff]
        %v8117 = vld [vmem:[#allocation5 + $0x20] sm:$0xff]
        %v8118 = vld [vmem:[#allocation5 + $0x28] sm:$0xff]
        %v8119 = vld [vmem:[#allocation5 + $0x30] sm:$0xff]
        %v8120 = vld [vmem:[#allocation5 + $0x38] sm:$0xff]
        %v8121 = vld [vmem:[#allocation5 + $0x40] sm:$0xff]
        %v8122 = vld [vmem:[#allocation5 + $0x48] sm:$0xff]
        %v8123 = vld [vmem:[#allocation5 + $0x50] sm:$0xff]
        %v8124 = vld [vmem:[#allocation5 + $0x58] sm:$0xff]
        %v8125 = vld [vmem:[#allocation5 + $0x60] sm:$0xff]
        %v8126 = vld [vmem:[#allocation5 + $0x68] sm:$0xff]
        %v8127 = vld [vmem:[#allocation5 + $0x70] sm:$0xff]
        %v8128 = vld [vmem:[#allocation5 + $0x78] sm:$0xff]
        %v8129 = vld [vmem:[#allocation5 + $0x80] sm:$0xff]
        %v8130 = vld [vmem:[#allocation5 + $0x88] sm:$0xff]
        %v8131 = vld [vmem:[#allocation5 + $0x90] sm:$0xff]
        %v8132 = vld [vmem:[#allocation5 + $0x98] sm:$0xff]
        %v8133 = vld [vmem:[#allocation5 + $0xa0] sm:$0xff]
        %v8134 = vld [vmem:[#allocation5 + $0xa8] sm:$0xff]
        %v8135 = vld [vmem:[#allocation5 + $0xb0] sm:$0xff]
        %v8136 = vld [vmem:[#allocation5 + $0xb8] sm:$0xff]
        %v8137 = vld [vmem:[#allocation5 + $0xc0] sm:$0xff]
        %v8138 = vld [vmem:[#allocation5 + $0xc8] sm:$0xff]
        %v8139 = vld [vmem:[#allocation5 + $0xd0] sm:$0xff]
        %v8140 = vld [vmem:[#allocation5 + $0xd8] sm:$0xff]
        %v8141 = vld [vmem:[#allocation5 + $0xe0] sm:$0xff]
        %v8142 = vld [vmem:[#allocation5 + $0xe8] sm:$0xff]
        %v8143 = vld [vmem:[#allocation5 + $0xf0] sm:$0xff]
        %v8144 = vld [vmem:[#allocation5 + $0xf8] sm:$0xff]
        %v8145 = vpack.c.bf16 %v8082, %v8081
        %v8146 = vpack.c.bf16 %v8084, %v8083
        %v8147 = vpack.c.bf16 %v8086, %v8085
        %v8148 = vpack.c.bf16 %v8088, %v8087
        %v8149 = vpack.c.bf16 %v8090, %v8089
        %v8150 = vpack.c.bf16 %v8092, %v8091
        %v8151 = vpack.c.bf16 %v8094, %v8093
        %v8152 = vpack.c.bf16 %v8096, %v8095
        %v8153 = vpack.c.bf16 %v8098, %v8097
        %v8154 = vpack.c.bf16 %v8100, %v8099
        %v8155 = vpack.c.bf16 %v8102, %v8101
        %v8156 = vpack.c.bf16 %v8104, %v8103
        %v8157 = vpack.c.bf16 %v8106, %v8105
        %v8158 = vpack.c.bf16 %v8108, %v8107
        %v8159 = vpack.c.bf16 %v8110, %v8109
        %v8160 = vpack.c.bf16 %v8112, %v8111
        %s8161 = scalar_lea.vmem [#allocation4], 384
        %v8162 = vld [vmem:[%s8161] sm:$0xff]
        %v8163 = vld [vmem:[%s8161 + $0x8] sm:$0xff]
        %v8164 = vld [vmem:[%s8161 + $0x10] sm:$0xff]
        %v8165 = vld [vmem:[%s8161 + $0x18] sm:$0xff]
        %v8166 = vld [vmem:[%s8161 + $0x20] sm:$0xff]
        %v8167 = vld [vmem:[%s8161 + $0x28] sm:$0xff]
        %v8168 = vld [vmem:[%s8161 + $0x30] sm:$0xff]
        %v8169 = vld [vmem:[%s8161 + $0x38] sm:$0xff]
        %8170 = vmatprep.subr.bf16.mxu0 0
        %8171 = vmatpush1.bf16.msra.mxu0 %v8162
        %8172 = vmatprep.subr.bf16.mxu0 0
        %8173 = vmatpush1.bf16.msra.mxu0 %v8163
        %8174 = vmatprep.subr.bf16.mxu0 0
        %8175 = vmatpush1.bf16.msra.mxu0 %v8164
        %8176 = vmatprep.subr.bf16.mxu0 0
        %8177 = vmatpush1.bf16.msra.mxu0 %v8165
        %8178 = vmatprep.subr.bf16.mxu0 0
        %8179 = vmatpush1.bf16.msra.mxu0 %v8166
        %8180 = vmatprep.subr.bf16.mxu0 0
        %8181 = vmatpush1.bf16.msra.mxu0 %v8167
        %8182 = vmatprep.subr.bf16.mxu0 0
        %8183 = vmatpush1.bf16.msra.mxu0 %v8168
        %8184 = vmatprep.subr.bf16.mxu0 0
        %8185 = vmatpush1.bf16.msra.mxu0 %v8169
        %8186 = vmatprep.subr.bf16.mxu0 0
        %8187 = vmatpush1.bf16.msra.mxu0 0
        %8188 = vmatprep.subr.bf16.mxu0 0
        %8189 = vmatpush1.bf16.msra.mxu0 0
        %8190 = vmatprep.subr.bf16.mxu0 0
        %8191 = vmatpush1.bf16.msra.mxu0 0
        %8192 = vmatprep.subr.bf16.mxu0 0
        %8193 = vmatpush1.bf16.msra.mxu0 0
        %8194 = vmatprep.subr.bf16.mxu0 0
        %8195 = vmatpush1.bf16.msra.mxu0 0
        %8196 = vmatprep.subr.bf16.mxu0 0
        %8197 = vmatpush1.bf16.msra.mxu0 0
        %8198 = vmatprep.subr.bf16.mxu0 0
        %8199 = vmatpush1.bf16.msra.mxu0 0
        %8200 = vmatprep.subr.bf16.mxu0 0
        %8201 = vmatpush1.bf16.msra.mxu0 0
        %8202 = vmatprep.mubr.bf16.mxu0 0
        %8203 = vmatmul.mubr.bf16.gmra.mrb[0].mxu0 %v8145
        %v8204 = vpop.f32.mrb[0].mxu0
        %v8205 = vadd.f32 0.0, %v8204
        %v8206 = vpop.f32.mrb[0].mxu0
        %v8207 = vpop.f32.mrb[0].mxu0
        %v8208 = vadd.f32 0.0, %v8207
        %v8209 = vpop.f32.mrb[0].mxu0
        %8210 = vmatprep.mubr.bf16.mxu0 0
        %8211 = vmatmul.mubr.bf16.gmra.mrb[0].mxu0 %v8146
        %v8212 = vpop.f32.mrb[0].mxu0
        %v8213 = vadd.f32 0.0, %v8212
        %v8214 = vpop.f32.mrb[0].mxu0
        %v8215 = vpop.f32.mrb[0].mxu0
        %v8216 = vadd.f32 0.0, %v8215
        %v8217 = vpop.f32.mrb[0].mxu0
        %8218 = vmatprep.mubr.bf16.mxu0 0
        %8219 = vmatmul.mubr.bf16.gmra.mrb[0].mxu0 %v8147
        %v8220 = vpop.f32.mrb[0].mxu0
        %v8221 = vadd.f32 0.0, %v8220
        %v8222 = vpop.f32.mrb[0].mxu0
        %v8223 = vpop.f32.mrb[0].mxu0
        %v8224 = vadd.f32 0.0, %v8223
        %v8225 = vpop.f32.mrb[0].mxu0
        %8226 = vmatprep.mubr.bf16.mxu0 0
        %8227 = vmatmul.mubr.bf16.gmra.mrb[0].mxu0 %v8148
        %v8228 = vpop.f32.mrb[0].mxu0
        %v8229 = vadd.f32 0.0, %v8228
        %v8230 = vpop.f32.mrb[0].mxu0
        %v8231 = vpop.f32.mrb[0].mxu0
        %v8232 = vadd.f32 0.0, %v8231
        %v8233 = vpop.f32.mrb[0].mxu0
        %8234 = vmatprep.mubr.bf16.mxu0 0
        %8235 = vmatmul.mubr.bf16.gmra.mrb[0].mxu0 %v8149
        %v8236 = vpop.f32.mrb[0].mxu0
        %v8237 = vadd.f32 0.0, %v8236
        %v8238 = vpop.f32.mrb[0].mxu0
        %v8239 = vpop.f32.mrb[0].mxu0
        %v8240 = vadd.f32 0.0, %v8239
        %v8241 = vpop.f32.mrb[0].mxu0
        %8242 = vmatprep.mubr.bf16.mxu0 0
        %8243 = vmatmul.mubr.bf16.gmra.mrb[0].mxu0 %v8150
        %v8244 = vpop.f32.mrb[0].mxu0
        %v8245 = vadd.f32 0.0, %v8244
        %v8246 = vpop.f32.mrb[0].mxu0
        %v8247 = vpop.f32.mrb[0].mxu0
        %v8248 = vadd.f32 0.0, %v8247
        %v8249 = vpop.f32.mrb[0].mxu0
        %8250 = vmatprep.mubr.bf16.mxu0 0
        %8251 = vmatmul.mubr.bf16.gmra.mrb[0].mxu0 %v8151
        %v8252 = vpop.f32.mrb[0].mxu0
        %v8253 = vadd.f32 0.0, %v8252
        %v8254 = vpop.f32.mrb[0].mxu0
        %v8255 = vpop.f32.mrb[0].mxu0
        %v8256 = vadd.f32 0.0, %v8255
        %v8257 = vpop.f32.mrb[0].mxu0
        %8258 = vmatprep.mubr.bf16.mxu0 0
        %8259 = vmatmul.mubr.bf16.gmra.mrb[0].mxu0 %v8152
        %v8260 = vpop.f32.mrb[0].mxu0
        %v8261 = vadd.f32 0.0, %v8260
        %v8262 = vpop.f32.mrb[0].mxu0
        %v8263 = vpop.f32.mrb[0].mxu0
        %v8264 = vadd.f32 0.0, %v8263
        %v8265 = vpop.f32.mrb[0].mxu0
        %8266 = vmatprep.mubr.bf16.mxu0 0
        %8267 = vmatmul.mubr.bf16.gmra.mrb[0].mxu0 %v8153
        %v8268 = vpop.f32.mrb[0].mxu0
        %v8269 = vadd.f32 0.0, %v8268
        %v8270 = vpop.f32.mrb[0].mxu0
        %v8271 = vpop.f32.mrb[0].mxu0
        %v8272 = vadd.f32 0.0, %v8271
        %v8273 = vpop.f32.mrb[0].mxu0
        %8274 = vmatprep.mubr.bf16.mxu0 0
        %8275 = vmatmul.mubr.bf16.gmra.mrb[0].mxu0 %v8154
        %v8276 = vpop.f32.mrb[0].mxu0
        %v8277 = vadd.f32 0.0, %v8276
        %v8278 = vpop.f32.mrb[0].mxu0
        %v8279 = vpop.f32.mrb[0].mxu0
        %v8280 = vadd.f32 0.0, %v8279
        %v8281 = vpop.f32.mrb[0].mxu0
        %8282 = vmatprep.mubr.bf16.mxu0 0
        %8283 = vmatmul.mubr.bf16.gmra.mrb[0].mxu0 %v8155
        %v8284 = vpop.f32.mrb[0].mxu0
        %v8285 = vadd.f32 0.0, %v8284
        %v8286 = vpop.f32.mrb[0].mxu0
        %v8287 = vpop.f32.mrb[0].mxu0
        %v8288 = vadd.f32 0.0, %v8287
        %v8289 = vpop.f32.mrb[0].mxu0
        %8290 = vmatprep.mubr.bf16.mxu0 0
        %8291 = vmatmul.mubr.bf16.gmra.mrb[0].mxu0 %v8156
        %v8292 = vpop.f32.mrb[0].mxu0
        %v8293 = vadd.f32 0.0, %v8292
        %v8294 = vpop.f32.mrb[0].mxu0
        %v8295 = vpop.f32.mrb[0].mxu0
        %v8296 = vadd.f32 0.0, %v8295
        %v8297 = vpop.f32.mrb[0].mxu0
        %8298 = vmatprep.mubr.bf16.mxu0 0
        %8299 = vmatmul.mubr.bf16.gmra.mrb[0].mxu0 %v8157
        %v8300 = vpop.f32.mrb[0].mxu0
        %v8301 = vadd.f32 0.0, %v8300
        %v8302 = vpop.f32.mrb[0].mxu0
        %v8303 = vpop.f32.mrb[0].mxu0
        %v8304 = vadd.f32 0.0, %v8303
        %v8305 = vpop.f32.mrb[0].mxu0
        %8306 = vmatprep.mubr.bf16.mxu0 0
        %8307 = vmatmul.mubr.bf16.gmra.mrb[0].mxu0 %v8158
        %v8308 = vpop.f32.mrb[0].mxu0
        %v8309 = vadd.f32 0.0, %v8308
        %v8310 = vpop.f32.mrb[0].mxu0
        %v8311 = vpop.f32.mrb[0].mxu0
        %v8312 = vadd.f32 0.0, %v8311
        %v8313 = vpop.f32.mrb[0].mxu0
        %8314 = vmatprep.mubr.bf16.mxu0 0
        %8315 = vmatmul.mubr.bf16.gmra.mrb[0].mxu0 %v8159
        %v8316 = vpop.f32.mrb[0].mxu0
        %v8317 = vadd.f32 0.0, %v8316
        %v8318 = vpop.f32.mrb[0].mxu0
        %v8319 = vpop.f32.mrb[0].mxu0
        %v8320 = vadd.f32 0.0, %v8319
        %v8321 = vpop.f32.mrb[0].mxu0
        %8322 = vmatprep.mubr.bf16.mxu0 0
        %8323 = vmatmul.mubr.bf16.gmra.mrb[0].mxu0 %v8160
        %v8324 = vpop.f32.mrb[0].mxu0
        %v8325 = vadd.f32 0.0, %v8324
        %v8326 = vpop.f32.mrb[0].mxu0
        %v8327 = vpop.f32.mrb[0].mxu0
        %v8328 = vadd.f32 0.0, %v8327
        %v8329 = vpop.f32.mrb[0].mxu0
        %8330 = vdwg.mxu0
        %v8331 = vadd.f32 %v8113, %v8205
        %v8332 = vadd.f32 %v8114, %v8208
        %v8333 = vadd.f32 %v8115, %v8213
        %v8334 = vadd.f32 %v8116, %v8216
        %v8335 = vadd.f32 %v8117, %v8221
        %v8336 = vadd.f32 %v8118, %v8224
        %v8337 = vadd.f32 %v8119, %v8229
        %v8338 = vadd.f32 %v8120, %v8232
        %v8339 = vadd.f32 %v8121, %v8237
        %v8340 = vadd.f32 %v8122, %v8240
        %v8341 = vadd.f32 %v8123, %v8245
        %v8342 = vadd.f32 %v8124, %v8248
        %v8343 = vadd.f32 %v8125, %v8253
        %v8344 = vadd.f32 %v8126, %v8256
        %v8345 = vadd.f32 %v8127, %v8261
        %v8346 = vadd.f32 %v8128, %v8264
        %v8347 = vadd.f32 %v8129, %v8269
        %v8348 = vadd.f32 %v8130, %v8272
        %v8349 = vadd.f32 %v8131, %v8277
        %v8350 = vadd.f32 %v8132, %v8280
        %v8351 = vadd.f32 %v8133, %v8285
        %v8352 = vadd.f32 %v8134, %v8288
        %v8353 = vadd.f32 %v8135, %v8293
        %v8354 = vadd.f32 %v8136, %v8296
        %v8355 = vadd.f32 %v8137, %v8301
        %v8356 = vadd.f32 %v8138, %v8304
        %v8357 = vadd.f32 %v8139, %v8309
        %v8358 = vadd.f32 %v8140, %v8312
        %v8359 = vadd.f32 %v8141, %v8317
        %v8360 = vadd.f32 %v8142, %v8320
        %v8361 = vadd.f32 %v8143, %v8325
        %v8362 = vadd.f32 %v8144, %v8328
        %8363 = vst [vmem:[#allocation5] sm:$0xff] %v8331
        %8364 = vst [vmem:[#allocation5 + $0x8] sm:$0xff] %v8332
        %8365 = vst [vmem:[#allocation5 + $0x10] sm:$0xff] %v8333
        %8366 = vst [vmem:[#allocation5 + $0x18] sm:$0xff] %v8334
        %8367 = vst [vmem:[#allocation5 + $0x20] sm:$0xff] %v8335
        %8368 = vst [vmem:[#allocation5 + $0x28] sm:$0xff] %v8336
        %8369 = vst [vmem:[#allocation5 + $0x30] sm:$0xff] %v8337
        %8370 = vst [vmem:[#allocation5 + $0x38] sm:$0xff] %v8338
        %8371 = vst [vmem:[#allocation5 + $0x40] sm:$0xff] %v8339
        %8372 = vst [vmem:[#allocation5 + $0x48] sm:$0xff] %v8340
        %8373 = vst [vmem:[#allocation5 + $0x50] sm:$0xff] %v8341
        %8374 = vst [vmem:[#allocation5 + $0x58] sm:$0xff] %v8342
        %8375 = vst [vmem:[#allocation5 + $0x60] sm:$0xff] %v8343
        %8376 = vst [vmem:[#allocation5 + $0x68] sm:$0xff] %v8344
        %8377 = vst [vmem:[#allocation5 + $0x70] sm:$0xff] %v8345
        %8378 = vst [vmem:[#allocation5 + $0x78] sm:$0xff] %v8346
        %8379 = vst [vmem:[#allocation5 + $0x80] sm:$0xff] %v8347
        %8380 = vst [vmem:[#allocation5 + $0x88] sm:$0xff] %v8348
        %8381 = vst [vmem:[#allocation5 + $0x90] sm:$0xff] %v8349
        %8382 = vst [vmem:[#allocation5 + $0x98] sm:$0xff] %v8350
        %8383 = vst [vmem:[#allocation5 + $0xa0] sm:$0xff] %v8351
        %8384 = vst [vmem:[#allocation5 + $0xa8] sm:$0xff] %v8352
        %8385 = vst [vmem:[#allocation5 + $0xb0] sm:$0xff] %v8353
        %8386 = vst [vmem:[#allocation5 + $0xb8] sm:$0xff] %v8354
        %8387 = vst [vmem:[#allocation5 + $0xc0] sm:$0xff] %v8355
        %8388 = vst [vmem:[#allocation5 + $0xc8] sm:$0xff] %v8356
        %8389 = vst [vmem:[#allocation5 + $0xd0] sm:$0xff] %v8357
        %8390 = vst [vmem:[#allocation5 + $0xd8] sm:$0xff] %v8358
        %8391 = vst [vmem:[#allocation5 + $0xe0] sm:$0xff] %v8359
        %8392 = vst [vmem:[#allocation5 + $0xe8] sm:$0xff] %v8360
        %8393 = vst [vmem:[#allocation5 + $0xf0] sm:$0xff] %v8361
        %8394 = vst [vmem:[#allocation5 + $0xf8] sm:$0xff] %v8362
        %v8395 = vld [vmem:[#allocation2] sm:$0xff]
        %v8396 = vld [vmem:[#allocation2 + $0x8] sm:$0xff]
        %v8397 = vld [vmem:[#allocation2 + $0x10] sm:$0xff]
        %v8398 = vld [vmem:[#allocation2 + $0x18] sm:$0xff]
        %v8399 = vld [vmem:[#allocation2 + $0x20] sm:$0xff]
        %v8400 = vld [vmem:[#allocation2 + $0x28] sm:$0xff]
        %v8401 = vld [vmem:[#allocation2 + $0x30] sm:$0xff]
        %v8402 = vld [vmem:[#allocation2 + $0x38] sm:$0xff]
        %v8403 = vld [vmem:[#allocation2 + $0x40] sm:$0xff]
        %v8404 = vld [vmem:[#allocation2 + $0x48] sm:$0xff]
        %v8405 = vld [vmem:[#allocation2 + $0x50] sm:$0xff]
        %v8406 = vld [vmem:[#allocation2 + $0x58] sm:$0xff]
        %v8407 = vld [vmem:[#allocation2 + $0x60] sm:$0xff]
        %v8408 = vld [vmem:[#allocation2 + $0x68] sm:$0xff]
        %v8409 = vld [vmem:[#allocation2 + $0x70] sm:$0xff]
        %v8410 = vld [vmem:[#allocation2 + $0x78] sm:$0xff]
        %v8411 = vld [vmem:[#allocation3] sm:$0xff]
        %v8412 = vld [vmem:[#allocation3 + $0x8] sm:$0xff]
        %v8413 = vld [vmem:[#allocation3 + $0x10] sm:$0xff]
        %v8414 = vld [vmem:[#allocation3 + $0x18] sm:$0xff]
        %v8415 = vld [vmem:[#allocation3 + $0x20] sm:$0xff]
        %v8416 = vld [vmem:[#allocation3 + $0x28] sm:$0xff]
        %v8417 = vld [vmem:[#allocation3 + $0x30] sm:$0xff]
        %v8418 = vld [vmem:[#allocation3 + $0x38] sm:$0xff]
        %8435 = vrot.lane.b32.xlu0 %v8395, 16
        %v8436 = vpop.permute.xlu0 %8435
        %8437 = vrot.lane.b32.xlu0 %v8396, 16
        %v8438 = vpop.permute.xlu0 %8437
        %8439 = vrot.lane.b32.xlu0 %v8397, 16
        %v8440 = vpop.permute.xlu0 %8439
        %8441 = vrot.lane.b32.xlu0 %v8398, 16
        %v8442 = vpop.permute.xlu0 %8441
        %8443 = vrot.lane.b32.xlu0 %v8399, 16
        %v8444 = vpop.permute.xlu0 %8443
        %8445 = vrot.lane.b32.xlu0 %v8400, 16
        %v8446 = vpop.permute.xlu0 %8445
        %8447 = vrot.lane.b32.xlu0 %v8401, 16
        %v8448 = vpop.permute.xlu0 %8447
        %8449 = vrot.lane.b32.xlu0 %v8402, 16
        %v8450 = vpop.permute.xlu0 %8449
        %8451 = vrot.lane.b32.xlu0 %v8403, 16
        %v8452 = vpop.permute.xlu0 %8451
        %8453 = vrot.lane.b32.xlu0 %v8404, 16
        %v8454 = vpop.permute.xlu0 %8453
        %8455 = vrot.lane.b32.xlu0 %v8405, 16
        %v8456 = vpop.permute.xlu0 %8455
        %8457 = vrot.lane.b32.xlu0 %v8406, 16
        %v8458 = vpop.permute.xlu0 %8457
        %8459 = vrot.lane.b32.xlu0 %v8407, 16
        %v8460 = vpop.permute.xlu0 %8459
        %8461 = vrot.lane.b32.xlu0 %v8408, 16
        %v8462 = vpop.permute.xlu0 %8461
        %8463 = vrot.lane.b32.xlu0 %v8409, 16
        %v8464 = vpop.permute.xlu0 %8463
        %8465 = vrot.lane.b32.xlu0 %v8410, 16
        %v8466 = vpop.permute.xlu0 %8465
        %8475 = vrot.lane.b32.xlu0 %v8411, 16
        %v8476 = vpop.permute.xlu0 %8475
        %8477 = vrot.lane.b32.xlu0 %v8412, 16
        %v8478 = vpop.permute.xlu0 %8477
        %8479 = vrot.lane.b32.xlu0 %v8413, 16
        %v8480 = vpop.permute.xlu0 %8479
        %8481 = vrot.lane.b32.xlu0 %v8414, 16
        %v8482 = vpop.permute.xlu0 %8481
        %8483 = vrot.lane.b32.xlu0 %v8415, 16
        %v8484 = vpop.permute.xlu0 %8483
        %8485 = vrot.lane.b32.xlu0 %v8416, 16
        %v8486 = vpop.permute.xlu0 %8485
        %8487 = vrot.lane.b32.xlu0 %v8417, 16
        %v8488 = vpop.permute.xlu0 %8487
        %8489 = vrot.lane.b32.xlu0 %v8418, 16
        %v8490 = vpop.permute.xlu0 %8489
        %v8492 = vsel %vm2198, %v8436, 0
        %v8495 = vsel %vm2198, %v8438, 0
        %v8498 = vsel %vm2198, %v8440, 0
        %v8501 = vsel %vm2198, %v8442, 0
        %v8504 = vsel %vm2198, %v8444, 0
        %v8507 = vsel %vm2198, %v8446, 0
        %v8510 = vsel %vm2198, %v8448, 0
        %v8513 = vsel %vm2198, %v8450, 0
        %v8516 = vsel %vm2198, %v8452, 0
        %v8519 = vsel %vm2198, %v8454, 0
        %v8522 = vsel %vm2198, %v8456, 0
        %v8525 = vsel %vm2198, %v8458, 0
        %v8528 = vsel %vm2198, %v8460, 0
        %v8531 = vsel %vm2198, %v8462, 0
        %v8534 = vsel %vm2198, %v8464, 0
        %v8537 = vsel %vm2198, %v8466, 0
        %v8540 = vsel %vm2198, %v8476, 0
        %v8543 = vsel %vm2198, %v8478, 0
        %v8546 = vsel %vm2198, %v8480, 0
        %v8549 = vsel %vm2198, %v8482, 0
        %v8552 = vsel %vm2198, %v8484, 0
        %v8555 = vsel %vm2198, %v8486, 0
        %v8558 = vsel %vm2198, %v8488, 0
        %v8561 = vsel %vm2198, %v8490, 0
        %8563 = vmatprep.subr.bf16.mxu0 0
        %8564 = vmatpush1.bf16.xpose.msra.mxu0 %v8540
        %8565 = vmatprep.subr.bf16.mxu0 0
        %8566 = vmatpush1.bf16.xpose.msra.mxu0 %v8543
        %8567 = vmatprep.subr.bf16.mxu0 0
        %8568 = vmatpush1.bf16.xpose.msra.mxu0 %v8546
        %8569 = vmatprep.subr.bf16.mxu0 0
        %8570 = vmatpush1.bf16.xpose.msra.mxu0 %v8549
        %8571 = vmatprep.subr.bf16.mxu0 0
        %8572 = vmatpush1.bf16.xpose.msra.mxu0 %v8552
        %8573 = vmatprep.subr.bf16.mxu0 0
        %8574 = vmatpush1.bf16.xpose.msra.mxu0 %v8555
        %8575 = vmatprep.subr.bf16.mxu0 0
        %8576 = vmatpush1.bf16.xpose.msra.mxu0 %v8558
        %8577 = vmatprep.subr.bf16.mxu0 0
        %8578 = vmatpush1.bf16.xpose.msra.mxu0 %v8561
        %8579 = vmatprep.subr.bf16.mxu0 0
        %8580 = vmatpush1.bf16.xpose.msra.mxu0 0
        %8581 = vmatprep.subr.bf16.mxu0 0
        %8582 = vmatpush1.bf16.xpose.msra.mxu0 0
        %8583 = vmatprep.subr.bf16.mxu0 0
        %8584 = vmatpush1.bf16.xpose.msra.mxu0 0
        %8585 = vmatprep.subr.bf16.mxu0 0
        %8586 = vmatpush1.bf16.xpose.msra.mxu0 0
        %8587 = vmatprep.subr.bf16.mxu0 0
        %8588 = vmatpush1.bf16.xpose.msra.mxu0 0
        %8589 = vmatprep.subr.bf16.mxu0 0
        %8590 = vmatpush1.bf16.xpose.msra.mxu0 0
        %8591 = vmatprep.subr.bf16.mxu0 0
        %8592 = vmatpush1.bf16.xpose.msra.mxu0 0
        %8593 = vmatprep.subr.bf16.mxu0 0
        %8594 = vmatpush1.bf16.xpose.msra.mxu0 0
        %8595 = vmatprep.mubr.bf16.mxu0 0
        %8596 = vmatmul.mubr.bf16.gmra.mrb[0].mxu0 %v8492
        %v8597 = vpop.f32.mrb[0].mxu0
        %v8598 = vadd.f32 0.0, %v8597
        %v8599 = vpop.f32.mrb[0].mxu0
        %v8600 = vpop.f32.mrb[0].mxu0
        %v8601 = vadd.f32 0.0, %v8600
        %v8602 = vpop.f32.mrb[0].mxu0
        %8603 = vmatprep.mubr.bf16.mxu0 0
        %8604 = vmatmul.mubr.bf16.gmra.mrb[0].mxu0 %v8495
        %v8605 = vpop.f32.mrb[0].mxu0
        %v8606 = vadd.f32 0.0, %v8605
        %v8607 = vpop.f32.mrb[0].mxu0
        %v8608 = vpop.f32.mrb[0].mxu0
        %v8609 = vadd.f32 0.0, %v8608
        %v8610 = vpop.f32.mrb[0].mxu0
        %8611 = vmatprep.mubr.bf16.mxu0 0
        %8612 = vmatmul.mubr.bf16.gmra.mrb[0].mxu0 %v8498
        %v8613 = vpop.f32.mrb[0].mxu0
        %v8614 = vadd.f32 0.0, %v8613
        %v8615 = vpop.f32.mrb[0].mxu0
        %v8616 = vpop.f32.mrb[0].mxu0
        %v8617 = vadd.f32 0.0, %v8616
        %v8618 = vpop.f32.mrb[0].mxu0
        %8619 = vmatprep.mubr.bf16.mxu0 0
        %8620 = vmatmul.mubr.bf16.gmra.mrb[0].mxu0 %v8501
        %v8621 = vpop.f32.mrb[0].mxu0
        %v8622 = vadd.f32 0.0, %v8621
        %v8623 = vpop.f32.mrb[0].mxu0
        %v8624 = vpop.f32.mrb[0].mxu0
        %v8625 = vadd.f32 0.0, %v8624
        %v8626 = vpop.f32.mrb[0].mxu0
        %8627 = vmatprep.mubr.bf16.mxu0 0
        %8628 = vmatmul.mubr.bf16.gmra.mrb[0].mxu0 %v8504
        %v8629 = vpop.f32.mrb[0].mxu0
        %v8630 = vadd.f32 0.0, %v8629
        %v8631 = vpop.f32.mrb[0].mxu0
        %v8632 = vpop.f32.mrb[0].mxu0
        %v8633 = vadd.f32 0.0, %v8632
        %v8634 = vpop.f32.mrb[0].mxu0
        %8635 = vmatprep.mubr.bf16.mxu0 0
        %8636 = vmatmul.mubr.bf16.gmra.mrb[0].mxu0 %v8507
        %v8637 = vpop.f32.mrb[0].mxu0
        %v8638 = vadd.f32 0.0, %v8637
        %v8639 = vpop.f32.mrb[0].mxu0
        %v8640 = vpop.f32.mrb[0].mxu0
        %v8641 = vadd.f32 0.0, %v8640
        %v8642 = vpop.f32.mrb[0].mxu0
        %8643 = vmatprep.mubr.bf16.mxu0 0
        %8644 = vmatmul.mubr.bf16.gmra.mrb[0].mxu0 %v8510
        %v8645 = vpop.f32.mrb[0].mxu0
        %v8646 = vadd.f32 0.0, %v8645
        %v8647 = vpop.f32.mrb[0].mxu0
        %v8648 = vpop.f32.mrb[0].mxu0
        %v8649 = vadd.f32 0.0, %v8648
        %v8650 = vpop.f32.mrb[0].mxu0
        %8651 = vmatprep.mubr.bf16.mxu0 0
        %8652 = vmatmul.mubr.bf16.gmra.mrb[0].mxu0 %v8513
        %v8653 = vpop.f32.mrb[0].mxu0
        %v8654 = vadd.f32 0.0, %v8653
        %v8655 = vpop.f32.mrb[0].mxu0
        %v8656 = vpop.f32.mrb[0].mxu0
        %v8657 = vadd.f32 0.0, %v8656
        %v8658 = vpop.f32.mrb[0].mxu0
        %8659 = vmatprep.mubr.bf16.mxu0 0
        %8660 = vmatmul.mubr.bf16.gmra.mrb[0].mxu0 %v8516
        %v8661 = vpop.f32.mrb[0].mxu0
        %v8662 = vadd.f32 0.0, %v8661
        %v8663 = vpop.f32.mrb[0].mxu0
        %v8664 = vpop.f32.mrb[0].mxu0
        %v8665 = vadd.f32 0.0, %v8664
        %v8666 = vpop.f32.mrb[0].mxu0
        %8667 = vmatprep.mubr.bf16.mxu0 0
        %8668 = vmatmul.mubr.bf16.gmra.mrb[0].mxu0 %v8519
        %v8669 = vpop.f32.mrb[0].mxu0
        %v8670 = vadd.f32 0.0, %v8669
        %v8671 = vpop.f32.mrb[0].mxu0
        %v8672 = vpop.f32.mrb[0].mxu0
        %v8673 = vadd.f32 0.0, %v8672
        %v8674 = vpop.f32.mrb[0].mxu0
        %8675 = vmatprep.mubr.bf16.mxu0 0
        %8676 = vmatmul.mubr.bf16.gmra.mrb[0].mxu0 %v8522
        %v8677 = vpop.f32.mrb[0].mxu0
        %v8678 = vadd.f32 0.0, %v8677
        %v8679 = vpop.f32.mrb[0].mxu0
        %v8680 = vpop.f32.mrb[0].mxu0
        %v8681 = vadd.f32 0.0, %v8680
        %v8682 = vpop.f32.mrb[0].mxu0
        %8683 = vmatprep.mubr.bf16.mxu0 0
        %8684 = vmatmul.mubr.bf16.gmra.mrb[0].mxu0 %v8525
        %v8685 = vpop.f32.mrb[0].mxu0
        %v8686 = vadd.f32 0.0, %v8685
        %v8687 = vpop.f32.mrb[0].mxu0
        %v8688 = vpop.f32.mrb[0].mxu0
        %v8689 = vadd.f32 0.0, %v8688
        %v8690 = vpop.f32.mrb[0].mxu0
        %8691 = vmatprep.mubr.bf16.mxu0 0
        %8692 = vmatmul.mubr.bf16.gmra.mrb[0].mxu0 %v8528
        %v8693 = vpop.f32.mrb[0].mxu0
        %v8694 = vadd.f32 0.0, %v8693
        %v8695 = vpop.f32.mrb[0].mxu0
        %v8696 = vpop.f32.mrb[0].mxu0
        %v8697 = vadd.f32 0.0, %v8696
        %v8698 = vpop.f32.mrb[0].mxu0
        %8699 = vmatprep.mubr.bf16.mxu0 0
        %8700 = vmatmul.mubr.bf16.gmra.mrb[0].mxu0 %v8531
        %v8701 = vpop.f32.mrb[0].mxu0
        %v8702 = vadd.f32 0.0, %v8701
        %v8703 = vpop.f32.mrb[0].mxu0
        %v8704 = vpop.f32.mrb[0].mxu0
        %v8705 = vadd.f32 0.0, %v8704
        %v8706 = vpop.f32.mrb[0].mxu0
        %8707 = vmatprep.mubr.bf16.mxu0 0
        %8708 = vmatmul.mubr.bf16.gmra.mrb[0].mxu0 %v8534
        %v8709 = vpop.f32.mrb[0].mxu0
        %v8710 = vadd.f32 0.0, %v8709
        %v8711 = vpop.f32.mrb[0].mxu0
        %v8712 = vpop.f32.mrb[0].mxu0
        %v8713 = vadd.f32 0.0, %v8712
        %v8714 = vpop.f32.mrb[0].mxu0
        %8715 = vmatprep.mubr.bf16.mxu0 0
        %8716 = vmatmul.mubr.bf16.gmra.mrb[0].mxu0 %v8537
        %v8717 = vpop.f32.mrb[0].mxu0
        %v8718 = vadd.f32 0.0, %v8717
        %v8719 = vpop.f32.mrb[0].mxu0
        %v8720 = vpop.f32.mrb[0].mxu0
        %v8721 = vadd.f32 0.0, %v8720
        %v8722 = vpop.f32.mrb[0].mxu0
        %8723 = vdwg.mxu0
        %8724 = vmax.xlane.f32.xlu0 %v8598
        %v8725 = vpop.xlane.xlu0 %8724
        %8726 = vmax.xlane.f32.xlu0 %v8601
        %v8727 = vpop.xlane.xlu0 %8726
        %8728 = vmax.xlane.f32.xlu0 %v8606
        %v8729 = vpop.xlane.xlu0 %8728
        %8730 = vmax.xlane.f32.xlu0 %v8609
        %v8731 = vpop.xlane.xlu0 %8730
        %8732 = vmax.xlane.f32.xlu0 %v8614
        %v8733 = vpop.xlane.xlu0 %8732
        %8734 = vmax.xlane.f32.xlu0 %v8617
        %v8735 = vpop.xlane.xlu0 %8734
        %8736 = vmax.xlane.f32.xlu0 %v8622
        %v8737 = vpop.xlane.xlu0 %8736
        %8738 = vmax.xlane.f32.xlu0 %v8625
        %v8739 = vpop.xlane.xlu0 %8738
        %8740 = vmax.xlane.f32.xlu0 %v8630
        %v8741 = vpop.xlane.xlu0 %8740
        %8742 = vmax.xlane.f32.xlu0 %v8633
        %v8743 = vpop.xlane.xlu0 %8742
        %8744 = vmax.xlane.f32.xlu0 %v8638
        %v8745 = vpop.xlane.xlu0 %8744
        %8746 = vmax.xlane.f32.xlu0 %v8641
        %v8747 = vpop.xlane.xlu0 %8746
        %8748 = vmax.xlane.f32.xlu0 %v8646
        %v8749 = vpop.xlane.xlu0 %8748
        %8750 = vmax.xlane.f32.xlu0 %v8649
        %v8751 = vpop.xlane.xlu0 %8750
        %8752 = vmax.xlane.f32.xlu0 %v8654
        %v8753 = vpop.xlane.xlu0 %8752
        %8754 = vmax.xlane.f32.xlu0 %v8657
        %v8755 = vpop.xlane.xlu0 %8754
        %8756 = vmax.xlane.f32.xlu0 %v8662
        %v8757 = vpop.xlane.xlu0 %8756
        %8758 = vmax.xlane.f32.xlu0 %v8665
        %v8759 = vpop.xlane.xlu0 %8758
        %8760 = vmax.xlane.f32.xlu0 %v8670
        %v8761 = vpop.xlane.xlu0 %8760
        %8762 = vmax.xlane.f32.xlu0 %v8673
        %v8763 = vpop.xlane.xlu0 %8762
        %8764 = vmax.xlane.f32.xlu0 %v8678
        %v8765 = vpop.xlane.xlu0 %8764
        %8766 = vmax.xlane.f32.xlu0 %v8681
        %v8767 = vpop.xlane.xlu0 %8766
        %8768 = vmax.xlane.f32.xlu0 %v8686
        %v8769 = vpop.xlane.xlu0 %8768
        %8770 = vmax.xlane.f32.xlu0 %v8689
        %v8771 = vpop.xlane.xlu0 %8770
        %8772 = vmax.xlane.f32.xlu0 %v8694
        %v8773 = vpop.xlane.xlu0 %8772
        %8774 = vmax.xlane.f32.xlu0 %v8697
        %v8775 = vpop.xlane.xlu0 %8774
        %8776 = vmax.xlane.f32.xlu0 %v8702
        %v8777 = vpop.xlane.xlu0 %8776
        %8778 = vmax.xlane.f32.xlu0 %v8705
        %v8779 = vpop.xlane.xlu0 %8778
        %8780 = vmax.xlane.f32.xlu0 %v8710
        %v8781 = vpop.xlane.xlu0 %8780
        %8782 = vmax.xlane.f32.xlu0 %v8713
        %v8783 = vpop.xlane.xlu0 %8782
        %8784 = vmax.xlane.f32.xlu0 %v8718
        %v8785 = vpop.xlane.xlu0 %8784
        %8786 = vmax.xlane.f32.xlu0 %v8721
        %v8787 = vpop.xlane.xlu0 %8786
        %v8788 = vsub.f32 %v8598, %v8725
        %v8789 = vsub.f32 %v8601, %v8727
        %v8790 = vsub.f32 %v8606, %v8729
        %v8791 = vsub.f32 %v8609, %v8731
        %v8792 = vsub.f32 %v8614, %v8733
        %v8793 = vsub.f32 %v8617, %v8735
        %v8794 = vsub.f32 %v8622, %v8737
        %v8795 = vsub.f32 %v8625, %v8739
        %v8796 = vsub.f32 %v8630, %v8741
        %v8797 = vsub.f32 %v8633, %v8743
        %v8798 = vsub.f32 %v8638, %v8745
        %v8799 = vsub.f32 %v8641, %v8747
        %v8800 = vsub.f32 %v8646, %v8749
        %v8801 = vsub.f32 %v8649, %v8751
        %v8802 = vsub.f32 %v8654, %v8753
        %v8803 = vsub.f32 %v8657, %v8755
        %v8804 = vsub.f32 %v8662, %v8757
        %v8805 = vsub.f32 %v8665, %v8759
        %v8806 = vsub.f32 %v8670, %v8761
        %v8807 = vsub.f32 %v8673, %v8763
        %v8808 = vsub.f32 %v8678, %v8765
        %v8809 = vsub.f32 %v8681, %v8767
        %v8810 = vsub.f32 %v8686, %v8769
        %v8811 = vsub.f32 %v8689, %v8771
        %v8812 = vsub.f32 %v8694, %v8773
        %v8813 = vsub.f32 %v8697, %v8775
        %v8814 = vsub.f32 %v8702, %v8777
        %v8815 = vsub.f32 %v8705, %v8779
        %v8816 = vsub.f32 %v8710, %v8781
        %v8817 = vsub.f32 %v8713, %v8783
        %v8818 = vsub.f32 %v8718, %v8785
        %v8819 = vsub.f32 %v8721, %v8787
        %v8820 = vmul.f32 %v8788, 1.442695
        %v8821 = vpow.pop %v8820
        %v8822 = vmul.f32 %v8789, 1.442695
        %v8823 = vpow.pop %v8822
        %v8824 = vmul.f32 %v8790, 1.442695
        %v8825 = vpow.pop %v8824
        %v8826 = vmul.f32 %v8791, 1.442695
        %v8827 = vpow.pop %v8826
        %v8828 = vmul.f32 %v8792, 1.442695
        %v8829 = vpow.pop %v8828
        %v8830 = vmul.f32 %v8793, 1.442695
        %v8831 = vpow.pop %v8830
        %v8832 = vmul.f32 %v8794, 1.442695
        %v8833 = vpow.pop %v8832
        %v8834 = vmul.f32 %v8795, 1.442695
        %v8835 = vpow.pop %v8834
        %v8836 = vmul.f32 %v8796, 1.442695
        %v8837 = vpow.pop %v8836
        %v8838 = vmul.f32 %v8797, 1.442695
        %v8839 = vpow.pop %v8838
        %v8840 = vmul.f32 %v8798, 1.442695
        %v8841 = vpow.pop %v8840
        %v8842 = vmul.f32 %v8799, 1.442695
        %v8843 = vpow.pop %v8842
        %v8844 = vmul.f32 %v8800, 1.442695
        %v8845 = vpow.pop %v8844
        %v8846 = vmul.f32 %v8801, 1.442695
        %v8847 = vpow.pop %v8846
        %v8848 = vmul.f32 %v8802, 1.442695
        %v8849 = vpow.pop %v8848
        %v8850 = vmul.f32 %v8803, 1.442695
        %v8851 = vpow.pop %v8850
        %v8852 = vmul.f32 %v8804, 1.442695
        %v8853 = vpow.pop %v8852
        %v8854 = vmul.f32 %v8805, 1.442695
        %v8855 = vpow.pop %v8854
        %v8856 = vmul.f32 %v8806, 1.442695
        %v8857 = vpow.pop %v8856
        %v8858 = vmul.f32 %v8807, 1.442695
        %v8859 = vpow.pop %v8858
        %v8860 = vmul.f32 %v8808, 1.442695
        %v8861 = vpow.pop %v8860
        %v8862 = vmul.f32 %v8809, 1.442695
        %v8863 = vpow.pop %v8862
        %v8864 = vmul.f32 %v8810, 1.442695
        %v8865 = vpow.pop %v8864
        %v8866 = vmul.f32 %v8811, 1.442695
        %v8867 = vpow.pop %v8866
        %v8868 = vmul.f32 %v8812, 1.442695
        %v8869 = vpow.pop %v8868
        %v8870 = vmul.f32 %v8813, 1.442695
        %v8871 = vpow.pop %v8870
        %v8872 = vmul.f32 %v8814, 1.442695
        %v8873 = vpow.pop %v8872
        %v8874 = vmul.f32 %v8815, 1.442695
        %v8875 = vpow.pop %v8874
        %v8876 = vmul.f32 %v8816, 1.442695
        %v8877 = vpow.pop %v8876
        %v8878 = vmul.f32 %v8817, 1.442695
        %v8879 = vpow.pop %v8878
        %v8880 = vmul.f32 %v8818, 1.442695
        %v8881 = vpow.pop %v8880
        %v8882 = vmul.f32 %v8819, 1.442695
        %v8883 = vpow.pop %v8882
        %8884 = vadd.xlane.f32.xlu0 %v8821
        %v8885 = vpop.xlane.xlu0 %8884
        %8886 = vadd.xlane.f32.xlu0 %v8823
        %v8887 = vpop.xlane.xlu0 %8886
        %8888 = vadd.xlane.f32.xlu0 %v8825
        %v8889 = vpop.xlane.xlu0 %8888
        %8890 = vadd.xlane.f32.xlu0 %v8827
        %v8891 = vpop.xlane.xlu0 %8890
        %8892 = vadd.xlane.f32.xlu0 %v8829
        %v8893 = vpop.xlane.xlu0 %8892
        %8894 = vadd.xlane.f32.xlu0 %v8831
        %v8895 = vpop.xlane.xlu0 %8894
        %8896 = vadd.xlane.f32.xlu0 %v8833
        %v8897 = vpop.xlane.xlu0 %8896
        %8898 = vadd.xlane.f32.xlu0 %v8835
        %v8899 = vpop.xlane.xlu0 %8898
        %8900 = vadd.xlane.f32.xlu0 %v8837
        %v8901 = vpop.xlane.xlu0 %8900
        %8902 = vadd.xlane.f32.xlu0 %v8839
        %v8903 = vpop.xlane.xlu0 %8902
        %8904 = vadd.xlane.f32.xlu0 %v8841
        %v8905 = vpop.xlane.xlu0 %8904
        %8906 = vadd.xlane.f32.xlu0 %v8843
        %v8907 = vpop.xlane.xlu0 %8906
        %8908 = vadd.xlane.f32.xlu0 %v8845
        %v8909 = vpop.xlane.xlu0 %8908
        %8910 = vadd.xlane.f32.xlu0 %v8847
        %v8911 = vpop.xlane.xlu0 %8910
        %8912 = vadd.xlane.f32.xlu0 %v8849
        %v8913 = vpop.xlane.xlu0 %8912
        %8914 = vadd.xlane.f32.xlu0 %v8851
        %v8915 = vpop.xlane.xlu0 %8914
        %8916 = vadd.xlane.f32.xlu0 %v8853
        %v8917 = vpop.xlane.xlu0 %8916
        %8918 = vadd.xlane.f32.xlu0 %v8855
        %v8919 = vpop.xlane.xlu0 %8918
        %8920 = vadd.xlane.f32.xlu0 %v8857
        %v8921 = vpop.xlane.xlu0 %8920
        %8922 = vadd.xlane.f32.xlu0 %v8859
        %v8923 = vpop.xlane.xlu0 %8922
        %8924 = vadd.xlane.f32.xlu0 %v8861
        %v8925 = vpop.xlane.xlu0 %8924
        %8926 = vadd.xlane.f32.xlu0 %v8863
        %v8927 = vpop.xlane.xlu0 %8926
        %8928 = vadd.xlane.f32.xlu0 %v8865
        %v8929 = vpop.xlane.xlu0 %8928
        %8930 = vadd.xlane.f32.xlu0 %v8867
        %v8931 = vpop.xlane.xlu0 %8930
        %8932 = vadd.xlane.f32.xlu0 %v8869
        %v8933 = vpop.xlane.xlu0 %8932
        %8934 = vadd.xlane.f32.xlu0 %v8871
        %v8935 = vpop.xlane.xlu0 %8934
        %8936 = vadd.xlane.f32.xlu0 %v8873
        %v8937 = vpop.xlane.xlu0 %8936
        %8938 = vadd.xlane.f32.xlu0 %v8875
        %v8939 = vpop.xlane.xlu0 %8938
        %8940 = vadd.xlane.f32.xlu0 %v8877
        %v8941 = vpop.xlane.xlu0 %8940
        %8942 = vadd.xlane.f32.xlu0 %v8879
        %v8943 = vpop.xlane.xlu0 %8942
        %8944 = vadd.xlane.f32.xlu0 %v8881
        %v8945 = vpop.xlane.xlu0 %8944
        %8946 = vadd.xlane.f32.xlu0 %v8883
        %v8947 = vpop.xlane.xlu0 %8946
        %v8948 = vrcp.pop %v8885
        %v8949 = vrcp.pop %v8887
        %v8950 = vrcp.pop %v8889
        %v8951 = vrcp.pop %v8891
        %v8952 = vrcp.pop %v8893
        %v8953 = vrcp.pop %v8895
        %v8954 = vrcp.pop %v8897
        %v8955 = vrcp.pop %v8899
        %v8956 = vrcp.pop %v8901
        %v8957 = vrcp.pop %v8903
        %v8958 = vrcp.pop %v8905
        %v8959 = vrcp.pop %v8907
        %v8960 = vrcp.pop %v8909
        %v8961 = vrcp.pop %v8911
        %v8962 = vrcp.pop %v8913
        %v8963 = vrcp.pop %v8915
        %v8964 = vrcp.pop %v8917
        %v8965 = vrcp.pop %v8919
        %v8966 = vrcp.pop %v8921
        %v8967 = vrcp.pop %v8923
        %v8968 = vrcp.pop %v8925
        %v8969 = vrcp.pop %v8927
        %v8970 = vrcp.pop %v8929
        %v8971 = vrcp.pop %v8931
        %v8972 = vrcp.pop %v8933
        %v8973 = vrcp.pop %v8935
        %v8974 = vrcp.pop %v8937
        %v8975 = vrcp.pop %v8939
        %v8976 = vrcp.pop %v8941
        %v8977 = vrcp.pop %v8943
        %v8978 = vrcp.pop %v8945
        %v8979 = vrcp.pop %v8947
        %v8980 = vmul.f32 %v8821, %v8948
        %v8981 = vmul.f32 %v8823, %v8949
        %v8982 = vmul.f32 %v8825, %v8950
        %v8983 = vmul.f32 %v8827, %v8951
        %v8984 = vmul.f32 %v8829, %v8952
        %v8985 = vmul.f32 %v8831, %v8953
        %v8986 = vmul.f32 %v8833, %v8954
        %v8987 = vmul.f32 %v8835, %v8955
        %v8988 = vmul.f32 %v8837, %v8956
        %v8989 = vmul.f32 %v8839, %v8957
        %v8990 = vmul.f32 %v8841, %v8958
        %v8991 = vmul.f32 %v8843, %v8959
        %v8992 = vmul.f32 %v8845, %v8960
        %v8993 = vmul.f32 %v8847, %v8961
        %v8994 = vmul.f32 %v8849, %v8962
        %v8995 = vmul.f32 %v8851, %v8963
        %v8996 = vmul.f32 %v8853, %v8964
        %v8997 = vmul.f32 %v8855, %v8965
        %v8998 = vmul.f32 %v8857, %v8966
        %v8999 = vmul.f32 %v8859, %v8967
        %v9000 = vmul.f32 %v8861, %v8968
        %v9001 = vmul.f32 %v8863, %v8969
        %v9002 = vmul.f32 %v8865, %v8970
        %v9003 = vmul.f32 %v8867, %v8971
        %v9004 = vmul.f32 %v8869, %v8972
        %v9005 = vmul.f32 %v8871, %v8973
        %v9006 = vmul.f32 %v8873, %v8974
        %v9007 = vmul.f32 %v8875, %v8975
        %v9008 = vmul.f32 %v8877, %v8976
        %v9009 = vmul.f32 %v8879, %v8977
        %v9010 = vmul.f32 %v8881, %v8978
        %v9011 = vmul.f32 %v8883, %v8979
        %v9012 = vld [vmem:[#allocation5] sm:$0xff]
        %v9013 = vld [vmem:[#allocation5 + $0x8] sm:$0xff]
        %v9014 = vld [vmem:[#allocation5 + $0x10] sm:$0xff]
        %v9015 = vld [vmem:[#allocation5 + $0x18] sm:$0xff]
        %v9016 = vld [vmem:[#allocation5 + $0x20] sm:$0xff]
        %v9017 = vld [vmem:[#allocation5 + $0x28] sm:$0xff]
        %v9018 = vld [vmem:[#allocation5 + $0x30] sm:$0xff]
        %v9019 = vld [vmem:[#allocation5 + $0x38] sm:$0xff]
        %v9020 = vld [vmem:[#allocation5 + $0x40] sm:$0xff]
        %v9021 = vld [vmem:[#allocation5 + $0x48] sm:$0xff]
        %v9022 = vld [vmem:[#allocation5 + $0x50] sm:$0xff]
        %v9023 = vld [vmem:[#allocation5 + $0x58] sm:$0xff]
        %v9024 = vld [vmem:[#allocation5 + $0x60] sm:$0xff]
        %v9025 = vld [vmem:[#allocation5 + $0x68] sm:$0xff]
        %v9026 = vld [vmem:[#allocation5 + $0x70] sm:$0xff]
        %v9027 = vld [vmem:[#allocation5 + $0x78] sm:$0xff]
        %v9028 = vld [vmem:[#allocation5 + $0x80] sm:$0xff]
        %v9029 = vld [vmem:[#allocation5 + $0x88] sm:$0xff]
        %v9030 = vld [vmem:[#allocation5 + $0x90] sm:$0xff]
        %v9031 = vld [vmem:[#allocation5 + $0x98] sm:$0xff]
        %v9032 = vld [vmem:[#allocation5 + $0xa0] sm:$0xff]
        %v9033 = vld [vmem:[#allocation5 + $0xa8] sm:$0xff]
        %v9034 = vld [vmem:[#allocation5 + $0xb0] sm:$0xff]
        %v9035 = vld [vmem:[#allocation5 + $0xb8] sm:$0xff]
        %v9036 = vld [vmem:[#allocation5 + $0xc0] sm:$0xff]
        %v9037 = vld [vmem:[#allocation5 + $0xc8] sm:$0xff]
        %v9038 = vld [vmem:[#allocation5 + $0xd0] sm:$0xff]
        %v9039 = vld [vmem:[#allocation5 + $0xd8] sm:$0xff]
        %v9040 = vld [vmem:[#allocation5 + $0xe0] sm:$0xff]
        %v9041 = vld [vmem:[#allocation5 + $0xe8] sm:$0xff]
        %v9042 = vld [vmem:[#allocation5 + $0xf0] sm:$0xff]
        %v9043 = vld [vmem:[#allocation5 + $0xf8] sm:$0xff]
        %v9044 = vpack.c.bf16 %v8981, %v8980
        %v9045 = vpack.c.bf16 %v8983, %v8982
        %v9046 = vpack.c.bf16 %v8985, %v8984
        %v9047 = vpack.c.bf16 %v8987, %v8986
        %v9048 = vpack.c.bf16 %v8989, %v8988
        %v9049 = vpack.c.bf16 %v8991, %v8990
        %v9050 = vpack.c.bf16 %v8993, %v8992
        %v9051 = vpack.c.bf16 %v8995, %v8994
        %v9052 = vpack.c.bf16 %v8997, %v8996
        %v9053 = vpack.c.bf16 %v8999, %v8998
        %v9054 = vpack.c.bf16 %v9001, %v9000
        %v9055 = vpack.c.bf16 %v9003, %v9002
        %v9056 = vpack.c.bf16 %v9005, %v9004
        %v9057 = vpack.c.bf16 %v9007, %v9006
        %v9058 = vpack.c.bf16 %v9009, %v9008
        %v9059 = vpack.c.bf16 %v9011, %v9010
        %s9060 = scalar_lea.vmem [#allocation4], 448
        %v9061 = vld [vmem:[%s9060] sm:$0xff]
        %v9062 = vld [vmem:[%s9060 + $0x8] sm:$0xff]
        %v9063 = vld [vmem:[%s9060 + $0x10] sm:$0xff]
        %v9064 = vld [vmem:[%s9060 + $0x18] sm:$0xff]
        %v9065 = vld [vmem:[%s9060 + $0x20] sm:$0xff]
        %v9066 = vld [vmem:[%s9060 + $0x28] sm:$0xff]
        %v9067 = vld [vmem:[%s9060 + $0x30] sm:$0xff]
        %v9068 = vld [vmem:[%s9060 + $0x38] sm:$0xff]
        %9069 = vmatprep.subr.bf16.mxu0 0
        %9070 = vmatpush1.bf16.msra.mxu0 %v9061
        %9071 = vmatprep.subr.bf16.mxu0 0
        %9072 = vmatpush1.bf16.msra.mxu0 %v9062
        %9073 = vmatprep.subr.bf16.mxu0 0
        %9074 = vmatpush1.bf16.msra.mxu0 %v9063
        %9075 = vmatprep.subr.bf16.mxu0 0
        %9076 = vmatpush1.bf16.msra.mxu0 %v9064
        %9077 = vmatprep.subr.bf16.mxu0 0
        %9078 = vmatpush1.bf16.msra.mxu0 %v9065
        %9079 = vmatprep.subr.bf16.mxu0 0
        %9080 = vmatpush1.bf16.msra.mxu0 %v9066
        %9081 = vmatprep.subr.bf16.mxu0 0
        %9082 = vmatpush1.bf16.msra.mxu0 %v9067
        %9083 = vmatprep.subr.bf16.mxu0 0
        %9084 = vmatpush1.bf16.msra.mxu0 %v9068
        %9085 = vmatprep.subr.bf16.mxu0 0
        %9086 = vmatpush1.bf16.msra.mxu0 0
        %9087 = vmatprep.subr.bf16.mxu0 0
        %9088 = vmatpush1.bf16.msra.mxu0 0
        %9089 = vmatprep.subr.bf16.mxu0 0
        %9090 = vmatpush1.bf16.msra.mxu0 0
        %9091 = vmatprep.subr.bf16.mxu0 0
        %9092 = vmatpush1.bf16.msra.mxu0 0
        %9093 = vmatprep.subr.bf16.mxu0 0
        %9094 = vmatpush1.bf16.msra.mxu0 0
        %9095 = vmatprep.subr.bf16.mxu0 0
        %9096 = vmatpush1.bf16.msra.mxu0 0
        %9097 = vmatprep.subr.bf16.mxu0 0
        %9098 = vmatpush1.bf16.msra.mxu0 0
        %9099 = vmatprep.subr.bf16.mxu0 0
        %9100 = vmatpush1.bf16.msra.mxu0 0
        %9101 = vmatprep.mubr.bf16.mxu0 0
        %9102 = vmatmul.mubr.bf16.gmra.mrb[0].mxu0 %v9044
        %v9103 = vpop.f32.mrb[0].mxu0
        %v9104 = vadd.f32 0.0, %v9103
        %v9105 = vpop.f32.mrb[0].mxu0
        %v9106 = vpop.f32.mrb[0].mxu0
        %v9107 = vadd.f32 0.0, %v9106
        %v9108 = vpop.f32.mrb[0].mxu0
        %9109 = vmatprep.mubr.bf16.mxu0 0
        %9110 = vmatmul.mubr.bf16.gmra.mrb[0].mxu0 %v9045
        %v9111 = vpop.f32.mrb[0].mxu0
        %v9112 = vadd.f32 0.0, %v9111
        %v9113 = vpop.f32.mrb[0].mxu0
        %v9114 = vpop.f32.mrb[0].mxu0
        %v9115 = vadd.f32 0.0, %v9114
        %v9116 = vpop.f32.mrb[0].mxu0
        %9117 = vmatprep.mubr.bf16.mxu0 0
        %9118 = vmatmul.mubr.bf16.gmra.mrb[0].mxu0 %v9046
        %v9119 = vpop.f32.mrb[0].mxu0
        %v9120 = vadd.f32 0.0, %v9119
        %v9121 = vpop.f32.mrb[0].mxu0
        %v9122 = vpop.f32.mrb[0].mxu0
        %v9123 = vadd.f32 0.0, %v9122
        %v9124 = vpop.f32.mrb[0].mxu0
        %9125 = vmatprep.mubr.bf16.mxu0 0
        %9126 = vmatmul.mubr.bf16.gmra.mrb[0].mxu0 %v9047
        %v9127 = vpop.f32.mrb[0].mxu0
        %v9128 = vadd.f32 0.0, %v9127
        %v9129 = vpop.f32.mrb[0].mxu0
        %v9130 = vpop.f32.mrb[0].mxu0
        %v9131 = vadd.f32 0.0, %v9130
        %v9132 = vpop.f32.mrb[0].mxu0
        %9133 = vmatprep.mubr.bf16.mxu0 0
        %9134 = vmatmul.mubr.bf16.gmra.mrb[0].mxu0 %v9048
        %v9135 = vpop.f32.mrb[0].mxu0
        %v9136 = vadd.f32 0.0, %v9135
        %v9137 = vpop.f32.mrb[0].mxu0
        %v9138 = vpop.f32.mrb[0].mxu0
        %v9139 = vadd.f32 0.0, %v9138
        %v9140 = vpop.f32.mrb[0].mxu0
        %9141 = vmatprep.mubr.bf16.mxu0 0
        %9142 = vmatmul.mubr.bf16.gmra.mrb[0].mxu0 %v9049
        %v9143 = vpop.f32.mrb[0].mxu0
        %v9144 = vadd.f32 0.0, %v9143
        %v9145 = vpop.f32.mrb[0].mxu0
        %v9146 = vpop.f32.mrb[0].mxu0
        %v9147 = vadd.f32 0.0, %v9146
        %v9148 = vpop.f32.mrb[0].mxu0
        %9149 = vmatprep.mubr.bf16.mxu0 0
        %9150 = vmatmul.mubr.bf16.gmra.mrb[0].mxu0 %v9050
        %v9151 = vpop.f32.mrb[0].mxu0
        %v9152 = vadd.f32 0.0, %v9151
        %v9153 = vpop.f32.mrb[0].mxu0
        %v9154 = vpop.f32.mrb[0].mxu0
        %v9155 = vadd.f32 0.0, %v9154
        %v9156 = vpop.f32.mrb[0].mxu0
        %9157 = vmatprep.mubr.bf16.mxu0 0
        %9158 = vmatmul.mubr.bf16.gmra.mrb[0].mxu0 %v9051
        %v9159 = vpop.f32.mrb[0].mxu0
        %v9160 = vadd.f32 0.0, %v9159
        %v9161 = vpop.f32.mrb[0].mxu0
        %v9162 = vpop.f32.mrb[0].mxu0
        %v9163 = vadd.f32 0.0, %v9162
        %v9164 = vpop.f32.mrb[0].mxu0
        %9165 = vmatprep.mubr.bf16.mxu0 0
        %9166 = vmatmul.mubr.bf16.gmra.mrb[0].mxu0 %v9052
        %v9167 = vpop.f32.mrb[0].mxu0
        %v9168 = vadd.f32 0.0, %v9167
        %v9169 = vpop.f32.mrb[0].mxu0
        %v9170 = vpop.f32.mrb[0].mxu0
        %v9171 = vadd.f32 0.0, %v9170
        %v9172 = vpop.f32.mrb[0].mxu0
        %9173 = vmatprep.mubr.bf16.mxu0 0
        %9174 = vmatmul.mubr.bf16.gmra.mrb[0].mxu0 %v9053
        %v9175 = vpop.f32.mrb[0].mxu0
        %v9176 = vadd.f32 0.0, %v9175
        %v9177 = vpop.f32.mrb[0].mxu0
        %v9178 = vpop.f32.mrb[0].mxu0
        %v9179 = vadd.f32 0.0, %v9178
        %v9180 = vpop.f32.mrb[0].mxu0
        %9181 = vmatprep.mubr.bf16.mxu0 0
        %9182 = vmatmul.mubr.bf16.gmra.mrb[0].mxu0 %v9054
        %v9183 = vpop.f32.mrb[0].mxu0
        %v9184 = vadd.f32 0.0, %v9183
        %v9185 = vpop.f32.mrb[0].mxu0
        %v9186 = vpop.f32.mrb[0].mxu0
        %v9187 = vadd.f32 0.0, %v9186
        %v9188 = vpop.f32.mrb[0].mxu0
        %9189 = vmatprep.mubr.bf16.mxu0 0
        %9190 = vmatmul.mubr.bf16.gmra.mrb[0].mxu0 %v9055
        %v9191 = vpop.f32.mrb[0].mxu0
        %v9192 = vadd.f32 0.0, %v9191
        %v9193 = vpop.f32.mrb[0].mxu0
        %v9194 = vpop.f32.mrb[0].mxu0
        %v9195 = vadd.f32 0.0, %v9194
        %v9196 = vpop.f32.mrb[0].mxu0
        %9197 = vmatprep.mubr.bf16.mxu0 0
        %9198 = vmatmul.mubr.bf16.gmra.mrb[0].mxu0 %v9056
        %v9199 = vpop.f32.mrb[0].mxu0
        %v9200 = vadd.f32 0.0, %v9199
        %v9201 = vpop.f32.mrb[0].mxu0
        %v9202 = vpop.f32.mrb[0].mxu0
        %v9203 = vadd.f32 0.0, %v9202
        %v9204 = vpop.f32.mrb[0].mxu0
        %9205 = vmatprep.mubr.bf16.mxu0 0
        %9206 = vmatmul.mubr.bf16.gmra.mrb[0].mxu0 %v9057
        %v9207 = vpop.f32.mrb[0].mxu0
        %v9208 = vadd.f32 0.0, %v9207
        %v9209 = vpop.f32.mrb[0].mxu0
        %v9210 = vpop.f32.mrb[0].mxu0
        %v9211 = vadd.f32 0.0, %v9210
        %v9212 = vpop.f32.mrb[0].mxu0
        %9213 = vmatprep.mubr.bf16.mxu0 0
        %9214 = vmatmul.mubr.bf16.gmra.mrb[0].mxu0 %v9058
        %v9215 = vpop.f32.mrb[0].mxu0
        %v9216 = vadd.f32 0.0, %v9215
        %v9217 = vpop.f32.mrb[0].mxu0
        %v9218 = vpop.f32.mrb[0].mxu0
        %v9219 = vadd.f32 0.0, %v9218
        %v9220 = vpop.f32.mrb[0].mxu0
        %9221 = vmatprep.mubr.bf16.mxu0 0
        %9222 = vmatmul.mubr.bf16.gmra.mrb[0].mxu0 %v9059
        %v9223 = vpop.f32.mrb[0].mxu0
        %v9224 = vadd.f32 0.0, %v9223
        %v9225 = vpop.f32.mrb[0].mxu0
        %v9226 = vpop.f32.mrb[0].mxu0
        %v9227 = vadd.f32 0.0, %v9226
        %v9228 = vpop.f32.mrb[0].mxu0
        %9229 = vdwg.mxu0
        %v9230 = vadd.f32 %v9012, %v9104
        %v9231 = vadd.f32 %v9013, %v9107
        %v9232 = vadd.f32 %v9014, %v9112
        %v9233 = vadd.f32 %v9015, %v9115
        %v9234 = vadd.f32 %v9016, %v9120
        %v9235 = vadd.f32 %v9017, %v9123
        %v9236 = vadd.f32 %v9018, %v9128
        %v9237 = vadd.f32 %v9019, %v9131
        %v9238 = vadd.f32 %v9020, %v9136
        %v9239 = vadd.f32 %v9021, %v9139
        %v9240 = vadd.f32 %v9022, %v9144
        %v9241 = vadd.f32 %v9023, %v9147
        %v9242 = vadd.f32 %v9024, %v9152
        %v9243 = vadd.f32 %v9025, %v9155
        %v9244 = vadd.f32 %v9026, %v9160
        %v9245 = vadd.f32 %v9027, %v9163
        %v9246 = vadd.f32 %v9028, %v9168
        %v9247 = vadd.f32 %v9029, %v9171
        %v9248 = vadd.f32 %v9030, %v9176
        %v9249 = vadd.f32 %v9031, %v9179
        %v9250 = vadd.f32 %v9032, %v9184
        %v9251 = vadd.f32 %v9033, %v9187
        %v9252 = vadd.f32 %v9034, %v9192
        %v9253 = vadd.f32 %v9035, %v9195
        %v9254 = vadd.f32 %v9036, %v9200
        %v9255 = vadd.f32 %v9037, %v9203
        %v9256 = vadd.f32 %v9038, %v9208
        %v9257 = vadd.f32 %v9039, %v9211
        %v9258 = vadd.f32 %v9040, %v9216
        %v9259 = vadd.f32 %v9041, %v9219
        %v9260 = vadd.f32 %v9042, %v9224
        %v9261 = vadd.f32 %v9043, %v9227
        %9262 = vst [vmem:[#allocation5] sm:$0xff] %v9230
        %9263 = vst [vmem:[#allocation5 + $0x8] sm:$0xff] %v9231
        %9264 = vst [vmem:[#allocation5 + $0x10] sm:$0xff] %v9232
        %9265 = vst [vmem:[#allocation5 + $0x18] sm:$0xff] %v9233
        %9266 = vst [vmem:[#allocation5 + $0x20] sm:$0xff] %v9234
        %9267 = vst [vmem:[#allocation5 + $0x28] sm:$0xff] %v9235
        %9268 = vst [vmem:[#allocation5 + $0x30] sm:$0xff] %v9236
        %9269 = vst [vmem:[#allocation5 + $0x38] sm:$0xff] %v9237
        %9270 = vst [vmem:[#allocation5 + $0x40] sm:$0xff] %v9238
        %9271 = vst [vmem:[#allocation5 + $0x48] sm:$0xff] %v9239
        %9272 = vst [vmem:[#allocation5 + $0x50] sm:$0xff] %v9240
        %9273 = vst [vmem:[#allocation5 + $0x58] sm:$0xff] %v9241
        %9274 = vst [vmem:[#allocation5 + $0x60] sm:$0xff] %v9242
        %9275 = vst [vmem:[#allocation5 + $0x68] sm:$0xff] %v9243
        %9276 = vst [vmem:[#allocation5 + $0x70] sm:$0xff] %v9244
        %9277 = vst [vmem:[#allocation5 + $0x78] sm:$0xff] %v9245
        %9278 = vst [vmem:[#allocation5 + $0x80] sm:$0xff] %v9246
        %9279 = vst [vmem:[#allocation5 + $0x88] sm:$0xff] %v9247
        %9280 = vst [vmem:[#allocation5 + $0x90] sm:$0xff] %v9248
        %9281 = vst [vmem:[#allocation5 + $0x98] sm:$0xff] %v9249
        %9282 = vst [vmem:[#allocation5 + $0xa0] sm:$0xff] %v9250
        %9283 = vst [vmem:[#allocation5 + $0xa8] sm:$0xff] %v9251
        %9284 = vst [vmem:[#allocation5 + $0xb0] sm:$0xff] %v9252
        %9285 = vst [vmem:[#allocation5 + $0xb8] sm:$0xff] %v9253
        %9286 = vst [vmem:[#allocation5 + $0xc0] sm:$0xff] %v9254
        %9287 = vst [vmem:[#allocation5 + $0xc8] sm:$0xff] %v9255
        %9288 = vst [vmem:[#allocation5 + $0xd0] sm:$0xff] %v9256
        %9289 = vst [vmem:[#allocation5 + $0xd8] sm:$0xff] %v9257
        %9290 = vst [vmem:[#allocation5 + $0xe0] sm:$0xff] %v9258
        %9291 = vst [vmem:[#allocation5 + $0xe8] sm:$0xff] %v9259
        %9292 = vst [vmem:[#allocation5 + $0xf0] sm:$0xff] %v9260
        %9293 = vst [vmem:[#allocation5 + $0xf8] sm:$0xff] %v9261
        %v9294 = vld [vmem:[#allocation5] sm:$0xff]
        %v9295 = vld [vmem:[#allocation5 + $0x8] sm:$0xff]
        %v9296 = vld [vmem:[#allocation5 + $0x10] sm:$0xff]
        %v9297 = vld [vmem:[#allocation5 + $0x18] sm:$0xff]
        %v9298 = vld [vmem:[#allocation5 + $0x20] sm:$0xff]
        %v9299 = vld [vmem:[#allocation5 + $0x28] sm:$0xff]
        %v9300 = vld [vmem:[#allocation5 + $0x30] sm:$0xff]
        %v9301 = vld [vmem:[#allocation5 + $0x38] sm:$0xff]
        %v9302 = vld [vmem:[#allocation5 + $0x40] sm:$0xff]
        %v9303 = vld [vmem:[#allocation5 + $0x48] sm:$0xff]
        %v9304 = vld [vmem:[#allocation5 + $0x50] sm:$0xff]
        %v9305 = vld [vmem:[#allocation5 + $0x58] sm:$0xff]
        %v9306 = vld [vmem:[#allocation5 + $0x60] sm:$0xff]
        %v9307 = vld [vmem:[#allocation5 + $0x68] sm:$0xff]
        %v9308 = vld [vmem:[#allocation5 + $0x70] sm:$0xff]
        %v9309 = vld [vmem:[#allocation5 + $0x78] sm:$0xff]
        %v9310 = vld [vmem:[#allocation5 + $0x80] sm:$0xff]
        %v9311 = vld [vmem:[#allocation5 + $0x88] sm:$0xff]
        %v9312 = vld [vmem:[#allocation5 + $0x90] sm:$0xff]
        %v9313 = vld [vmem:[#allocation5 + $0x98] sm:$0xff]
        %v9314 = vld [vmem:[#allocation5 + $0xa0] sm:$0xff]
        %v9315 = vld [vmem:[#allocation5 + $0xa8] sm:$0xff]
        %v9316 = vld [vmem:[#allocation5 + $0xb0] sm:$0xff]
        %v9317 = vld [vmem:[#allocation5 + $0xb8] sm:$0xff]
        %v9318 = vld [vmem:[#allocation5 + $0xc0] sm:$0xff]
        %v9319 = vld [vmem:[#allocation5 + $0xc8] sm:$0xff]
        %v9320 = vld [vmem:[#allocation5 + $0xd0] sm:$0xff]
        %v9321 = vld [vmem:[#allocation5 + $0xd8] sm:$0xff]
        %v9322 = vld [vmem:[#allocation5 + $0xe0] sm:$0xff]
        %v9323 = vld [vmem:[#allocation5 + $0xe8] sm:$0xff]
        %v9324 = vld [vmem:[#allocation5 + $0xf0] sm:$0xff]
        %v9325 = vld [vmem:[#allocation5 + $0xf8] sm:$0xff]
        %v9326 = vld [vmem:[%s5] sm:$0x1]
        %v9328 = vlaneseq
        %v9329 = vshrl.u32 %v9328, 7
        %v9330 = vsub.s32 0, %v9329
        %v9331 = vrot.slane %v9326, %v9330
        %v9333 = vadd.f32 %v9294, %v9331
        %v9334 = vadd.f32 %v9295, %v9331
        %v9335 = vadd.f32 %v9296, %v9331
        %v9336 = vadd.f32 %v9297, %v9331
        %v9337 = vadd.f32 %v9298, %v9331
        %v9338 = vadd.f32 %v9299, %v9331
        %v9339 = vadd.f32 %v9300, %v9331
        %v9340 = vadd.f32 %v9301, %v9331
        %v9341 = vadd.f32 %v9302, %v9331
        %v9342 = vadd.f32 %v9303, %v9331
        %v9343 = vadd.f32 %v9304, %v9331
        %v9344 = vadd.f32 %v9305, %v9331
        %v9345 = vadd.f32 %v9306, %v9331
        %v9346 = vadd.f32 %v9307, %v9331
        %v9347 = vadd.f32 %v9308, %v9331
        %v9348 = vadd.f32 %v9309, %v9331
        %v9349 = vadd.f32 %v9310, %v9331
        %v9350 = vadd.f32 %v9311, %v9331
        %v9351 = vadd.f32 %v9312, %v9331
        %v9352 = vadd.f32 %v9313, %v9331
        %v9353 = vadd.f32 %v9314, %v9331
        %v9354 = vadd.f32 %v9315, %v9331
        %v9355 = vadd.f32 %v9316, %v9331
        %v9356 = vadd.f32 %v9317, %v9331
        %v9357 = vadd.f32 %v9318, %v9331
        %v9358 = vadd.f32 %v9319, %v9331
        %v9359 = vadd.f32 %v9320, %v9331
        %v9360 = vadd.f32 %v9321, %v9331
        %v9361 = vadd.f32 %v9322, %v9331
        %v9362 = vadd.f32 %v9323, %v9331
        %v9363 = vadd.f32 %v9324, %v9331
        %v9364 = vadd.f32 %v9325, %v9331
        %9365 = vst [vmem:[%s302] sm:$0xff] %v9333
        %9366 = vst [vmem:[%s302 + $0x8] sm:$0xff] %v9334
        %9367 = vst [vmem:[%s302 + $0x10] sm:$0xff] %v9335
        %9368 = vst [vmem:[%s302 + $0x18] sm:$0xff] %v9336
        %9369 = vst [vmem:[%s302 + $0x20] sm:$0xff] %v9337
        %9370 = vst [vmem:[%s302 + $0x28] sm:$0xff] %v9338
        %9371 = vst [vmem:[%s302 + $0x30] sm:$0xff] %v9339
        %9372 = vst [vmem:[%s302 + $0x38] sm:$0xff] %v9340
        %9373 = vst [vmem:[%s302 + $0x40] sm:$0xff] %v9341
        %9374 = vst [vmem:[%s302 + $0x48] sm:$0xff] %v9342
        %9375 = vst [vmem:[%s302 + $0x50] sm:$0xff] %v9343
        %9376 = vst [vmem:[%s302 + $0x58] sm:$0xff] %v9344
        %9377 = vst [vmem:[%s302 + $0x60] sm:$0xff] %v9345
        %9378 = vst [vmem:[%s302 + $0x68] sm:$0xff] %v9346
        %9379 = vst [vmem:[%s302 + $0x70] sm:$0xff] %v9347
        %9380 = vst [vmem:[%s302 + $0x78] sm:$0xff] %v9348
        %9381 = vst [vmem:[%s302 + $0x80] sm:$0xff] %v9349
        %9382 = vst [vmem:[%s302 + $0x88] sm:$0xff] %v9350
        %9383 = vst [vmem:[%s302 + $0x90] sm:$0xff] %v9351
        %9384 = vst [vmem:[%s302 + $0x98] sm:$0xff] %v9352
        %9385 = vst [vmem:[%s302 + $0xa0] sm:$0xff] %v9353
        %9386 = vst [vmem:[%s302 + $0xa8] sm:$0xff] %v9354
        %9387 = vst [vmem:[%s302 + $0xb0] sm:$0xff] %v9355
        %9388 = vst [vmem:[%s302 + $0xb8] sm:$0xff] %v9356
        %9389 = vst [vmem:[%s302 + $0xc0] sm:$0xff] %v9357
        %9390 = vst [vmem:[%s302 + $0xc8] sm:$0xff] %v9358
        %9391 = vst [vmem:[%s302 + $0xd0] sm:$0xff] %v9359
        %9392 = vst [vmem:[%s302 + $0xd8] sm:$0xff] %v9360
        %9393 = vst [vmem:[%s302 + $0xe0] sm:$0xff] %v9361
        %9394 = vst [vmem:[%s302 + $0xe8] sm:$0xff] %v9362
        %9395 = vst [vmem:[%s302 + $0xf0] sm:$0xff] %v9363
        %9396 = vst [vmem:[%s302 + $0xf8] sm:$0xff] %v9364
        %s9397 = sand.u32 %s183, 1
        %s9398 = scalar_lea.sflag [#allocation8], %s9397
        %s9399 = sand.u32 %s183, 1
        %s9400 = smul.addr %s9399, 256
        %s9401 = scalar_lea.vmem [#allocation9], %s9400
        // Predicated region
        $region53: #{tpu_custom_call.1} parent=43 // pred_check
          %p9402 = pneg %p193
        $region54: #{tpu_custom_call.1} parent=43 // pred_check_branch
          %9404 = sbr.rel (%p9402) target = $region56
        $region55: #{tpu_custom_call.1} parent=43 // pred_region
          %s9405 = smul.u32 32, %s28
          %s9407 = ssub.s32 4096, 4096
          %9408 = vsyncadd %s9398, %s9407
          %s9409 = smul.addr %s27, 32
          %s9410 = sadd.s32 %s9405, %s9409
          %s9411 = smul.addr %s9410, 128
          %s9412 = scalar_lea.hbm %s6, %s9411
          %s9413 = sshll.u32 %s9401, 4
          %s9414 = int_to_ptr.vmem [resolvable:$true] %s9413
          %9419 = dma.vmem_to_hbm [thread:$0]  %s9414, 4096, %s9412, %s9398, 128, 128, 8
        $region56: #{tpu_custom_call.1} parent=43 // pred_fallthru
          _
      $region44: #{tpu_custom_call.1} parent=5 // pred_fallthru
        _
      %p9420 = scmp.le.s32.totalorder 2, %s18
      // Predicated region
      $region57: #{tpu_custom_call.1} parent=5 // pred_check
        %p9421 = pneg %p9420
      $region58: #{tpu_custom_call.1} parent=5 // pred_check_branch
        %9423 = sbr.rel (%p9421) target = $region60
      $region59: #{tpu_custom_call.1} parent=5 // pred_region
        %s9424 = ssub.s32 %s18, 2
        // Predicated region
        $region61: #{tpu_custom_call.1} parent=59 // pred_check
          %p9425 = pneg %p199
        $region62: #{tpu_custom_call.1} parent=59 // pred_check_branch
          %9427 = sbr.rel (%p9425) target = $region64
        $region63: #{tpu_custom_call.1} parent=59 // pred_region
          %s9428 = sand.u32 %s184, 1
          %s9429 = scalar_lea.sflag [#allocation8], %s9428
          %s9430 = sand.u32 %s184, 1
          %s9431 = smul.addr %s9430, 256
          %s9432 = scalar_lea.vmem [#allocation9], %s9431
          %9433 = dma.done %s9429, 4096
        $region64: #{tpu_custom_call.1} parent=59 // pred_fallthru
          _
      $region60: #{tpu_custom_call.1} parent=5 // pred_fallthru
        _
    $region6: #{tpu_custom_call.1} parent=1 // loop_footer
      %s22 = sadd.s32 1, %s18
    $region7: #{tpu_custom_call.1} parent=1 // loop_footer_branch
      %17 = sbr.rel target = $region3
    $region8: #{tpu_custom_call.1} parent=1 // loop_exit
      _
    %9434 = vsyncpa [#allocation7], 1
    %s9435 = scalar_lea.sflag [#allocation7], 1
    %9436 = vsyncpa %s9435, 1
    %9437 = vsyncpa [#allocation8], 1
    %s9438 = scalar_lea.sflag [#allocation8], 1
    %9439 = vsyncpa %s9438, 1

</llo_original>
